<compile_context>
chip_gen: v5e
topology: v5e:2x2
jax: 0.10.0
libtpu: 0.0.40
codegen_flags: <defaults>
</compile_context>

<pallas_src>
import numpy as np
import jax
import jax.numpy as jnp
from jax import lax
from jax.experimental import pallas as pl
from jax.experimental.pallas import tpu as pltpu

# ----------------------------------------------------------------------------
# Network geometry (hard-coded by the PyTorch module: input is (N, 1, 50, 21)).
# ----------------------------------------------------------------------------
KH = KW = 2
PAD = 2
NTAP = KH * KW
CPAD = 128                       # every channel-ish dim padded to one lane tile

H_IN, W_IN = 50, 21

# conv1: 50x21 -> pad 54x25 -> conv 53x24 -> pool 26x12
HPOOL1, WPOOL1 = 26, 12
PITCH1 = 24                      # row pitch of the flat conv1 output canvas (=Wo1)
M1 = 2 * HPOOL1 * PITCH1         # 1248 conv rows actually needed by the pooling

# conv2: 26x12 -> pad 30x16 -> conv 29x15 -> pool 14x7
HP2, PITCH2 = 30, 16             # padded canvas height / row pitch (= padded W)
HPOOL2, WPOOL2 = 14, 7
M2 = 2 * HPOOL2 * PITCH2         # 448

# conv3: 14x7 -> pad 18x11 -> conv 17x10 -> pool 8x5
HP3, PITCH3 = 18, 11
HPOOL3, WPOOL3 = 8, 5
M3 = 2 * HPOOL3 * PITCH3         # 176

NPATCH = HPOOL3 * WPOOL3         # 40 spatial positions feeding fc1
FC_HIDDEN = 100
NUM_CLASSES = 7
NEG_INF = -1e30


# ----------------------------------------------------------------------------
# Fully fused kernel: one grid step == one sample.
# ----------------------------------------------------------------------------
def _fused_net_kernel(p1_ref, w1c_ref, b1c_ref, w2c_ref, b2c_ref,
                      w3c_ref, b3c_ref, w1f_ref, b1f_ref, w2f_ref, b2f_ref,
                      out_ref,
                      cbuf1, pin2, cbuf2, pin3, cbuf3, feat):
    f32 = jnp.float32

    def conv_taps(pin, pitch, nrows, w_ref, b_ref, cbuf):
        # 2x2 conv on a flat padded canvas: 4 row-shifted slabs, one matmul each.
        acc = None
        for t, off in enumerate((0, 1, pitch, pitch + 1)):
            d = jnp.dot(pin[pl.ds(off, nrows), :], w_ref[t],
                        preferred_element_type=f32)
            acc = d if acc is None else acc + d
        cbuf[...] = jnp.maximum(acc + b_ref[...], 0.0)     # bias + ReLU

    def maxpool_to(cbuf, pitch, hpool, wpool, dst, dst_row0, dst_pitch):
        # 2x2 floor max-pool of the flat conv canvas; pooled row ph is written
        # at flat row dst_row0 + ph*dst_pitch of the destination canvas.
        for ph in range(hpool):
            base = 2 * ph * pitch
            p = cbuf[pl.ds(base, wpool, stride=2), :]
            p = jnp.maximum(p, cbuf[pl.ds(base + 1, wpool, stride=2), :])
            p = jnp.maximum(p, cbuf[pl.ds(base + pitch, wpool, stride=2), :])
            p = jnp.maximum(p, cbuf[pl.ds(base + pitch + 1, wpool, stride=2), :])
            dst[pl.ds(dst_row0 + ph * dst_pitch, wpool), :] = p

    # ---- stage 1: conv1 + ReLU (im2col patches built by the wrapper, K=4) ----
    z1 = jnp.dot(p1_ref[0], w1c_ref[...], preferred_element_type=f32)
    cbuf1[...] = jnp.maximum(z1 + b1c_ref[...], 0.0)

    # zero the padded canvases of the next two convs (their borders must be 0)
    pin2[...] = jnp.zeros_like(pin2)
    pin3[...] = jnp.zeros_like(pin3)

    # pool1 -> interior of the padded conv2 canvas
    maxpool_to(cbuf1, PITCH1, HPOOL1, WPOOL1, pin2, PAD * PITCH2 + PAD, PITCH2)

    # ---- stage 2: conv2 + ReLU, pool2 -> interior of the padded conv3 canvas -
    conv_taps(pin2, PITCH2, M2, w2c_ref, b2c_ref, cbuf2)
    maxpool_to(cbuf2, PITCH2, HPOOL2, WPOOL2, pin3, PAD * PITCH3 + PAD, PITCH3)

    # ---- stage 3: conv3 + ReLU, pool3 -> feature rows (p = h*5 + w, c) -------
    conv_taps(pin3, PITCH3, M3, w3c_ref, b3c_ref, cbuf3)
    maxpool_to(cbuf3, PITCH3, HPOOL3, WPOOL3, feat, 0, WPOOL3)

    # ---- fc1 + ReLU:  h[j] = sum_{p,c} feat[p, c] * w1f[p, c, j] -------------
    h = None
    for p_idx in range(NPATCH):
        d = jnp.dot(feat[pl.ds(p_idx, 1), :], w1f_ref[p_idx],
                    preferred_element_type=f32)
        h = d if h is None else h + d
    h = jnp.maximum(h + b1f_ref[...], 0.0)

    # ---- fc2 + softmax (padded logit lanes carry bias -1e30 -> exp() == 0) ---
    logits = jnp.dot(h, w2f_ref[...], preferred_element_type=f32) + b2f_ref[...]
    mx = jnp.max(logits, axis=-1, keepdims=True)
    e = jnp.exp(logits - mx)
    out_ref[0] = e / jnp.sum(e, axis=-1, keepdims=True)


def _fused_forward(p1, packed):
    n = p1.shape[0]
    out = pl.pallas_call(
        _fused_net_kernel,
        out_shape=jax.ShapeDtypeStruct((n, 1, CPAD), jnp.float32),
        grid=(n,),
        in_specs=[
            pl.BlockSpec((1, M1, NTAP), lambda i: (i, 0, 0)),      # conv1 patches
            pl.BlockSpec((NTAP, CPAD), lambda i: (0, 0)),          # w1c
            pl.BlockSpec((1, CPAD), lambda i: (0, 0)),             # b1c
            pl.BlockSpec((NTAP, CPAD, CPAD), lambda i: (0, 0, 0)),  # w2c
            pl.BlockSpec((1, CPAD), lambda i: (0, 0)),             # b2c
            pl.BlockSpec((NTAP, CPAD, CPAD), lambda i: (0, 0, 0)),  # w3c
            pl.BlockSpec((1, CPAD), lambda i: (0, 0)),             # b3c
            pl.BlockSpec((NPATCH, CPAD, CPAD), lambda i: (0, 0, 0)),  # w1f
            pl.BlockSpec((1, CPAD), lambda i: (0, 0)),             # b1f
            pl.BlockSpec((CPAD, CPAD), lambda i: (0, 0)),          # w2f
            pl.BlockSpec((1, CPAD), lambda i: (0, 0)),             # b2f
        ],
        out_specs=pl.BlockSpec((1, 1, CPAD), lambda i: (i, 0, 0)),
        scratch_shapes=[
            pltpu.VMEM((M1, CPAD), jnp.float32),             # conv1 output canvas
            pltpu.VMEM((HP2 * PITCH2, CPAD), jnp.float32),   # padded conv2 input
            pltpu.VMEM((M2, CPAD), jnp.float32),             # conv2 output canvas
            pltpu.VMEM((HP3 * PITCH3, CPAD), jnp.float32),   # padded conv3 input
            pltpu.VMEM((M3, CPAD), jnp.float32),             # conv3 output canvas
            pltpu.VMEM((NPATCH, CPAD), jnp.float32),         # flattened features
        ],
        compiler_params=pltpu.CompilerParams(
            dimension_semantics=("parallel",),
            vmem_limit_bytes=32 * 1024 * 1024),
    )(p1, packed["w1c"], packed["b1c"], packed["w2c"], packed["b2c"],
      packed["w3c"], packed["b3c"], packed["w1f"], packed["b1f"],
      packed["w2f"], packed["b2f"])
    return out[:, 0, :NUM_CLASSES]


def _build_conv1_patches(x_nchw):
    """im2col for conv1 (Cin=1): (N,1,50,21) -> (N, 1248, 4) patch rows, where
    row h*24 + w holds the 2x2 window at padded position (h, w)."""
    x = x_nchw[:, 0, :, :].astype(jnp.float32)                  # (N, 50, 21)
    xp = jnp.pad(x, ((0, 0), (PAD, PAD), (PAD, PAD)))           # (N, 54, 25)
    taps = [xp[:, kh:kh + 2 * HPOOL1, kw:kw + PITCH1]
            for kh in range(KH) for kw in range(KW)]            # 4 x (N, 52, 24)
    p = jnp.stack(taps, axis=-1)                                # (N, 52, 24, 4)
    return p.reshape(x.shape[0], M1, NTAP)


def pack_params(params):
    """One-time repack of torch-layout params into the lane-dense (128-padded)
    layouts the fused kernel expects."""
    f32 = jnp.float32

    # conv1: (32,1,2,2) -> (4 taps, 128): taps folded into the contraction dim.
    w1, b1 = params["conv1"]
    w1c = jnp.transpose(w1[:, 0], (1, 2, 0)).reshape(NTAP, w1.shape[0])
    w1c = jnp.pad(w1c, ((0, 0), (0, CPAD - w1.shape[0]))).astype(f32)
    b1c = jnp.pad(b1, (0, CPAD - b1.shape[0])).reshape(1, CPAD).astype(f32)

    def conv_pack(w, b):
        cout, cin = w.shape[0], w.shape[1]
        wk = jnp.transpose(w, (2, 3, 1, 0)).reshape(NTAP, cin, cout)
        wk = jnp.pad(wk, ((0, 0), (0, CPAD - cin), (0, CPAD - cout))).astype(f32)
        bk = jnp.pad(b, (0, CPAD - cout)).reshape(1, CPAD).astype(f32)
        return wk, bk

    w2c, b2c = conv_pack(*params["conv2"])
    w3c, b3c = conv_pack(*params["conv3"])

    # fc1: rows of (5120,100) follow torch NCHW flatten order f = c*40 + (h*5+w);
    # the kernel consumes features as (p = h*5+w, c) rows -> (40, 128, 128).
    wf1, bf1 = params["fc1"]
    w1f = jnp.transpose(wf1.reshape(CPAD, NPATCH, FC_HIDDEN), (1, 0, 2))
    w1f = jnp.pad(w1f, ((0, 0), (0, 0), (0, CPAD - FC_HIDDEN))).astype(f32)
    b1f = jnp.pad(bf1, (0, CPAD - FC_HIDDEN)).reshape(1, CPAD).astype(f32)

    # fc2: pad to 128x128; padded logit lanes get bias -1e30 so softmax is exact.
    wf2, bf2 = params["fc2"]
    w2f = jnp.pad(wf2, ((0, CPAD - FC_HIDDEN), (0, CPAD - NUM_CLASSES))).astype(f32)
    b2f = jnp.pad(bf2, (0, CPAD - NUM_CLASSES),
                  constant_values=NEG_INF).reshape(1, CPAD).astype(f32)

    return dict(w1c=w1c, b1c=b1c, w2c=w2c, b2c=b2c, w3c=w3c, b3c=b3c,
                w1f=w1f, b1f=b1f, w2f=w2f, b2f=b2f)


@jax.jit
def net_forward_pallas(x_nchw, packed):
    p1 = _build_conv1_patches(x_nchw)   # tiny boundary-layout op on the raw input
    return _fused_forward(p1, packed)


# ----------------------------------------------------------------------------
# Deterministic synthetic params + plain-JAX reference of the PyTorch forward.
# ----------------------------------------------------------------------------
def init_params(key):
    ks = jax.random.split(key, 10)

    def conv_init(kw_, kb_, cin, cout):
        bound = 1.0 / np.sqrt(cin * KH * KW)
        w = jax.random.uniform(kw_, (cout, cin, KH, KW), jnp.float32, -bound, bound)
        b = jax.random.uniform(kb_, (cout,), jnp.float32, -bound, bound)
        return w, b

    def linear_init(kw_, kb_, fin, fout):
        bound = 1.0 / np.sqrt(fin)
        w = jax.random.uniform(kw_, (fin, fout), jnp.float32, -bound, bound)
        b = jax.random.uniform(kb_, (fout,), jnp.float32, -bound, bound)
        return w, b

    return {
        "conv1": conv_init(ks[0], ks[1], 1, 32),
        "conv2": conv_init(ks[2], ks[3], 32, 64),
        "conv3": conv_init(ks[4], ks[5], 64, 128),
        "fc1": linear_init(ks[6], ks[7], CPAD * HPOOL3 * WPOOL3, FC_HIDDEN),  # 5120
        "fc2": linear_init(ks[8], ks[9], FC_HIDDEN, NUM_CLASSES),
    }


def net_forward_reference(x_nchw, params):
    x = x_nchw.astype(jnp.float32)
    for name in ("conv1", "conv2", "conv3"):
        w, b = params[name]
        x = lax.conv_general_dilated(
            x, w, window_strides=(1, 1), padding=((PAD, PAD), (PAD, PAD)),
            dimension_numbers=("NCHW", "OIHW", "NCHW"),
            precision=lax.Precision.HIGHEST)
        x = jnp.maximum(x + b[None, :, None, None], 0.0)
        x = lax.reduce_window(x, -jnp.inf, lax.max,
                              (1, 1, 2, 2), (1, 1, 2, 2), "VALID")
    feat = x.reshape(x.shape[0], -1)
    w1, b1 = params["fc1"]
    w2, b2 = params["fc2"]
    h = jnp.maximum(jnp.dot(feat, w1, precision=lax.Precision.HIGHEST) + b1, 0.0)
    logits = jnp.dot(h, w2, precision=lax.Precision.HIGHEST) + b2
    return jax.nn.softmax(logits, axis=1)


if __name__ == "__main__":
    key = jax.random.PRNGKey(0)
    k_param, k_x = jax.random.split(key)
    params = init_params(k_param)
    packed = pack_params(params)    # one-time weight repack (outside the hot path)

    # The module hard-codes a (*, 1, 50, 21) input geometry (=> _to_linear = 5120).
    x = jax.random.normal(k_x, (2, 1, H_IN, W_IN), dtype=jnp.float32)

    out = net_forward_pallas(x, packed)
    out = jax.block_until_ready(out)

    ref = net_forward_reference(x, params)
    assert out.shape == (2, NUM_CLASSES)
    np.testing.assert_allclose(np.asarray(out), np.asarray(ref), atol=3e-2, rtol=0)
    np.testing.assert_allclose(np.asarray(out).sum(axis=1), np.ones(2), atol=1e-3)
    print("KERNEL_OK")
</pallas_src>

<mosaic_0001>
module attributes {stable_mosaic.version = 11 : i64} {
  func.func @_fused_net_kernel(%arg0: i32, %arg1: memref<1x1248x4xf32, #tpu.memory_space<vmem>>, %arg2: memref<4x128xf32, #tpu.memory_space<vmem>>, %arg3: memref<1x128xf32, #tpu.memory_space<vmem>>, %arg4: memref<4x128x128xf32, #tpu.memory_space<vmem>>, %arg5: memref<1x128xf32, #tpu.memory_space<vmem>>, %arg6: memref<4x128x128xf32, #tpu.memory_space<vmem>>, %arg7: memref<1x128xf32, #tpu.memory_space<vmem>>, %arg8: memref<40x128x128xf32, #tpu.memory_space<vmem>>, %arg9: memref<1x128xf32, #tpu.memory_space<vmem>>, %arg10: memref<128x128xf32, #tpu.memory_space<vmem>>, %arg11: memref<1x128xf32, #tpu.memory_space<vmem>>, %arg12: memref<1x1x128xf32, #tpu.memory_space<vmem>>, %arg13: memref<1248x128xf32, #tpu.memory_space<vmem>>, %arg14: memref<480x128xf32, #tpu.memory_space<vmem>>, %arg15: memref<448x128xf32, #tpu.memory_space<vmem>>, %arg16: memref<198x128xf32, #tpu.memory_space<vmem>>, %arg17: memref<176x128xf32, #tpu.memory_space<vmem>>, %arg18: memref<40x128xf32, #tpu.memory_space<vmem>>) attributes {dimension_semantics = [#tpu.dimension_semantics<parallel>], iteration_bounds = array<i64: 2>, scalar_prefetch = 0 : i64, scratch_operands = 6 : i64, tpu.core_type = #tpu.core_type<tc>, window_params = [{transform_indices = @transform_0, window_bounds = array<i64: 1, 1248, 4>}, {pipeline_mode = #tpu.pipeline_mode<synchronous>, transform_indices = @transform_1, window_bounds = array<i64: 4, 128>}, {pipeline_mode = #tpu.pipeline_mode<synchronous>, transform_indices = @transform_2, window_bounds = array<i64: 1, 128>}, {pipeline_mode = #tpu.pipeline_mode<synchronous>, transform_indices = @transform_3, window_bounds = array<i64: 4, 128, 128>}, {pipeline_mode = #tpu.pipeline_mode<synchronous>, transform_indices = @transform_4, window_bounds = array<i64: 1, 128>}, {pipeline_mode = #tpu.pipeline_mode<synchronous>, transform_indices = @transform_5, window_bounds = array<i64: 4, 128, 128>}, {pipeline_mode = #tpu.pipeline_mode<synchronous>, transform_indices = @transform_6, window_bounds = array<i64: 1, 128>}, {pipeline_mode = #tpu.pipeline_mode<synchronous>, transform_indices = @transform_7, window_bounds = array<i64: 40, 128, 128>}, {pipeline_mode = #tpu.pipeline_mode<synchronous>, transform_indices = @transform_8, window_bounds = array<i64: 1, 128>}, {pipeline_mode = #tpu.pipeline_mode<synchronous>, transform_indices = @transform_9, window_bounds = array<i64: 128, 128>}, {pipeline_mode = #tpu.pipeline_mode<synchronous>, transform_indices = @transform_10, window_bounds = array<i64: 1, 128>}, {transform_indices = @transform_11, window_bounds = array<i64: 1, 1, 128>}]} {
    %c0 = arith.constant 0 : index
    %c0_0 = arith.constant 0 : index
    %c0_1 = arith.constant 0 : index
    %0 = vector.load %arg1[%c0, %c0_0, %c0_1] : memref<1x1248x4xf32, #tpu.memory_space<vmem>>, vector<1x1248x4xf32>
    %1 = vector.shape_cast %0 : vector<1x1248x4xf32> to vector<1248x4xf32>
    %c0_2 = arith.constant 0 : index
    %c0_3 = arith.constant 0 : index
    %2 = vector.load %arg2[%c0_2, %c0_3] : memref<4x128xf32, #tpu.memory_space<vmem>>, vector<4x128xf32>
    %cst = arith.constant dense<0.000000e+00> : vector<1248x128xf32>
    %3 = tpu.matmul %1, %2, %cst {dimension_numbers = #tpu.dot_dimension_numbers<[1], [0], [0], [1], [0, 0, 1, 1], [], []>} : vector<1248x4xf32>, vector<4x128xf32>, vector<1248x128xf32> -> vector<1248x128xf32>
    %c0_4 = arith.constant 0 : index
    %c0_5 = arith.constant 0 : index
    %4 = vector.load %arg3[%c0_4, %c0_5] : memref<1x128xf32, #tpu.memory_space<vmem>>, vector<1x128xf32>
    %5 = vector.broadcast %4 : vector<1x128xf32> to vector<1248x128xf32>
    %6 = arith.addf %3, %5 : vector<1248x128xf32>
    %cst_6 = arith.constant 0.000000e+00 : f32
    %7 = vector.broadcast %cst_6 : f32 to vector<1248x128xf32>
    %8 = arith.maximumf %6, %7 : vector<1248x128xf32>
    %c0_7 = arith.constant 0 : index
    %c0_8 = arith.constant 0 : index
    %9 = vector.load %arg13[%c0_7, %c0_8] : memref<1248x128xf32, #tpu.memory_space<vmem>>, vector<1248x128xf32>
    tpu.vector_store %arg13[%c0_7, %c0_8], %8 {strides = array<i32>} : memref<1248x128xf32, #tpu.memory_space<vmem>>, vector<1248x128xf32>,
    %cst_9 = arith.constant 0.000000e+00 : f32
    %10 = vector.broadcast %cst_9 : f32 to vector<480x128xf32>
    %c0_10 = arith.constant 0 : index
    %c0_11 = arith.constant 0 : index
    %11 = vector.load %arg14[%c0_10, %c0_11] : memref<480x128xf32, #tpu.memory_space<vmem>>, vector<480x128xf32>
    tpu.vector_store %arg14[%c0_10, %c0_11], %10 {strides = array<i32>} : memref<480x128xf32, #tpu.memory_space<vmem>>, vector<480x128xf32>,
    %cst_12 = arith.constant 0.000000e+00 : f32
    %12 = vector.broadcast %cst_12 : f32 to vector<198x128xf32>
    %c0_13 = arith.constant 0 : index
    %c0_14 = arith.constant 0 : index
    %13 = vector.load %arg16[%c0_13, %c0_14] : memref<198x128xf32, #tpu.memory_space<vmem>>, vector<198x128xf32>
    tpu.vector_store %arg16[%c0_13, %c0_14], %12 {strides = array<i32>} : memref<198x128xf32, #tpu.memory_space<vmem>>, vector<198x128xf32>,
    %c0_15 = arith.constant 0 : index
    %c0_16 = arith.constant 0 : index
    %14 = tpu.strided_load %arg13[%c0_15, %c0_16] {strides = array<i32: 2, 1>} : memref<1248x128xf32, #tpu.memory_space<vmem>>, vector<12x128xf32>
    %c1 = arith.constant 1 : index
    %c0_17 = arith.constant 0 : index
    %15 = tpu.strided_load %arg13[%c1, %c0_17] {strides = array<i32: 2, 1>} : memref<1248x128xf32, #tpu.memory_space<vmem>>, vector<12x128xf32>
    %16 = arith.maximumf %14, %15 : vector<12x128xf32>
    %c24 = arith.constant 24 : index
    %c0_18 = arith.constant 0 : index
    %17 = tpu.strided_load %arg13[%c24, %c0_18] {strides = array<i32: 2, 1>} : memref<1248x128xf32, #tpu.memory_space<vmem>>, vector<12x128xf32>
    %18 = arith.maximumf %16, %17 : vector<12x128xf32>
    %c25 = arith.constant 25 : index
    %c0_19 = arith.constant 0 : index
    %19 = tpu.strided_load %arg13[%c25, %c0_19] {strides = array<i32: 2, 1>} : memref<1248x128xf32, #tpu.memory_space<vmem>>, vector<12x128xf32>
    %20 = arith.maximumf %18, %19 : vector<12x128xf32>
    %c34 = arith.constant 34 : index
    %c0_20 = arith.constant 0 : index
    %21 = vector.load %arg14[%c34, %c0_20] : memref<480x128xf32, #tpu.memory_space<vmem>>, vector<12x128xf32>
    tpu.vector_store %arg14[%c34, %c0_20], %20 {strides = array<i32>} : memref<480x128xf32, #tpu.memory_space<vmem>>, vector<12x128xf32>,
    %c48 = arith.constant 48 : index
    %c0_21 = arith.constant 0 : index
    %22 = tpu.strided_load %arg13[%c48, %c0_21] {strides = array<i32: 2, 1>} : memref<1248x128xf32, #tpu.memory_space<vmem>>, vector<12x128xf32>
    %c49 = arith.constant 49 : index
    %c0_22 = arith.constant 0 : index
    %23 = tpu.strided_load %arg13[%c49, %c0_22] {strides = array<i32: 2, 1>} : memref<1248x128xf32, #tpu.memory_space<vmem>>, vector<12x128xf32>
    %24 = arith.maximumf %22, %23 : vector<12x128xf32>
    %c72 = arith.constant 72 : index
    %c0_23 = arith.constant 0 : index
    %25 = tpu.strided_load %arg13[%c72, %c0_23] {strides = array<i32: 2, 1>} : memref<1248x128xf32, #tpu.memory_space<vmem>>, vector<12x128xf32>
    %26 = arith.maximumf %24, %25 : vector<12x128xf32>
    %c73 = arith.constant 73 : index
    %c0_24 = arith.constant 0 : index
    %27 = tpu.strided_load %arg13[%c73, %c0_24] {strides = array<i32: 2, 1>} : memref<1248x128xf32, #tpu.memory_space<vmem>>, vector<12x128xf32>
    %28 = arith.maximumf %26, %27 : vector<12x128xf32>
    %c50 = arith.constant 50 : index
    %c0_25 = arith.constant 0 : index
    %29 = vector.load %arg14[%c50, %c0_25] : memref<480x128xf32, #tpu.memory_space<vmem>>, vector<12x128xf32>
    tpu.vector_store %arg14[%c50, %c0_25], %28 {strides = array<i32>} : memref<480x128xf32, #tpu.memory_space<vmem>>, vector<12x128xf32>,
    %c96 = arith.constant 96 : index
    %c0_26 = arith.constant 0 : index
    %30 = tpu.strided_load %arg13[%c96, %c0_26] {strides = array<i32: 2, 1>} : memref<1248x128xf32, #tpu.memory_space<vmem>>, vector<12x128xf32>
    %c97 = arith.constant 97 : index
    %c0_27 = arith.constant 0 : index
    %31 = tpu.strided_load %arg13[%c97, %c0_27] {strides = array<i32: 2, 1>} : memref<1248x128xf32, #tpu.memory_space<vmem>>, vector<12x128xf32>
    %32 = arith.maximumf %30, %31 : vector<12x128xf32>
    %c120 = arith.constant 120 : index
    %c0_28 = arith.constant 0 : index
    %33 = tpu.strided_load %arg13[%c120, %c0_28] {strides = array<i32: 2, 1>} : memref<1248x128xf32, #tpu.memory_space<vmem>>, vector<12x128xf32>
    %34 = arith.maximumf %32, %33 : vector<12x128xf32>
    %c121 = arith.constant 121 : index
    %c0_29 = arith.constant 0 : index
    %35 = tpu.strided_load %arg13[%c121, %c0_29] {strides = array<i32: 2, 1>} : memref<1248x128xf32, #tpu.memory_space<vmem>>, vector<12x128xf32>
    %36 = arith.maximumf %34, %35 : vector<12x128xf32>
    %c66 = arith.constant 66 : index
    %c0_30 = arith.constant 0 : index
    %37 = vector.load %arg14[%c66, %c0_30] : memref<480x128xf32, #tpu.memory_space<vmem>>, vector<12x128xf32>
    tpu.vector_store %arg14[%c66, %c0_30], %36 {strides = array<i32>} : memref<480x128xf32, #tpu.memory_space<vmem>>, vector<12x128xf32>,
    %c144 = arith.constant 144 : index
    %c0_31 = arith.constant 0 : index
    %38 = tpu.strided_load %arg13[%c144, %c0_31] {strides = array<i32: 2, 1>} : memref<1248x128xf32, #tpu.memory_space<vmem>>, vector<12x128xf32>
    %c145 = arith.constant 145 : index
    %c0_32 = arith.constant 0 : index
    %39 = tpu.strided_load %arg13[%c145, %c0_32] {strides = array<i32: 2, 1>} : memref<1248x128xf32, #tpu.memory_space<vmem>>, vector<12x128xf32>
    %40 = arith.maximumf %38, %39 : vector<12x128xf32>
    %c168 = arith.constant 168 : index
    %c0_33 = arith.constant 0 : index
    %41 = tpu.strided_load %arg13[%c168, %c0_33] {strides = array<i32: 2, 1>} : memref<1248x128xf32, #tpu.memory_space<vmem>>, vector<12x128xf32>
    %42 = arith.maximumf %40, %41 : vector<12x128xf32>
    %c169 = arith.constant 169 : index
    %c0_34 = arith.constant 0 : index
    %43 = tpu.strided_load %arg13[%c169, %c0_34] {strides = array<i32: 2, 1>} : memref<1248x128xf32, #tpu.memory_space<vmem>>, vector<12x128xf32>
    %44 = arith.maximumf %42, %43 : vector<12x128xf32>
    %c82 = arith.constant 82 : index
    %c0_35 = arith.constant 0 : index
    %45 = vector.load %arg14[%c82, %c0_35] : memref<480x128xf32, #tpu.memory_space<vmem>>, vector<12x128xf32>
    tpu.vector_store %arg14[%c82, %c0_35], %44 {strides = array<i32>} : memref<480x128xf32, #tpu.memory_space<vmem>>, vector<12x128xf32>,
    %c192 = arith.constant 192 : index
    %c0_36 = arith.constant 0 : index
    %46 = tpu.strided_load %arg13[%c192, %c0_36] {strides = array<i32: 2, 1>} : memref<1248x128xf32, #tpu.memory_space<vmem>>, vector<12x128xf32>
    %c193 = arith.constant 193 : index
    %c0_37 = arith.constant 0 : index
    %47 = tpu.strided_load %arg13[%c193, %c0_37] {strides = array<i32: 2, 1>} : memref<1248x128xf32, #tpu.memory_space<vmem>>, vector<12x128xf32>
    %48 = arith.maximumf %46, %47 : vector<12x128xf32>
    %c216 = arith.constant 216 : index
    %c0_38 = arith.constant 0 : index
    %49 = tpu.strided_load %arg13[%c216, %c0_38] {strides = array<i32: 2, 1>} : memref<1248x128xf32, #tpu.memory_space<vmem>>, vector<12x128xf32>
    %50 = arith.maximumf %48, %49 : vector<12x128xf32>
    %c217 = arith.constant 217 : index
    %c0_39 = arith.constant 0 : index
    %51 = tpu.strided_load %arg13[%c217, %c0_39] {strides = array<i32: 2, 1>} : memref<1248x128xf32, #tpu.memory_space<vmem>>, vector<12x128xf32>
    %52 = arith.maximumf %50, %51 : vector<12x128xf32>
    %c98 = arith.constant 98 : index
    %c0_40 = arith.constant 0 : index
    %53 = vector.load %arg14[%c98, %c0_40] : memref<480x128xf32, #tpu.memory_space<vmem>>, vector<12x128xf32>
    tpu.vector_store %arg14[%c98, %c0_40], %52 {strides = array<i32>} : memref<480x128xf32, #tpu.memory_space<vmem>>, vector<12x128xf32>,
    %c240 = arith.constant 240 : index
    %c0_41 = arith.constant 0 : index
    %54 = tpu.strided_load %arg13[%c240, %c0_41] {strides = array<i32: 2, 1>} : memref<1248x128xf32, #tpu.memory_space<vmem>>, vector<12x128xf32>
    %c241 = arith.constant 241 : index
    %c0_42 = arith.constant 0 : index
    %55 = tpu.strided_load %arg13[%c241, %c0_42] {strides = array<i32: 2, 1>} : memref<1248x128xf32, #tpu.memory_space<vmem>>, vector<12x128xf32>
    %56 = arith.maximumf %54, %55 : vector<12x128xf32>
    %c264 = arith.constant 264 : index
    %c0_43 = arith.constant 0 : index
    %57 = tpu.strided_load %arg13[%c264, %c0_43] {strides = array<i32: 2, 1>} : memref<1248x128xf32, #tpu.memory_space<vmem>>, vector<12x128xf32>
    %58 = arith.maximumf %56, %57 : vector<12x128xf32>
    %c265 = arith.constant 265 : index
    %c0_44 = arith.constant 0 : index
    %59 = tpu.strided_load %arg13[%c265, %c0_44] {strides = array<i32: 2, 1>} : memref<1248x128xf32, #tpu.memory_space<vmem>>, vector<12x128xf32>
    %60 = arith.maximumf %58, %59 : vector<12x128xf32>
    %c114 = arith.constant 114 : index
    %c0_45 = arith.constant 0 : index
    %61 = vector.load %arg14[%c114, %c0_45] : memref<480x128xf32, #tpu.memory_space<vmem>>, vector<12x128xf32>
    tpu.vector_store %arg14[%c114, %c0_45], %60 {strides = array<i32>} : memref<480x128xf32, #tpu.memory_space<vmem>>, vector<12x128xf32>,
    %c288 = arith.constant 288 : index
    %c0_46 = arith.constant 0 : index
    %62 = tpu.strided_load %arg13[%c288, %c0_46] {strides = array<i32: 2, 1>} : memref<1248x128xf32, #tpu.memory_space<vmem>>, vector<12x128xf32>
    %c289 = arith.constant 289 : index
    %c0_47 = arith.constant 0 : index
    %63 = tpu.strided_load %arg13[%c289, %c0_47] {strides = array<i32: 2, 1>} : memref<1248x128xf32, #tpu.memory_space<vmem>>, vector<12x128xf32>
    %64 = arith.maximumf %62, %63 : vector<12x128xf32>
    %c312 = arith.constant 312 : index
    %c0_48 = arith.constant 0 : index
    %65 = tpu.strided_load %arg13[%c312, %c0_48] {strides = array<i32: 2, 1>} : memref<1248x128xf32, #tpu.memory_space<vmem>>, vector<12x128xf32>
    %66 = arith.maximumf %64, %65 : vector<12x128xf32>
    %c313 = arith.constant 313 : index
    %c0_49 = arith.constant 0 : index
    %67 = tpu.strided_load %arg13[%c313, %c0_49] {strides = array<i32: 2, 1>} : memref<1248x128xf32, #tpu.memory_space<vmem>>, vector<12x128xf32>
    %68 = arith.maximumf %66, %67 : vector<12x128xf32>
    %c130 = arith.constant 130 : index
    %c0_50 = arith.constant 0 : index
    %69 = vector.load %arg14[%c130, %c0_50] : memref<480x128xf32, #tpu.memory_space<vmem>>, vector<12x128xf32>
    tpu.vector_store %arg14[%c130, %c0_50], %68 {strides = array<i32>} : memref<480x128xf32, #tpu.memory_space<vmem>>, vector<12x128xf32>,
    %c336 = arith.constant 336 : index
    %c0_51 = arith.constant 0 : index
    %70 = tpu.strided_load %arg13[%c336, %c0_51] {strides = array<i32: 2, 1>} : memref<1248x128xf32, #tpu.memory_space<vmem>>, vector<12x128xf32>
    %c337 = arith.constant 337 : index
    %c0_52 = arith.constant 0 : index
    %71 = tpu.strided_load %arg13[%c337, %c0_52] {strides = array<i32: 2, 1>} : memref<1248x128xf32, #tpu.memory_space<vmem>>, vector<12x128xf32>
    %72 = arith.maximumf %70, %71 : vector<12x128xf32>
    %c360 = arith.constant 360 : index
    %c0_53 = arith.constant 0 : index
    %73 = tpu.strided_load %arg13[%c360, %c0_53] {strides = array<i32: 2, 1>} : memref<1248x128xf32, #tpu.memory_space<vmem>>, vector<12x128xf32>
    %74 = arith.maximumf %72, %73 : vector<12x128xf32>
    %c361 = arith.constant 361 : index
    %c0_54 = arith.constant 0 : index
    %75 = tpu.strided_load %arg13[%c361, %c0_54] {strides = array<i32: 2, 1>} : memref<1248x128xf32, #tpu.memory_space<vmem>>, vector<12x128xf32>
    %76 = arith.maximumf %74, %75 : vector<12x128xf32>
    %c146 = arith.constant 146 : index
    %c0_55 = arith.constant 0 : index
    %77 = vector.load %arg14[%c146, %c0_55] : memref<480x128xf32, #tpu.memory_space<vmem>>, vector<12x128xf32>
    tpu.vector_store %arg14[%c146, %c0_55], %76 {strides = array<i32>} : memref<480x128xf32, #tpu.memory_space<vmem>>, vector<12x128xf32>,
    %c384 = arith.constant 384 : index
    %c0_56 = arith.constant 0 : index
    %78 = tpu.strided_load %arg13[%c384, %c0_56] {strides = array<i32: 2, 1>} : memref<1248x128xf32, #tpu.memory_space<vmem>>, vector<12x128xf32>
    %c385 = arith.constant 385 : index
    %c0_57 = arith.constant 0 : index
    %79 = tpu.strided_load %arg13[%c385, %c0_57] {strides = array<i32: 2, 1>} : memref<1248x128xf32, #tpu.memory_space<vmem>>, vector<12x128xf32>
    %80 = arith.maximumf %78, %79 : vector<12x128xf32>
    %c408 = arith.constant 408 : index
    %c0_58 = arith.constant 0 : index
    %81 = tpu.strided_load %arg13[%c408, %c0_58] {strides = array<i32: 2, 1>} : memref<1248x128xf32, #tpu.memory_space<vmem>>, vector<12x128xf32>
    %82 = arith.maximumf %80, %81 : vector<12x128xf32>
    %c409 = arith.constant 409 : index
    %c0_59 = arith.constant 0 : index
    %83 = tpu.strided_load %arg13[%c409, %c0_59] {strides = array<i32: 2, 1>} : memref<1248x128xf32, #tpu.memory_space<vmem>>, vector<12x128xf32>
    %84 = arith.maximumf %82, %83 : vector<12x128xf32>
    %c162 = arith.constant 162 : index
    %c0_60 = arith.constant 0 : index
    %85 = vector.load %arg14[%c162, %c0_60] : memref<480x128xf32, #tpu.memory_space<vmem>>, vector<12x128xf32>
    tpu.vector_store %arg14[%c162, %c0_60], %84 {strides = array<i32>} : memref<480x128xf32, #tpu.memory_space<vmem>>, vector<12x128xf32>,
    %c432 = arith.constant 432 : index
    %c0_61 = arith.constant 0 : index
    %86 = tpu.strided_load %arg13[%c432, %c0_61] {strides = array<i32: 2, 1>} : memref<1248x128xf32, #tpu.memory_space<vmem>>, vector<12x128xf32>
    %c433 = arith.constant 433 : index
    %c0_62 = arith.constant 0 : index
    %87 = tpu.strided_load %arg13[%c433, %c0_62] {strides = array<i32: 2, 1>} : memref<1248x128xf32, #tpu.memory_space<vmem>>, vector<12x128xf32>
    %88 = arith.maximumf %86, %87 : vector<12x128xf32>
    %c456 = arith.constant 456 : index
    %c0_63 = arith.constant 0 : index
    %89 = tpu.strided_load %arg13[%c456, %c0_63] {strides = array<i32: 2, 1>} : memref<1248x128xf32, #tpu.memory_space<vmem>>, vector<12x128xf32>
    %90 = arith.maximumf %88, %89 : vector<12x128xf32>
    %c457 = arith.constant 457 : index
    %c0_64 = arith.constant 0 : index
    %91 = tpu.strided_load %arg13[%c457, %c0_64] {strides = array<i32: 2, 1>} : memref<1248x128xf32, #tpu.memory_space<vmem>>, vector<12x128xf32>
    %92 = arith.maximumf %90, %91 : vector<12x128xf32>
    %c178 = arith.constant 178 : index
    %c0_65 = arith.constant 0 : index
    %93 = vector.load %arg14[%c178, %c0_65] : memref<480x128xf32, #tpu.memory_space<vmem>>, vector<12x128xf32>
    tpu.vector_store %arg14[%c178, %c0_65], %92 {strides = array<i32>} : memref<480x128xf32, #tpu.memory_space<vmem>>, vector<12x128xf32>,
    %c480 = arith.constant 480 : index
    %c0_66 = arith.constant 0 : index
    %94 = tpu.strided_load %arg13[%c480, %c0_66] {strides = array<i32: 2, 1>} : memref<1248x128xf32, #tpu.memory_space<vmem>>, vector<12x128xf32>
    %c481 = arith.constant 481 : index
    %c0_67 = arith.constant 0 : index
    %95 = tpu.strided_load %arg13[%c481, %c0_67] {strides = array<i32: 2, 1>} : memref<1248x128xf32, #tpu.memory_space<vmem>>, vector<12x128xf32>
    %96 = arith.maximumf %94, %95 : vector<12x128xf32>
    %c504 = arith.constant 504 : index
    %c0_68 = arith.constant 0 : index
    %97 = tpu.strided_load %arg13[%c504, %c0_68] {strides = array<i32: 2, 1>} : memref<1248x128xf32, #tpu.memory_space<vmem>>, vector<12x128xf32>
    %98 = arith.maximumf %96, %97 : vector<12x128xf32>
    %c505 = arith.constant 505 : index
    %c0_69 = arith.constant 0 : index
    %99 = tpu.strided_load %arg13[%c505, %c0_69] {strides = array<i32: 2, 1>} : memref<1248x128xf32, #tpu.memory_space<vmem>>, vector<12x128xf32>
    %100 = arith.maximumf %98, %99 : vector<12x128xf32>
    %c194 = arith.constant 194 : index
    %c0_70 = arith.constant 0 : index
    %101 = vector.load %arg14[%c194, %c0_70] : memref<480x128xf32, #tpu.memory_space<vmem>>, vector<12x128xf32>
    tpu.vector_store %arg14[%c194, %c0_70], %100 {strides = array<i32>} : memref<480x128xf32, #tpu.memory_space<vmem>>, vector<12x128xf32>,
    %c528 = arith.constant 528 : index
    %c0_71 = arith.constant 0 : index
    %102 = tpu.strided_load %arg13[%c528, %c0_71] {strides = array<i32: 2, 1>} : memref<1248x128xf32, #tpu.memory_space<vmem>>, vector<12x128xf32>
    %c529 = arith.constant 529 : index
    %c0_72 = arith.constant 0 : index
    %103 = tpu.strided_load %arg13[%c529, %c0_72] {strides = array<i32: 2, 1>} : memref<1248x128xf32, #tpu.memory_space<vmem>>, vector<12x128xf32>
    %104 = arith.maximumf %102, %103 : vector<12x128xf32>
    %c552 = arith.constant 552 : index
    %c0_73 = arith.constant 0 : index
    %105 = tpu.strided_load %arg13[%c552, %c0_73] {strides = array<i32: 2, 1>} : memref<1248x128xf32, #tpu.memory_space<vmem>>, vector<12x128xf32>
    %106 = arith.maximumf %104, %105 : vector<12x128xf32>
    %c553 = arith.constant 553 : index
    %c0_74 = arith.constant 0 : index
    %107 = tpu.strided_load %arg13[%c553, %c0_74] {strides = array<i32: 2, 1>} : memref<1248x128xf32, #tpu.memory_space<vmem>>, vector<12x128xf32>
    %108 = arith.maximumf %106, %107 : vector<12x128xf32>
    %c210 = arith.constant 210 : index
    %c0_75 = arith.constant 0 : index
    %109 = vector.load %arg14[%c210, %c0_75] : memref<480x128xf32, #tpu.memory_space<vmem>>, vector<12x128xf32>
    tpu.vector_store %arg14[%c210, %c0_75], %108 {strides = array<i32>} : memref<480x128xf32, #tpu.memory_space<vmem>>, vector<12x128xf32>,
    %c576 = arith.constant 576 : index
    %c0_76 = arith.constant 0 : index
    %110 = tpu.strided_load %arg13[%c576, %c0_76] {strides = array<i32: 2, 1>} : memref<1248x128xf32, #tpu.memory_space<vmem>>, vector<12x128xf32>
    %c577 = arith.constant 577 : index
    %c0_77 = arith.constant 0 : index
    %111 = tpu.strided_load %arg13[%c577, %c0_77] {strides = array<i32: 2, 1>} : memref<1248x128xf32, #tpu.memory_space<vmem>>, vector<12x128xf32>
    %112 = arith.maximumf %110, %111 : vector<12x128xf32>
    %c600 = arith.constant 600 : index
    %c0_78 = arith.constant 0 : index
    %113 = tpu.strided_load %arg13[%c600, %c0_78] {strides = array<i32: 2, 1>} : memref<1248x128xf32, #tpu.memory_space<vmem>>, vector<12x128xf32>
    %114 = arith.maximumf %112, %113 : vector<12x128xf32>
    %c601 = arith.constant 601 : index
    %c0_79 = arith.constant 0 : index
    %115 = tpu.strided_load %arg13[%c601, %c0_79] {strides = array<i32: 2, 1>} : memref<1248x128xf32, #tpu.memory_space<vmem>>, vector<12x128xf32>
    %116 = arith.maximumf %114, %115 : vector<12x128xf32>
    %c226 = arith.constant 226 : index
    %c0_80 = arith.constant 0 : index
    %117 = vector.load %arg14[%c226, %c0_80] : memref<480x128xf32, #tpu.memory_space<vmem>>, vector<12x128xf32>
    tpu.vector_store %arg14[%c226, %c0_80], %116 {strides = array<i32>} : memref<480x128xf32, #tpu.memory_space<vmem>>, vector<12x128xf32>,
    %c624 = arith.constant 624 : index
    %c0_81 = arith.constant 0 : index
    %118 = tpu.strided_load %arg13[%c624, %c0_81] {strides = array<i32: 2, 1>} : memref<1248x128xf32, #tpu.memory_space<vmem>>, vector<12x128xf32>
    %c625 = arith.constant 625 : index
    %c0_82 = arith.constant 0 : index
    %119 = tpu.strided_load %arg13[%c625, %c0_82] {strides = array<i32: 2, 1>} : memref<1248x128xf32, #tpu.memory_space<vmem>>, vector<12x128xf32>
    %120 = arith.maximumf %118, %119 : vector<12x128xf32>
    %c648 = arith.constant 648 : index
    %c0_83 = arith.constant 0 : index
    %121 = tpu.strided_load %arg13[%c648, %c0_83] {strides = array<i32: 2, 1>} : memref<1248x128xf32, #tpu.memory_space<vmem>>, vector<12x128xf32>
    %122 = arith.maximumf %120, %121 : vector<12x128xf32>
    %c649 = arith.constant 649 : index
    %c0_84 = arith.constant 0 : index
    %123 = tpu.strided_load %arg13[%c649, %c0_84] {strides = array<i32: 2, 1>} : memref<1248x128xf32, #tpu.memory_space<vmem>>, vector<12x128xf32>
    %124 = arith.maximumf %122, %123 : vector<12x128xf32>
    %c242 = arith.constant 242 : index
    %c0_85 = arith.constant 0 : index
    %125 = vector.load %arg14[%c242, %c0_85] : memref<480x128xf32, #tpu.memory_space<vmem>>, vector<12x128xf32>
    tpu.vector_store %arg14[%c242, %c0_85], %124 {strides = array<i32>} : memref<480x128xf32, #tpu.memory_space<vmem>>, vector<12x128xf32>,
    %c672 = arith.constant 672 : index
    %c0_86 = arith.constant 0 : index
    %126 = tpu.strided_load %arg13[%c672, %c0_86] {strides = array<i32: 2, 1>} : memref<1248x128xf32, #tpu.memory_space<vmem>>, vector<12x128xf32>
    %c673 = arith.constant 673 : index
    %c0_87 = arith.constant 0 : index
    %127 = tpu.strided_load %arg13[%c673, %c0_87] {strides = array<i32: 2, 1>} : memref<1248x128xf32, #tpu.memory_space<vmem>>, vector<12x128xf32>
    %128 = arith.maximumf %126, %127 : vector<12x128xf32>
    %c696 = arith.constant 696 : index
    %c0_88 = arith.constant 0 : index
    %129 = tpu.strided_load %arg13[%c696, %c0_88] {strides = array<i32: 2, 1>} : memref<1248x128xf32, #tpu.memory_space<vmem>>, vector<12x128xf32>
    %130 = arith.maximumf %128, %129 : vector<12x128xf32>
    %c697 = arith.constant 697 : index
    %c0_89 = arith.constant 0 : index
    %131 = tpu.strided_load %arg13[%c697, %c0_89] {strides = array<i32: 2, 1>} : memref<1248x128xf32, #tpu.memory_space<vmem>>, vector<12x128xf32>
    %132 = arith.maximumf %130, %131 : vector<12x128xf32>
    %c258 = arith.constant 258 : index
    %c0_90 = arith.constant 0 : index
    %133 = vector.load %arg14[%c258, %c0_90] : memref<480x128xf32, #tpu.memory_space<vmem>>, vector<12x128xf32>
    tpu.vector_store %arg14[%c258, %c0_90], %132 {strides = array<i32>} : memref<480x128xf32, #tpu.memory_space<vmem>>, vector<12x128xf32>,
    %c720 = arith.constant 720 : index
    %c0_91 = arith.constant 0 : index
    %134 = tpu.strided_load %arg13[%c720, %c0_91] {strides = array<i32: 2, 1>} : memref<1248x128xf32, #tpu.memory_space<vmem>>, vector<12x128xf32>
    %c721 = arith.constant 721 : index
    %c0_92 = arith.constant 0 : index
    %135 = tpu.strided_load %arg13[%c721, %c0_92] {strides = array<i32: 2, 1>} : memref<1248x128xf32, #tpu.memory_space<vmem>>, vector<12x128xf32>
    %136 = arith.maximumf %134, %135 : vector<12x128xf32>
    %c744 = arith.constant 744 : index
    %c0_93 = arith.constant 0 : index
    %137 = tpu.strided_load %arg13[%c744, %c0_93] {strides = array<i32: 2, 1>} : memref<1248x128xf32, #tpu.memory_space<vmem>>, vector<12x128xf32>
    %138 = arith.maximumf %136, %137 : vector<12x128xf32>
    %c745 = arith.constant 745 : index
    %c0_94 = arith.constant 0 : index
    %139 = tpu.strided_load %arg13[%c745, %c0_94] {strides = array<i32: 2, 1>} : memref<1248x128xf32, #tpu.memory_space<vmem>>, vector<12x128xf32>
    %140 = arith.maximumf %138, %139 : vector<12x128xf32>
    %c274 = arith.constant 274 : index
    %c0_95 = arith.constant 0 : index
    %141 = vector.load %arg14[%c274, %c0_95] : memref<480x128xf32, #tpu.memory_space<vmem>>, vector<12x128xf32>
    tpu.vector_store %arg14[%c274, %c0_95], %140 {strides = array<i32>} : memref<480x128xf32, #tpu.memory_space<vmem>>, vector<12x128xf32>,
    %c768 = arith.constant 768 : index
    %c0_96 = arith.constant 0 : index
    %142 = tpu.strided_load %arg13[%c768, %c0_96] {strides = array<i32: 2, 1>} : memref<1248x128xf32, #tpu.memory_space<vmem>>, vector<12x128xf32>
    %c769 = arith.constant 769 : index
    %c0_97 = arith.constant 0 : index
    %143 = tpu.strided_load %arg13[%c769, %c0_97] {strides = array<i32: 2, 1>} : memref<1248x128xf32, #tpu.memory_space<vmem>>, vector<12x128xf32>
    %144 = arith.maximumf %142, %143 : vector<12x128xf32>
    %c792 = arith.constant 792 : index
    %c0_98 = arith.constant 0 : index
    %145 = tpu.strided_load %arg13[%c792, %c0_98] {strides = array<i32: 2, 1>} : memref<1248x128xf32, #tpu.memory_space<vmem>>, vector<12x128xf32>
    %146 = arith.maximumf %144, %145 : vector<12x128xf32>
    %c793 = arith.constant 793 : index
    %c0_99 = arith.constant 0 : index
    %147 = tpu.strided_load %arg13[%c793, %c0_99] {strides = array<i32: 2, 1>} : memref<1248x128xf32, #tpu.memory_space<vmem>>, vector<12x128xf32>
    %148 = arith.maximumf %146, %147 : vector<12x128xf32>
    %c290 = arith.constant 290 : index
    %c0_100 = arith.constant 0 : index
    %149 = vector.load %arg14[%c290, %c0_100] : memref<480x128xf32, #tpu.memory_space<vmem>>, vector<12x128xf32>
    tpu.vector_store %arg14[%c290, %c0_100], %148 {strides = array<i32>} : memref<480x128xf32, #tpu.memory_space<vmem>>, vector<12x128xf32>,
    %c816 = arith.constant 816 : index
    %c0_101 = arith.constant 0 : index
    %150 = tpu.strided_load %arg13[%c816, %c0_101] {strides = array<i32: 2, 1>} : memref<1248x128xf32, #tpu.memory_space<vmem>>, vector<12x128xf32>
    %c817 = arith.constant 817 : index
    %c0_102 = arith.constant 0 : index
    %151 = tpu.strided_load %arg13[%c817, %c0_102] {strides = array<i32: 2, 1>} : memref<1248x128xf32, #tpu.memory_space<vmem>>, vector<12x128xf32>
    %152 = arith.maximumf %150, %151 : vector<12x128xf32>
    %c840 = arith.constant 840 : index
    %c0_103 = arith.constant 0 : index
    %153 = tpu.strided_load %arg13[%c840, %c0_103] {strides = array<i32: 2, 1>} : memref<1248x128xf32, #tpu.memory_space<vmem>>, vector<12x128xf32>
    %154 = arith.maximumf %152, %153 : vector<12x128xf32>
    %c841 = arith.constant 841 : index
    %c0_104 = arith.constant 0 : index
    %155 = tpu.strided_load %arg13[%c841, %c0_104] {strides = array<i32: 2, 1>} : memref<1248x128xf32, #tpu.memory_space<vmem>>, vector<12x128xf32>
    %156 = arith.maximumf %154, %155 : vector<12x128xf32>
    %c306 = arith.constant 306 : index
    %c0_105 = arith.constant 0 : index
    %157 = vector.load %arg14[%c306, %c0_105] : memref<480x128xf32, #tpu.memory_space<vmem>>, vector<12x128xf32>
    tpu.vector_store %arg14[%c306, %c0_105], %156 {strides = array<i32>} : memref<480x128xf32, #tpu.memory_space<vmem>>, vector<12x128xf32>,
    %c864 = arith.constant 864 : index
    %c0_106 = arith.constant 0 : index
    %158 = tpu.strided_load %arg13[%c864, %c0_106] {strides = array<i32: 2, 1>} : memref<1248x128xf32, #tpu.memory_space<vmem>>, vector<12x128xf32>
    %c865 = arith.constant 865 : index
    %c0_107 = arith.constant 0 : index
    %159 = tpu.strided_load %arg13[%c865, %c0_107] {strides = array<i32: 2, 1>} : memref<1248x128xf32, #tpu.memory_space<vmem>>, vector<12x128xf32>
    %160 = arith.maximumf %158, %159 : vector<12x128xf32>
    %c888 = arith.constant 888 : index
    %c0_108 = arith.constant 0 : index
    %161 = tpu.strided_load %arg13[%c888, %c0_108] {strides = array<i32: 2, 1>} : memref<1248x128xf32, #tpu.memory_space<vmem>>, vector<12x128xf32>
    %162 = arith.maximumf %160, %161 : vector<12x128xf32>
    %c889 = arith.constant 889 : index
    %c0_109 = arith.constant 0 : index
    %163 = tpu.strided_load %arg13[%c889, %c0_109] {strides = array<i32: 2, 1>} : memref<1248x128xf32, #tpu.memory_space<vmem>>, vector<12x128xf32>
    %164 = arith.maximumf %162, %163 : vector<12x128xf32>
    %c322 = arith.constant 322 : index
    %c0_110 = arith.constant 0 : index
    %165 = vector.load %arg14[%c322, %c0_110] : memref<480x128xf32, #tpu.memory_space<vmem>>, vector<12x128xf32>
    tpu.vector_store %arg14[%c322, %c0_110], %164 {strides = array<i32>} : memref<480x128xf32, #tpu.memory_space<vmem>>, vector<12x128xf32>,
    %c912 = arith.constant 912 : index
    %c0_111 = arith.constant 0 : index
    %166 = tpu.strided_load %arg13[%c912, %c0_111] {strides = array<i32: 2, 1>} : memref<1248x128xf32, #tpu.memory_space<vmem>>, vector<12x128xf32>
    %c913 = arith.constant 913 : index
    %c0_112 = arith.constant 0 : index
    %167 = tpu.strided_load %arg13[%c913, %c0_112] {strides = array<i32: 2, 1>} : memref<1248x128xf32, #tpu.memory_space<vmem>>, vector<12x128xf32>
    %168 = arith.maximumf %166, %167 : vector<12x128xf32>
    %c936 = arith.constant 936 : index
    %c0_113 = arith.constant 0 : index
    %169 = tpu.strided_load %arg13[%c936, %c0_113] {strides = array<i32: 2, 1>} : memref<1248x128xf32, #tpu.memory_space<vmem>>, vector<12x128xf32>
    %170 = arith.maximumf %168, %169 : vector<12x128xf32>
    %c937 = arith.constant 937 : index
    %c0_114 = arith.constant 0 : index
    %171 = tpu.strided_load %arg13[%c937, %c0_114] {strides = array<i32: 2, 1>} : memref<1248x128xf32, #tpu.memory_space<vmem>>, vector<12x128xf32>
    %172 = arith.maximumf %170, %171 : vector<12x128xf32>
    %c338 = arith.constant 338 : index
    %c0_115 = arith.constant 0 : index
    %173 = vector.load %arg14[%c338, %c0_115] : memref<480x128xf32, #tpu.memory_space<vmem>>, vector<12x128xf32>
    tpu.vector_store %arg14[%c338, %c0_115], %172 {strides = array<i32>} : memref<480x128xf32, #tpu.memory_space<vmem>>, vector<12x128xf32>,
    %c960 = arith.constant 960 : index
    %c0_116 = arith.constant 0 : index
    %174 = tpu.strided_load %arg13[%c960, %c0_116] {strides = array<i32: 2, 1>} : memref<1248x128xf32, #tpu.memory_space<vmem>>, vector<12x128xf32>
    %c961 = arith.constant 961 : index
    %c0_117 = arith.constant 0 : index
    %175 = tpu.strided_load %arg13[%c961, %c0_117] {strides = array<i32: 2, 1>} : memref<1248x128xf32, #tpu.memory_space<vmem>>, vector<12x128xf32>
    %176 = arith.maximumf %174, %175 : vector<12x128xf32>
    %c984 = arith.constant 984 : index
    %c0_118 = arith.constant 0 : index
    %177 = tpu.strided_load %arg13[%c984, %c0_118] {strides = array<i32: 2, 1>} : memref<1248x128xf32, #tpu.memory_space<vmem>>, vector<12x128xf32>
    %178 = arith.maximumf %176, %177 : vector<12x128xf32>
    %c985 = arith.constant 985 : index
    %c0_119 = arith.constant 0 : index
    %179 = tpu.strided_load %arg13[%c985, %c0_119] {strides = array<i32: 2, 1>} : memref<1248x128xf32, #tpu.memory_space<vmem>>, vector<12x128xf32>
    %180 = arith.maximumf %178, %179 : vector<12x128xf32>
    %c354 = arith.constant 354 : index
    %c0_120 = arith.constant 0 : index
    %181 = vector.load %arg14[%c354, %c0_120] : memref<480x128xf32, #tpu.memory_space<vmem>>, vector<12x128xf32>
    tpu.vector_store %arg14[%c354, %c0_120], %180 {strides = array<i32>} : memref<480x128xf32, #tpu.memory_space<vmem>>, vector<12x128xf32>,
    %c1008 = arith.constant 1008 : index
    %c0_121 = arith.constant 0 : index
    %182 = tpu.strided_load %arg13[%c1008, %c0_121] {strides = array<i32: 2, 1>} : memref<1248x128xf32, #tpu.memory_space<vmem>>, vector<12x128xf32>
    %c1009 = arith.constant 1009 : index
    %c0_122 = arith.constant 0 : index
    %183 = tpu.strided_load %arg13[%c1009, %c0_122] {strides = array<i32: 2, 1>} : memref<1248x128xf32, #tpu.memory_space<vmem>>, vector<12x128xf32>
    %184 = arith.maximumf %182, %183 : vector<12x128xf32>
    %c1032 = arith.constant 1032 : index
    %c0_123 = arith.constant 0 : index
    %185 = tpu.strided_load %arg13[%c1032, %c0_123] {strides = array<i32: 2, 1>} : memref<1248x128xf32, #tpu.memory_space<vmem>>, vector<12x128xf32>
    %186 = arith.maximumf %184, %185 : vector<12x128xf32>
    %c1033 = arith.constant 1033 : index
    %c0_124 = arith.constant 0 : index
    %187 = tpu.strided_load %arg13[%c1033, %c0_124] {strides = array<i32: 2, 1>} : memref<1248x128xf32, #tpu.memory_space<vmem>>, vector<12x128xf32>
    %188 = arith.maximumf %186, %187 : vector<12x128xf32>
    %c370 = arith.constant 370 : index
    %c0_125 = arith.constant 0 : index
    %189 = vector.load %arg14[%c370, %c0_125] : memref<480x128xf32, #tpu.memory_space<vmem>>, vector<12x128xf32>
    tpu.vector_store %arg14[%c370, %c0_125], %188 {strides = array<i32>} : memref<480x128xf32, #tpu.memory_space<vmem>>, vector<12x128xf32>,
    %c1056 = arith.constant 1056 : index
    %c0_126 = arith.constant 0 : index
    %190 = tpu.strided_load %arg13[%c1056, %c0_126] {strides = array<i32: 2, 1>} : memref<1248x128xf32, #tpu.memory_space<vmem>>, vector<12x128xf32>
    %c1057 = arith.constant 1057 : index
    %c0_127 = arith.constant 0 : index
    %191 = tpu.strided_load %arg13[%c1057, %c0_127] {strides = array<i32: 2, 1>} : memref<1248x128xf32, #tpu.memory_space<vmem>>, vector<12x128xf32>
    %192 = arith.maximumf %190, %191 : vector<12x128xf32>
    %c1080 = arith.constant 1080 : index
    %c0_128 = arith.constant 0 : index
    %193 = tpu.strided_load %arg13[%c1080, %c0_128] {strides = array<i32: 2, 1>} : memref<1248x128xf32, #tpu.memory_space<vmem>>, vector<12x128xf32>
    %194 = arith.maximumf %192, %193 : vector<12x128xf32>
    %c1081 = arith.constant 1081 : index
    %c0_129 = arith.constant 0 : index
    %195 = tpu.strided_load %arg13[%c1081, %c0_129] {strides = array<i32: 2, 1>} : memref<1248x128xf32, #tpu.memory_space<vmem>>, vector<12x128xf32>
    %196 = arith.maximumf %194, %195 : vector<12x128xf32>
    %c386 = arith.constant 386 : index
    %c0_130 = arith.constant 0 : index
    %197 = vector.load %arg14[%c386, %c0_130] : memref<480x128xf32, #tpu.memory_space<vmem>>, vector<12x128xf32>
    tpu.vector_store %arg14[%c386, %c0_130], %196 {strides = array<i32>} : memref<480x128xf32, #tpu.memory_space<vmem>>, vector<12x128xf32>,
    %c1104 = arith.constant 1104 : index
    %c0_131 = arith.constant 0 : index
    %198 = tpu.strided_load %arg13[%c1104, %c0_131] {strides = array<i32: 2, 1>} : memref<1248x128xf32, #tpu.memory_space<vmem>>, vector<12x128xf32>
    %c1105 = arith.constant 1105 : index
    %c0_132 = arith.constant 0 : index
    %199 = tpu.strided_load %arg13[%c1105, %c0_132] {strides = array<i32: 2, 1>} : memref<1248x128xf32, #tpu.memory_space<vmem>>, vector<12x128xf32>
    %200 = arith.maximumf %198, %199 : vector<12x128xf32>
    %c1128 = arith.constant 1128 : index
    %c0_133 = arith.constant 0 : index
    %201 = tpu.strided_load %arg13[%c1128, %c0_133] {strides = array<i32: 2, 1>} : memref<1248x128xf32, #tpu.memory_space<vmem>>, vector<12x128xf32>
    %202 = arith.maximumf %200, %201 : vector<12x128xf32>
    %c1129 = arith.constant 1129 : index
    %c0_134 = arith.constant 0 : index
    %203 = tpu.strided_load %arg13[%c1129, %c0_134] {strides = array<i32: 2, 1>} : memref<1248x128xf32, #tpu.memory_space<vmem>>, vector<12x128xf32>
    %204 = arith.maximumf %202, %203 : vector<12x128xf32>
    %c402 = arith.constant 402 : index
    %c0_135 = arith.constant 0 : index
    %205 = vector.load %arg14[%c402, %c0_135] : memref<480x128xf32, #tpu.memory_space<vmem>>, vector<12x128xf32>
    tpu.vector_store %arg14[%c402, %c0_135], %204 {strides = array<i32>} : memref<480x128xf32, #tpu.memory_space<vmem>>, vector<12x128xf32>,
    %c1152 = arith.constant 1152 : index
    %c0_136 = arith.constant 0 : index
    %206 = tpu.strided_load %arg13[%c1152, %c0_136] {strides = array<i32: 2, 1>} : memref<1248x128xf32, #tpu.memory_space<vmem>>, vector<12x128xf32>
    %c1153 = arith.constant 1153 : index
    %c0_137 = arith.constant 0 : index
    %207 = tpu.strided_load %arg13[%c1153, %c0_137] {strides = array<i32: 2, 1>} : memref<1248x128xf32, #tpu.memory_space<vmem>>, vector<12x128xf32>
    %208 = arith.maximumf %206, %207 : vector<12x128xf32>
    %c1176 = arith.constant 1176 : index
    %c0_138 = arith.constant 0 : index
    %209 = tpu.strided_load %arg13[%c1176, %c0_138] {strides = array<i32: 2, 1>} : memref<1248x128xf32, #tpu.memory_space<vmem>>, vector<12x128xf32>
    %210 = arith.maximumf %208, %209 : vector<12x128xf32>
    %c1177 = arith.constant 1177 : index
    %c0_139 = arith.constant 0 : index
    %211 = tpu.strided_load %arg13[%c1177, %c0_139] {strides = array<i32: 2, 1>} : memref<1248x128xf32, #tpu.memory_space<vmem>>, vector<12x128xf32>
    %212 = arith.maximumf %210, %211 : vector<12x128xf32>
    %c418 = arith.constant 418 : index
    %c0_140 = arith.constant 0 : index
    %213 = vector.load %arg14[%c418, %c0_140] : memref<480x128xf32, #tpu.memory_space<vmem>>, vector<12x128xf32>
    tpu.vector_store %arg14[%c418, %c0_140], %212 {strides = array<i32>} : memref<480x128xf32, #tpu.memory_space<vmem>>, vector<12x128xf32>,
    %c1200 = arith.constant 1200 : index
    %c0_141 = arith.constant 0 : index
    %214 = tpu.strided_load %arg13[%c1200, %c0_141] {strides = array<i32: 2, 1>} : memref<1248x128xf32, #tpu.memory_space<vmem>>, vector<12x128xf32>
    %c1201 = arith.constant 1201 : index
    %c0_142 = arith.constant 0 : index
    %215 = tpu.strided_load %arg13[%c1201, %c0_142] {strides = array<i32: 2, 1>} : memref<1248x128xf32, #tpu.memory_space<vmem>>, vector<12x128xf32>
    %216 = arith.maximumf %214, %215 : vector<12x128xf32>
    %c1224 = arith.constant 1224 : index
    %c0_143 = arith.constant 0 : index
    %217 = tpu.strided_load %arg13[%c1224, %c0_143] {strides = array<i32: 2, 1>} : memref<1248x128xf32, #tpu.memory_space<vmem>>, vector<12x128xf32>
    %218 = arith.maximumf %216, %217 : vector<12x128xf32>
    %c1225 = arith.constant 1225 : index
    %c0_144 = arith.constant 0 : index
    %219 = tpu.strided_load %arg13[%c1225, %c0_144] {strides = array<i32: 2, 1>} : memref<1248x128xf32, #tpu.memory_space<vmem>>, vector<12x128xf32>
    %220 = arith.maximumf %218, %219 : vector<12x128xf32>
    %c434 = arith.constant 434 : index
    %c0_145 = arith.constant 0 : index
    %221 = vector.load %arg14[%c434, %c0_145] : memref<480x128xf32, #tpu.memory_space<vmem>>, vector<12x128xf32>
    tpu.vector_store %arg14[%c434, %c0_145], %220 {strides = array<i32>} : memref<480x128xf32, #tpu.memory_space<vmem>>, vector<12x128xf32>,
    %c0_146 = arith.constant 0 : index
    %c0_147 = arith.constant 0 : index
    %222 = vector.load %arg14[%c0_146, %c0_147] : memref<480x128xf32, #tpu.memory_space<vmem>>, vector<448x128xf32>
    %c0_148 = arith.constant 0 : index
    %c0_149 = arith.constant 0 : index
    %c0_150 = arith.constant 0 : index
    %223 = vector.load %arg4[%c0_148, %c0_149, %c0_150] : memref<4x128x128xf32, #tpu.memory_space<vmem>>, vector<1x128x128xf32>
    %224 = vector.shape_cast %223 : vector<1x128x128xf32> to vector<128x128xf32>
    %cst_151 = arith.constant dense<0.000000e+00> : vector<448x128xf32>
    %225 = tpu.matmul %222, %224, %cst_151 {dimension_numbers = #tpu.dot_dimension_numbers<[1], [0], [0], [1], [0, 0, 1, 1], [], []>} : vector<448x128xf32>, vector<128x128xf32>, vector<448x128xf32> -> vector<448x128xf32>
    %c1_152 = arith.constant 1 : index
    %c0_153 = arith.constant 0 : index
    %226 = vector.load %arg14[%c1_152, %c0_153] : memref<480x128xf32, #tpu.memory_space<vmem>>, vector<448x128xf32>
    %c1_154 = arith.constant 1 : index
    %c0_155 = arith.constant 0 : index
    %c0_156 = arith.constant 0 : index
    %227 = vector.load %arg4[%c1_154, %c0_155, %c0_156] : memref<4x128x128xf32, #tpu.memory_space<vmem>>, vector<1x128x128xf32>
    %228 = vector.shape_cast %227 : vector<1x128x128xf32> to vector<128x128xf32>
    %cst_157 = arith.constant dense<0.000000e+00> : vector<448x128xf32>
    %229 = tpu.matmul %226, %228, %cst_157 {dimension_numbers = #tpu.dot_dimension_numbers<[1], [0], [0], [1], [0, 0, 1, 1], [], []>} : vector<448x128xf32>, vector<128x128xf32>, vector<448x128xf32> -> vector<448x128xf32>
    %230 = arith.addf %225, %229 : vector<448x128xf32>
    %c16 = arith.constant 16 : index
    %c0_158 = arith.constant 0 : index
    %231 = vector.load %arg14[%c16, %c0_158] : memref<480x128xf32, #tpu.memory_space<vmem>>, vector<448x128xf32>
    %c2 = arith.constant 2 : index
    %c0_159 = arith.constant 0 : index
    %c0_160 = arith.constant 0 : index
    %232 = vector.load %arg4[%c2, %c0_159, %c0_160] : memref<4x128x128xf32, #tpu.memory_space<vmem>>, vector<1x128x128xf32>
    %233 = vector.shape_cast %232 : vector<1x128x128xf32> to vector<128x128xf32>
    %cst_161 = arith.constant dense<0.000000e+00> : vector<448x128xf32>
    %234 = tpu.matmul %231, %233, %cst_161 {dimension_numbers = #tpu.dot_dimension_numbers<[1], [0], [0], [1], [0, 0, 1, 1], [], []>} : vector<448x128xf32>, vector<128x128xf32>, vector<448x128xf32> -> vector<448x128xf32>
    %235 = arith.addf %230, %234 : vector<448x128xf32>
    %c17 = arith.constant 17 : index
    %c0_162 = arith.constant 0 : index
    %236 = vector.load %arg14[%c17, %c0_162] : memref<480x128xf32, #tpu.memory_space<vmem>>, vector<448x128xf32>
    %c3 = arith.constant 3 : index
    %c0_163 = arith.constant 0 : index
    %c0_164 = arith.constant 0 : index
    %237 = vector.load %arg4[%c3, %c0_163, %c0_164] : memref<4x128x128xf32, #tpu.memory_space<vmem>>, vector<1x128x128xf32>
    %238 = vector.shape_cast %237 : vector<1x128x128xf32> to vector<128x128xf32>
    %cst_165 = arith.constant dense<0.000000e+00> : vector<448x128xf32>
    %239 = tpu.matmul %236, %238, %cst_165 {dimension_numbers = #tpu.dot_dimension_numbers<[1], [0], [0], [1], [0, 0, 1, 1], [], []>} : vector<448x128xf32>, vector<128x128xf32>, vector<448x128xf32> -> vector<448x128xf32>
    %240 = arith.addf %235, %239 : vector<448x128xf32>
    %c0_166 = arith.constant 0 : index
    %c0_167 = arith.constant 0 : index
    %241 = vector.load %arg5[%c0_166, %c0_167] : memref<1x128xf32, #tpu.memory_space<vmem>>, vector<1x128xf32>
    %242 = vector.broadcast %241 : vector<1x128xf32> to vector<448x128xf32>
    %243 = arith.addf %240, %242 : vector<448x128xf32>
    %cst_168 = arith.constant 0.000000e+00 : f32
    %244 = vector.broadcast %cst_168 : f32 to vector<448x128xf32>
    %245 = arith.maximumf %243, %244 : vector<448x128xf32>
    %c0_169 = arith.constant 0 : index
    %c0_170 = arith.constant 0 : index
    %246 = vector.load %arg15[%c0_169, %c0_170] : memref<448x128xf32, #tpu.memory_space<vmem>>, vector<448x128xf32>
    tpu.vector_store %arg15[%c0_169, %c0_170], %245 {strides = array<i32>} : memref<448x128xf32, #tpu.memory_space<vmem>>, vector<448x128xf32>,
    %c0_171 = arith.constant 0 : index
    %c0_172 = arith.constant 0 : index
    %247 = tpu.strided_load %arg15[%c0_171, %c0_172] {strides = array<i32: 2, 1>} : memref<448x128xf32, #tpu.memory_space<vmem>>, vector<7x128xf32>
    %c1_173 = arith.constant 1 : index
    %c0_174 = arith.constant 0 : index
    %248 = tpu.strided_load %arg15[%c1_173, %c0_174] {strides = array<i32: 2, 1>} : memref<448x128xf32, #tpu.memory_space<vmem>>, vector<7x128xf32>
    %249 = arith.maximumf %247, %248 : vector<7x128xf32>
    %c16_175 = arith.constant 16 : index
    %c0_176 = arith.constant 0 : index
    %250 = tpu.strided_load %arg15[%c16_175, %c0_176] {strides = array<i32: 2, 1>} : memref<448x128xf32, #tpu.memory_space<vmem>>, vector<7x128xf32>
    %251 = arith.maximumf %249, %250 : vector<7x128xf32>
    %c17_177 = arith.constant 17 : index
    %c0_178 = arith.constant 0 : index
    %252 = tpu.strided_load %arg15[%c17_177, %c0_178] {strides = array<i32: 2, 1>} : memref<448x128xf32, #tpu.memory_space<vmem>>, vector<7x128xf32>
    %253 = arith.maximumf %251, %252 : vector<7x128xf32>
    %c24_179 = arith.constant 24 : index
    %c0_180 = arith.constant 0 : index
    %254 = vector.load %arg16[%c24_179, %c0_180] : memref<198x128xf32, #tpu.memory_space<vmem>>, vector<7x128xf32>
    tpu.vector_store %arg16[%c24_179, %c0_180], %253 {strides = array<i32>} : memref<198x128xf32, #tpu.memory_space<vmem>>, vector<7x128xf32>,
    %c32 = arith.constant 32 : index
    %c0_181 = arith.constant 0 : index
    %255 = tpu.strided_load %arg15[%c32, %c0_181] {strides = array<i32: 2, 1>} : memref<448x128xf32, #tpu.memory_space<vmem>>, vector<7x128xf32>
    %c33 = arith.constant 33 : index
    %c0_182 = arith.constant 0 : index
    %256 = tpu.strided_load %arg15[%c33, %c0_182] {strides = array<i32: 2, 1>} : memref<448x128xf32, #tpu.memory_space<vmem>>, vector<7x128xf32>
    %257 = arith.maximumf %255, %256 : vector<7x128xf32>
    %c48_183 = arith.constant 48 : index
    %c0_184 = arith.constant 0 : index
    %258 = tpu.strided_load %arg15[%c48_183, %c0_184] {strides = array<i32: 2, 1>} : memref<448x128xf32, #tpu.memory_space<vmem>>, vector<7x128xf32>
    %259 = arith.maximumf %257, %258 : vector<7x128xf32>
    %c49_185 = arith.constant 49 : index
    %c0_186 = arith.constant 0 : index
    %260 = tpu.strided_load %arg15[%c49_185, %c0_186] {strides = array<i32: 2, 1>} : memref<448x128xf32, #tpu.memory_space<vmem>>, vector<7x128xf32>
    %261 = arith.maximumf %259, %260 : vector<7x128xf32>
    %c35 = arith.constant 35 : index
    %c0_187 = arith.constant 0 : index
    %262 = vector.load %arg16[%c35, %c0_187] : memref<198x128xf32, #tpu.memory_space<vmem>>, vector<7x128xf32>
    tpu.vector_store %arg16[%c35, %c0_187], %261 {strides = array<i32>} : memref<198x128xf32, #tpu.memory_space<vmem>>, vector<7x128xf32>,
    %c64 = arith.constant 64 : index
    %c0_188 = arith.constant 0 : index
    %263 = tpu.strided_load %arg15[%c64, %c0_188] {strides = array<i32: 2, 1>} : memref<448x128xf32, #tpu.memory_space<vmem>>, vector<7x128xf32>
    %c65 = arith.constant 65 : index
    %c0_189 = arith.constant 0 : index
    %264 = tpu.strided_load %arg15[%c65, %c0_189] {strides = array<i32: 2, 1>} : memref<448x128xf32, #tpu.memory_space<vmem>>, vector<7x128xf32>
    %265 = arith.maximumf %263, %264 : vector<7x128xf32>
    %c80 = arith.constant 80 : index
    %c0_190 = arith.constant 0 : index
    %266 = tpu.strided_load %arg15[%c80, %c0_190] {strides = array<i32: 2, 1>} : memref<448x128xf32, #tpu.memory_space<vmem>>, vector<7x128xf32>
    %267 = arith.maximumf %265, %266 : vector<7x128xf32>
    %c81 = arith.constant 81 : index
    %c0_191 = arith.constant 0 : index
    %268 = tpu.strided_load %arg15[%c81, %c0_191] {strides = array<i32: 2, 1>} : memref<448x128xf32, #tpu.memory_space<vmem>>, vector<7x128xf32>
    %269 = arith.maximumf %267, %268 : vector<7x128xf32>
    %c46 = arith.constant 46 : index
    %c0_192 = arith.constant 0 : index
    %270 = vector.load %arg16[%c46, %c0_192] : memref<198x128xf32, #tpu.memory_space<vmem>>, vector<7x128xf32>
    tpu.vector_store %arg16[%c46, %c0_192], %269 {strides = array<i32>} : memref<198x128xf32, #tpu.memory_space<vmem>>, vector<7x128xf32>,
    %c96_193 = arith.constant 96 : index
    %c0_194 = arith.constant 0 : index
    %271 = tpu.strided_load %arg15[%c96_193, %c0_194] {strides = array<i32: 2, 1>} : memref<448x128xf32, #tpu.memory_space<vmem>>, vector<7x128xf32>
    %c97_195 = arith.constant 97 : index
    %c0_196 = arith.constant 0 : index
    %272 = tpu.strided_load %arg15[%c97_195, %c0_196] {strides = array<i32: 2, 1>} : memref<448x128xf32, #tpu.memory_space<vmem>>, vector<7x128xf32>
    %273 = arith.maximumf %271, %272 : vector<7x128xf32>
    %c112 = arith.constant 112 : index
    %c0_197 = arith.constant 0 : index
    %274 = tpu.strided_load %arg15[%c112, %c0_197] {strides = array<i32: 2, 1>} : memref<448x128xf32, #tpu.memory_space<vmem>>, vector<7x128xf32>
    %275 = arith.maximumf %273, %274 : vector<7x128xf32>
    %c113 = arith.constant 113 : index
    %c0_198 = arith.constant 0 : index
    %276 = tpu.strided_load %arg15[%c113, %c0_198] {strides = array<i32: 2, 1>} : memref<448x128xf32, #tpu.memory_space<vmem>>, vector<7x128xf32>
    %277 = arith.maximumf %275, %276 : vector<7x128xf32>
    %c57 = arith.constant 57 : index
    %c0_199 = arith.constant 0 : index
    %278 = vector.load %arg16[%c57, %c0_199] : memref<198x128xf32, #tpu.memory_space<vmem>>, vector<7x128xf32>
    tpu.vector_store %arg16[%c57, %c0_199], %277 {strides = array<i32>} : memref<198x128xf32, #tpu.memory_space<vmem>>, vector<7x128xf32>,
    %c128 = arith.constant 128 : index
    %c0_200 = arith.constant 0 : index
    %279 = tpu.strided_load %arg15[%c128, %c0_200] {strides = array<i32: 2, 1>} : memref<448x128xf32, #tpu.memory_space<vmem>>, vector<7x128xf32>
    %c129 = arith.constant 129 : index
    %c0_201 = arith.constant 0 : index
    %280 = tpu.strided_load %arg15[%c129, %c0_201] {strides = array<i32: 2, 1>} : memref<448x128xf32, #tpu.memory_space<vmem>>, vector<7x128xf32>
    %281 = arith.maximumf %279, %280 : vector<7x128xf32>
    %c144_202 = arith.constant 144 : index
    %c0_203 = arith.constant 0 : index
    %282 = tpu.strided_load %arg15[%c144_202, %c0_203] {strides = array<i32: 2, 1>} : memref<448x128xf32, #tpu.memory_space<vmem>>, vector<7x128xf32>
    %283 = arith.maximumf %281, %282 : vector<7x128xf32>
    %c145_204 = arith.constant 145 : index
    %c0_205 = arith.constant 0 : index
    %284 = tpu.strided_load %arg15[%c145_204, %c0_205] {strides = array<i32: 2, 1>} : memref<448x128xf32, #tpu.memory_space<vmem>>, vector<7x128xf32>
    %285 = arith.maximumf %283, %284 : vector<7x128xf32>
    %c68 = arith.constant 68 : index
    %c0_206 = arith.constant 0 : index
    %286 = vector.load %arg16[%c68, %c0_206] : memref<198x128xf32, #tpu.memory_space<vmem>>, vector<7x128xf32>
    tpu.vector_store %arg16[%c68, %c0_206], %285 {strides = array<i32>} : memref<198x128xf32, #tpu.memory_space<vmem>>, vector<7x128xf32>,
    %c160 = arith.constant 160 : index
    %c0_207 = arith.constant 0 : index
    %287 = tpu.strided_load %arg15[%c160, %c0_207] {strides = array<i32: 2, 1>} : memref<448x128xf32, #tpu.memory_space<vmem>>, vector<7x128xf32>
    %c161 = arith.constant 161 : index
    %c0_208 = arith.constant 0 : index
    %288 = tpu.strided_load %arg15[%c161, %c0_208] {strides = array<i32: 2, 1>} : memref<448x128xf32, #tpu.memory_space<vmem>>, vector<7x128xf32>
    %289 = arith.maximumf %287, %288 : vector<7x128xf32>
    %c176 = arith.constant 176 : index
    %c0_209 = arith.constant 0 : index
    %290 = tpu.strided_load %arg15[%c176, %c0_209] {strides = array<i32: 2, 1>} : memref<448x128xf32, #tpu.memory_space<vmem>>, vector<7x128xf32>
    %291 = arith.maximumf %289, %290 : vector<7x128xf32>
    %c177 = arith.constant 177 : index
    %c0_210 = arith.constant 0 : index
    %292 = tpu.strided_load %arg15[%c177, %c0_210] {strides = array<i32: 2, 1>} : memref<448x128xf32, #tpu.memory_space<vmem>>, vector<7x128xf32>
    %293 = arith.maximumf %291, %292 : vector<7x128xf32>
    %c79 = arith.constant 79 : index
    %c0_211 = arith.constant 0 : index
    %294 = vector.load %arg16[%c79, %c0_211] : memref<198x128xf32, #tpu.memory_space<vmem>>, vector<7x128xf32>
    tpu.vector_store %arg16[%c79, %c0_211], %293 {strides = array<i32>} : memref<198x128xf32, #tpu.memory_space<vmem>>, vector<7x128xf32>,
    %c192_212 = arith.constant 192 : index
    %c0_213 = arith.constant 0 : index
    %295 = tpu.strided_load %arg15[%c192_212, %c0_213] {strides = array<i32: 2, 1>} : memref<448x128xf32, #tpu.memory_space<vmem>>, vector<7x128xf32>
    %c193_214 = arith.constant 193 : index
    %c0_215 = arith.constant 0 : index
    %296 = tpu.strided_load %arg15[%c193_214, %c0_215] {strides = array<i32: 2, 1>} : memref<448x128xf32, #tpu.memory_space<vmem>>, vector<7x128xf32>
    %297 = arith.maximumf %295, %296 : vector<7x128xf32>
    %c208 = arith.constant 208 : index
    %c0_216 = arith.constant 0 : index
    %298 = tpu.strided_load %arg15[%c208, %c0_216] {strides = array<i32: 2, 1>} : memref<448x128xf32, #tpu.memory_space<vmem>>, vector<7x128xf32>
    %299 = arith.maximumf %297, %298 : vector<7x128xf32>
    %c209 = arith.constant 209 : index
    %c0_217 = arith.constant 0 : index
    %300 = tpu.strided_load %arg15[%c209, %c0_217] {strides = array<i32: 2, 1>} : memref<448x128xf32, #tpu.memory_space<vmem>>, vector<7x128xf32>
    %301 = arith.maximumf %299, %300 : vector<7x128xf32>
    %c90 = arith.constant 90 : index
    %c0_218 = arith.constant 0 : index
    %302 = vector.load %arg16[%c90, %c0_218] : memref<198x128xf32, #tpu.memory_space<vmem>>, vector<7x128xf32>
    tpu.vector_store %arg16[%c90, %c0_218], %301 {strides = array<i32>} : memref<198x128xf32, #tpu.memory_space<vmem>>, vector<7x128xf32>,
    %c224 = arith.constant 224 : index
    %c0_219 = arith.constant 0 : index
    %303 = tpu.strided_load %arg15[%c224, %c0_219] {strides = array<i32: 2, 1>} : memref<448x128xf32, #tpu.memory_space<vmem>>, vector<7x128xf32>
    %c225 = arith.constant 225 : index
    %c0_220 = arith.constant 0 : index
    %304 = tpu.strided_load %arg15[%c225, %c0_220] {strides = array<i32: 2, 1>} : memref<448x128xf32, #tpu.memory_space<vmem>>, vector<7x128xf32>
    %305 = arith.maximumf %303, %304 : vector<7x128xf32>
    %c240_221 = arith.constant 240 : index
    %c0_222 = arith.constant 0 : index
    %306 = tpu.strided_load %arg15[%c240_221, %c0_222] {strides = array<i32: 2, 1>} : memref<448x128xf32, #tpu.memory_space<vmem>>, vector<7x128xf32>
    %307 = arith.maximumf %305, %306 : vector<7x128xf32>
    %c241_223 = arith.constant 241 : index
    %c0_224 = arith.constant 0 : index
    %308 = tpu.strided_load %arg15[%c241_223, %c0_224] {strides = array<i32: 2, 1>} : memref<448x128xf32, #tpu.memory_space<vmem>>, vector<7x128xf32>
    %309 = arith.maximumf %307, %308 : vector<7x128xf32>
    %c101 = arith.constant 101 : index
    %c0_225 = arith.constant 0 : index
    %310 = vector.load %arg16[%c101, %c0_225] : memref<198x128xf32, #tpu.memory_space<vmem>>, vector<7x128xf32>
    tpu.vector_store %arg16[%c101, %c0_225], %309 {strides = array<i32>} : memref<198x128xf32, #tpu.memory_space<vmem>>, vector<7x128xf32>,
    %c256 = arith.constant 256 : index
    %c0_226 = arith.constant 0 : index
    %311 = tpu.strided_load %arg15[%c256, %c0_226] {strides = array<i32: 2, 1>} : memref<448x128xf32, #tpu.memory_space<vmem>>, vector<7x128xf32>
    %c257 = arith.constant 257 : index
    %c0_227 = arith.constant 0 : index
    %312 = tpu.strided_load %arg15[%c257, %c0_227] {strides = array<i32: 2, 1>} : memref<448x128xf32, #tpu.memory_space<vmem>>, vector<7x128xf32>
    %313 = arith.maximumf %311, %312 : vector<7x128xf32>
    %c272 = arith.constant 272 : index
    %c0_228 = arith.constant 0 : index
    %314 = tpu.strided_load %arg15[%c272, %c0_228] {strides = array<i32: 2, 1>} : memref<448x128xf32, #tpu.memory_space<vmem>>, vector<7x128xf32>
    %315 = arith.maximumf %313, %314 : vector<7x128xf32>
    %c273 = arith.constant 273 : index
    %c0_229 = arith.constant 0 : index
    %316 = tpu.strided_load %arg15[%c273, %c0_229] {strides = array<i32: 2, 1>} : memref<448x128xf32, #tpu.memory_space<vmem>>, vector<7x128xf32>
    %317 = arith.maximumf %315, %316 : vector<7x128xf32>
    %c112_230 = arith.constant 112 : index
    %c0_231 = arith.constant 0 : index
    %318 = vector.load %arg16[%c112_230, %c0_231] : memref<198x128xf32, #tpu.memory_space<vmem>>, vector<7x128xf32>
    tpu.vector_store %arg16[%c112_230, %c0_231], %317 {strides = array<i32>} : memref<198x128xf32, #tpu.memory_space<vmem>>, vector<7x128xf32>,
    %c288_232 = arith.constant 288 : index
    %c0_233 = arith.constant 0 : index
    %319 = tpu.strided_load %arg15[%c288_232, %c0_233] {strides = array<i32: 2, 1>} : memref<448x128xf32, #tpu.memory_space<vmem>>, vector<7x128xf32>
    %c289_234 = arith.constant 289 : index
    %c0_235 = arith.constant 0 : index
    %320 = tpu.strided_load %arg15[%c289_234, %c0_235] {strides = array<i32: 2, 1>} : memref<448x128xf32, #tpu.memory_space<vmem>>, vector<7x128xf32>
    %321 = arith.maximumf %319, %320 : vector<7x128xf32>
    %c304 = arith.constant 304 : index
    %c0_236 = arith.constant 0 : index
    %322 = tpu.strided_load %arg15[%c304, %c0_236] {strides = array<i32: 2, 1>} : memref<448x128xf32, #tpu.memory_space<vmem>>, vector<7x128xf32>
    %323 = arith.maximumf %321, %322 : vector<7x128xf32>
    %c305 = arith.constant 305 : index
    %c0_237 = arith.constant 0 : index
    %324 = tpu.strided_load %arg15[%c305, %c0_237] {strides = array<i32: 2, 1>} : memref<448x128xf32, #tpu.memory_space<vmem>>, vector<7x128xf32>
    %325 = arith.maximumf %323, %324 : vector<7x128xf32>
    %c123 = arith.constant 123 : index
    %c0_238 = arith.constant 0 : index
    %326 = vector.load %arg16[%c123, %c0_238] : memref<198x128xf32, #tpu.memory_space<vmem>>, vector<7x128xf32>
    tpu.vector_store %arg16[%c123, %c0_238], %325 {strides = array<i32>} : memref<198x128xf32, #tpu.memory_space<vmem>>, vector<7x128xf32>,
    %c320 = arith.constant 320 : index
    %c0_239 = arith.constant 0 : index
    %327 = tpu.strided_load %arg15[%c320, %c0_239] {strides = array<i32: 2, 1>} : memref<448x128xf32, #tpu.memory_space<vmem>>, vector<7x128xf32>
    %c321 = arith.constant 321 : index
    %c0_240 = arith.constant 0 : index
    %328 = tpu.strided_load %arg15[%c321, %c0_240] {strides = array<i32: 2, 1>} : memref<448x128xf32, #tpu.memory_space<vmem>>, vector<7x128xf32>
    %329 = arith.maximumf %327, %328 : vector<7x128xf32>
    %c336_241 = arith.constant 336 : index
    %c0_242 = arith.constant 0 : index
    %330 = tpu.strided_load %arg15[%c336_241, %c0_242] {strides = array<i32: 2, 1>} : memref<448x128xf32, #tpu.memory_space<vmem>>, vector<7x128xf32>
    %331 = arith.maximumf %329, %330 : vector<7x128xf32>
    %c337_243 = arith.constant 337 : index
    %c0_244 = arith.constant 0 : index
    %332 = tpu.strided_load %arg15[%c337_243, %c0_244] {strides = array<i32: 2, 1>} : memref<448x128xf32, #tpu.memory_space<vmem>>, vector<7x128xf32>
    %333 = arith.maximumf %331, %332 : vector<7x128xf32>
    %c134 = arith.constant 134 : index
    %c0_245 = arith.constant 0 : index
    %334 = vector.load %arg16[%c134, %c0_245] : memref<198x128xf32, #tpu.memory_space<vmem>>, vector<7x128xf32>
    tpu.vector_store %arg16[%c134, %c0_245], %333 {strides = array<i32>} : memref<198x128xf32, #tpu.memory_space<vmem>>, vector<7x128xf32>,
    %c352 = arith.constant 352 : index
    %c0_246 = arith.constant 0 : index
    %335 = tpu.strided_load %arg15[%c352, %c0_246] {strides = array<i32: 2, 1>} : memref<448x128xf32, #tpu.memory_space<vmem>>, vector<7x128xf32>
    %c353 = arith.constant 353 : index
    %c0_247 = arith.constant 0 : index
    %336 = tpu.strided_load %arg15[%c353, %c0_247] {strides = array<i32: 2, 1>} : memref<448x128xf32, #tpu.memory_space<vmem>>, vector<7x128xf32>
    %337 = arith.maximumf %335, %336 : vector<7x128xf32>
    %c368 = arith.constant 368 : index
    %c0_248 = arith.constant 0 : index
    %338 = tpu.strided_load %arg15[%c368, %c0_248] {strides = array<i32: 2, 1>} : memref<448x128xf32, #tpu.memory_space<vmem>>, vector<7x128xf32>
    %339 = arith.maximumf %337, %338 : vector<7x128xf32>
    %c369 = arith.constant 369 : index
    %c0_249 = arith.constant 0 : index
    %340 = tpu.strided_load %arg15[%c369, %c0_249] {strides = array<i32: 2, 1>} : memref<448x128xf32, #tpu.memory_space<vmem>>, vector<7x128xf32>
    %341 = arith.maximumf %339, %340 : vector<7x128xf32>
    %c145_250 = arith.constant 145 : index
    %c0_251 = arith.constant 0 : index
    %342 = vector.load %arg16[%c145_250, %c0_251] : memref<198x128xf32, #tpu.memory_space<vmem>>, vector<7x128xf32>
    tpu.vector_store %arg16[%c145_250, %c0_251], %341 {strides = array<i32>} : memref<198x128xf32, #tpu.memory_space<vmem>>, vector<7x128xf32>,
    %c384_252 = arith.constant 384 : index
    %c0_253 = arith.constant 0 : index
    %343 = tpu.strided_load %arg15[%c384_252, %c0_253] {strides = array<i32: 2, 1>} : memref<448x128xf32, #tpu.memory_space<vmem>>, vector<7x128xf32>
    %c385_254 = arith.constant 385 : index
    %c0_255 = arith.constant 0 : index
    %344 = tpu.strided_load %arg15[%c385_254, %c0_255] {strides = array<i32: 2, 1>} : memref<448x128xf32, #tpu.memory_space<vmem>>, vector<7x128xf32>
    %345 = arith.maximumf %343, %344 : vector<7x128xf32>
    %c400 = arith.constant 400 : index
    %c0_256 = arith.constant 0 : index
    %346 = tpu.strided_load %arg15[%c400, %c0_256] {strides = array<i32: 2, 1>} : memref<448x128xf32, #tpu.memory_space<vmem>>, vector<7x128xf32>
    %347 = arith.maximumf %345, %346 : vector<7x128xf32>
    %c401 = arith.constant 401 : index
    %c0_257 = arith.constant 0 : index
    %348 = tpu.strided_load %arg15[%c401, %c0_257] {strides = array<i32: 2, 1>} : memref<448x128xf32, #tpu.memory_space<vmem>>, vector<7x128xf32>
    %349 = arith.maximumf %347, %348 : vector<7x128xf32>
    %c156 = arith.constant 156 : index
    %c0_258 = arith.constant 0 : index
    %350 = vector.load %arg16[%c156, %c0_258] : memref<198x128xf32, #tpu.memory_space<vmem>>, vector<7x128xf32>
    tpu.vector_store %arg16[%c156, %c0_258], %349 {strides = array<i32>} : memref<198x128xf32, #tpu.memory_space<vmem>>, vector<7x128xf32>,
    %c416 = arith.constant 416 : index
    %c0_259 = arith.constant 0 : index
    %351 = tpu.strided_load %arg15[%c416, %c0_259] {strides = array<i32: 2, 1>} : memref<448x128xf32, #tpu.memory_space<vmem>>, vector<7x128xf32>
    %c417 = arith.constant 417 : index
    %c0_260 = arith.constant 0 : index
    %352 = tpu.strided_load %arg15[%c417, %c0_260] {strides = array<i32: 2, 1>} : memref<448x128xf32, #tpu.memory_space<vmem>>, vector<7x128xf32>
    %353 = arith.maximumf %351, %352 : vector<7x128xf32>
    %c432_261 = arith.constant 432 : index
    %c0_262 = arith.constant 0 : index
    %354 = tpu.strided_load %arg15[%c432_261, %c0_262] {strides = array<i32: 2, 1>} : memref<448x128xf32, #tpu.memory_space<vmem>>, vector<7x128xf32>
    %355 = arith.maximumf %353, %354 : vector<7x128xf32>
    %c433_263 = arith.constant 433 : index
    %c0_264 = arith.constant 0 : index
    %356 = tpu.strided_load %arg15[%c433_263, %c0_264] {strides = array<i32: 2, 1>} : memref<448x128xf32, #tpu.memory_space<vmem>>, vector<7x128xf32>
    %357 = arith.maximumf %355, %356 : vector<7x128xf32>
    %c167 = arith.constant 167 : index
    %c0_265 = arith.constant 0 : index
    %358 = vector.load %arg16[%c167, %c0_265] : memref<198x128xf32, #tpu.memory_space<vmem>>, vector<7x128xf32>
    tpu.vector_store %arg16[%c167, %c0_265], %357 {strides = array<i32>} : memref<198x128xf32, #tpu.memory_space<vmem>>, vector<7x128xf32>,
    %c0_266 = arith.constant 0 : index
    %c0_267 = arith.constant 0 : index
    %359 = vector.load %arg16[%c0_266, %c0_267] : memref<198x128xf32, #tpu.memory_space<vmem>>, vector<176x128xf32>
    %c0_268 = arith.constant 0 : index
    %c0_269 = arith.constant 0 : index
    %c0_270 = arith.constant 0 : index
    %360 = vector.load %arg6[%c0_268, %c0_269, %c0_270] : memref<4x128x128xf32, #tpu.memory_space<vmem>>, vector<1x128x128xf32>
    %361 = vector.shape_cast %360 : vector<1x128x128xf32> to vector<128x128xf32>
    %cst_271 = arith.constant dense<0.000000e+00> : vector<176x128xf32>
    %362 = tpu.matmul %359, %361, %cst_271 {dimension_numbers = #tpu.dot_dimension_numbers<[1], [0], [0], [1], [0, 0, 1, 1], [], []>} : vector<176x128xf32>, vector<128x128xf32>, vector<176x128xf32> -> vector<176x128xf32>
    %c1_272 = arith.constant 1 : index
    %c0_273 = arith.constant 0 : index
    %363 = vector.load %arg16[%c1_272, %c0_273] : memref<198x128xf32, #tpu.memory_space<vmem>>, vector<176x128xf32>
    %c1_274 = arith.constant 1 : index
    %c0_275 = arith.constant 0 : index
    %c0_276 = arith.constant 0 : index
    %364 = vector.load %arg6[%c1_274, %c0_275, %c0_276] : memref<4x128x128xf32, #tpu.memory_space<vmem>>, vector<1x128x128xf32>
    %365 = vector.shape_cast %364 : vector<1x128x128xf32> to vector<128x128xf32>
    %cst_277 = arith.constant dense<0.000000e+00> : vector<176x128xf32>
    %366 = tpu.matmul %363, %365, %cst_277 {dimension_numbers = #tpu.dot_dimension_numbers<[1], [0], [0], [1], [0, 0, 1, 1], [], []>} : vector<176x128xf32>, vector<128x128xf32>, vector<176x128xf32> -> vector<176x128xf32>
    %367 = arith.addf %362, %366 : vector<176x128xf32>
    %c11 = arith.constant 11 : index
    %c0_278 = arith.constant 0 : index
    %368 = vector.load %arg16[%c11, %c0_278] : memref<198x128xf32, #tpu.memory_space<vmem>>, vector<176x128xf32>
    %c2_279 = arith.constant 2 : index
    %c0_280 = arith.constant 0 : index
    %c0_281 = arith.constant 0 : index
    %369 = vector.load %arg6[%c2_279, %c0_280, %c0_281] : memref<4x128x128xf32, #tpu.memory_space<vmem>>, vector<1x128x128xf32>
    %370 = vector.shape_cast %369 : vector<1x128x128xf32> to vector<128x128xf32>
    %cst_282 = arith.constant dense<0.000000e+00> : vector<176x128xf32>
    %371 = tpu.matmul %368, %370, %cst_282 {dimension_numbers = #tpu.dot_dimension_numbers<[1], [0], [0], [1], [0, 0, 1, 1], [], []>} : vector<176x128xf32>, vector<128x128xf32>, vector<176x128xf32> -> vector<176x128xf32>
    %372 = arith.addf %367, %371 : vector<176x128xf32>
    %c12 = arith.constant 12 : index
    %c0_283 = arith.constant 0 : index
    %373 = vector.load %arg16[%c12, %c0_283] : memref<198x128xf32, #tpu.memory_space<vmem>>, vector<176x128xf32>
    %c3_284 = arith.constant 3 : index
    %c0_285 = arith.constant 0 : index
    %c0_286 = arith.constant 0 : index
    %374 = vector.load %arg6[%c3_284, %c0_285, %c0_286] : memref<4x128x128xf32, #tpu.memory_space<vmem>>, vector<1x128x128xf32>
    %375 = vector.shape_cast %374 : vector<1x128x128xf32> to vector<128x128xf32>
    %cst_287 = arith.constant dense<0.000000e+00> : vector<176x128xf32>
    %376 = tpu.matmul %373, %375, %cst_287 {dimension_numbers = #tpu.dot_dimension_numbers<[1], [0], [0], [1], [0, 0, 1, 1], [], []>} : vector<176x128xf32>, vector<128x128xf32>, vector<176x128xf32> -> vector<176x128xf32>
    %377 = arith.addf %372, %376 : vector<176x128xf32>
    %c0_288 = arith.constant 0 : index
    %c0_289 = arith.constant 0 : index
    %378 = vector.load %arg7[%c0_288, %c0_289] : memref<1x128xf32, #tpu.memory_space<vmem>>, vector<1x128xf32>
    %379 = vector.broadcast %378 : vector<1x128xf32> to vector<176x128xf32>
    %380 = arith.addf %377, %379 : vector<176x128xf32>
    %cst_290 = arith.constant 0.000000e+00 : f32
    %381 = vector.broadcast %cst_290 : f32 to vector<176x128xf32>
    %382 = arith.maximumf %380, %381 : vector<176x128xf32>
    %c0_291 = arith.constant 0 : index
    %c0_292 = arith.constant 0 : index
    %383 = vector.load %arg17[%c0_291, %c0_292] : memref<176x128xf32, #tpu.memory_space<vmem>>, vector<176x128xf32>
    tpu.vector_store %arg17[%c0_291, %c0_292], %382 {strides = array<i32>} : memref<176x128xf32, #tpu.memory_space<vmem>>, vector<176x128xf32>,
    %c0_293 = arith.constant 0 : index
    %c0_294 = arith.constant 0 : index
    %384 = tpu.strided_load %arg17[%c0_293, %c0_294] {strides = array<i32: 2, 1>} : memref<176x128xf32, #tpu.memory_space<vmem>>, vector<5x128xf32>
    %c1_295 = arith.constant 1 : index
    %c0_296 = arith.constant 0 : index
    %385 = tpu.strided_load %arg17[%c1_295, %c0_296] {strides = array<i32: 2, 1>} : memref<176x128xf32, #tpu.memory_space<vmem>>, vector<5x128xf32>
    %386 = arith.maximumf %384, %385 : vector<5x128xf32>
    %c11_297 = arith.constant 11 : index
    %c0_298 = arith.constant 0 : index
    %387 = tpu.strided_load %arg17[%c11_297, %c0_298] {strides = array<i32: 2, 1>} : memref<176x128xf32, #tpu.memory_space<vmem>>, vector<5x128xf32>
    %388 = arith.maximumf %386, %387 : vector<5x128xf32>
    %c12_299 = arith.constant 12 : index
    %c0_300 = arith.constant 0 : index
    %389 = tpu.strided_load %arg17[%c12_299, %c0_300] {strides = array<i32: 2, 1>} : memref<176x128xf32, #tpu.memory_space<vmem>>, vector<5x128xf32>
    %390 = arith.maximumf %388, %389 : vector<5x128xf32>
    %c0_301 = arith.constant 0 : index
    %c0_302 = arith.constant 0 : index
    %391 = vector.load %arg18[%c0_301, %c0_302] : memref<40x128xf32, #tpu.memory_space<vmem>>, vector<5x128xf32>
    tpu.vector_store %arg18[%c0_301, %c0_302], %390 {strides = array<i32>} : memref<40x128xf32, #tpu.memory_space<vmem>>, vector<5x128xf32>,
    %c22 = arith.constant 22 : index
    %c0_303 = arith.constant 0 : index
    %392 = tpu.strided_load %arg17[%c22, %c0_303] {strides = array<i32: 2, 1>} : memref<176x128xf32, #tpu.memory_space<vmem>>, vector<5x128xf32>
    %c23 = arith.constant 23 : index
    %c0_304 = arith.constant 0 : index
    %393 = tpu.strided_load %arg17[%c23, %c0_304] {strides = array<i32: 2, 1>} : memref<176x128xf32, #tpu.memory_space<vmem>>, vector<5x128xf32>
    %394 = arith.maximumf %392, %393 : vector<5x128xf32>
    %c33_305 = arith.constant 33 : index
    %c0_306 = arith.constant 0 : index
    %395 = tpu.strided_load %arg17[%c33_305, %c0_306] {strides = array<i32: 2, 1>} : memref<176x128xf32, #tpu.memory_space<vmem>>, vector<5x128xf32>
    %396 = arith.maximumf %394, %395 : vector<5x128xf32>
    %c34_307 = arith.constant 34 : index
    %c0_308 = arith.constant 0 : index
    %397 = tpu.strided_load %arg17[%c34_307, %c0_308] {strides = array<i32: 2, 1>} : memref<176x128xf32, #tpu.memory_space<vmem>>, vector<5x128xf32>
    %398 = arith.maximumf %396, %397 : vector<5x128xf32>
    %c5 = arith.constant 5 : index
    %c0_309 = arith.constant 0 : index
    %399 = vector.load %arg18[%c5, %c0_309] : memref<40x128xf32, #tpu.memory_space<vmem>>, vector<5x128xf32>
    tpu.vector_store %arg18[%c5, %c0_309], %398 {strides = array<i32>} : memref<40x128xf32, #tpu.memory_space<vmem>>, vector<5x128xf32>,
    %c44 = arith.constant 44 : index
    %c0_310 = arith.constant 0 : index
    %400 = tpu.strided_load %arg17[%c44, %c0_310] {strides = array<i32: 2, 1>} : memref<176x128xf32, #tpu.memory_space<vmem>>, vector<5x128xf32>
    %c45 = arith.constant 45 : index
    %c0_311 = arith.constant 0 : index
    %401 = tpu.strided_load %arg17[%c45, %c0_311] {strides = array<i32: 2, 1>} : memref<176x128xf32, #tpu.memory_space<vmem>>, vector<5x128xf32>
    %402 = arith.maximumf %400, %401 : vector<5x128xf32>
    %c55 = arith.constant 55 : index
    %c0_312 = arith.constant 0 : index
    %403 = tpu.strided_load %arg17[%c55, %c0_312] {strides = array<i32: 2, 1>} : memref<176x128xf32, #tpu.memory_space<vmem>>, vector<5x128xf32>
    %404 = arith.maximumf %402, %403 : vector<5x128xf32>
    %c56 = arith.constant 56 : index
    %c0_313 = arith.constant 0 : index
    %405 = tpu.strided_load %arg17[%c56, %c0_313] {strides = array<i32: 2, 1>} : memref<176x128xf32, #tpu.memory_space<vmem>>, vector<5x128xf32>
    %406 = arith.maximumf %404, %405 : vector<5x128xf32>
    %c10 = arith.constant 10 : index
    %c0_314 = arith.constant 0 : index
    %407 = vector.load %arg18[%c10, %c0_314] : memref<40x128xf32, #tpu.memory_space<vmem>>, vector<5x128xf32>
    tpu.vector_store %arg18[%c10, %c0_314], %406 {strides = array<i32>} : memref<40x128xf32, #tpu.memory_space<vmem>>, vector<5x128xf32>,
    %c66_315 = arith.constant 66 : index
    %c0_316 = arith.constant 0 : index
    %408 = tpu.strided_load %arg17[%c66_315, %c0_316] {strides = array<i32: 2, 1>} : memref<176x128xf32, #tpu.memory_space<vmem>>, vector<5x128xf32>
    %c67 = arith.constant 67 : index
    %c0_317 = arith.constant 0 : index
    %409 = tpu.strided_load %arg17[%c67, %c0_317] {strides = array<i32: 2, 1>} : memref<176x128xf32, #tpu.memory_space<vmem>>, vector<5x128xf32>
    %410 = arith.maximumf %408, %409 : vector<5x128xf32>
    %c77 = arith.constant 77 : index
    %c0_318 = arith.constant 0 : index
    %411 = tpu.strided_load %arg17[%c77, %c0_318] {strides = array<i32: 2, 1>} : memref<176x128xf32, #tpu.memory_space<vmem>>, vector<5x128xf32>
    %412 = arith.maximumf %410, %411 : vector<5x128xf32>
    %c78 = arith.constant 78 : index
    %c0_319 = arith.constant 0 : index
    %413 = tpu.strided_load %arg17[%c78, %c0_319] {strides = array<i32: 2, 1>} : memref<176x128xf32, #tpu.memory_space<vmem>>, vector<5x128xf32>
    %414 = arith.maximumf %412, %413 : vector<5x128xf32>
    %c15 = arith.constant 15 : index
    %c0_320 = arith.constant 0 : index
    %415 = vector.load %arg18[%c15, %c0_320] : memref<40x128xf32, #tpu.memory_space<vmem>>, vector<5x128xf32>
    tpu.vector_store %arg18[%c15, %c0_320], %414 {strides = array<i32>} : memref<40x128xf32, #tpu.memory_space<vmem>>, vector<5x128xf32>,
    %c88 = arith.constant 88 : index
    %c0_321 = arith.constant 0 : index
    %416 = tpu.strided_load %arg17[%c88, %c0_321] {strides = array<i32: 2, 1>} : memref<176x128xf32, #tpu.memory_space<vmem>>, vector<5x128xf32>
    %c89 = arith.constant 89 : index
    %c0_322 = arith.constant 0 : index
    %417 = tpu.strided_load %arg17[%c89, %c0_322] {strides = array<i32: 2, 1>} : memref<176x128xf32, #tpu.memory_space<vmem>>, vector<5x128xf32>
    %418 = arith.maximumf %416, %417 : vector<5x128xf32>
    %c99 = arith.constant 99 : index
    %c0_323 = arith.constant 0 : index
    %419 = tpu.strided_load %arg17[%c99, %c0_323] {strides = array<i32: 2, 1>} : memref<176x128xf32, #tpu.memory_space<vmem>>, vector<5x128xf32>
    %420 = arith.maximumf %418, %419 : vector<5x128xf32>
    %c100 = arith.constant 100 : index
    %c0_324 = arith.constant 0 : index
    %421 = tpu.strided_load %arg17[%c100, %c0_324] {strides = array<i32: 2, 1>} : memref<176x128xf32, #tpu.memory_space<vmem>>, vector<5x128xf32>
    %422 = arith.maximumf %420, %421 : vector<5x128xf32>
    %c20 = arith.constant 20 : index
    %c0_325 = arith.constant 0 : index
    %423 = vector.load %arg18[%c20, %c0_325] : memref<40x128xf32, #tpu.memory_space<vmem>>, vector<5x128xf32>
    tpu.vector_store %arg18[%c20, %c0_325], %422 {strides = array<i32>} : memref<40x128xf32, #tpu.memory_space<vmem>>, vector<5x128xf32>,
    %c110 = arith.constant 110 : index
    %c0_326 = arith.constant 0 : index
    %424 = tpu.strided_load %arg17[%c110, %c0_326] {strides = array<i32: 2, 1>} : memref<176x128xf32, #tpu.memory_space<vmem>>, vector<5x128xf32>
    %c111 = arith.constant 111 : index
    %c0_327 = arith.constant 0 : index
    %425 = tpu.strided_load %arg17[%c111, %c0_327] {strides = array<i32: 2, 1>} : memref<176x128xf32, #tpu.memory_space<vmem>>, vector<5x128xf32>
    %426 = arith.maximumf %424, %425 : vector<5x128xf32>
    %c121_328 = arith.constant 121 : index
    %c0_329 = arith.constant 0 : index
    %427 = tpu.strided_load %arg17[%c121_328, %c0_329] {strides = array<i32: 2, 1>} : memref<176x128xf32, #tpu.memory_space<vmem>>, vector<5x128xf32>
    %428 = arith.maximumf %426, %427 : vector<5x128xf32>
    %c122 = arith.constant 122 : index
    %c0_330 = arith.constant 0 : index
    %429 = tpu.strided_load %arg17[%c122, %c0_330] {strides = array<i32: 2, 1>} : memref<176x128xf32, #tpu.memory_space<vmem>>, vector<5x128xf32>
    %430 = arith.maximumf %428, %429 : vector<5x128xf32>
    %c25_331 = arith.constant 25 : index
    %c0_332 = arith.constant 0 : index
    %431 = vector.load %arg18[%c25_331, %c0_332] : memref<40x128xf32, #tpu.memory_space<vmem>>, vector<5x128xf32>
    tpu.vector_store %arg18[%c25_331, %c0_332], %430 {strides = array<i32>} : memref<40x128xf32, #tpu.memory_space<vmem>>, vector<5x128xf32>,
    %c132 = arith.constant 132 : index
    %c0_333 = arith.constant 0 : index
    %432 = tpu.strided_load %arg17[%c132, %c0_333] {strides = array<i32: 2, 1>} : memref<176x128xf32, #tpu.memory_space<vmem>>, vector<5x128xf32>
    %c133 = arith.constant 133 : index
    %c0_334 = arith.constant 0 : index
    %433 = tpu.strided_load %arg17[%c133, %c0_334] {strides = array<i32: 2, 1>} : memref<176x128xf32, #tpu.memory_space<vmem>>, vector<5x128xf32>
    %434 = arith.maximumf %432, %433 : vector<5x128xf32>
    %c143 = arith.constant 143 : index
    %c0_335 = arith.constant 0 : index
    %435 = tpu.strided_load %arg17[%c143, %c0_335] {strides = array<i32: 2, 1>} : memref<176x128xf32, #tpu.memory_space<vmem>>, vector<5x128xf32>
    %436 = arith.maximumf %434, %435 : vector<5x128xf32>
    %c144_336 = arith.constant 144 : index
    %c0_337 = arith.constant 0 : index
    %437 = tpu.strided_load %arg17[%c144_336, %c0_337] {strides = array<i32: 2, 1>} : memref<176x128xf32, #tpu.memory_space<vmem>>, vector<5x128xf32>
    %438 = arith.maximumf %436, %437 : vector<5x128xf32>
    %c30 = arith.constant 30 : index
    %c0_338 = arith.constant 0 : index
    %439 = vector.load %arg18[%c30, %c0_338] : memref<40x128xf32, #tpu.memory_space<vmem>>, vector<5x128xf32>
    tpu.vector_store %arg18[%c30, %c0_338], %438 {strides = array<i32>} : memref<40x128xf32, #tpu.memory_space<vmem>>, vector<5x128xf32>,
    %c154 = arith.constant 154 : index
    %c0_339 = arith.constant 0 : index
    %440 = tpu.strided_load %arg17[%c154, %c0_339] {strides = array<i32: 2, 1>} : memref<176x128xf32, #tpu.memory_space<vmem>>, vector<5x128xf32>
    %c155 = arith.constant 155 : index
    %c0_340 = arith.constant 0 : index
    %441 = tpu.strided_load %arg17[%c155, %c0_340] {strides = array<i32: 2, 1>} : memref<176x128xf32, #tpu.memory_space<vmem>>, vector<5x128xf32>
    %442 = arith.maximumf %440, %441 : vector<5x128xf32>
    %c165 = arith.constant 165 : index
    %c0_341 = arith.constant 0 : index
    %443 = tpu.strided_load %arg17[%c165, %c0_341] {strides = array<i32: 2, 1>} : memref<176x128xf32, #tpu.memory_space<vmem>>, vector<5x128xf32>
    %444 = arith.maximumf %442, %443 : vector<5x128xf32>
    %c166 = arith.constant 166 : index
    %c0_342 = arith.constant 0 : index
    %445 = tpu.strided_load %arg17[%c166, %c0_342] {strides = array<i32: 2, 1>} : memref<176x128xf32, #tpu.memory_space<vmem>>, vector<5x128xf32>
    %446 = arith.maximumf %444, %445 : vector<5x128xf32>
    %c35_343 = arith.constant 35 : index
    %c0_344 = arith.constant 0 : index
    %447 = vector.load %arg18[%c35_343, %c0_344] : memref<40x128xf32, #tpu.memory_space<vmem>>, vector<5x128xf32>
    tpu.vector_store %arg18[%c35_343, %c0_344], %446 {strides = array<i32>} : memref<40x128xf32, #tpu.memory_space<vmem>>, vector<5x128xf32>,
    %c0_345 = arith.constant 0 : index
    %c0_346 = arith.constant 0 : index
    %448 = vector.load %arg18[%c0_345, %c0_346] : memref<40x128xf32, #tpu.memory_space<vmem>>, vector<1x128xf32>
    %c0_347 = arith.constant 0 : index
    %c0_348 = arith.constant 0 : index
    %c0_349 = arith.constant 0 : index
    %449 = vector.load %arg8[%c0_347, %c0_348, %c0_349] : memref<40x128x128xf32, #tpu.memory_space<vmem>>, vector<1x128x128xf32>
    %450 = vector.shape_cast %449 : vector<1x128x128xf32> to vector<128x128xf32>
    %cst_350 = arith.constant dense<0.000000e+00> : vector<1x128xf32>
    %451 = tpu.matmul %448, %450, %cst_350 {dimension_numbers = #tpu.dot_dimension_numbers<[1], [0], [0], [1], [0, 0, 1, 1], [], []>} : vector<1x128xf32>, vector<128x128xf32>, vector<1x128xf32> -> vector<1x128xf32>
    %c1_351 = arith.constant 1 : index
    %c0_352 = arith.constant 0 : index
    %452 = vector.load %arg18[%c1_351, %c0_352] : memref<40x128xf32, #tpu.memory_space<vmem>>, vector<1x128xf32>
    %c1_353 = arith.constant 1 : index
    %c0_354 = arith.constant 0 : index
    %c0_355 = arith.constant 0 : index
    %453 = vector.load %arg8[%c1_353, %c0_354, %c0_355] : memref<40x128x128xf32, #tpu.memory_space<vmem>>, vector<1x128x128xf32>
    %454 = vector.shape_cast %453 : vector<1x128x128xf32> to vector<128x128xf32>
    %cst_356 = arith.constant dense<0.000000e+00> : vector<1x128xf32>
    %455 = tpu.matmul %452, %454, %cst_356 {dimension_numbers = #tpu.dot_dimension_numbers<[1], [0], [0], [1], [0, 0, 1, 1], [], []>} : vector<1x128xf32>, vector<128x128xf32>, vector<1x128xf32> -> vector<1x128xf32>
    %456 = arith.addf %451, %455 : vector<1x128xf32>
    %c2_357 = arith.constant 2 : index
    %c0_358 = arith.constant 0 : index
    %457 = vector.load %arg18[%c2_357, %c0_358] : memref<40x128xf32, #tpu.memory_space<vmem>>, vector<1x128xf32>
    %c2_359 = arith.constant 2 : index
    %c0_360 = arith.constant 0 : index
    %c0_361 = arith.constant 0 : index
    %458 = vector.load %arg8[%c2_359, %c0_360, %c0_361] : memref<40x128x128xf32, #tpu.memory_space<vmem>>, vector<1x128x128xf32>
    %459 = vector.shape_cast %458 : vector<1x128x128xf32> to vector<128x128xf32>
    %cst_362 = arith.constant dense<0.000000e+00> : vector<1x128xf32>
    %460 = tpu.matmul %457, %459, %cst_362 {dimension_numbers = #tpu.dot_dimension_numbers<[1], [0], [0], [1], [0, 0, 1, 1], [], []>} : vector<1x128xf32>, vector<128x128xf32>, vector<1x128xf32> -> vector<1x128xf32>
    %461 = arith.addf %456, %460 : vector<1x128xf32>
    %c3_363 = arith.constant 3 : index
    %c0_364 = arith.constant 0 : index
    %462 = vector.load %arg18[%c3_363, %c0_364] : memref<40x128xf32, #tpu.memory_space<vmem>>, vector<1x128xf32>
    %c3_365 = arith.constant 3 : index
    %c0_366 = arith.constant 0 : index
    %c0_367 = arith.constant 0 : index
    %463 = vector.load %arg8[%c3_365, %c0_366, %c0_367] : memref<40x128x128xf32, #tpu.memory_space<vmem>>, vector<1x128x128xf32>
    %464 = vector.shape_cast %463 : vector<1x128x128xf32> to vector<128x128xf32>
    %cst_368 = arith.constant dense<0.000000e+00> : vector<1x128xf32>
    %465 = tpu.matmul %462, %464, %cst_368 {dimension_numbers = #tpu.dot_dimension_numbers<[1], [0], [0], [1], [0, 0, 1, 1], [], []>} : vector<1x128xf32>, vector<128x128xf32>, vector<1x128xf32> -> vector<1x128xf32>
    %466 = arith.addf %461, %465 : vector<1x128xf32>
    %c4 = arith.constant 4 : index
    %c0_369 = arith.constant 0 : index
    %467 = vector.load %arg18[%c4, %c0_369] : memref<40x128xf32, #tpu.memory_space<vmem>>, vector<1x128xf32>
    %c4_370 = arith.constant 4 : index
    %c0_371 = arith.constant 0 : index
    %c0_372 = arith.constant 0 : index
    %468 = vector.load %arg8[%c4_370, %c0_371, %c0_372] : memref<40x128x128xf32, #tpu.memory_space<vmem>>, vector<1x128x128xf32>
    %469 = vector.shape_cast %468 : vector<1x128x128xf32> to vector<128x128xf32>
    %cst_373 = arith.constant dense<0.000000e+00> : vector<1x128xf32>
    %470 = tpu.matmul %467, %469, %cst_373 {dimension_numbers = #tpu.dot_dimension_numbers<[1], [0], [0], [1], [0, 0, 1, 1], [], []>} : vector<1x128xf32>, vector<128x128xf32>, vector<1x128xf32> -> vector<1x128xf32>
    %471 = arith.addf %466, %470 : vector<1x128xf32>
    %c5_374 = arith.constant 5 : index
    %c0_375 = arith.constant 0 : index
    %472 = vector.load %arg18[%c5_374, %c0_375] : memref<40x128xf32, #tpu.memory_space<vmem>>, vector<1x128xf32>
    %c5_376 = arith.constant 5 : index
    %c0_377 = arith.constant 0 : index
    %c0_378 = arith.constant 0 : index
    %473 = vector.load %arg8[%c5_376, %c0_377, %c0_378] : memref<40x128x128xf32, #tpu.memory_space<vmem>>, vector<1x128x128xf32>
    %474 = vector.shape_cast %473 : vector<1x128x128xf32> to vector<128x128xf32>
    %cst_379 = arith.constant dense<0.000000e+00> : vector<1x128xf32>
    %475 = tpu.matmul %472, %474, %cst_379 {dimension_numbers = #tpu.dot_dimension_numbers<[1], [0], [0], [1], [0, 0, 1, 1], [], []>} : vector<1x128xf32>, vector<128x128xf32>, vector<1x128xf32> -> vector<1x128xf32>
    %476 = arith.addf %471, %475 : vector<1x128xf32>
    %c6 = arith.constant 6 : index
    %c0_380 = arith.constant 0 : index
    %477 = vector.load %arg18[%c6, %c0_380] : memref<40x128xf32, #tpu.memory_space<vmem>>, vector<1x128xf32>
    %c6_381 = arith.constant 6 : index
    %c0_382 = arith.constant 0 : index
    %c0_383 = arith.constant 0 : index
    %478 = vector.load %arg8[%c6_381, %c0_382, %c0_383] : memref<40x128x128xf32, #tpu.memory_space<vmem>>, vector<1x128x128xf32>
    %479 = vector.shape_cast %478 : vector<1x128x128xf32> to vector<128x128xf32>
    %cst_384 = arith.constant dense<0.000000e+00> : vector<1x128xf32>
    %480 = tpu.matmul %477, %479, %cst_384 {dimension_numbers = #tpu.dot_dimension_numbers<[1], [0], [0], [1], [0, 0, 1, 1], [], []>} : vector<1x128xf32>, vector<128x128xf32>, vector<1x128xf32> -> vector<1x128xf32>
    %481 = arith.addf %476, %480 : vector<1x128xf32>
    %c7 = arith.constant 7 : index
    %c0_385 = arith.constant 0 : index
    %482 = vector.load %arg18[%c7, %c0_385] : memref<40x128xf32, #tpu.memory_space<vmem>>, vector<1x128xf32>
    %c7_386 = arith.constant 7 : index
    %c0_387 = arith.constant 0 : index
    %c0_388 = arith.constant 0 : index
    %483 = vector.load %arg8[%c7_386, %c0_387, %c0_388] : memref<40x128x128xf32, #tpu.memory_space<vmem>>, vector<1x128x128xf32>
    %484 = vector.shape_cast %483 : vector<1x128x128xf32> to vector<128x128xf32>
    %cst_389 = arith.constant dense<0.000000e+00> : vector<1x128xf32>
    %485 = tpu.matmul %482, %484, %cst_389 {dimension_numbers = #tpu.dot_dimension_numbers<[1], [0], [0], [1], [0, 0, 1, 1], [], []>} : vector<1x128xf32>, vector<128x128xf32>, vector<1x128xf32> -> vector<1x128xf32>
    %486 = arith.addf %481, %485 : vector<1x128xf32>
    %c8 = arith.constant 8 : index
    %c0_390 = arith.constant 0 : index
    %487 = vector.load %arg18[%c8, %c0_390] : memref<40x128xf32, #tpu.memory_space<vmem>>, vector<1x128xf32>
    %c8_391 = arith.constant 8 : index
    %c0_392 = arith.constant 0 : index
    %c0_393 = arith.constant 0 : index
    %488 = vector.load %arg8[%c8_391, %c0_392, %c0_393] : memref<40x128x128xf32, #tpu.memory_space<vmem>>, vector<1x128x128xf32>
    %489 = vector.shape_cast %488 : vector<1x128x128xf32> to vector<128x128xf32>
    %cst_394 = arith.constant dense<0.000000e+00> : vector<1x128xf32>
    %490 = tpu.matmul %487, %489, %cst_394 {dimension_numbers = #tpu.dot_dimension_numbers<[1], [0], [0], [1], [0, 0, 1, 1], [], []>} : vector<1x128xf32>, vector<128x128xf32>, vector<1x128xf32> -> vector<1x128xf32>
    %491 = arith.addf %486, %490 : vector<1x128xf32>
    %c9 = arith.constant 9 : index
    %c0_395 = arith.constant 0 : index
    %492 = vector.load %arg18[%c9, %c0_395] : memref<40x128xf32, #tpu.memory_space<vmem>>, vector<1x128xf32>
    %c9_396 = arith.constant 9 : index
    %c0_397 = arith.constant 0 : index
    %c0_398 = arith.constant 0 : index
    %493 = vector.load %arg8[%c9_396, %c0_397, %c0_398] : memref<40x128x128xf32, #tpu.memory_space<vmem>>, vector<1x128x128xf32>
    %494 = vector.shape_cast %493 : vector<1x128x128xf32> to vector<128x128xf32>
    %cst_399 = arith.constant dense<0.000000e+00> : vector<1x128xf32>
    %495 = tpu.matmul %492, %494, %cst_399 {dimension_numbers = #tpu.dot_dimension_numbers<[1], [0], [0], [1], [0, 0, 1, 1], [], []>} : vector<1x128xf32>, vector<128x128xf32>, vector<1x128xf32> -> vector<1x128xf32>
    %496 = arith.addf %491, %495 : vector<1x128xf32>
    %c10_400 = arith.constant 10 : index
    %c0_401 = arith.constant 0 : index
    %497 = vector.load %arg18[%c10_400, %c0_401] : memref<40x128xf32, #tpu.memory_space<vmem>>, vector<1x128xf32>
    %c10_402 = arith.constant 10 : index
    %c0_403 = arith.constant 0 : index
    %c0_404 = arith.constant 0 : index
    %498 = vector.load %arg8[%c10_402, %c0_403, %c0_404] : memref<40x128x128xf32, #tpu.memory_space<vmem>>, vector<1x128x128xf32>
    %499 = vector.shape_cast %498 : vector<1x128x128xf32> to vector<128x128xf32>
    %cst_405 = arith.constant dense<0.000000e+00> : vector<1x128xf32>
    %500 = tpu.matmul %497, %499, %cst_405 {dimension_numbers = #tpu.dot_dimension_numbers<[1], [0], [0], [1], [0, 0, 1, 1], [], []>} : vector<1x128xf32>, vector<128x128xf32>, vector<1x128xf32> -> vector<1x128xf32>
    %501 = arith.addf %496, %500 : vector<1x128xf32>
    %c11_406 = arith.constant 11 : index
    %c0_407 = arith.constant 0 : index
    %502 = vector.load %arg18[%c11_406, %c0_407] : memref<40x128xf32, #tpu.memory_space<vmem>>, vector<1x128xf32>
    %c11_408 = arith.constant 11 : index
    %c0_409 = arith.constant 0 : index
    %c0_410 = arith.constant 0 : index
    %503 = vector.load %arg8[%c11_408, %c0_409, %c0_410] : memref<40x128x128xf32, #tpu.memory_space<vmem>>, vector<1x128x128xf32>
    %504 = vector.shape_cast %503 : vector<1x128x128xf32> to vector<128x128xf32>
    %cst_411 = arith.constant dense<0.000000e+00> : vector<1x128xf32>
    %505 = tpu.matmul %502, %504, %cst_411 {dimension_numbers = #tpu.dot_dimension_numbers<[1], [0], [0], [1], [0, 0, 1, 1], [], []>} : vector<1x128xf32>, vector<128x128xf32>, vector<1x128xf32> -> vector<1x128xf32>
    %506 = arith.addf %501, %505 : vector<1x128xf32>
    %c12_412 = arith.constant 12 : index
    %c0_413 = arith.constant 0 : index
    %507 = vector.load %arg18[%c12_412, %c0_413] : memref<40x128xf32, #tpu.memory_space<vmem>>, vector<1x128xf32>
    %c12_414 = arith.constant 12 : index
    %c0_415 = arith.constant 0 : index
    %c0_416 = arith.constant 0 : index
    %508 = vector.load %arg8[%c12_414, %c0_415, %c0_416] : memref<40x128x128xf32, #tpu.memory_space<vmem>>, vector<1x128x128xf32>
    %509 = vector.shape_cast %508 : vector<1x128x128xf32> to vector<128x128xf32>
    %cst_417 = arith.constant dense<0.000000e+00> : vector<1x128xf32>
    %510 = tpu.matmul %507, %509, %cst_417 {dimension_numbers = #tpu.dot_dimension_numbers<[1], [0], [0], [1], [0, 0, 1, 1], [], []>} : vector<1x128xf32>, vector<128x128xf32>, vector<1x128xf32> -> vector<1x128xf32>
    %511 = arith.addf %506, %510 : vector<1x128xf32>
    %c13 = arith.constant 13 : index
    %c0_418 = arith.constant 0 : index
    %512 = vector.load %arg18[%c13, %c0_418] : memref<40x128xf32, #tpu.memory_space<vmem>>, vector<1x128xf32>
    %c13_419 = arith.constant 13 : index
    %c0_420 = arith.constant 0 : index
    %c0_421 = arith.constant 0 : index
    %513 = vector.load %arg8[%c13_419, %c0_420, %c0_421] : memref<40x128x128xf32, #tpu.memory_space<vmem>>, vector<1x128x128xf32>
    %514 = vector.shape_cast %513 : vector<1x128x128xf32> to vector<128x128xf32>
    %cst_422 = arith.constant dense<0.000000e+00> : vector<1x128xf32>
    %515 = tpu.matmul %512, %514, %cst_422 {dimension_numbers = #tpu.dot_dimension_numbers<[1], [0], [0], [1], [0, 0, 1, 1], [], []>} : vector<1x128xf32>, vector<128x128xf32>, vector<1x128xf32> -> vector<1x128xf32>
    %516 = arith.addf %511, %515 : vector<1x128xf32>
    %c14 = arith.constant 14 : index
    %c0_423 = arith.constant 0 : index
    %517 = vector.load %arg18[%c14, %c0_423] : memref<40x128xf32, #tpu.memory_space<vmem>>, vector<1x128xf32>
    %c14_424 = arith.constant 14 : index
    %c0_425 = arith.constant 0 : index
    %c0_426 = arith.constant 0 : index
    %518 = vector.load %arg8[%c14_424, %c0_425, %c0_426] : memref<40x128x128xf32, #tpu.memory_space<vmem>>, vector<1x128x128xf32>
    %519 = vector.shape_cast %518 : vector<1x128x128xf32> to vector<128x128xf32>
    %cst_427 = arith.constant dense<0.000000e+00> : vector<1x128xf32>
    %520 = tpu.matmul %517, %519, %cst_427 {dimension_numbers = #tpu.dot_dimension_numbers<[1], [0], [0], [1], [0, 0, 1, 1], [], []>} : vector<1x128xf32>, vector<128x128xf32>, vector<1x128xf32> -> vector<1x128xf32>
    %521 = arith.addf %516, %520 : vector<1x128xf32>
    %c15_428 = arith.constant 15 : index
    %c0_429 = arith.constant 0 : index
    %522 = vector.load %arg18[%c15_428, %c0_429] : memref<40x128xf32, #tpu.memory_space<vmem>>, vector<1x128xf32>
    %c15_430 = arith.constant 15 : index
    %c0_431 = arith.constant 0 : index
    %c0_432 = arith.constant 0 : index
    %523 = vector.load %arg8[%c15_430, %c0_431, %c0_432] : memref<40x128x128xf32, #tpu.memory_space<vmem>>, vector<1x128x128xf32>
    %524 = vector.shape_cast %523 : vector<1x128x128xf32> to vector<128x128xf32>
    %cst_433 = arith.constant dense<0.000000e+00> : vector<1x128xf32>
    %525 = tpu.matmul %522, %524, %cst_433 {dimension_numbers = #tpu.dot_dimension_numbers<[1], [0], [0], [1], [0, 0, 1, 1], [], []>} : vector<1x128xf32>, vector<128x128xf32>, vector<1x128xf32> -> vector<1x128xf32>
    %526 = arith.addf %521, %525 : vector<1x128xf32>
    %c16_434 = arith.constant 16 : index
    %c0_435 = arith.constant 0 : index
    %527 = vector.load %arg18[%c16_434, %c0_435] : memref<40x128xf32, #tpu.memory_space<vmem>>, vector<1x128xf32>
    %c16_436 = arith.constant 16 : index
    %c0_437 = arith.constant 0 : index
    %c0_438 = arith.constant 0 : index
    %528 = vector.load %arg8[%c16_436, %c0_437, %c0_438] : memref<40x128x128xf32, #tpu.memory_space<vmem>>, vector<1x128x128xf32>
    %529 = vector.shape_cast %528 : vector<1x128x128xf32> to vector<128x128xf32>
    %cst_439 = arith.constant dense<0.000000e+00> : vector<1x128xf32>
    %530 = tpu.matmul %527, %529, %cst_439 {dimension_numbers = #tpu.dot_dimension_numbers<[1], [0], [0], [1], [0, 0, 1, 1], [], []>} : vector<1x128xf32>, vector<128x128xf32>, vector<1x128xf32> -> vector<1x128xf32>
    %531 = arith.addf %526, %530 : vector<1x128xf32>
    %c17_440 = arith.constant 17 : index
    %c0_441 = arith.constant 0 : index
    %532 = vector.load %arg18[%c17_440, %c0_441] : memref<40x128xf32, #tpu.memory_space<vmem>>, vector<1x128xf32>
    %c17_442 = arith.constant 17 : index
    %c0_443 = arith.constant 0 : index
    %c0_444 = arith.constant 0 : index
    %533 = vector.load %arg8[%c17_442, %c0_443, %c0_444] : memref<40x128x128xf32, #tpu.memory_space<vmem>>, vector<1x128x128xf32>
    %534 = vector.shape_cast %533 : vector<1x128x128xf32> to vector<128x128xf32>
    %cst_445 = arith.constant dense<0.000000e+00> : vector<1x128xf32>
    %535 = tpu.matmul %532, %534, %cst_445 {dimension_numbers = #tpu.dot_dimension_numbers<[1], [0], [0], [1], [0, 0, 1, 1], [], []>} : vector<1x128xf32>, vector<128x128xf32>, vector<1x128xf32> -> vector<1x128xf32>
    %536 = arith.addf %531, %535 : vector<1x128xf32>
    %c18 = arith.constant 18 : index
    %c0_446 = arith.constant 0 : index
    %537 = vector.load %arg18[%c18, %c0_446] : memref<40x128xf32, #tpu.memory_space<vmem>>, vector<1x128xf32>
    %c18_447 = arith.constant 18 : index
    %c0_448 = arith.constant 0 : index
    %c0_449 = arith.constant 0 : index
    %538 = vector.load %arg8[%c18_447, %c0_448, %c0_449] : memref<40x128x128xf32, #tpu.memory_space<vmem>>, vector<1x128x128xf32>
    %539 = vector.shape_cast %538 : vector<1x128x128xf32> to vector<128x128xf32>
    %cst_450 = arith.constant dense<0.000000e+00> : vector<1x128xf32>
    %540 = tpu.matmul %537, %539, %cst_450 {dimension_numbers = #tpu.dot_dimension_numbers<[1], [0], [0], [1], [0, 0, 1, 1], [], []>} : vector<1x128xf32>, vector<128x128xf32>, vector<1x128xf32> -> vector<1x128xf32>
    %541 = arith.addf %536, %540 : vector<1x128xf32>
    %c19 = arith.constant 19 : index
    %c0_451 = arith.constant 0 : index
    %542 = vector.load %arg18[%c19, %c0_451] : memref<40x128xf32, #tpu.memory_space<vmem>>, vector<1x128xf32>
    %c19_452 = arith.constant 19 : index
    %c0_453 = arith.constant 0 : index
    %c0_454 = arith.constant 0 : index
    %543 = vector.load %arg8[%c19_452, %c0_453, %c0_454] : memref<40x128x128xf32, #tpu.memory_space<vmem>>, vector<1x128x128xf32>
    %544 = vector.shape_cast %543 : vector<1x128x128xf32> to vector<128x128xf32>
    %cst_455 = arith.constant dense<0.000000e+00> : vector<1x128xf32>
    %545 = tpu.matmul %542, %544, %cst_455 {dimension_numbers = #tpu.dot_dimension_numbers<[1], [0], [0], [1], [0, 0, 1, 1], [], []>} : vector<1x128xf32>, vector<128x128xf32>, vector<1x128xf32> -> vector<1x128xf32>
    %546 = arith.addf %541, %545 : vector<1x128xf32>
    %c20_456 = arith.constant 20 : index
    %c0_457 = arith.constant 0 : index
    %547 = vector.load %arg18[%c20_456, %c0_457] : memref<40x128xf32, #tpu.memory_space<vmem>>, vector<1x128xf32>
    %c20_458 = arith.constant 20 : index
    %c0_459 = arith.constant 0 : index
    %c0_460 = arith.constant 0 : index
    %548 = vector.load %arg8[%c20_458, %c0_459, %c0_460] : memref<40x128x128xf32, #tpu.memory_space<vmem>>, vector<1x128x128xf32>
    %549 = vector.shape_cast %548 : vector<1x128x128xf32> to vector<128x128xf32>
    %cst_461 = arith.constant dense<0.000000e+00> : vector<1x128xf32>
    %550 = tpu.matmul %547, %549, %cst_461 {dimension_numbers = #tpu.dot_dimension_numbers<[1], [0], [0], [1], [0, 0, 1, 1], [], []>} : vector<1x128xf32>, vector<128x128xf32>, vector<1x128xf32> -> vector<1x128xf32>
    %551 = arith.addf %546, %550 : vector<1x128xf32>
    %c21 = arith.constant 21 : index
    %c0_462 = arith.constant 0 : index
    %552 = vector.load %arg18[%c21, %c0_462] : memref<40x128xf32, #tpu.memory_space<vmem>>, vector<1x128xf32>
    %c21_463 = arith.constant 21 : index
    %c0_464 = arith.constant 0 : index
    %c0_465 = arith.constant 0 : index
    %553 = vector.load %arg8[%c21_463, %c0_464, %c0_465] : memref<40x128x128xf32, #tpu.memory_space<vmem>>, vector<1x128x128xf32>
    %554 = vector.shape_cast %553 : vector<1x128x128xf32> to vector<128x128xf32>
    %cst_466 = arith.constant dense<0.000000e+00> : vector<1x128xf32>
    %555 = tpu.matmul %552, %554, %cst_466 {dimension_numbers = #tpu.dot_dimension_numbers<[1], [0], [0], [1], [0, 0, 1, 1], [], []>} : vector<1x128xf32>, vector<128x128xf32>, vector<1x128xf32> -> vector<1x128xf32>
    %556 = arith.addf %551, %555 : vector<1x128xf32>
    %c22_467 = arith.constant 22 : index
    %c0_468 = arith.constant 0 : index
    %557 = vector.load %arg18[%c22_467, %c0_468] : memref<40x128xf32, #tpu.memory_space<vmem>>, vector<1x128xf32>
    %c22_469 = arith.constant 22 : index
    %c0_470 = arith.constant 0 : index
    %c0_471 = arith.constant 0 : index
    %558 = vector.load %arg8[%c22_469, %c0_470, %c0_471] : memref<40x128x128xf32, #tpu.memory_space<vmem>>, vector<1x128x128xf32>
    %559 = vector.shape_cast %558 : vector<1x128x128xf32> to vector<128x128xf32>
    %cst_472 = arith.constant dense<0.000000e+00> : vector<1x128xf32>
    %560 = tpu.matmul %557, %559, %cst_472 {dimension_numbers = #tpu.dot_dimension_numbers<[1], [0], [0], [1], [0, 0, 1, 1], [], []>} : vector<1x128xf32>, vector<128x128xf32>, vector<1x128xf32> -> vector<1x128xf32>
    %561 = arith.addf %556, %560 : vector<1x128xf32>
    %c23_473 = arith.constant 23 : index
    %c0_474 = arith.constant 0 : index
    %562 = vector.load %arg18[%c23_473, %c0_474] : memref<40x128xf32, #tpu.memory_space<vmem>>, vector<1x128xf32>
    %c23_475 = arith.constant 23 : index
    %c0_476 = arith.constant 0 : index
    %c0_477 = arith.constant 0 : index
    %563 = vector.load %arg8[%c23_475, %c0_476, %c0_477] : memref<40x128x128xf32, #tpu.memory_space<vmem>>, vector<1x128x128xf32>
    %564 = vector.shape_cast %563 : vector<1x128x128xf32> to vector<128x128xf32>
    %cst_478 = arith.constant dense<0.000000e+00> : vector<1x128xf32>
    %565 = tpu.matmul %562, %564, %cst_478 {dimension_numbers = #tpu.dot_dimension_numbers<[1], [0], [0], [1], [0, 0, 1, 1], [], []>} : vector<1x128xf32>, vector<128x128xf32>, vector<1x128xf32> -> vector<1x128xf32>
    %566 = arith.addf %561, %565 : vector<1x128xf32>
    %c24_479 = arith.constant 24 : index
    %c0_480 = arith.constant 0 : index
    %567 = vector.load %arg18[%c24_479, %c0_480] : memref<40x128xf32, #tpu.memory_space<vmem>>, vector<1x128xf32>
    %c24_481 = arith.constant 24 : index
    %c0_482 = arith.constant 0 : index
    %c0_483 = arith.constant 0 : index
    %568 = vector.load %arg8[%c24_481, %c0_482, %c0_483] : memref<40x128x128xf32, #tpu.memory_space<vmem>>, vector<1x128x128xf32>
    %569 = vector.shape_cast %568 : vector<1x128x128xf32> to vector<128x128xf32>
    %cst_484 = arith.constant dense<0.000000e+00> : vector<1x128xf32>
    %570 = tpu.matmul %567, %569, %cst_484 {dimension_numbers = #tpu.dot_dimension_numbers<[1], [0], [0], [1], [0, 0, 1, 1], [], []>} : vector<1x128xf32>, vector<128x128xf32>, vector<1x128xf32> -> vector<1x128xf32>
    %571 = arith.addf %566, %570 : vector<1x128xf32>
    %c25_485 = arith.constant 25 : index
    %c0_486 = arith.constant 0 : index
    %572 = vector.load %arg18[%c25_485, %c0_486] : memref<40x128xf32, #tpu.memory_space<vmem>>, vector<1x128xf32>
    %c25_487 = arith.constant 25 : index
    %c0_488 = arith.constant 0 : index
    %c0_489 = arith.constant 0 : index
    %573 = vector.load %arg8[%c25_487, %c0_488, %c0_489] : memref<40x128x128xf32, #tpu.memory_space<vmem>>, vector<1x128x128xf32>
    %574 = vector.shape_cast %573 : vector<1x128x128xf32> to vector<128x128xf32>
    %cst_490 = arith.constant dense<0.000000e+00> : vector<1x128xf32>
    %575 = tpu.matmul %572, %574, %cst_490 {dimension_numbers = #tpu.dot_dimension_numbers<[1], [0], [0], [1], [0, 0, 1, 1], [], []>} : vector<1x128xf32>, vector<128x128xf32>, vector<1x128xf32> -> vector<1x128xf32>
    %576 = arith.addf %571, %575 : vector<1x128xf32>
    %c26 = arith.constant 26 : index
    %c0_491 = arith.constant 0 : index
    %577 = vector.load %arg18[%c26, %c0_491] : memref<40x128xf32, #tpu.memory_space<vmem>>, vector<1x128xf32>
    %c26_492 = arith.constant 26 : index
    %c0_493 = arith.constant 0 : index
    %c0_494 = arith.constant 0 : index
    %578 = vector.load %arg8[%c26_492, %c0_493, %c0_494] : memref<40x128x128xf32, #tpu.memory_space<vmem>>, vector<1x128x128xf32>
    %579 = vector.shape_cast %578 : vector<1x128x128xf32> to vector<128x128xf32>
    %cst_495 = arith.constant dense<0.000000e+00> : vector<1x128xf32>
    %580 = tpu.matmul %577, %579, %cst_495 {dimension_numbers = #tpu.dot_dimension_numbers<[1], [0], [0], [1], [0, 0, 1, 1], [], []>} : vector<1x128xf32>, vector<128x128xf32>, vector<1x128xf32> -> vector<1x128xf32>
    %581 = arith.addf %576, %580 : vector<1x128xf32>
    %c27 = arith.constant 27 : index
    %c0_496 = arith.constant 0 : index
    %582 = vector.load %arg18[%c27, %c0_496] : memref<40x128xf32, #tpu.memory_space<vmem>>, vector<1x128xf32>
    %c27_497 = arith.constant 27 : index
    %c0_498 = arith.constant 0 : index
    %c0_499 = arith.constant 0 : index
    %583 = vector.load %arg8[%c27_497, %c0_498, %c0_499] : memref<40x128x128xf32, #tpu.memory_space<vmem>>, vector<1x128x128xf32>
    %584 = vector.shape_cast %583 : vector<1x128x128xf32> to vector<128x128xf32>
    %cst_500 = arith.constant dense<0.000000e+00> : vector<1x128xf32>
    %585 = tpu.matmul %582, %584, %cst_500 {dimension_numbers = #tpu.dot_dimension_numbers<[1], [0], [0], [1], [0, 0, 1, 1], [], []>} : vector<1x128xf32>, vector<128x128xf32>, vector<1x128xf32> -> vector<1x128xf32>
    %586 = arith.addf %581, %585 : vector<1x128xf32>
    %c28 = arith.constant 28 : index
    %c0_501 = arith.constant 0 : index
    %587 = vector.load %arg18[%c28, %c0_501] : memref<40x128xf32, #tpu.memory_space<vmem>>, vector<1x128xf32>
    %c28_502 = arith.constant 28 : index
    %c0_503 = arith.constant 0 : index
    %c0_504 = arith.constant 0 : index
    %588 = vector.load %arg8[%c28_502, %c0_503, %c0_504] : memref<40x128x128xf32, #tpu.memory_space<vmem>>, vector<1x128x128xf32>
    %589 = vector.shape_cast %588 : vector<1x128x128xf32> to vector<128x128xf32>
    %cst_505 = arith.constant dense<0.000000e+00> : vector<1x128xf32>
    %590 = tpu.matmul %587, %589, %cst_505 {dimension_numbers = #tpu.dot_dimension_numbers<[1], [0], [0], [1], [0, 0, 1, 1], [], []>} : vector<1x128xf32>, vector<128x128xf32>, vector<1x128xf32> -> vector<1x128xf32>
    %591 = arith.addf %586, %590 : vector<1x128xf32>
    %c29 = arith.constant 29 : index
    %c0_506 = arith.constant 0 : index
    %592 = vector.load %arg18[%c29, %c0_506] : memref<40x128xf32, #tpu.memory_space<vmem>>, vector<1x128xf32>
    %c29_507 = arith.constant 29 : index
    %c0_508 = arith.constant 0 : index
    %c0_509 = arith.constant 0 : index
    %593 = vector.load %arg8[%c29_507, %c0_508, %c0_509] : memref<40x128x128xf32, #tpu.memory_space<vmem>>, vector<1x128x128xf32>
    %594 = vector.shape_cast %593 : vector<1x128x128xf32> to vector<128x128xf32>
    %cst_510 = arith.constant dense<0.000000e+00> : vector<1x128xf32>
    %595 = tpu.matmul %592, %594, %cst_510 {dimension_numbers = #tpu.dot_dimension_numbers<[1], [0], [0], [1], [0, 0, 1, 1], [], []>} : vector<1x128xf32>, vector<128x128xf32>, vector<1x128xf32> -> vector<1x128xf32>
    %596 = arith.addf %591, %595 : vector<1x128xf32>
    %c30_511 = arith.constant 30 : index
    %c0_512 = arith.constant 0 : index
    %597 = vector.load %arg18[%c30_511, %c0_512] : memref<40x128xf32, #tpu.memory_space<vmem>>, vector<1x128xf32>
    %c30_513 = arith.constant 30 : index
    %c0_514 = arith.constant 0 : index
    %c0_515 = arith.constant 0 : index
    %598 = vector.load %arg8[%c30_513, %c0_514, %c0_515] : memref<40x128x128xf32, #tpu.memory_space<vmem>>, vector<1x128x128xf32>
    %599 = vector.shape_cast %598 : vector<1x128x128xf32> to vector<128x128xf32>
    %cst_516 = arith.constant dense<0.000000e+00> : vector<1x128xf32>
    %600 = tpu.matmul %597, %599, %cst_516 {dimension_numbers = #tpu.dot_dimension_numbers<[1], [0], [0], [1], [0, 0, 1, 1], [], []>} : vector<1x128xf32>, vector<128x128xf32>, vector<1x128xf32> -> vector<1x128xf32>
    %601 = arith.addf %596, %600 : vector<1x128xf32>
    %c31 = arith.constant 31 : index
    %c0_517 = arith.constant 0 : index
    %602 = vector.load %arg18[%c31, %c0_517] : memref<40x128xf32, #tpu.memory_space<vmem>>, vector<1x128xf32>
    %c31_518 = arith.constant 31 : index
    %c0_519 = arith.constant 0 : index
    %c0_520 = arith.constant 0 : index
    %603 = vector.load %arg8[%c31_518, %c0_519, %c0_520] : memref<40x128x128xf32, #tpu.memory_space<vmem>>, vector<1x128x128xf32>
    %604 = vector.shape_cast %603 : vector<1x128x128xf32> to vector<128x128xf32>
    %cst_521 = arith.constant dense<0.000000e+00> : vector<1x128xf32>
    %605 = tpu.matmul %602, %604, %cst_521 {dimension_numbers = #tpu.dot_dimension_numbers<[1], [0], [0], [1], [0, 0, 1, 1], [], []>} : vector<1x128xf32>, vector<128x128xf32>, vector<1x128xf32> -> vector<1x128xf32>
    %606 = arith.addf %601, %605 : vector<1x128xf32>
    %c32_522 = arith.constant 32 : index
    %c0_523 = arith.constant 0 : index
    %607 = vector.load %arg18[%c32_522, %c0_523] : memref<40x128xf32, #tpu.memory_space<vmem>>, vector<1x128xf32>
    %c32_524 = arith.constant 32 : index
    %c0_525 = arith.constant 0 : index
    %c0_526 = arith.constant 0 : index
    %608 = vector.load %arg8[%c32_524, %c0_525, %c0_526] : memref<40x128x128xf32, #tpu.memory_space<vmem>>, vector<1x128x128xf32>
    %609 = vector.shape_cast %608 : vector<1x128x128xf32> to vector<128x128xf32>
    %cst_527 = arith.constant dense<0.000000e+00> : vector<1x128xf32>
    %610 = tpu.matmul %607, %609, %cst_527 {dimension_numbers = #tpu.dot_dimension_numbers<[1], [0], [0], [1], [0, 0, 1, 1], [], []>} : vector<1x128xf32>, vector<128x128xf32>, vector<1x128xf32> -> vector<1x128xf32>
    %611 = arith.addf %606, %610 : vector<1x128xf32>
    %c33_528 = arith.constant 33 : index
    %c0_529 = arith.constant 0 : index
    %612 = vector.load %arg18[%c33_528, %c0_529] : memref<40x128xf32, #tpu.memory_space<vmem>>, vector<1x128xf32>
    %c33_530 = arith.constant 33 : index
    %c0_531 = arith.constant 0 : index
    %c0_532 = arith.constant 0 : index
    %613 = vector.load %arg8[%c33_530, %c0_531, %c0_532] : memref<40x128x128xf32, #tpu.memory_space<vmem>>, vector<1x128x128xf32>
    %614 = vector.shape_cast %613 : vector<1x128x128xf32> to vector<128x128xf32>
    %cst_533 = arith.constant dense<0.000000e+00> : vector<1x128xf32>
    %615 = tpu.matmul %612, %614, %cst_533 {dimension_numbers = #tpu.dot_dimension_numbers<[1], [0], [0], [1], [0, 0, 1, 1], [], []>} : vector<1x128xf32>, vector<128x128xf32>, vector<1x128xf32> -> vector<1x128xf32>
    %616 = arith.addf %611, %615 : vector<1x128xf32>
    %c34_534 = arith.constant 34 : index
    %c0_535 = arith.constant 0 : index
    %617 = vector.load %arg18[%c34_534, %c0_535] : memref<40x128xf32, #tpu.memory_space<vmem>>, vector<1x128xf32>
    %c34_536 = arith.constant 34 : index
    %c0_537 = arith.constant 0 : index
    %c0_538 = arith.constant 0 : index
    %618 = vector.load %arg8[%c34_536, %c0_537, %c0_538] : memref<40x128x128xf32, #tpu.memory_space<vmem>>, vector<1x128x128xf32>
    %619 = vector.shape_cast %618 : vector<1x128x128xf32> to vector<128x128xf32>
    %cst_539 = arith.constant dense<0.000000e+00> : vector<1x128xf32>
    %620 = tpu.matmul %617, %619, %cst_539 {dimension_numbers = #tpu.dot_dimension_numbers<[1], [0], [0], [1], [0, 0, 1, 1], [], []>} : vector<1x128xf32>, vector<128x128xf32>, vector<1x128xf32> -> vector<1x128xf32>
    %621 = arith.addf %616, %620 : vector<1x128xf32>
    %c35_540 = arith.constant 35 : index
    %c0_541 = arith.constant 0 : index
    %622 = vector.load %arg18[%c35_540, %c0_541] : memref<40x128xf32, #tpu.memory_space<vmem>>, vector<1x128xf32>
    %c35_542 = arith.constant 35 : index
    %c0_543 = arith.constant 0 : index
    %c0_544 = arith.constant 0 : index
    %623 = vector.load %arg8[%c35_542, %c0_543, %c0_544] : memref<40x128x128xf32, #tpu.memory_space<vmem>>, vector<1x128x128xf32>
    %624 = vector.shape_cast %623 : vector<1x128x128xf32> to vector<128x128xf32>
    %cst_545 = arith.constant dense<0.000000e+00> : vector<1x128xf32>
    %625 = tpu.matmul %622, %624, %cst_545 {dimension_numbers = #tpu.dot_dimension_numbers<[1], [0], [0], [1], [0, 0, 1, 1], [], []>} : vector<1x128xf32>, vector<128x128xf32>, vector<1x128xf32> -> vector<1x128xf32>
    %626 = arith.addf %621, %625 : vector<1x128xf32>
    %c36 = arith.constant 36 : index
    %c0_546 = arith.constant 0 : index
    %627 = vector.load %arg18[%c36, %c0_546] : memref<40x128xf32, #tpu.memory_space<vmem>>, vector<1x128xf32>
    %c36_547 = arith.constant 36 : index
    %c0_548 = arith.constant 0 : index
    %c0_549 = arith.constant 0 : index
    %628 = vector.load %arg8[%c36_547, %c0_548, %c0_549] : memref<40x128x128xf32, #tpu.memory_space<vmem>>, vector<1x128x128xf32>
    %629 = vector.shape_cast %628 : vector<1x128x128xf32> to vector<128x128xf32>
    %cst_550 = arith.constant dense<0.000000e+00> : vector<1x128xf32>
    %630 = tpu.matmul %627, %629, %cst_550 {dimension_numbers = #tpu.dot_dimension_numbers<[1], [0], [0], [1], [0, 0, 1, 1], [], []>} : vector<1x128xf32>, vector<128x128xf32>, vector<1x128xf32> -> vector<1x128xf32>
    %631 = arith.addf %626, %630 : vector<1x128xf32>
    %c37 = arith.constant 37 : index
    %c0_551 = arith.constant 0 : index
    %632 = vector.load %arg18[%c37, %c0_551] : memref<40x128xf32, #tpu.memory_space<vmem>>, vector<1x128xf32>
    %c37_552 = arith.constant 37 : index
    %c0_553 = arith.constant 0 : index
    %c0_554 = arith.constant 0 : index
    %633 = vector.load %arg8[%c37_552, %c0_553, %c0_554] : memref<40x128x128xf32, #tpu.memory_space<vmem>>, vector<1x128x128xf32>
    %634 = vector.shape_cast %633 : vector<1x128x128xf32> to vector<128x128xf32>
    %cst_555 = arith.constant dense<0.000000e+00> : vector<1x128xf32>
    %635 = tpu.matmul %632, %634, %cst_555 {dimension_numbers = #tpu.dot_dimension_numbers<[1], [0], [0], [1], [0, 0, 1, 1], [], []>} : vector<1x128xf32>, vector<128x128xf32>, vector<1x128xf32> -> vector<1x128xf32>
    %636 = arith.addf %631, %635 : vector<1x128xf32>
    %c38 = arith.constant 38 : index
    %c0_556 = arith.constant 0 : index
    %637 = vector.load %arg18[%c38, %c0_556] : memref<40x128xf32, #tpu.memory_space<vmem>>, vector<1x128xf32>
    %c38_557 = arith.constant 38 : index
    %c0_558 = arith.constant 0 : index
    %c0_559 = arith.constant 0 : index
    %638 = vector.load %arg8[%c38_557, %c0_558, %c0_559] : memref<40x128x128xf32, #tpu.memory_space<vmem>>, vector<1x128x128xf32>
    %639 = vector.shape_cast %638 : vector<1x128x128xf32> to vector<128x128xf32>
    %cst_560 = arith.constant dense<0.000000e+00> : vector<1x128xf32>
    %640 = tpu.matmul %637, %639, %cst_560 {dimension_numbers = #tpu.dot_dimension_numbers<[1], [0], [0], [1], [0, 0, 1, 1], [], []>} : vector<1x128xf32>, vector<128x128xf32>, vector<1x128xf32> -> vector<1x128xf32>
    %641 = arith.addf %636, %640 : vector<1x128xf32>
    %c39 = arith.constant 39 : index
    %c0_561 = arith.constant 0 : index
    %642 = vector.load %arg18[%c39, %c0_561] : memref<40x128xf32, #tpu.memory_space<vmem>>, vector<1x128xf32>
    %c39_562 = arith.constant 39 : index
    %c0_563 = arith.constant 0 : index
    %c0_564 = arith.constant 0 : index
    %643 = vector.load %arg8[%c39_562, %c0_563, %c0_564] : memref<40x128x128xf32, #tpu.memory_space<vmem>>, vector<1x128x128xf32>
    %644 = vector.shape_cast %643 : vector<1x128x128xf32> to vector<128x128xf32>
    %cst_565 = arith.constant dense<0.000000e+00> : vector<1x128xf32>
    %645 = tpu.matmul %642, %644, %cst_565 {dimension_numbers = #tpu.dot_dimension_numbers<[1], [0], [0], [1], [0, 0, 1, 1], [], []>} : vector<1x128xf32>, vector<128x128xf32>, vector<1x128xf32> -> vector<1x128xf32>
    %646 = arith.addf %641, %645 : vector<1x128xf32>
    %c0_566 = arith.constant 0 : index
    %c0_567 = arith.constant 0 : index
    %647 = vector.load %arg9[%c0_566, %c0_567] : memref<1x128xf32, #tpu.memory_space<vmem>>, vector<1x128xf32>
    %648 = arith.addf %646, %647 : vector<1x128xf32>
    %cst_568 = arith.constant 0.000000e+00 : f32
    %649 = vector.broadcast %cst_568 : f32 to vector<1x128xf32>
    %650 = arith.maximumf %648, %649 : vector<1x128xf32>
    %c0_569 = arith.constant 0 : index
    %c0_570 = arith.constant 0 : index
    %651 = vector.load %arg10[%c0_569, %c0_570] : memref<128x128xf32, #tpu.memory_space<vmem>>, vector<128x128xf32>
    %cst_571 = arith.constant dense<0.000000e+00> : vector<1x128xf32>
    %652 = tpu.matmul %650, %651, %cst_571 {dimension_numbers = #tpu.dot_dimension_numbers<[1], [0], [0], [1], [0, 0, 1, 1], [], []>} : vector<1x128xf32>, vector<128x128xf32>, vector<1x128xf32> -> vector<1x128xf32>
    %c0_572 = arith.constant 0 : index
    %c0_573 = arith.constant 0 : index
    %653 = vector.load %arg11[%c0_572, %c0_573] : memref<1x128xf32, #tpu.memory_space<vmem>>, vector<1x128xf32>
    %654 = arith.addf %652, %653 : vector<1x128xf32>
    %cst_574 = arith.constant dense<0xFF800000> : vector<1xf32>
    %655 = vector.multi_reduction <maximumf>, %654, %cst_574 [1] : vector<1x128xf32> to vector<1xf32>
    %656 = vector.shape_cast %655 : vector<1xf32> to vector<1x1xf32>
    %657 = vector.broadcast %656 : vector<1x1xf32> to vector<1x128xf32>
    %658 = arith.subf %654, %657 : vector<1x128xf32>
    %659 = math.exp %658 : vector<1x128xf32>
    %cst_575 = arith.constant dense<0.000000e+00> : vector<1xf32>
    %660 = vector.multi_reduction <add>, %659, %cst_575 [1] : vector<1x128xf32> to vector<1xf32>
    %661 = vector.shape_cast %660 : vector<1xf32> to vector<1x1xf32>
    %662 = vector.broadcast %661 : vector<1x1xf32> to vector<1x128xf32>
    %663 = arith.divf %659, %662 : vector<1x128xf32>
    %c0_576 = arith.constant 0 : index
    %c0_577 = arith.constant 0 : index
    %c0_578 = arith.constant 0 : index
    %664 = vector.load %arg12[%c0_576, %c0_577, %c0_578] : memref<1x1x128xf32, #tpu.memory_space<vmem>>, vector<1x1x128xf32>
    %665 = vector.shape_cast %664 : vector<1x1x128xf32> to vector<1x128xf32>
    %666 = vector.shape_cast %663 : vector<1x128xf32> to vector<1x1x128xf32>
    tpu.vector_store %arg12[%c0_576, %c0_577, %c0_578], %666 {strides = array<i32>} : memref<1x1x128xf32, #tpu.memory_space<vmem>>, vector<1x1x128xf32>,
    return
  }
  func.func @transform_0(%arg0: i32) -> (i32, i32, i32) {
    %c0_i32 = arith.constant 0 : i32
    %c0_i32_0 = arith.constant 0 : i32
    %c0_i32_1 = arith.constant 0 : i32
    return %arg0, %c0_i32, %c0_i32_0 : i32, i32, i32
  }
  func.func @transform_1(%arg0: i32) -> (i32, i32) {
    %c0_i32 = arith.constant 0 : i32
    %c0_i32_0 = arith.constant 0 : i32
    %c0_i32_1 = arith.constant 0 : i32
    return %c0_i32, %c0_i32_0 : i32, i32
  }
  func.func @transform_2(%arg0: i32) -> (i32, i32) {
    %c0_i32 = arith.constant 0 : i32
    %c0_i32_0 = arith.constant 0 : i32
    %c0_i32_1 = arith.constant 0 : i32
    return %c0_i32, %c0_i32_0 : i32, i32
  }
  func.func @transform_3(%arg0: i32) -> (i32, i32, i32) {
    %c0_i32 = arith.constant 0 : i32
    %c0_i32_0 = arith.constant 0 : i32
    %c0_i32_1 = arith.constant 0 : i32
    %c0_i32_2 = arith.constant 0 : i32
    return %c0_i32, %c0_i32_0, %c0_i32_1 : i32, i32, i32
  }
  func.func @transform_4(%arg0: i32) -> (i32, i32) {
    %c0_i32 = arith.constant 0 : i32
    %c0_i32_0 = arith.constant 0 : i32
    %c0_i32_1 = arith.constant 0 : i32
    return %c0_i32, %c0_i32_0 : i32, i32
  }
  func.func @transform_5(%arg0: i32) -> (i32, i32, i32) {
    %c0_i32 = arith.constant 0 : i32
    %c0_i32_0 = arith.constant 0 : i32
    %c0_i32_1 = arith.constant 0 : i32
    %c0_i32_2 = arith.constant 0 : i32
    return %c0_i32, %c0_i32_0, %c0_i32_1 : i32, i32, i32
  }
  func.func @transform_6(%arg0: i32) -> (i32, i32) {
    %c0_i32 = arith.constant 0 : i32
    %c0_i32_0 = arith.constant 0 : i32
    %c0_i32_1 = arith.constant 0 : i32
    return %c0_i32, %c0_i32_0 : i32, i32
  }
  func.func @transform_7(%arg0: i32) -> (i32, i32, i32) {
    %c0_i32 = arith.constant 0 : i32
    %c0_i32_0 = arith.constant 0 : i32
    %c0_i32_1 = arith.constant 0 : i32
    %c0_i32_2 = arith.constant 0 : i32
    return %c0_i32, %c0_i32_0, %c0_i32_1 : i32, i32, i32
  }
  func.func @transform_8(%arg0: i32) -> (i32, i32) {
    %c0_i32 = arith.constant 0 : i32
    %c0_i32_0 = arith.constant 0 : i32
    %c0_i32_1 = arith.constant 0 : i32
    return %c0_i32, %c0_i32_0 : i32, i32
  }
  func.func @transform_9(%arg0: i32) -> (i32, i32) {
    %c0_i32 = arith.constant 0 : i32
    %c0_i32_0 = arith.constant 0 : i32
    %c0_i32_1 = arith.constant 0 : i32
    return %c0_i32, %c0_i32_0 : i32, i32
  }
  func.func @transform_10(%arg0: i32) -> (i32, i32) {
    %c0_i32 = arith.constant 0 : i32
    %c0_i32_0 = arith.constant 0 : i32
    %c0_i32_1 = arith.constant 0 : i32
    return %c0_i32, %c0_i32_0 : i32, i32
  }
  func.func @transform_11(%arg0: i32) -> (i32, i32, i32) {
    %c0_i32 = arith.constant 0 : i32
    %c0_i32_0 = arith.constant 0 : i32
    %c0_i32_1 = arith.constant 0 : i32
    return %arg0, %c0_i32, %c0_i32_0 : i32, i32, i32
  }
}

</mosaic_0001>

<llo_original>
// kernel: net_forward_pallas.1
$region0: #{net_forward_pallas.1}
  #allocation0 [shape = 'u32[]', space=smem, size = 0x4, offset = 0x4, fixed_abs, tag = 'smem constant byte address 0x4 - core index']
  #allocation1 [shape = 'u32[72,128]{1,0:T(1,128)}', space=vmem, size = 0x9000, scoped, tag = 'internal scratch']
  #allocation2 [shape = 'f32[1248,128]{1,0:T(8,128)}', space=vmem, size = 0x9c000, scoped, tag = 'scratch operand']
  #allocation3 [shape = 'f32[480,128]{1,0:T(8,128)}', space=vmem, size = 0x3c000, scoped, tag = 'scratch operand']
  #allocation4 [shape = 'f32[448,128]{1,0:T(8,128)}', space=vmem, size = 0x38000, scoped, tag = 'scratch operand']
  #allocation5 [shape = 'f32[198,128]{1,0:T(8,128)}', space=vmem, size = 0x19000, scoped, tag = 'scratch operand']
  #allocation6 [shape = 'f32[176,128]{1,0:T(8,128)}', space=vmem, size = 0x16000, scoped, tag = 'scratch operand']
  #allocation7 [shape = 'f32[40,128]{1,0:T(8,128)}', space=vmem, size = 0x5000, scoped, tag = 'scratch operand']
  %s0 = inlined_call_operand.vmem [shape: f32[2,1248,4], index: 0, kind: input, shape index: {}]
  %s1 = inlined_call_operand.vmem [shape: f32[4,128], index: 1, kind: input, shape index: {}]
  %s2 = inlined_call_operand.vmem [shape: f32[1,128], index: 2, kind: input, shape index: {}]
  %s3 = inlined_call_operand.vmem [shape: f32[4,128,128], index: 3, kind: input, shape index: {}]
  %s4 = inlined_call_operand.vmem [shape: f32[1,128], index: 4, kind: input, shape index: {}]
  %s5 = inlined_call_operand.vmem [shape: f32[4,128,128], index: 5, kind: input, shape index: {}]
  %s6 = inlined_call_operand.vmem [shape: f32[1,128], index: 6, kind: input, shape index: {}]
  %s7 = inlined_call_operand.vmem [shape: f32[40,128,128], index: 7, kind: input, shape index: {}]
  %s8 = inlined_call_operand.vmem [shape: f32[1,128], index: 8, kind: input, shape index: {}]
  %s9 = inlined_call_operand.vmem [shape: f32[128,128], index: 9, kind: input, shape index: {}]
  %s10 = inlined_call_operand.vmem [shape: f32[1,128], index: 10, kind: input, shape index: {}]
  %s11 = inlined_call_operand.hbm [shape: f32[2,1,128], index: 11, kind: output, shape index: {}]
  %s12 = sld [smem:[#allocation0]]
  $region77: #{net_forward_pallas.1} parent=0
    _
  %s14 = ssub.s32 1, %s12
  %s15 = scalar_select 0, %s14, %s12
  $region1: #{net_forward_pallas.1} parent=0
    #allocation8 [shape = 'u8[1024]{0}', space=vmem, size = 0x400, scoped, tag = 'output window, operand 0']
    #allocation9 [shape = 's32[2]{0}', space=sflag, size = 0x8, scoped, tag = 'scoped memory for net_forward_pallas.1']
    %16 = vsyncpa [#allocation9], 0
    %s17 = scalar_lea.sflag [#allocation9], 1
    %18 = vsyncpa %s17, 0
    loop: start=0, step=1, limit=4
    $region2: #{net_forward_pallas.1} parent=1 // loop_pre_header
      _
    $region3: #{net_forward_pallas.1} parent=1 // loop_header
      %s20 = sphi 0, %s24
      %p21 = scmp.ge.s32.totalorder %s20, 4
      %s30 = sphi 0, %s32
      %s33 = sphi 0, %s30
      %s34 = sphi 0, %s33
      %s50 = sphi 0, %s34
      %s54 = sphi 0, %s54
      %s56 = sphi 0, %s54
      %s57 = sphi 0, %s56
      %s71 = sphi 0, %s57
      %s75 = sphi 0, %s75
      %s77 = sphi 0, %s75
      %s78 = sphi 0, %s77
      %s92 = sphi 0, %s78
      %s96 = sphi 0, %s96
      %s98 = sphi 0, %s96
      %s99 = sphi 0, %s98
      %s113 = sphi 0, %s99
      %s117 = sphi 0, %s117
      %s119 = sphi 0, %s117
      %s120 = sphi 0, %s119
      %s134 = sphi 0, %s120
      %s138 = sphi 0, %s138
      %s140 = sphi 0, %s138
      %s141 = sphi 0, %s140
      %s155 = sphi 0, %s141
      %s159 = sphi 0, %s159
      %s161 = sphi 0, %s159
      %s162 = sphi 0, %s161
      %s176 = sphi 0, %s162
      %s180 = sphi 0, %s180
      %s182 = sphi 0, %s180
      %s183 = sphi 0, %s182
      %s197 = sphi 0, %s183
      %s201 = sphi 0, %s201
      %s203 = sphi 0, %s201
      %s204 = sphi 0, %s203
      %s218 = sphi 0, %s204
      %s222 = sphi 0, %s222
      %s224 = sphi 0, %s222
      %s225 = sphi 0, %s224
      %s239 = sphi 0, %s225
      %s243 = sphi 0, %s243
      %s245 = sphi 0, %s243
      %s246 = sphi 0, %s245
      %s260 = sphi 0, %s246
      %s266 = sphi 0, %s268
      %s269 = sphi 0, %s266
      %s270 = sphi 0, %s269
      %s286 = sphi 0, %s270
    $region4: #{net_forward_pallas.1} parent=1 // loop_header_branch
      %23 = sbr.rel (%p21) target = $region8
    $region5: #{net_forward_pallas.1} parent=1 // loop_body
      %s25 = ssub.s32 %s20, 1
      %s26 = ssub.s32 %s20, 2
      %s27 = sadd.s32 %s20, 1
      %s28 = ssub.s32 %s20, %s27
      %p29 = scmp.eq.s32.totalorder %s28, 0
      %s31 = sadd.s32 %s30, 1
      %s32 = scalar_select %p29, %s30, %s31
      %p35 = pneg %p29
      %p36 = scmp.eq.s32.totalorder %s20, 1
      %p37 = por %p35, %p36
      %p38 = scmp.ne.s32.totalorder %s30, %s33
      %p39 = scmp.eq.s32.totalorder %s20, 0
      %p40 = por %p38, %p39
      %p41 = scmp.ne.s32.totalorder %s30, %s33
      %p42 = scmp.eq.s32.totalorder %s25, 1
      %p43 = por %p41, %p42
      %p44 = scmp.ne.s32.totalorder %s33, %s34
      %p45 = scmp.eq.s32.totalorder %s25, 0
      %p46 = por %p44, %p45
      %p47 = scmp.ne.s32.totalorder %s33, %s34
      %p48 = scmp.eq.s32.totalorder %s26, 1
      %p49 = por %p47, %p48
      %p51 = scmp.ne.s32.totalorder %s34, %s50
      %p52 = scmp.eq.s32.totalorder %s26, 0
      %p53 = por %p51, %p52
      %s55 = sadd.s32 %s54, 1
      %p58 = scmp.eq.s32.totalorder %s20, 1
      %p59 = scmp.ne.s32.totalorder %s54, %s56
      %p60 = scmp.eq.s32.totalorder %s20, 0
      %p61 = por %p59, %p60
      %p62 = scmp.ne.s32.totalorder %s54, %s56
      %p63 = scmp.eq.s32.totalorder %s25, 1
      %p64 = por %p62, %p63
      %p65 = scmp.ne.s32.totalorder %s56, %s57
      %p66 = scmp.eq.s32.totalorder %s25, 0
      %p67 = por %p65, %p66
      %p68 = scmp.ne.s32.totalorder %s56, %s57
      %p69 = scmp.eq.s32.totalorder %s26, 1
      %p70 = por %p68, %p69
      %p72 = scmp.ne.s32.totalorder %s57, %s71
      %p73 = scmp.eq.s32.totalorder %s26, 0
      %p74 = por %p72, %p73
      %s76 = sadd.s32 %s75, 1
      %p79 = scmp.eq.s32.totalorder %s20, 1
      %p80 = scmp.ne.s32.totalorder %s75, %s77
      %p81 = scmp.eq.s32.totalorder %s20, 0
      %p82 = por %p80, %p81
      %p83 = scmp.ne.s32.totalorder %s75, %s77
      %p84 = scmp.eq.s32.totalorder %s25, 1
      %p85 = por %p83, %p84
      %p86 = scmp.ne.s32.totalorder %s77, %s78
      %p87 = scmp.eq.s32.totalorder %s25, 0
      %p88 = por %p86, %p87
      %p89 = scmp.ne.s32.totalorder %s77, %s78
      %p90 = scmp.eq.s32.totalorder %s26, 1
      %p91 = por %p89, %p90
      %p93 = scmp.ne.s32.totalorder %s78, %s92
      %p94 = scmp.eq.s32.totalorder %s26, 0
      %p95 = por %p93, %p94
      %s97 = sadd.s32 %s96, 1
      %p100 = scmp.eq.s32.totalorder %s20, 1
      %p101 = scmp.ne.s32.totalorder %s96, %s98
      %p102 = scmp.eq.s32.totalorder %s20, 0
      %p103 = por %p101, %p102
      %p104 = scmp.ne.s32.totalorder %s96, %s98
      %p105 = scmp.eq.s32.totalorder %s25, 1
      %p106 = por %p104, %p105
      %p107 = scmp.ne.s32.totalorder %s98, %s99
      %p108 = scmp.eq.s32.totalorder %s25, 0
      %p109 = por %p107, %p108
      %p110 = scmp.ne.s32.totalorder %s98, %s99
      %p111 = scmp.eq.s32.totalorder %s26, 1
      %p112 = por %p110, %p111
      %p114 = scmp.ne.s32.totalorder %s99, %s113
      %p115 = scmp.eq.s32.totalorder %s26, 0
      %p116 = por %p114, %p115
      %s118 = sadd.s32 %s117, 1
      %p121 = scmp.eq.s32.totalorder %s20, 1
      %p122 = scmp.ne.s32.totalorder %s117, %s119
      %p123 = scmp.eq.s32.totalorder %s20, 0
      %p124 = por %p122, %p123
      %p125 = scmp.ne.s32.totalorder %s117, %s119
      %p126 = scmp.eq.s32.totalorder %s25, 1
      %p127 = por %p125, %p126
      %p128 = scmp.ne.s32.totalorder %s119, %s120
      %p129 = scmp.eq.s32.totalorder %s25, 0
      %p130 = por %p128, %p129
      %p131 = scmp.ne.s32.totalorder %s119, %s120
      %p132 = scmp.eq.s32.totalorder %s26, 1
      %p133 = por %p131, %p132
      %p135 = scmp.ne.s32.totalorder %s120, %s134
      %p136 = scmp.eq.s32.totalorder %s26, 0
      %p137 = por %p135, %p136
      %s139 = sadd.s32 %s138, 1
      %p142 = scmp.eq.s32.totalorder %s20, 1
      %p143 = scmp.ne.s32.totalorder %s138, %s140
      %p144 = scmp.eq.s32.totalorder %s20, 0
      %p145 = por %p143, %p144
      %p146 = scmp.ne.s32.totalorder %s138, %s140
      %p147 = scmp.eq.s32.totalorder %s25, 1
      %p148 = por %p146, %p147
      %p149 = scmp.ne.s32.totalorder %s140, %s141
      %p150 = scmp.eq.s32.totalorder %s25, 0
      %p151 = por %p149, %p150
      %p152 = scmp.ne.s32.totalorder %s140, %s141
      %p153 = scmp.eq.s32.totalorder %s26, 1
      %p154 = por %p152, %p153
      %p156 = scmp.ne.s32.totalorder %s141, %s155
      %p157 = scmp.eq.s32.totalorder %s26, 0
      %p158 = por %p156, %p157
      %s160 = sadd.s32 %s159, 1
      %p163 = scmp.eq.s32.totalorder %s20, 1
      %p164 = scmp.ne.s32.totalorder %s159, %s161
      %p165 = scmp.eq.s32.totalorder %s20, 0
      %p166 = por %p164, %p165
      %p167 = scmp.ne.s32.totalorder %s159, %s161
      %p168 = scmp.eq.s32.totalorder %s25, 1
      %p169 = por %p167, %p168
      %p170 = scmp.ne.s32.totalorder %s161, %s162
      %p171 = scmp.eq.s32.totalorder %s25, 0
      %p172 = por %p170, %p171
      %p173 = scmp.ne.s32.totalorder %s161, %s162
      %p174 = scmp.eq.s32.totalorder %s26, 1
      %p175 = por %p173, %p174
      %p177 = scmp.ne.s32.totalorder %s162, %s176
      %p178 = scmp.eq.s32.totalorder %s26, 0
      %p179 = por %p177, %p178
      %s181 = sadd.s32 %s180, 1
      %p184 = scmp.eq.s32.totalorder %s20, 1
      %p185 = scmp.ne.s32.totalorder %s180, %s182
      %p186 = scmp.eq.s32.totalorder %s20, 0
      %p187 = por %p185, %p186
      %p188 = scmp.ne.s32.totalorder %s180, %s182
      %p189 = scmp.eq.s32.totalorder %s25, 1
      %p190 = por %p188, %p189
      %p191 = scmp.ne.s32.totalorder %s182, %s183
      %p192 = scmp.eq.s32.totalorder %s25, 0
      %p193 = por %p191, %p192
      %p194 = scmp.ne.s32.totalorder %s182, %s183
      %p195 = scmp.eq.s32.totalorder %s26, 1
      %p196 = por %p194, %p195
      %p198 = scmp.ne.s32.totalorder %s183, %s197
      %p199 = scmp.eq.s32.totalorder %s26, 0
      %p200 = por %p198, %p199
      %s202 = sadd.s32 %s201, 1
      %p205 = scmp.eq.s32.totalorder %s20, 1
      %p206 = scmp.ne.s32.totalorder %s201, %s203
      %p207 = scmp.eq.s32.totalorder %s20, 0
      %p208 = por %p206, %p207
      %p209 = scmp.ne.s32.totalorder %s201, %s203
      %p210 = scmp.eq.s32.totalorder %s25, 1
      %p211 = por %p209, %p210
      %p212 = scmp.ne.s32.totalorder %s203, %s204
      %p213 = scmp.eq.s32.totalorder %s25, 0
      %p214 = por %p212, %p213
      %p215 = scmp.ne.s32.totalorder %s203, %s204
      %p216 = scmp.eq.s32.totalorder %s26, 1
      %p217 = por %p215, %p216
      %p219 = scmp.ne.s32.totalorder %s204, %s218
      %p220 = scmp.eq.s32.totalorder %s26, 0
      %p221 = por %p219, %p220
      %s223 = sadd.s32 %s222, 1
      %p226 = scmp.eq.s32.totalorder %s20, 1
      %p227 = scmp.ne.s32.totalorder %s222, %s224
      %p228 = scmp.eq.s32.totalorder %s20, 0
      %p229 = por %p227, %p228
      %p230 = scmp.ne.s32.totalorder %s222, %s224
      %p231 = scmp.eq.s32.totalorder %s25, 1
      %p232 = por %p230, %p231
      %p233 = scmp.ne.s32.totalorder %s224, %s225
      %p234 = scmp.eq.s32.totalorder %s25, 0
      %p235 = por %p233, %p234
      %p236 = scmp.ne.s32.totalorder %s224, %s225
      %p237 = scmp.eq.s32.totalorder %s26, 1
      %p238 = por %p236, %p237
      %p240 = scmp.ne.s32.totalorder %s225, %s239
      %p241 = scmp.eq.s32.totalorder %s26, 0
      %p242 = por %p240, %p241
      %s244 = sadd.s32 %s243, 1
      %p247 = scmp.eq.s32.totalorder %s20, 1
      %p248 = scmp.ne.s32.totalorder %s243, %s245
      %p249 = scmp.eq.s32.totalorder %s20, 0
      %p250 = por %p248, %p249
      %p251 = scmp.ne.s32.totalorder %s243, %s245
      %p252 = scmp.eq.s32.totalorder %s25, 1
      %p253 = por %p251, %p252
      %p254 = scmp.ne.s32.totalorder %s245, %s246
      %p255 = scmp.eq.s32.totalorder %s25, 0
      %p256 = por %p254, %p255
      %p257 = scmp.ne.s32.totalorder %s245, %s246
      %p258 = scmp.eq.s32.totalorder %s26, 1
      %p259 = por %p257, %p258
      %p261 = scmp.ne.s32.totalorder %s246, %s260
      %p262 = scmp.eq.s32.totalorder %s26, 0
      %p263 = por %p261, %p262
      %s264 = ssub.s32 %s20, %s27
      %p265 = scmp.eq.s32.totalorder %s264, 0
      %s267 = sadd.s32 %s266, 1
      %s268 = scalar_select %p265, %s266, %s267
      %p271 = pneg %p265
      %p272 = scmp.eq.s32.totalorder %s20, 1
      %p273 = por %p271, %p272
      %p274 = scmp.ne.s32.totalorder %s266, %s269
      %p275 = scmp.eq.s32.totalorder %s20, 0
      %p276 = por %p274, %p275
      %p277 = scmp.ne.s32.totalorder %s266, %s269
      %p278 = scmp.eq.s32.totalorder %s25, 1
      %p279 = por %p277, %p278
      %p280 = scmp.ne.s32.totalorder %s269, %s270
      %p281 = scmp.eq.s32.totalorder %s25, 0
      %p282 = por %p280, %p281
      %p283 = scmp.ne.s32.totalorder %s269, %s270
      %p284 = scmp.eq.s32.totalorder %s26, 1
      %p285 = por %p283, %p284
      %p287 = scmp.ne.s32.totalorder %s270, %s286
      %p288 = scmp.eq.s32.totalorder %s26, 0
      %p289 = por %p287, %p288
      %p290 = scmp.le.s32.totalorder 1, %s20
      %p291 = scmp.lt.s32.totalorder %s20, 3
      %p292 = pnand %p290, %p291
      %p293 = pneg %p292
      // Predicated region
      $region9: #{net_forward_pallas.1} parent=5 // pred_check
        _
      $region10: #{net_forward_pallas.1} parent=5 // pred_check_branch
        %295 = sbr.rel (%p292) target = $region12
      $region11: #{net_forward_pallas.1} parent=5 // pred_region
        %s296 = ssub.s32 %s20, 1
        // Predicated region
        $region13: #{net_forward_pallas.1} parent=11 // pred_check
          %p297 = pneg %p67
        $region14: #{net_forward_pallas.1} parent=11 // pred_check_branch
          %299 = sbr.rel (%p297) target = $region16
        $region15: #{net_forward_pallas.1} parent=11 // pred_region
          _
        $region16: #{net_forward_pallas.1} parent=11 // pred_fallthru
          _
        // Predicated region
        $region17: #{net_forward_pallas.1} parent=11 // pred_check
          %p300 = pneg %p88
        $region18: #{net_forward_pallas.1} parent=11 // pred_check_branch
          %302 = sbr.rel (%p300) target = $region20
        $region19: #{net_forward_pallas.1} parent=11 // pred_region
          _
        $region20: #{net_forward_pallas.1} parent=11 // pred_fallthru
          _
        // Predicated region
        $region21: #{net_forward_pallas.1} parent=11 // pred_check
          %p303 = pneg %p109
        $region22: #{net_forward_pallas.1} parent=11 // pred_check_branch
          %305 = sbr.rel (%p303) target = $region24
        $region23: #{net_forward_pallas.1} parent=11 // pred_region
          _
        $region24: #{net_forward_pallas.1} parent=11 // pred_fallthru
          _
        // Predicated region
        $region25: #{net_forward_pallas.1} parent=11 // pred_check
          %p306 = pneg %p130
        $region26: #{net_forward_pallas.1} parent=11 // pred_check_branch
          %308 = sbr.rel (%p306) target = $region28
        $region27: #{net_forward_pallas.1} parent=11 // pred_region
          _
        $region28: #{net_forward_pallas.1} parent=11 // pred_fallthru
          _
        // Predicated region
        $region29: #{net_forward_pallas.1} parent=11 // pred_check
          %p309 = pneg %p151
        $region30: #{net_forward_pallas.1} parent=11 // pred_check_branch
          %311 = sbr.rel (%p309) target = $region32
        $region31: #{net_forward_pallas.1} parent=11 // pred_region
          _
        $region32: #{net_forward_pallas.1} parent=11 // pred_fallthru
          _
        // Predicated region
        $region33: #{net_forward_pallas.1} parent=11 // pred_check
          %p312 = pneg %p172
        $region34: #{net_forward_pallas.1} parent=11 // pred_check_branch
          %314 = sbr.rel (%p312) target = $region36
        $region35: #{net_forward_pallas.1} parent=11 // pred_region
          _
        $region36: #{net_forward_pallas.1} parent=11 // pred_fallthru
          _
        // Predicated region
        $region37: #{net_forward_pallas.1} parent=11 // pred_check
          %p315 = pneg %p193
        $region38: #{net_forward_pallas.1} parent=11 // pred_check_branch
          %317 = sbr.rel (%p315) target = $region40
        $region39: #{net_forward_pallas.1} parent=11 // pred_region
          _
        $region40: #{net_forward_pallas.1} parent=11 // pred_fallthru
          _
        // Predicated region
        $region41: #{net_forward_pallas.1} parent=11 // pred_check
          %p318 = pneg %p214
        $region42: #{net_forward_pallas.1} parent=11 // pred_check_branch
          %320 = sbr.rel (%p318) target = $region44
        $region43: #{net_forward_pallas.1} parent=11 // pred_region
          _
        $region44: #{net_forward_pallas.1} parent=11 // pred_fallthru
          _
        // Predicated region
        $region45: #{net_forward_pallas.1} parent=11 // pred_check
          %p321 = pneg %p235
        $region46: #{net_forward_pallas.1} parent=11 // pred_check_branch
          %323 = sbr.rel (%p321) target = $region48
        $region47: #{net_forward_pallas.1} parent=11 // pred_region
          _
        $region48: #{net_forward_pallas.1} parent=11 // pred_fallthru
          _
        // Predicated region
        $region49: #{net_forward_pallas.1} parent=11 // pred_check
          %p324 = pneg %p256
        $region50: #{net_forward_pallas.1} parent=11 // pred_check_branch
          %326 = sbr.rel (%p324) target = $region52
        $region51: #{net_forward_pallas.1} parent=11 // pred_region
          _
        $region52: #{net_forward_pallas.1} parent=11 // pred_fallthru
          _
      $region12: #{net_forward_pallas.1} parent=5 // pred_fallthru
        _
      %p327 = scmp.lt.s32.totalorder %s20, 2
      // Predicated region
      $region53: #{net_forward_pallas.1} parent=5 // pred_check
        %p328 = pneg %p327
      $region54: #{net_forward_pallas.1} parent=5 // pred_check_branch
        %330 = sbr.rel (%p328) target = $region56
      $region55: #{net_forward_pallas.1} parent=5 // pred_region
        // Predicated region
        $region57: #{net_forward_pallas.1} parent=55 // pred_check
          %p331 = pneg %p40
        $region58: #{net_forward_pallas.1} parent=55 // pred_check_branch
          %333 = sbr.rel (%p331) target = $region60
        $region59: #{net_forward_pallas.1} parent=55 // pred_region
          %p334 = scmp.lt.s32.totalorder %s20, 1
          %s335 = scalar_select %p334, %s20, 1
          %s336 = smul.addr %s335, 156
          %s337 = smul.addr %s336, 8
          %s338 = scalar_lea.vmem %s0, %s337
        $region60: #{net_forward_pallas.1} parent=55 // pred_fallthru
          _
      $region56: #{net_forward_pallas.1} parent=5 // pred_fallthru
        _
      %p339 = scmp.le.s32.totalorder 1, %s20
      %p340 = scmp.lt.s32.totalorder %s20, 3
      %p341 = pnand %p339, %p340
      %p342 = pneg %p341
      // Predicated region
      $region61: #{net_forward_pallas.1} parent=5 // pred_check
        _
      $region62: #{net_forward_pallas.1} parent=5 // pred_check_branch
        %344 = sbr.rel (%p341) target = $region64
      $region63: #{net_forward_pallas.1} parent=5 // pred_region
        %s345 = ssub.s32 %s20, 1
        %p346 = scmp.lt.s32.totalorder %s25, 1
        %s347 = scalar_select %p346, %s25, 1
        %s348 = smul.addr %s347, 156
        %s349 = smul.addr %s348, 8
        %s350 = scalar_lea.vmem %s0, %s349
        %p351 = pneg %p46
        %p352 = pneg %p43
        %p353 = pneg %p67
        %p354 = pneg %p64
        %p355 = pneg %p88
        %p356 = pneg %p85
        %p357 = pneg %p109
        %p358 = pneg %p106
        %p359 = pneg %p130
        %p360 = pneg %p127
        %p361 = pneg %p151
        %p362 = pneg %p148
        %p363 = pneg %p172
        %p364 = pneg %p169
        %p365 = pneg %p193
        %p366 = pneg %p190
        %p367 = pneg %p214
        %p368 = pneg %p211
        %p369 = pneg %p235
        %p370 = pneg %p232
        %p371 = pneg %p256
        %p372 = pneg %p253
        %p373 = pneg %p282
        %p374 = pneg %p279
        %s375 = sand.u32 %s269, 1
        %s376 = scalar_lea.sflag [#allocation9], %s375
        %s377 = sand.u32 %s269, 1
        %s378 = scalar_lea.vmem [#allocation8], %s377
        %p379 = scmp.lt.s32.totalorder %s25, 1
        %s380 = scalar_select %p379, %s25, 1
        %s381 = smul.addr %s380, 156
        %s382 = smul.addr %s381, 8
        %s383 = scalar_lea.vmem %s0, %s382
        %v384 = vld [vmem:[%s383] sm:$0xff]
        %v385 = vld [vmem:[%s383 + $0x8] sm:$0xff]
        %v386 = vld [vmem:[%s383 + $0x10] sm:$0xff]
        %v387 = vld [vmem:[%s383 + $0x18] sm:$0xff]
        %v388 = vld [vmem:[%s383 + $0x20] sm:$0xff]
        %v389 = vld [vmem:[%s383 + $0x28] sm:$0xff]
        %v390 = vld [vmem:[%s383 + $0x30] sm:$0xff]
        %v391 = vld [vmem:[%s383 + $0x38] sm:$0xff]
        %v392 = vld [vmem:[%s383 + $0x40] sm:$0xff]
        %v393 = vld [vmem:[%s383 + $0x48] sm:$0xff]
        %v394 = vld [vmem:[%s383 + $0x50] sm:$0xff]
        %v395 = vld [vmem:[%s383 + $0x58] sm:$0xff]
        %v396 = vld [vmem:[%s383 + $0x60] sm:$0xff]
        %v397 = vld [vmem:[%s383 + $0x68] sm:$0xff]
        %v398 = vld [vmem:[%s383 + $0x70] sm:$0xff]
        %v399 = vld [vmem:[%s383 + $0x78] sm:$0xff]
        %v400 = vld [vmem:[%s383 + $0x80] sm:$0xff]
        %v401 = vld [vmem:[%s383 + $0x88] sm:$0xff]
        %v402 = vld [vmem:[%s383 + $0x90] sm:$0xff]
        %v403 = vld [vmem:[%s383 + $0x98] sm:$0xff]
        %v404 = vld [vmem:[%s383 + $0xa0] sm:$0xff]
        %v405 = vld [vmem:[%s383 + $0xa8] sm:$0xff]
        %v406 = vld [vmem:[%s383 + $0xb0] sm:$0xff]
        %v407 = vld [vmem:[%s383 + $0xb8] sm:$0xff]
        %v408 = vld [vmem:[%s383 + $0xc0] sm:$0xff]
        %v409 = vld [vmem:[%s383 + $0xc8] sm:$0xff]
        %v410 = vld [vmem:[%s383 + $0xd0] sm:$0xff]
        %v411 = vld [vmem:[%s383 + $0xd8] sm:$0xff]
        %v412 = vld [vmem:[%s383 + $0xe0] sm:$0xff]
        %v413 = vld [vmem:[%s383 + $0xe8] sm:$0xff]
        %v414 = vld [vmem:[%s383 + $0xf0] sm:$0xff]
        %v415 = vld [vmem:[%s383 + $0xf8] sm:$0xff]
        %v416 = vld [vmem:[%s383 + $0x100] sm:$0xff]
        %v417 = vld [vmem:[%s383 + $0x108] sm:$0xff]
        %v418 = vld [vmem:[%s383 + $0x110] sm:$0xff]
        %v419 = vld [vmem:[%s383 + $0x118] sm:$0xff]
        %v420 = vld [vmem:[%s383 + $0x120] sm:$0xff]
        %v421 = vld [vmem:[%s383 + $0x128] sm:$0xff]
        %v422 = vld [vmem:[%s383 + $0x130] sm:$0xff]
        %v423 = vld [vmem:[%s383 + $0x138] sm:$0xff]
        %v424 = vld [vmem:[%s383 + $0x140] sm:$0xff]
        %v425 = vld [vmem:[%s383 + $0x148] sm:$0xff]
        %v426 = vld [vmem:[%s383 + $0x150] sm:$0xff]
        %v427 = vld [vmem:[%s383 + $0x158] sm:$0xff]
        %v428 = vld [vmem:[%s383 + $0x160] sm:$0xff]
        %v429 = vld [vmem:[%s383 + $0x168] sm:$0xff]
        %v430 = vld [vmem:[%s383 + $0x170] sm:$0xff]
        %v431 = vld [vmem:[%s383 + $0x178] sm:$0xff]
        %v432 = vld [vmem:[%s383 + $0x180] sm:$0xff]
        %v433 = vld [vmem:[%s383 + $0x188] sm:$0xff]
        %v434 = vld [vmem:[%s383 + $0x190] sm:$0xff]
        %v435 = vld [vmem:[%s383 + $0x198] sm:$0xff]
        %v436 = vld [vmem:[%s383 + $0x1a0] sm:$0xff]
        %v437 = vld [vmem:[%s383 + $0x1a8] sm:$0xff]
        %v438 = vld [vmem:[%s383 + $0x1b0] sm:$0xff]
        %v439 = vld [vmem:[%s383 + $0x1b8] sm:$0xff]
        %v440 = vld [vmem:[%s383 + $0x1c0] sm:$0xff]
        %v441 = vld [vmem:[%s383 + $0x1c8] sm:$0xff]
        %v442 = vld [vmem:[%s383 + $0x1d0] sm:$0xff]
        %v443 = vld [vmem:[%s383 + $0x1d8] sm:$0xff]
        %v444 = vld [vmem:[%s383 + $0x1e0] sm:$0xff]
        %v445 = vld [vmem:[%s383 + $0x1e8] sm:$0xff]
        %v446 = vld [vmem:[%s383 + $0x1f0] sm:$0xff]
        %v447 = vld [vmem:[%s383 + $0x1f8] sm:$0xff]
        %v448 = vld [vmem:[%s383 + $0x200] sm:$0xff]
        %v449 = vld [vmem:[%s383 + $0x208] sm:$0xff]
        %v450 = vld [vmem:[%s383 + $0x210] sm:$0xff]
        %v451 = vld [vmem:[%s383 + $0x218] sm:$0xff]
        %v452 = vld [vmem:[%s383 + $0x220] sm:$0xff]
        %v453 = vld [vmem:[%s383 + $0x228] sm:$0xff]
        %v454 = vld [vmem:[%s383 + $0x230] sm:$0xff]
        %v455 = vld [vmem:[%s383 + $0x238] sm:$0xff]
        %v456 = vld [vmem:[%s383 + $0x240] sm:$0xff]
        %v457 = vld [vmem:[%s383 + $0x248] sm:$0xff]
        %v458 = vld [vmem:[%s383 + $0x250] sm:$0xff]
        %v459 = vld [vmem:[%s383 + $0x258] sm:$0xff]
        %v460 = vld [vmem:[%s383 + $0x260] sm:$0xff]
        %v461 = vld [vmem:[%s383 + $0x268] sm:$0xff]
        %v462 = vld [vmem:[%s383 + $0x270] sm:$0xff]
        %v463 = vld [vmem:[%s383 + $0x278] sm:$0xff]
        %v464 = vld [vmem:[%s383 + $0x280] sm:$0xff]
        %v465 = vld [vmem:[%s383 + $0x288] sm:$0xff]
        %v466 = vld [vmem:[%s383 + $0x290] sm:$0xff]
        %v467 = vld [vmem:[%s383 + $0x298] sm:$0xff]
        %v468 = vld [vmem:[%s383 + $0x2a0] sm:$0xff]
        %v469 = vld [vmem:[%s383 + $0x2a8] sm:$0xff]
        %v470 = vld [vmem:[%s383 + $0x2b0] sm:$0xff]
        %v471 = vld [vmem:[%s383 + $0x2b8] sm:$0xff]
        %v472 = vld [vmem:[%s383 + $0x2c0] sm:$0xff]
        %v473 = vld [vmem:[%s383 + $0x2c8] sm:$0xff]
        %v474 = vld [vmem:[%s383 + $0x2d0] sm:$0xff]
        %v475 = vld [vmem:[%s383 + $0x2d8] sm:$0xff]
        %v476 = vld [vmem:[%s383 + $0x2e0] sm:$0xff]
        %v477 = vld [vmem:[%s383 + $0x2e8] sm:$0xff]
        %v478 = vld [vmem:[%s383 + $0x2f0] sm:$0xff]
        %v479 = vld [vmem:[%s383 + $0x2f8] sm:$0xff]
        %v480 = vld [vmem:[%s383 + $0x300] sm:$0xff]
        %v481 = vld [vmem:[%s383 + $0x308] sm:$0xff]
        %v482 = vld [vmem:[%s383 + $0x310] sm:$0xff]
        %v483 = vld [vmem:[%s383 + $0x318] sm:$0xff]
        %v484 = vld [vmem:[%s383 + $0x320] sm:$0xff]
        %v485 = vld [vmem:[%s383 + $0x328] sm:$0xff]
        %v486 = vld [vmem:[%s383 + $0x330] sm:$0xff]
        %v487 = vld [vmem:[%s383 + $0x338] sm:$0xff]
        %v488 = vld [vmem:[%s383 + $0x340] sm:$0xff]
        %v489 = vld [vmem:[%s383 + $0x348] sm:$0xff]
        %v490 = vld [vmem:[%s383 + $0x350] sm:$0xff]
        %v491 = vld [vmem:[%s383 + $0x358] sm:$0xff]
        %v492 = vld [vmem:[%s383 + $0x360] sm:$0xff]
        %v493 = vld [vmem:[%s383 + $0x368] sm:$0xff]
        %v494 = vld [vmem:[%s383 + $0x370] sm:$0xff]
        %v495 = vld [vmem:[%s383 + $0x378] sm:$0xff]
        %v496 = vld [vmem:[%s383 + $0x380] sm:$0xff]
        %v497 = vld [vmem:[%s383 + $0x388] sm:$0xff]
        %v498 = vld [vmem:[%s383 + $0x390] sm:$0xff]
        %v499 = vld [vmem:[%s383 + $0x398] sm:$0xff]
        %v500 = vld [vmem:[%s383 + $0x3a0] sm:$0xff]
        %v501 = vld [vmem:[%s383 + $0x3a8] sm:$0xff]
        %v502 = vld [vmem:[%s383 + $0x3b0] sm:$0xff]
        %v503 = vld [vmem:[%s383 + $0x3b8] sm:$0xff]
        %v504 = vld [vmem:[%s383 + $0x3c0] sm:$0xff]
        %v505 = vld [vmem:[%s383 + $0x3c8] sm:$0xff]
        %v506 = vld [vmem:[%s383 + $0x3d0] sm:$0xff]
        %v507 = vld [vmem:[%s383 + $0x3d8] sm:$0xff]
        %v508 = vld [vmem:[%s383 + $0x3e0] sm:$0xff]
        %v509 = vld [vmem:[%s383 + $0x3e8] sm:$0xff]
        %v510 = vld [vmem:[%s383 + $0x3f0] sm:$0xff]
        %v511 = vld [vmem:[%s383 + $0x3f8] sm:$0xff]
        %v512 = vld [vmem:[%s383 + $0x400] sm:$0xff]
        %v513 = vld [vmem:[%s383 + $0x408] sm:$0xff]
        %v514 = vld [vmem:[%s383 + $0x410] sm:$0xff]
        %v515 = vld [vmem:[%s383 + $0x418] sm:$0xff]
        %v516 = vld [vmem:[%s383 + $0x420] sm:$0xff]
        %v517 = vld [vmem:[%s383 + $0x428] sm:$0xff]
        %v518 = vld [vmem:[%s383 + $0x430] sm:$0xff]
        %v519 = vld [vmem:[%s383 + $0x438] sm:$0xff]
        %v520 = vld [vmem:[%s383 + $0x440] sm:$0xff]
        %v521 = vld [vmem:[%s383 + $0x448] sm:$0xff]
        %v522 = vld [vmem:[%s383 + $0x450] sm:$0xff]
        %v523 = vld [vmem:[%s383 + $0x458] sm:$0xff]
        %v524 = vld [vmem:[%s383 + $0x460] sm:$0xff]
        %v525 = vld [vmem:[%s383 + $0x468] sm:$0xff]
        %v526 = vld [vmem:[%s383 + $0x470] sm:$0xff]
        %v527 = vld [vmem:[%s383 + $0x478] sm:$0xff]
        %v528 = vld [vmem:[%s383 + $0x480] sm:$0xff]
        %v529 = vld [vmem:[%s383 + $0x488] sm:$0xff]
        %v530 = vld [vmem:[%s383 + $0x490] sm:$0xff]
        %v531 = vld [vmem:[%s383 + $0x498] sm:$0xff]
        %v532 = vld [vmem:[%s383 + $0x4a0] sm:$0xff]
        %v533 = vld [vmem:[%s383 + $0x4a8] sm:$0xff]
        %v534 = vld [vmem:[%s383 + $0x4b0] sm:$0xff]
        %v535 = vld [vmem:[%s383 + $0x4b8] sm:$0xff]
        %v536 = vld [vmem:[%s383 + $0x4c0] sm:$0xff]
        %v537 = vld [vmem:[%s383 + $0x4c8] sm:$0xff]
        %v538 = vld [vmem:[%s383 + $0x4d0] sm:$0xff]
        %v539 = vld [vmem:[%s383 + $0x4d8] sm:$0xff]
        %v540 = vld [vmem:[%s1] sm:$0xf]
        %v541 = vld [vmem:[%s2] sm:$0x1]
        %v543 = vperm.slane %v541, 0
        %vm545 = vcmask 31744
        %v547 = vsel %vm545, %v384, 0
        %v550 = vsel %vm545, %v385, 0
        %v553 = vsel %vm545, %v386, 0
        %v556 = vsel %vm545, %v387, 0
        %v559 = vsel %vm545, %v388, 0
        %v562 = vsel %vm545, %v389, 0
        %v565 = vsel %vm545, %v390, 0
        %v568 = vsel %vm545, %v391, 0
        %v571 = vsel %vm545, %v392, 0
        %v574 = vsel %vm545, %v393, 0
        %v577 = vsel %vm545, %v394, 0
        %v580 = vsel %vm545, %v395, 0
        %v583 = vsel %vm545, %v396, 0
        %v586 = vsel %vm545, %v397, 0
        %v589 = vsel %vm545, %v398, 0
        %v592 = vsel %vm545, %v399, 0
        %v595 = vsel %vm545, %v400, 0
        %v598 = vsel %vm545, %v401, 0
        %v601 = vsel %vm545, %v402, 0
        %v604 = vsel %vm545, %v403, 0
        %v607 = vsel %vm545, %v404, 0
        %v610 = vsel %vm545, %v405, 0
        %v613 = vsel %vm545, %v406, 0
        %v616 = vsel %vm545, %v407, 0
        %v619 = vsel %vm545, %v408, 0
        %v622 = vsel %vm545, %v409, 0
        %v625 = vsel %vm545, %v410, 0
        %v628 = vsel %vm545, %v411, 0
        %v631 = vsel %vm545, %v412, 0
        %v634 = vsel %vm545, %v413, 0
        %v637 = vsel %vm545, %v414, 0
        %v640 = vsel %vm545, %v415, 0
        %v643 = vsel %vm545, %v416, 0
        %v646 = vsel %vm545, %v417, 0
        %v649 = vsel %vm545, %v418, 0
        %v652 = vsel %vm545, %v419, 0
        %v655 = vsel %vm545, %v420, 0
        %v658 = vsel %vm545, %v421, 0
        %v661 = vsel %vm545, %v422, 0
        %v664 = vsel %vm545, %v423, 0
        %v667 = vsel %vm545, %v424, 0
        %v670 = vsel %vm545, %v425, 0
        %v673 = vsel %vm545, %v426, 0
        %v676 = vsel %vm545, %v427, 0
        %v679 = vsel %vm545, %v428, 0
        %v682 = vsel %vm545, %v429, 0
        %v685 = vsel %vm545, %v430, 0
        %v688 = vsel %vm545, %v431, 0
        %v691 = vsel %vm545, %v432, 0
        %v694 = vsel %vm545, %v433, 0
        %v697 = vsel %vm545, %v434, 0
        %v700 = vsel %vm545, %v435, 0
        %v703 = vsel %vm545, %v436, 0
        %v706 = vsel %vm545, %v437, 0
        %v709 = vsel %vm545, %v438, 0
        %v712 = vsel %vm545, %v439, 0
        %v715 = vsel %vm545, %v440, 0
        %v718 = vsel %vm545, %v441, 0
        %v721 = vsel %vm545, %v442, 0
        %v724 = vsel %vm545, %v443, 0
        %v727 = vsel %vm545, %v444, 0
        %v730 = vsel %vm545, %v445, 0
        %v733 = vsel %vm545, %v446, 0
        %v736 = vsel %vm545, %v447, 0
        %v739 = vsel %vm545, %v448, 0
        %v742 = vsel %vm545, %v449, 0
        %v745 = vsel %vm545, %v450, 0
        %v748 = vsel %vm545, %v451, 0
        %v751 = vsel %vm545, %v452, 0
        %v754 = vsel %vm545, %v453, 0
        %v757 = vsel %vm545, %v454, 0
        %v760 = vsel %vm545, %v455, 0
        %v763 = vsel %vm545, %v456, 0
        %v766 = vsel %vm545, %v457, 0
        %v769 = vsel %vm545, %v458, 0
        %v772 = vsel %vm545, %v459, 0
        %v775 = vsel %vm545, %v460, 0
        %v778 = vsel %vm545, %v461, 0
        %v781 = vsel %vm545, %v462, 0
        %v784 = vsel %vm545, %v463, 0
        %v787 = vsel %vm545, %v464, 0
        %v790 = vsel %vm545, %v465, 0
        %v793 = vsel %vm545, %v466, 0
        %v796 = vsel %vm545, %v467, 0
        %v799 = vsel %vm545, %v468, 0
        %v802 = vsel %vm545, %v469, 0
        %v805 = vsel %vm545, %v470, 0
        %v808 = vsel %vm545, %v471, 0
        %v811 = vsel %vm545, %v472, 0
        %v814 = vsel %vm545, %v473, 0
        %v817 = vsel %vm545, %v474, 0
        %v820 = vsel %vm545, %v475, 0
        %v823 = vsel %vm545, %v476, 0
        %v826 = vsel %vm545, %v477, 0
        %v829 = vsel %vm545, %v478, 0
        %v832 = vsel %vm545, %v479, 0
        %v835 = vsel %vm545, %v480, 0
        %v838 = vsel %vm545, %v481, 0
        %v841 = vsel %vm545, %v482, 0
        %v844 = vsel %vm545, %v483, 0
        %v847 = vsel %vm545, %v484, 0
        %v850 = vsel %vm545, %v485, 0
        %v853 = vsel %vm545, %v486, 0
        %v856 = vsel %vm545, %v487, 0
        %v859 = vsel %vm545, %v488, 0
        %v862 = vsel %vm545, %v489, 0
        %v865 = vsel %vm545, %v490, 0
        %v868 = vsel %vm545, %v491, 0
        %v871 = vsel %vm545, %v492, 0
        %v874 = vsel %vm545, %v493, 0
        %v877 = vsel %vm545, %v494, 0
        %v880 = vsel %vm545, %v495, 0
        %v883 = vsel %vm545, %v496, 0
        %v886 = vsel %vm545, %v497, 0
        %v889 = vsel %vm545, %v498, 0
        %v892 = vsel %vm545, %v499, 0
        %v895 = vsel %vm545, %v500, 0
        %v898 = vsel %vm545, %v501, 0
        %v901 = vsel %vm545, %v502, 0
        %v904 = vsel %vm545, %v503, 0
        %v907 = vsel %vm545, %v504, 0
        %v910 = vsel %vm545, %v505, 0
        %v913 = vsel %vm545, %v506, 0
        %v916 = vsel %vm545, %v507, 0
        %v919 = vsel %vm545, %v508, 0
        %v922 = vsel %vm545, %v509, 0
        %v925 = vsel %vm545, %v510, 0
        %v928 = vsel %vm545, %v511, 0
        %v931 = vsel %vm545, %v512, 0
        %v934 = vsel %vm545, %v513, 0
        %v937 = vsel %vm545, %v514, 0
        %v940 = vsel %vm545, %v515, 0
        %v943 = vsel %vm545, %v516, 0
        %v946 = vsel %vm545, %v517, 0
        %v949 = vsel %vm545, %v518, 0
        %v952 = vsel %vm545, %v519, 0
        %v955 = vsel %vm545, %v520, 0
        %v958 = vsel %vm545, %v521, 0
        %v961 = vsel %vm545, %v522, 0
        %v964 = vsel %vm545, %v523, 0
        %v967 = vsel %vm545, %v524, 0
        %v970 = vsel %vm545, %v525, 0
        %v973 = vsel %vm545, %v526, 0
        %v976 = vsel %vm545, %v527, 0
        %v979 = vsel %vm545, %v528, 0
        %v982 = vsel %vm545, %v529, 0
        %v985 = vsel %vm545, %v530, 0
        %v988 = vsel %vm545, %v531, 0
        %v991 = vsel %vm545, %v532, 0
        %v994 = vsel %vm545, %v533, 0
        %v997 = vsel %vm545, %v534, 0
        %v1000 = vsel %vm545, %v535, 0
        %v1003 = vsel %vm545, %v536, 0
        %v1006 = vsel %vm545, %v537, 0
        %v1009 = vsel %vm545, %v538, 0
        %v1012 = vsel %vm545, %v539, 0
        %vm1014 = vcmask 1043456
        %v1016 = vsel %vm1014, %v540, 0
        %1018 = vmatpush.msra.mxu0 0.0
        %1019 = vmatpush.msra.mxu0 0.0
        %1020 = vmatpush.msra.mxu0 0.0
        %1021 = vmatpush.msra.mxu0 0.0
        %1022 = vmatpush.msra.mxu0 0.0
        %1023 = vmatpush.msra.mxu0 0.0
        %1024 = vmatpush.msra.mxu0 0.0
        %1025 = vmatpush.msra.mxu0 0.0
        %1026 = vmatpush.msra.mxu0 0.0
        %1027 = vmatpush.msra.mxu0 0.0
        %1028 = vmatpush.msra.mxu0 0.0
        %1029 = vmatpush.msra.mxu0 0.0
        %1030 = vmatpush.msra.mxu0 0.0
        %1031 = vmatpush.msra.mxu0 0.0
        %1032 = vmatpush.msra.mxu0 0.0
        %1033 = vmatpush.msra.mxu0 %v1016
        %1034 = vmatmul.f32.gmra.mxu0 %v547
        %v1035 = vpop.f32.mrf.mxu0
        %v1036 = vadd.f32 %v543, %v1035
        %1037 = vmatmul.f32.gmra.mxu0 %v550
        %v1038 = vpop.f32.mrf.mxu0
        %v1039 = vadd.f32 %v543, %v1038
        %1040 = vmatmul.f32.gmra.mxu0 %v553
        %v1041 = vpop.f32.mrf.mxu0
        %v1042 = vadd.f32 %v543, %v1041
        %1043 = vmatmul.f32.gmra.mxu0 %v556
        %v1044 = vpop.f32.mrf.mxu0
        %v1045 = vadd.f32 %v543, %v1044
        %1046 = vmatmul.f32.gmra.mxu0 %v559
        %v1047 = vpop.f32.mrf.mxu0
        %v1048 = vadd.f32 %v543, %v1047
        %1049 = vmatmul.f32.gmra.mxu0 %v562
        %v1050 = vpop.f32.mrf.mxu0
        %v1051 = vadd.f32 %v543, %v1050
        %1052 = vmatmul.f32.gmra.mxu0 %v565
        %v1053 = vpop.f32.mrf.mxu0
        %v1054 = vadd.f32 %v543, %v1053
        %1055 = vmatmul.f32.gmra.mxu0 %v568
        %v1056 = vpop.f32.mrf.mxu0
        %v1057 = vadd.f32 %v543, %v1056
        %1058 = vmatmul.f32.gmra.mxu0 %v571
        %v1059 = vpop.f32.mrf.mxu0
        %v1060 = vadd.f32 %v543, %v1059
        %1061 = vmatmul.f32.gmra.mxu0 %v574
        %v1062 = vpop.f32.mrf.mxu0
        %v1063 = vadd.f32 %v543, %v1062
        %1064 = vmatmul.f32.gmra.mxu0 %v577
        %v1065 = vpop.f32.mrf.mxu0
        %v1066 = vadd.f32 %v543, %v1065
        %1067 = vmatmul.f32.gmra.mxu0 %v580
        %v1068 = vpop.f32.mrf.mxu0
        %v1069 = vadd.f32 %v543, %v1068
        %1070 = vmatmul.f32.gmra.mxu0 %v583
        %v1071 = vpop.f32.mrf.mxu0
        %v1072 = vadd.f32 %v543, %v1071
        %1073 = vmatmul.f32.gmra.mxu0 %v586
        %v1074 = vpop.f32.mrf.mxu0
        %v1075 = vadd.f32 %v543, %v1074
        %1076 = vmatmul.f32.gmra.mxu0 %v589
        %v1077 = vpop.f32.mrf.mxu0
        %v1078 = vadd.f32 %v543, %v1077
        %1079 = vmatmul.f32.gmra.mxu0 %v592
        %v1080 = vpop.f32.mrf.mxu0
        %v1081 = vadd.f32 %v543, %v1080
        %1082 = vmatmul.f32.gmra.mxu0 %v595
        %v1083 = vpop.f32.mrf.mxu0
        %v1084 = vadd.f32 %v543, %v1083
        %1085 = vmatmul.f32.gmra.mxu0 %v598
        %v1086 = vpop.f32.mrf.mxu0
        %v1087 = vadd.f32 %v543, %v1086
        %1088 = vmatmul.f32.gmra.mxu0 %v601
        %v1089 = vpop.f32.mrf.mxu0
        %v1090 = vadd.f32 %v543, %v1089
        %1091 = vmatmul.f32.gmra.mxu0 %v604
        %v1092 = vpop.f32.mrf.mxu0
        %v1093 = vadd.f32 %v543, %v1092
        %1094 = vmatmul.f32.gmra.mxu0 %v607
        %v1095 = vpop.f32.mrf.mxu0
        %v1096 = vadd.f32 %v543, %v1095
        %1097 = vmatmul.f32.gmra.mxu0 %v610
        %v1098 = vpop.f32.mrf.mxu0
        %v1099 = vadd.f32 %v543, %v1098
        %1100 = vmatmul.f32.gmra.mxu0 %v613
        %v1101 = vpop.f32.mrf.mxu0
        %v1102 = vadd.f32 %v543, %v1101
        %1103 = vmatmul.f32.gmra.mxu0 %v616
        %v1104 = vpop.f32.mrf.mxu0
        %v1105 = vadd.f32 %v543, %v1104
        %1106 = vmatmul.f32.gmra.mxu0 %v619
        %v1107 = vpop.f32.mrf.mxu0
        %v1108 = vadd.f32 %v543, %v1107
        %1109 = vmatmul.f32.gmra.mxu0 %v622
        %v1110 = vpop.f32.mrf.mxu0
        %v1111 = vadd.f32 %v543, %v1110
        %1112 = vmatmul.f32.gmra.mxu0 %v625
        %v1113 = vpop.f32.mrf.mxu0
        %v1114 = vadd.f32 %v543, %v1113
        %1115 = vmatmul.f32.gmra.mxu0 %v628
        %v1116 = vpop.f32.mrf.mxu0
        %v1117 = vadd.f32 %v543, %v1116
        %1118 = vmatmul.f32.gmra.mxu0 %v631
        %v1119 = vpop.f32.mrf.mxu0
        %v1120 = vadd.f32 %v543, %v1119
        %1121 = vmatmul.f32.gmra.mxu0 %v634
        %v1122 = vpop.f32.mrf.mxu0
        %v1123 = vadd.f32 %v543, %v1122
        %1124 = vmatmul.f32.gmra.mxu0 %v637
        %v1125 = vpop.f32.mrf.mxu0
        %v1126 = vadd.f32 %v543, %v1125
        %1127 = vmatmul.f32.gmra.mxu0 %v640
        %v1128 = vpop.f32.mrf.mxu0
        %v1129 = vadd.f32 %v543, %v1128
        %1130 = vmatmul.f32.gmra.mxu0 %v643
        %v1131 = vpop.f32.mrf.mxu0
        %v1132 = vadd.f32 %v543, %v1131
        %1133 = vmatmul.f32.gmra.mxu0 %v646
        %v1134 = vpop.f32.mrf.mxu0
        %v1135 = vadd.f32 %v543, %v1134
        %1136 = vmatmul.f32.gmra.mxu0 %v649
        %v1137 = vpop.f32.mrf.mxu0
        %v1138 = vadd.f32 %v543, %v1137
        %1139 = vmatmul.f32.gmra.mxu0 %v652
        %v1140 = vpop.f32.mrf.mxu0
        %v1141 = vadd.f32 %v543, %v1140
        %1142 = vmatmul.f32.gmra.mxu0 %v655
        %v1143 = vpop.f32.mrf.mxu0
        %v1144 = vadd.f32 %v543, %v1143
        %1145 = vmatmul.f32.gmra.mxu0 %v658
        %v1146 = vpop.f32.mrf.mxu0
        %v1147 = vadd.f32 %v543, %v1146
        %1148 = vmatmul.f32.gmra.mxu0 %v661
        %v1149 = vpop.f32.mrf.mxu0
        %v1150 = vadd.f32 %v543, %v1149
        %1151 = vmatmul.f32.gmra.mxu0 %v664
        %v1152 = vpop.f32.mrf.mxu0
        %v1153 = vadd.f32 %v543, %v1152
        %1154 = vmatmul.f32.gmra.mxu0 %v667
        %v1155 = vpop.f32.mrf.mxu0
        %v1156 = vadd.f32 %v543, %v1155
        %1157 = vmatmul.f32.gmra.mxu0 %v670
        %v1158 = vpop.f32.mrf.mxu0
        %v1159 = vadd.f32 %v543, %v1158
        %1160 = vmatmul.f32.gmra.mxu0 %v673
        %v1161 = vpop.f32.mrf.mxu0
        %v1162 = vadd.f32 %v543, %v1161
        %1163 = vmatmul.f32.gmra.mxu0 %v676
        %v1164 = vpop.f32.mrf.mxu0
        %v1165 = vadd.f32 %v543, %v1164
        %1166 = vmatmul.f32.gmra.mxu0 %v679
        %v1167 = vpop.f32.mrf.mxu0
        %v1168 = vadd.f32 %v543, %v1167
        %1169 = vmatmul.f32.gmra.mxu0 %v682
        %v1170 = vpop.f32.mrf.mxu0
        %v1171 = vadd.f32 %v543, %v1170
        %1172 = vmatmul.f32.gmra.mxu0 %v685
        %v1173 = vpop.f32.mrf.mxu0
        %v1174 = vadd.f32 %v543, %v1173
        %1175 = vmatmul.f32.gmra.mxu0 %v688
        %v1176 = vpop.f32.mrf.mxu0
        %v1177 = vadd.f32 %v543, %v1176
        %1178 = vmatmul.f32.gmra.mxu0 %v691
        %v1179 = vpop.f32.mrf.mxu0
        %v1180 = vadd.f32 %v543, %v1179
        %1181 = vmatmul.f32.gmra.mxu0 %v694
        %v1182 = vpop.f32.mrf.mxu0
        %v1183 = vadd.f32 %v543, %v1182
        %1184 = vmatmul.f32.gmra.mxu0 %v697
        %v1185 = vpop.f32.mrf.mxu0
        %v1186 = vadd.f32 %v543, %v1185
        %1187 = vmatmul.f32.gmra.mxu0 %v700
        %v1188 = vpop.f32.mrf.mxu0
        %v1189 = vadd.f32 %v543, %v1188
        %1190 = vmatmul.f32.gmra.mxu0 %v703
        %v1191 = vpop.f32.mrf.mxu0
        %v1192 = vadd.f32 %v543, %v1191
        %1193 = vmatmul.f32.gmra.mxu0 %v706
        %v1194 = vpop.f32.mrf.mxu0
        %v1195 = vadd.f32 %v543, %v1194
        %1196 = vmatmul.f32.gmra.mxu0 %v709
        %v1197 = vpop.f32.mrf.mxu0
        %v1198 = vadd.f32 %v543, %v1197
        %1199 = vmatmul.f32.gmra.mxu0 %v712
        %v1200 = vpop.f32.mrf.mxu0
        %v1201 = vadd.f32 %v543, %v1200
        %1202 = vmatmul.f32.gmra.mxu0 %v715
        %v1203 = vpop.f32.mrf.mxu0
        %v1204 = vadd.f32 %v543, %v1203
        %1205 = vmatmul.f32.gmra.mxu0 %v718
        %v1206 = vpop.f32.mrf.mxu0
        %v1207 = vadd.f32 %v543, %v1206
        %1208 = vmatmul.f32.gmra.mxu0 %v721
        %v1209 = vpop.f32.mrf.mxu0
        %v1210 = vadd.f32 %v543, %v1209
        %1211 = vmatmul.f32.gmra.mxu0 %v724
        %v1212 = vpop.f32.mrf.mxu0
        %v1213 = vadd.f32 %v543, %v1212
        %1214 = vmatmul.f32.gmra.mxu0 %v727
        %v1215 = vpop.f32.mrf.mxu0
        %v1216 = vadd.f32 %v543, %v1215
        %1217 = vmatmul.f32.gmra.mxu0 %v730
        %v1218 = vpop.f32.mrf.mxu0
        %v1219 = vadd.f32 %v543, %v1218
        %1220 = vmatmul.f32.gmra.mxu0 %v733
        %v1221 = vpop.f32.mrf.mxu0
        %v1222 = vadd.f32 %v543, %v1221
        %1223 = vmatmul.f32.gmra.mxu0 %v736
        %v1224 = vpop.f32.mrf.mxu0
        %v1225 = vadd.f32 %v543, %v1224
        %1226 = vmatmul.f32.gmra.mxu0 %v739
        %v1227 = vpop.f32.mrf.mxu0
        %v1228 = vadd.f32 %v543, %v1227
        %1229 = vmatmul.f32.gmra.mxu0 %v742
        %v1230 = vpop.f32.mrf.mxu0
        %v1231 = vadd.f32 %v543, %v1230
        %1232 = vmatmul.f32.gmra.mxu0 %v745
        %v1233 = vpop.f32.mrf.mxu0
        %v1234 = vadd.f32 %v543, %v1233
        %1235 = vmatmul.f32.gmra.mxu0 %v748
        %v1236 = vpop.f32.mrf.mxu0
        %v1237 = vadd.f32 %v543, %v1236
        %1238 = vmatmul.f32.gmra.mxu0 %v751
        %v1239 = vpop.f32.mrf.mxu0
        %v1240 = vadd.f32 %v543, %v1239
        %1241 = vmatmul.f32.gmra.mxu0 %v754
        %v1242 = vpop.f32.mrf.mxu0
        %v1243 = vadd.f32 %v543, %v1242
        %1244 = vmatmul.f32.gmra.mxu0 %v757
        %v1245 = vpop.f32.mrf.mxu0
        %v1246 = vadd.f32 %v543, %v1245
        %1247 = vmatmul.f32.gmra.mxu0 %v760
        %v1248 = vpop.f32.mrf.mxu0
        %v1249 = vadd.f32 %v543, %v1248
        %1250 = vmatmul.f32.gmra.mxu0 %v763
        %v1251 = vpop.f32.mrf.mxu0
        %v1252 = vadd.f32 %v543, %v1251
        %1253 = vmatmul.f32.gmra.mxu0 %v766
        %v1254 = vpop.f32.mrf.mxu0
        %v1255 = vadd.f32 %v543, %v1254
        %1256 = vmatmul.f32.gmra.mxu0 %v769
        %v1257 = vpop.f32.mrf.mxu0
        %v1258 = vadd.f32 %v543, %v1257
        %1259 = vmatmul.f32.gmra.mxu0 %v772
        %v1260 = vpop.f32.mrf.mxu0
        %v1261 = vadd.f32 %v543, %v1260
        %1262 = vmatmul.f32.gmra.mxu0 %v775
        %v1263 = vpop.f32.mrf.mxu0
        %v1264 = vadd.f32 %v543, %v1263
        %1265 = vmatmul.f32.gmra.mxu0 %v778
        %v1266 = vpop.f32.mrf.mxu0
        %v1267 = vadd.f32 %v543, %v1266
        %1268 = vmatmul.f32.gmra.mxu0 %v781
        %v1269 = vpop.f32.mrf.mxu0
        %v1270 = vadd.f32 %v543, %v1269
        %1271 = vmatmul.f32.gmra.mxu0 %v784
        %v1272 = vpop.f32.mrf.mxu0
        %v1273 = vadd.f32 %v543, %v1272
        %1274 = vmatmul.f32.gmra.mxu0 %v787
        %v1275 = vpop.f32.mrf.mxu0
        %v1276 = vadd.f32 %v543, %v1275
        %1277 = vmatmul.f32.gmra.mxu0 %v790
        %v1278 = vpop.f32.mrf.mxu0
        %v1279 = vadd.f32 %v543, %v1278
        %1280 = vmatmul.f32.gmra.mxu0 %v793
        %v1281 = vpop.f32.mrf.mxu0
        %v1282 = vadd.f32 %v543, %v1281
        %1283 = vmatmul.f32.gmra.mxu0 %v796
        %v1284 = vpop.f32.mrf.mxu0
        %v1285 = vadd.f32 %v543, %v1284
        %1286 = vmatmul.f32.gmra.mxu0 %v799
        %v1287 = vpop.f32.mrf.mxu0
        %v1288 = vadd.f32 %v543, %v1287
        %1289 = vmatmul.f32.gmra.mxu0 %v802
        %v1290 = vpop.f32.mrf.mxu0
        %v1291 = vadd.f32 %v543, %v1290
        %1292 = vmatmul.f32.gmra.mxu0 %v805
        %v1293 = vpop.f32.mrf.mxu0
        %v1294 = vadd.f32 %v543, %v1293
        %1295 = vmatmul.f32.gmra.mxu0 %v808
        %v1296 = vpop.f32.mrf.mxu0
        %v1297 = vadd.f32 %v543, %v1296
        %1298 = vmatmul.f32.gmra.mxu0 %v811
        %v1299 = vpop.f32.mrf.mxu0
        %v1300 = vadd.f32 %v543, %v1299
        %1301 = vmatmul.f32.gmra.mxu0 %v814
        %v1302 = vpop.f32.mrf.mxu0
        %v1303 = vadd.f32 %v543, %v1302
        %1304 = vmatmul.f32.gmra.mxu0 %v817
        %v1305 = vpop.f32.mrf.mxu0
        %v1306 = vadd.f32 %v543, %v1305
        %1307 = vmatmul.f32.gmra.mxu0 %v820
        %v1308 = vpop.f32.mrf.mxu0
        %v1309 = vadd.f32 %v543, %v1308
        %1310 = vmatmul.f32.gmra.mxu0 %v823
        %v1311 = vpop.f32.mrf.mxu0
        %v1312 = vadd.f32 %v543, %v1311
        %1313 = vmatmul.f32.gmra.mxu0 %v826
        %v1314 = vpop.f32.mrf.mxu0
        %v1315 = vadd.f32 %v543, %v1314
        %1316 = vmatmul.f32.gmra.mxu0 %v829
        %v1317 = vpop.f32.mrf.mxu0
        %v1318 = vadd.f32 %v543, %v1317
        %1319 = vmatmul.f32.gmra.mxu0 %v832
        %v1320 = vpop.f32.mrf.mxu0
        %v1321 = vadd.f32 %v543, %v1320
        %1322 = vmatmul.f32.gmra.mxu0 %v835
        %v1323 = vpop.f32.mrf.mxu0
        %v1324 = vadd.f32 %v543, %v1323
        %1325 = vmatmul.f32.gmra.mxu0 %v838
        %v1326 = vpop.f32.mrf.mxu0
        %v1327 = vadd.f32 %v543, %v1326
        %1328 = vmatmul.f32.gmra.mxu0 %v841
        %v1329 = vpop.f32.mrf.mxu0
        %v1330 = vadd.f32 %v543, %v1329
        %1331 = vmatmul.f32.gmra.mxu0 %v844
        %v1332 = vpop.f32.mrf.mxu0
        %v1333 = vadd.f32 %v543, %v1332
        %1334 = vmatmul.f32.gmra.mxu0 %v847
        %v1335 = vpop.f32.mrf.mxu0
        %v1336 = vadd.f32 %v543, %v1335
        %1337 = vmatmul.f32.gmra.mxu0 %v850
        %v1338 = vpop.f32.mrf.mxu0
        %v1339 = vadd.f32 %v543, %v1338
        %1340 = vmatmul.f32.gmra.mxu0 %v853
        %v1341 = vpop.f32.mrf.mxu0
        %v1342 = vadd.f32 %v543, %v1341
        %1343 = vmatmul.f32.gmra.mxu0 %v856
        %v1344 = vpop.f32.mrf.mxu0
        %v1345 = vadd.f32 %v543, %v1344
        %1346 = vmatmul.f32.gmra.mxu0 %v859
        %v1347 = vpop.f32.mrf.mxu0
        %v1348 = vadd.f32 %v543, %v1347
        %1349 = vmatmul.f32.gmra.mxu0 %v862
        %v1350 = vpop.f32.mrf.mxu0
        %v1351 = vadd.f32 %v543, %v1350
        %1352 = vmatmul.f32.gmra.mxu0 %v865
        %v1353 = vpop.f32.mrf.mxu0
        %v1354 = vadd.f32 %v543, %v1353
        %1355 = vmatmul.f32.gmra.mxu0 %v868
        %v1356 = vpop.f32.mrf.mxu0
        %v1357 = vadd.f32 %v543, %v1356
        %1358 = vmatmul.f32.gmra.mxu0 %v871
        %v1359 = vpop.f32.mrf.mxu0
        %v1360 = vadd.f32 %v543, %v1359
        %1361 = vmatmul.f32.gmra.mxu0 %v874
        %v1362 = vpop.f32.mrf.mxu0
        %v1363 = vadd.f32 %v543, %v1362
        %1364 = vmatmul.f32.gmra.mxu0 %v877
        %v1365 = vpop.f32.mrf.mxu0
        %v1366 = vadd.f32 %v543, %v1365
        %1367 = vmatmul.f32.gmra.mxu0 %v880
        %v1368 = vpop.f32.mrf.mxu0
        %v1369 = vadd.f32 %v543, %v1368
        %1370 = vmatmul.f32.gmra.mxu0 %v883
        %v1371 = vpop.f32.mrf.mxu0
        %v1372 = vadd.f32 %v543, %v1371
        %1373 = vmatmul.f32.gmra.mxu0 %v886
        %v1374 = vpop.f32.mrf.mxu0
        %v1375 = vadd.f32 %v543, %v1374
        %1376 = vmatmul.f32.gmra.mxu0 %v889
        %v1377 = vpop.f32.mrf.mxu0
        %v1378 = vadd.f32 %v543, %v1377
        %1379 = vmatmul.f32.gmra.mxu0 %v892
        %v1380 = vpop.f32.mrf.mxu0
        %v1381 = vadd.f32 %v543, %v1380
        %1382 = vmatmul.f32.gmra.mxu0 %v895
        %v1383 = vpop.f32.mrf.mxu0
        %v1384 = vadd.f32 %v543, %v1383
        %1385 = vmatmul.f32.gmra.mxu0 %v898
        %v1386 = vpop.f32.mrf.mxu0
        %v1387 = vadd.f32 %v543, %v1386
        %1388 = vmatmul.f32.gmra.mxu0 %v901
        %v1389 = vpop.f32.mrf.mxu0
        %v1390 = vadd.f32 %v543, %v1389
        %1391 = vmatmul.f32.gmra.mxu0 %v904
        %v1392 = vpop.f32.mrf.mxu0
        %v1393 = vadd.f32 %v543, %v1392
        %1394 = vmatmul.f32.gmra.mxu0 %v907
        %v1395 = vpop.f32.mrf.mxu0
        %v1396 = vadd.f32 %v543, %v1395
        %1397 = vmatmul.f32.gmra.mxu0 %v910
        %v1398 = vpop.f32.mrf.mxu0
        %v1399 = vadd.f32 %v543, %v1398
        %1400 = vmatmul.f32.gmra.mxu0 %v913
        %v1401 = vpop.f32.mrf.mxu0
        %v1402 = vadd.f32 %v543, %v1401
        %1403 = vmatmul.f32.gmra.mxu0 %v916
        %v1404 = vpop.f32.mrf.mxu0
        %v1405 = vadd.f32 %v543, %v1404
        %1406 = vmatmul.f32.gmra.mxu0 %v919
        %v1407 = vpop.f32.mrf.mxu0
        %v1408 = vadd.f32 %v543, %v1407
        %1409 = vmatmul.f32.gmra.mxu0 %v922
        %v1410 = vpop.f32.mrf.mxu0
        %v1411 = vadd.f32 %v543, %v1410
        %1412 = vmatmul.f32.gmra.mxu0 %v925
        %v1413 = vpop.f32.mrf.mxu0
        %v1414 = vadd.f32 %v543, %v1413
        %1415 = vmatmul.f32.gmra.mxu0 %v928
        %v1416 = vpop.f32.mrf.mxu0
        %v1417 = vadd.f32 %v543, %v1416
        %1418 = vmatmul.f32.gmra.mxu0 %v931
        %v1419 = vpop.f32.mrf.mxu0
        %v1420 = vadd.f32 %v543, %v1419
        %1421 = vmatmul.f32.gmra.mxu0 %v934
        %v1422 = vpop.f32.mrf.mxu0
        %v1423 = vadd.f32 %v543, %v1422
        %1424 = vmatmul.f32.gmra.mxu0 %v937
        %v1425 = vpop.f32.mrf.mxu0
        %v1426 = vadd.f32 %v543, %v1425
        %1427 = vmatmul.f32.gmra.mxu0 %v940
        %v1428 = vpop.f32.mrf.mxu0
        %v1429 = vadd.f32 %v543, %v1428
        %1430 = vmatmul.f32.gmra.mxu0 %v943
        %v1431 = vpop.f32.mrf.mxu0
        %v1432 = vadd.f32 %v543, %v1431
        %1433 = vmatmul.f32.gmra.mxu0 %v946
        %v1434 = vpop.f32.mrf.mxu0
        %v1435 = vadd.f32 %v543, %v1434
        %1436 = vmatmul.f32.gmra.mxu0 %v949
        %v1437 = vpop.f32.mrf.mxu0
        %v1438 = vadd.f32 %v543, %v1437
        %1439 = vmatmul.f32.gmra.mxu0 %v952
        %v1440 = vpop.f32.mrf.mxu0
        %v1441 = vadd.f32 %v543, %v1440
        %1442 = vmatmul.f32.gmra.mxu0 %v955
        %v1443 = vpop.f32.mrf.mxu0
        %v1444 = vadd.f32 %v543, %v1443
        %1445 = vmatmul.f32.gmra.mxu0 %v958
        %v1446 = vpop.f32.mrf.mxu0
        %v1447 = vadd.f32 %v543, %v1446
        %1448 = vmatmul.f32.gmra.mxu0 %v961
        %v1449 = vpop.f32.mrf.mxu0
        %v1450 = vadd.f32 %v543, %v1449
        %1451 = vmatmul.f32.gmra.mxu0 %v964
        %v1452 = vpop.f32.mrf.mxu0
        %v1453 = vadd.f32 %v543, %v1452
        %1454 = vmatmul.f32.gmra.mxu0 %v967
        %v1455 = vpop.f32.mrf.mxu0
        %v1456 = vadd.f32 %v543, %v1455
        %1457 = vmatmul.f32.gmra.mxu0 %v970
        %v1458 = vpop.f32.mrf.mxu0
        %v1459 = vadd.f32 %v543, %v1458
        %1460 = vmatmul.f32.gmra.mxu0 %v973
        %v1461 = vpop.f32.mrf.mxu0
        %v1462 = vadd.f32 %v543, %v1461
        %1463 = vmatmul.f32.gmra.mxu0 %v976
        %v1464 = vpop.f32.mrf.mxu0
        %v1465 = vadd.f32 %v543, %v1464
        %1466 = vmatmul.f32.gmra.mxu0 %v979
        %v1467 = vpop.f32.mrf.mxu0
        %v1468 = vadd.f32 %v543, %v1467
        %1469 = vmatmul.f32.gmra.mxu0 %v982
        %v1470 = vpop.f32.mrf.mxu0
        %v1471 = vadd.f32 %v543, %v1470
        %1472 = vmatmul.f32.gmra.mxu0 %v985
        %v1473 = vpop.f32.mrf.mxu0
        %v1474 = vadd.f32 %v543, %v1473
        %1475 = vmatmul.f32.gmra.mxu0 %v988
        %v1476 = vpop.f32.mrf.mxu0
        %v1477 = vadd.f32 %v543, %v1476
        %1478 = vmatmul.f32.gmra.mxu0 %v991
        %v1479 = vpop.f32.mrf.mxu0
        %v1480 = vadd.f32 %v543, %v1479
        %1481 = vmatmul.f32.gmra.mxu0 %v994
        %v1482 = vpop.f32.mrf.mxu0
        %v1483 = vadd.f32 %v543, %v1482
        %1484 = vmatmul.f32.gmra.mxu0 %v997
        %v1485 = vpop.f32.mrf.mxu0
        %v1486 = vadd.f32 %v543, %v1485
        %1487 = vmatmul.f32.gmra.mxu0 %v1000
        %v1488 = vpop.f32.mrf.mxu0
        %v1489 = vadd.f32 %v543, %v1488
        %1490 = vmatmul.f32.gmra.mxu0 %v1003
        %v1491 = vpop.f32.mrf.mxu0
        %v1492 = vadd.f32 %v543, %v1491
        %1493 = vmatmul.f32.gmra.mxu0 %v1006
        %v1494 = vpop.f32.mrf.mxu0
        %v1495 = vadd.f32 %v543, %v1494
        %1496 = vmatmul.f32.gmra.mxu0 %v1009
        %v1497 = vpop.f32.mrf.mxu0
        %v1498 = vadd.f32 %v543, %v1497
        %1499 = vmatmul.f32.gmra.mxu0 %v1012
        %v1500 = vpop.f32.mrf.mxu0
        %v1501 = vadd.f32 %v543, %v1500
        %1502 = vdwg.mxu0
        %v1503 = vmax.f32 %v1036, 0.0
        %v1504 = vmax.f32 %v1039, 0.0
        %v1505 = vmax.f32 %v1042, 0.0
        %v1506 = vmax.f32 %v1045, 0.0
        %v1507 = vmax.f32 %v1048, 0.0
        %v1508 = vmax.f32 %v1051, 0.0
        %v1509 = vmax.f32 %v1054, 0.0
        %v1510 = vmax.f32 %v1057, 0.0
        %v1511 = vmax.f32 %v1060, 0.0
        %v1512 = vmax.f32 %v1063, 0.0
        %v1513 = vmax.f32 %v1066, 0.0
        %v1514 = vmax.f32 %v1069, 0.0
        %v1515 = vmax.f32 %v1072, 0.0
        %v1516 = vmax.f32 %v1075, 0.0
        %v1517 = vmax.f32 %v1078, 0.0
        %v1518 = vmax.f32 %v1081, 0.0
        %v1519 = vmax.f32 %v1084, 0.0
        %v1520 = vmax.f32 %v1087, 0.0
        %v1521 = vmax.f32 %v1090, 0.0
        %v1522 = vmax.f32 %v1093, 0.0
        %v1523 = vmax.f32 %v1096, 0.0
        %v1524 = vmax.f32 %v1099, 0.0
        %v1525 = vmax.f32 %v1102, 0.0
        %v1526 = vmax.f32 %v1105, 0.0
        %v1527 = vmax.f32 %v1108, 0.0
        %v1528 = vmax.f32 %v1111, 0.0
        %v1529 = vmax.f32 %v1114, 0.0
        %v1530 = vmax.f32 %v1117, 0.0
        %v1531 = vmax.f32 %v1120, 0.0
        %v1532 = vmax.f32 %v1123, 0.0
        %v1533 = vmax.f32 %v1126, 0.0
        %v1534 = vmax.f32 %v1129, 0.0
        %v1535 = vmax.f32 %v1132, 0.0
        %v1536 = vmax.f32 %v1135, 0.0
        %v1537 = vmax.f32 %v1138, 0.0
        %v1538 = vmax.f32 %v1141, 0.0
        %v1539 = vmax.f32 %v1144, 0.0
        %v1540 = vmax.f32 %v1147, 0.0
        %v1541 = vmax.f32 %v1150, 0.0
        %v1542 = vmax.f32 %v1153, 0.0
        %v1543 = vmax.f32 %v1156, 0.0
        %v1544 = vmax.f32 %v1159, 0.0
        %v1545 = vmax.f32 %v1162, 0.0
        %v1546 = vmax.f32 %v1165, 0.0
        %v1547 = vmax.f32 %v1168, 0.0
        %v1548 = vmax.f32 %v1171, 0.0
        %v1549 = vmax.f32 %v1174, 0.0
        %v1550 = vmax.f32 %v1177, 0.0
        %v1551 = vmax.f32 %v1180, 0.0
        %v1552 = vmax.f32 %v1183, 0.0
        %v1553 = vmax.f32 %v1186, 0.0
        %v1554 = vmax.f32 %v1189, 0.0
        %v1555 = vmax.f32 %v1192, 0.0
        %v1556 = vmax.f32 %v1195, 0.0
        %v1557 = vmax.f32 %v1198, 0.0
        %v1558 = vmax.f32 %v1201, 0.0
        %v1559 = vmax.f32 %v1204, 0.0
        %v1560 = vmax.f32 %v1207, 0.0
        %v1561 = vmax.f32 %v1210, 0.0
        %v1562 = vmax.f32 %v1213, 0.0
        %v1563 = vmax.f32 %v1216, 0.0
        %v1564 = vmax.f32 %v1219, 0.0
        %v1565 = vmax.f32 %v1222, 0.0
        %v1566 = vmax.f32 %v1225, 0.0
        %v1567 = vmax.f32 %v1228, 0.0
        %v1568 = vmax.f32 %v1231, 0.0
        %v1569 = vmax.f32 %v1234, 0.0
        %v1570 = vmax.f32 %v1237, 0.0
        %v1571 = vmax.f32 %v1240, 0.0
        %v1572 = vmax.f32 %v1243, 0.0
        %v1573 = vmax.f32 %v1246, 0.0
        %v1574 = vmax.f32 %v1249, 0.0
        %v1575 = vmax.f32 %v1252, 0.0
        %v1576 = vmax.f32 %v1255, 0.0
        %v1577 = vmax.f32 %v1258, 0.0
        %v1578 = vmax.f32 %v1261, 0.0
        %v1579 = vmax.f32 %v1264, 0.0
        %v1580 = vmax.f32 %v1267, 0.0
        %v1581 = vmax.f32 %v1270, 0.0
        %v1582 = vmax.f32 %v1273, 0.0
        %v1583 = vmax.f32 %v1276, 0.0
        %v1584 = vmax.f32 %v1279, 0.0
        %v1585 = vmax.f32 %v1282, 0.0
        %v1586 = vmax.f32 %v1285, 0.0
        %v1587 = vmax.f32 %v1288, 0.0
        %v1588 = vmax.f32 %v1291, 0.0
        %v1589 = vmax.f32 %v1294, 0.0
        %v1590 = vmax.f32 %v1297, 0.0
        %v1591 = vmax.f32 %v1300, 0.0
        %v1592 = vmax.f32 %v1303, 0.0
        %v1593 = vmax.f32 %v1306, 0.0
        %v1594 = vmax.f32 %v1309, 0.0
        %v1595 = vmax.f32 %v1312, 0.0
        %v1596 = vmax.f32 %v1315, 0.0
        %v1597 = vmax.f32 %v1318, 0.0
        %v1598 = vmax.f32 %v1321, 0.0
        %v1599 = vmax.f32 %v1324, 0.0
        %v1600 = vmax.f32 %v1327, 0.0
        %v1601 = vmax.f32 %v1330, 0.0
        %v1602 = vmax.f32 %v1333, 0.0
        %v1603 = vmax.f32 %v1336, 0.0
        %v1604 = vmax.f32 %v1339, 0.0
        %v1605 = vmax.f32 %v1342, 0.0
        %v1606 = vmax.f32 %v1345, 0.0
        %v1607 = vmax.f32 %v1348, 0.0
        %v1608 = vmax.f32 %v1351, 0.0
        %v1609 = vmax.f32 %v1354, 0.0
        %v1610 = vmax.f32 %v1357, 0.0
        %v1611 = vmax.f32 %v1360, 0.0
        %v1612 = vmax.f32 %v1363, 0.0
        %v1613 = vmax.f32 %v1366, 0.0
        %v1614 = vmax.f32 %v1369, 0.0
        %v1615 = vmax.f32 %v1372, 0.0
        %v1616 = vmax.f32 %v1375, 0.0
        %v1617 = vmax.f32 %v1378, 0.0
        %v1618 = vmax.f32 %v1381, 0.0
        %v1619 = vmax.f32 %v1384, 0.0
        %v1620 = vmax.f32 %v1387, 0.0
        %v1621 = vmax.f32 %v1390, 0.0
        %v1622 = vmax.f32 %v1393, 0.0
        %v1623 = vmax.f32 %v1396, 0.0
        %v1624 = vmax.f32 %v1399, 0.0
        %v1625 = vmax.f32 %v1402, 0.0
        %v1626 = vmax.f32 %v1405, 0.0
        %v1627 = vmax.f32 %v1408, 0.0
        %v1628 = vmax.f32 %v1411, 0.0
        %v1629 = vmax.f32 %v1414, 0.0
        %v1630 = vmax.f32 %v1417, 0.0
        %v1631 = vmax.f32 %v1420, 0.0
        %v1632 = vmax.f32 %v1423, 0.0
        %v1633 = vmax.f32 %v1426, 0.0
        %v1634 = vmax.f32 %v1429, 0.0
        %v1635 = vmax.f32 %v1432, 0.0
        %v1636 = vmax.f32 %v1435, 0.0
        %v1637 = vmax.f32 %v1438, 0.0
        %v1638 = vmax.f32 %v1441, 0.0
        %v1639 = vmax.f32 %v1444, 0.0
        %v1640 = vmax.f32 %v1447, 0.0
        %v1641 = vmax.f32 %v1450, 0.0
        %v1642 = vmax.f32 %v1453, 0.0
        %v1643 = vmax.f32 %v1456, 0.0
        %v1644 = vmax.f32 %v1459, 0.0
        %v1645 = vmax.f32 %v1462, 0.0
        %v1646 = vmax.f32 %v1465, 0.0
        %v1647 = vmax.f32 %v1468, 0.0
        %v1648 = vmax.f32 %v1471, 0.0
        %v1649 = vmax.f32 %v1474, 0.0
        %v1650 = vmax.f32 %v1477, 0.0
        %v1651 = vmax.f32 %v1480, 0.0
        %v1652 = vmax.f32 %v1483, 0.0
        %v1653 = vmax.f32 %v1486, 0.0
        %v1654 = vmax.f32 %v1489, 0.0
        %v1655 = vmax.f32 %v1492, 0.0
        %v1656 = vmax.f32 %v1495, 0.0
        %v1657 = vmax.f32 %v1498, 0.0
        %v1658 = vmax.f32 %v1501, 0.0
        %1659 = vst [vmem:[#allocation2] sm:$0xff] %v1503
        %1660 = vst [vmem:[#allocation2 + $0x8] sm:$0xff] %v1504
        %1661 = vst [vmem:[#allocation2 + $0x10] sm:$0xff] %v1505
        %1662 = vst [vmem:[#allocation2 + $0x18] sm:$0xff] %v1506
        %1663 = vst [vmem:[#allocation2 + $0x20] sm:$0xff] %v1507
        %1664 = vst [vmem:[#allocation2 + $0x28] sm:$0xff] %v1508
        %1665 = vst [vmem:[#allocation2 + $0x30] sm:$0xff] %v1509
        %1666 = vst [vmem:[#allocation2 + $0x38] sm:$0xff] %v1510
        %1667 = vst [vmem:[#allocation2 + $0x40] sm:$0xff] %v1511
        %1668 = vst [vmem:[#allocation2 + $0x48] sm:$0xff] %v1512
        %1669 = vst [vmem:[#allocation2 + $0x50] sm:$0xff] %v1513
        %1670 = vst [vmem:[#allocation2 + $0x58] sm:$0xff] %v1514
        %1671 = vst [vmem:[#allocation2 + $0x60] sm:$0xff] %v1515
        %1672 = vst [vmem:[#allocation2 + $0x68] sm:$0xff] %v1516
        %1673 = vst [vmem:[#allocation2 + $0x70] sm:$0xff] %v1517
        %1674 = vst [vmem:[#allocation2 + $0x78] sm:$0xff] %v1518
        %1675 = vst [vmem:[#allocation2 + $0x80] sm:$0xff] %v1519
        %1676 = vst [vmem:[#allocation2 + $0x88] sm:$0xff] %v1520
        %1677 = vst [vmem:[#allocation2 + $0x90] sm:$0xff] %v1521
        %1678 = vst [vmem:[#allocation2 + $0x98] sm:$0xff] %v1522
        %1679 = vst [vmem:[#allocation2 + $0xa0] sm:$0xff] %v1523
        %1680 = vst [vmem:[#allocation2 + $0xa8] sm:$0xff] %v1524
        %1681 = vst [vmem:[#allocation2 + $0xb0] sm:$0xff] %v1525
        %1682 = vst [vmem:[#allocation2 + $0xb8] sm:$0xff] %v1526
        %1683 = vst [vmem:[#allocation2 + $0xc0] sm:$0xff] %v1527
        %1684 = vst [vmem:[#allocation2 + $0xc8] sm:$0xff] %v1528
        %1685 = vst [vmem:[#allocation2 + $0xd0] sm:$0xff] %v1529
        %1686 = vst [vmem:[#allocation2 + $0xd8] sm:$0xff] %v1530
        %1687 = vst [vmem:[#allocation2 + $0xe0] sm:$0xff] %v1531
        %1688 = vst [vmem:[#allocation2 + $0xe8] sm:$0xff] %v1532
        %1689 = vst [vmem:[#allocation2 + $0xf0] sm:$0xff] %v1533
        %1690 = vst [vmem:[#allocation2 + $0xf8] sm:$0xff] %v1534
        %1691 = vst [vmem:[#allocation2 + $0x100] sm:$0xff] %v1535
        %1692 = vst [vmem:[#allocation2 + $0x108] sm:$0xff] %v1536
        %1693 = vst [vmem:[#allocation2 + $0x110] sm:$0xff] %v1537
        %1694 = vst [vmem:[#allocation2 + $0x118] sm:$0xff] %v1538
        %1695 = vst [vmem:[#allocation2 + $0x120] sm:$0xff] %v1539
        %1696 = vst [vmem:[#allocation2 + $0x128] sm:$0xff] %v1540
        %1697 = vst [vmem:[#allocation2 + $0x130] sm:$0xff] %v1541
        %1698 = vst [vmem:[#allocation2 + $0x138] sm:$0xff] %v1542
        %1699 = vst [vmem:[#allocation2 + $0x140] sm:$0xff] %v1543
        %1700 = vst [vmem:[#allocation2 + $0x148] sm:$0xff] %v1544
        %1701 = vst [vmem:[#allocation2 + $0x150] sm:$0xff] %v1545
        %1702 = vst [vmem:[#allocation2 + $0x158] sm:$0xff] %v1546
        %1703 = vst [vmem:[#allocation2 + $0x160] sm:$0xff] %v1547
        %1704 = vst [vmem:[#allocation2 + $0x168] sm:$0xff] %v1548
        %1705 = vst [vmem:[#allocation2 + $0x170] sm:$0xff] %v1549
        %1706 = vst [vmem:[#allocation2 + $0x178] sm:$0xff] %v1550
        %1707 = vst [vmem:[#allocation2 + $0x180] sm:$0xff] %v1551
        %1708 = vst [vmem:[#allocation2 + $0x188] sm:$0xff] %v1552
        %1709 = vst [vmem:[#allocation2 + $0x190] sm:$0xff] %v1553
        %1710 = vst [vmem:[#allocation2 + $0x198] sm:$0xff] %v1554
        %1711 = vst [vmem:[#allocation2 + $0x1a0] sm:$0xff] %v1555
        %1712 = vst [vmem:[#allocation2 + $0x1a8] sm:$0xff] %v1556
        %1713 = vst [vmem:[#allocation2 + $0x1b0] sm:$0xff] %v1557
        %1714 = vst [vmem:[#allocation2 + $0x1b8] sm:$0xff] %v1558
        %1715 = vst [vmem:[#allocation2 + $0x1c0] sm:$0xff] %v1559
        %1716 = vst [vmem:[#allocation2 + $0x1c8] sm:$0xff] %v1560
        %1717 = vst [vmem:[#allocation2 + $0x1d0] sm:$0xff] %v1561
        %1718 = vst [vmem:[#allocation2 + $0x1d8] sm:$0xff] %v1562
        %1719 = vst [vmem:[#allocation2 + $0x1e0] sm:$0xff] %v1563
        %1720 = vst [vmem:[#allocation2 + $0x1e8] sm:$0xff] %v1564
        %1721 = vst [vmem:[#allocation2 + $0x1f0] sm:$0xff] %v1565
        %1722 = vst [vmem:[#allocation2 + $0x1f8] sm:$0xff] %v1566
        %1723 = vst [vmem:[#allocation2 + $0x200] sm:$0xff] %v1567
        %1724 = vst [vmem:[#allocation2 + $0x208] sm:$0xff] %v1568
        %1725 = vst [vmem:[#allocation2 + $0x210] sm:$0xff] %v1569
        %1726 = vst [vmem:[#allocation2 + $0x218] sm:$0xff] %v1570
        %1727 = vst [vmem:[#allocation2 + $0x220] sm:$0xff] %v1571
        %1728 = vst [vmem:[#allocation2 + $0x228] sm:$0xff] %v1572
        %1729 = vst [vmem:[#allocation2 + $0x230] sm:$0xff] %v1573
        %1730 = vst [vmem:[#allocation2 + $0x238] sm:$0xff] %v1574
        %1731 = vst [vmem:[#allocation2 + $0x240] sm:$0xff] %v1575
        %1732 = vst [vmem:[#allocation2 + $0x248] sm:$0xff] %v1576
        %1733 = vst [vmem:[#allocation2 + $0x250] sm:$0xff] %v1577
        %1734 = vst [vmem:[#allocation2 + $0x258] sm:$0xff] %v1578
        %1735 = vst [vmem:[#allocation2 + $0x260] sm:$0xff] %v1579
        %1736 = vst [vmem:[#allocation2 + $0x268] sm:$0xff] %v1580
        %1737 = vst [vmem:[#allocation2 + $0x270] sm:$0xff] %v1581
        %1738 = vst [vmem:[#allocation2 + $0x278] sm:$0xff] %v1582
        %1739 = vst [vmem:[#allocation2 + $0x280] sm:$0xff] %v1583
        %1740 = vst [vmem:[#allocation2 + $0x288] sm:$0xff] %v1584
        %1741 = vst [vmem:[#allocation2 + $0x290] sm:$0xff] %v1585
        %1742 = vst [vmem:[#allocation2 + $0x298] sm:$0xff] %v1586
        %1743 = vst [vmem:[#allocation2 + $0x2a0] sm:$0xff] %v1587
        %1744 = vst [vmem:[#allocation2 + $0x2a8] sm:$0xff] %v1588
        %1745 = vst [vmem:[#allocation2 + $0x2b0] sm:$0xff] %v1589
        %1746 = vst [vmem:[#allocation2 + $0x2b8] sm:$0xff] %v1590
        %1747 = vst [vmem:[#allocation2 + $0x2c0] sm:$0xff] %v1591
        %1748 = vst [vmem:[#allocation2 + $0x2c8] sm:$0xff] %v1592
        %1749 = vst [vmem:[#allocation2 + $0x2d0] sm:$0xff] %v1593
        %1750 = vst [vmem:[#allocation2 + $0x2d8] sm:$0xff] %v1594
        %1751 = vst [vmem:[#allocation2 + $0x2e0] sm:$0xff] %v1595
        %1752 = vst [vmem:[#allocation2 + $0x2e8] sm:$0xff] %v1596
        %1753 = vst [vmem:[#allocation2 + $0x2f0] sm:$0xff] %v1597
        %1754 = vst [vmem:[#allocation2 + $0x2f8] sm:$0xff] %v1598
        %1755 = vst [vmem:[#allocation2 + $0x300] sm:$0xff] %v1599
        %1756 = vst [vmem:[#allocation2 + $0x308] sm:$0xff] %v1600
        %1757 = vst [vmem:[#allocation2 + $0x310] sm:$0xff] %v1601
        %1758 = vst [vmem:[#allocation2 + $0x318] sm:$0xff] %v1602
        %1759 = vst [vmem:[#allocation2 + $0x320] sm:$0xff] %v1603
        %1760 = vst [vmem:[#allocation2 + $0x328] sm:$0xff] %v1604
        %1761 = vst [vmem:[#allocation2 + $0x330] sm:$0xff] %v1605
        %1762 = vst [vmem:[#allocation2 + $0x338] sm:$0xff] %v1606
        %1763 = vst [vmem:[#allocation2 + $0x340] sm:$0xff] %v1607
        %1764 = vst [vmem:[#allocation2 + $0x348] sm:$0xff] %v1608
        %1765 = vst [vmem:[#allocation2 + $0x350] sm:$0xff] %v1609
        %1766 = vst [vmem:[#allocation2 + $0x358] sm:$0xff] %v1610
        %1767 = vst [vmem:[#allocation2 + $0x360] sm:$0xff] %v1611
        %1768 = vst [vmem:[#allocation2 + $0x368] sm:$0xff] %v1612
        %1769 = vst [vmem:[#allocation2 + $0x370] sm:$0xff] %v1613
        %1770 = vst [vmem:[#allocation2 + $0x378] sm:$0xff] %v1614
        %1771 = vst [vmem:[#allocation2 + $0x380] sm:$0xff] %v1615
        %1772 = vst [vmem:[#allocation2 + $0x388] sm:$0xff] %v1616
        %1773 = vst [vmem:[#allocation2 + $0x390] sm:$0xff] %v1617
        %1774 = vst [vmem:[#allocation2 + $0x398] sm:$0xff] %v1618
        %1775 = vst [vmem:[#allocation2 + $0x3a0] sm:$0xff] %v1619
        %1776 = vst [vmem:[#allocation2 + $0x3a8] sm:$0xff] %v1620
        %1777 = vst [vmem:[#allocation2 + $0x3b0] sm:$0xff] %v1621
        %1778 = vst [vmem:[#allocation2 + $0x3b8] sm:$0xff] %v1622
        %1779 = vst [vmem:[#allocation2 + $0x3c0] sm:$0xff] %v1623
        %1780 = vst [vmem:[#allocation2 + $0x3c8] sm:$0xff] %v1624
        %1781 = vst [vmem:[#allocation2 + $0x3d0] sm:$0xff] %v1625
        %1782 = vst [vmem:[#allocation2 + $0x3d8] sm:$0xff] %v1626
        %1783 = vst [vmem:[#allocation2 + $0x3e0] sm:$0xff] %v1627
        %1784 = vst [vmem:[#allocation2 + $0x3e8] sm:$0xff] %v1628
        %1785 = vst [vmem:[#allocation2 + $0x3f0] sm:$0xff] %v1629
        %1786 = vst [vmem:[#allocation2 + $0x3f8] sm:$0xff] %v1630
        %1787 = vst [vmem:[#allocation2 + $0x400] sm:$0xff] %v1631
        %1788 = vst [vmem:[#allocation2 + $0x408] sm:$0xff] %v1632
        %1789 = vst [vmem:[#allocation2 + $0x410] sm:$0xff] %v1633
        %1790 = vst [vmem:[#allocation2 + $0x418] sm:$0xff] %v1634
        %1791 = vst [vmem:[#allocation2 + $0x420] sm:$0xff] %v1635
        %1792 = vst [vmem:[#allocation2 + $0x428] sm:$0xff] %v1636
        %1793 = vst [vmem:[#allocation2 + $0x430] sm:$0xff] %v1637
        %1794 = vst [vmem:[#allocation2 + $0x438] sm:$0xff] %v1638
        %1795 = vst [vmem:[#allocation2 + $0x440] sm:$0xff] %v1639
        %1796 = vst [vmem:[#allocation2 + $0x448] sm:$0xff] %v1640
        %1797 = vst [vmem:[#allocation2 + $0x450] sm:$0xff] %v1641
        %1798 = vst [vmem:[#allocation2 + $0x458] sm:$0xff] %v1642
        %1799 = vst [vmem:[#allocation2 + $0x460] sm:$0xff] %v1643
        %1800 = vst [vmem:[#allocation2 + $0x468] sm:$0xff] %v1644
        %1801 = vst [vmem:[#allocation2 + $0x470] sm:$0xff] %v1645
        %1802 = vst [vmem:[#allocation2 + $0x478] sm:$0xff] %v1646
        %1803 = vst [vmem:[#allocation2 + $0x480] sm:$0xff] %v1647
        %1804 = vst [vmem:[#allocation2 + $0x488] sm:$0xff] %v1648
        %1805 = vst [vmem:[#allocation2 + $0x490] sm:$0xff] %v1649
        %1806 = vst [vmem:[#allocation2 + $0x498] sm:$0xff] %v1650
        %1807 = vst [vmem:[#allocation2 + $0x4a0] sm:$0xff] %v1651
        %1808 = vst [vmem:[#allocation2 + $0x4a8] sm:$0xff] %v1652
        %1809 = vst [vmem:[#allocation2 + $0x4b0] sm:$0xff] %v1653
        %1810 = vst [vmem:[#allocation2 + $0x4b8] sm:$0xff] %v1654
        %1811 = vst [vmem:[#allocation2 + $0x4c0] sm:$0xff] %v1655
        %1812 = vst [vmem:[#allocation2 + $0x4c8] sm:$0xff] %v1656
        %1813 = vst [vmem:[#allocation2 + $0x4d0] sm:$0xff] %v1657
        %1814 = vst [vmem:[#allocation2 + $0x4d8] sm:$0xff] %v1658
        %1815 = vst [vmem:[#allocation3] sm:$0xff] 0.0
        %1816 = vst [vmem:[#allocation3 + $0x8] sm:$0xff] 0.0
        %1817 = vst [vmem:[#allocation3 + $0x10] sm:$0xff] 0.0
        %1818 = vst [vmem:[#allocation3 + $0x18] sm:$0xff] 0.0
        %1819 = vst [vmem:[#allocation3 + $0x20] sm:$0xff] 0.0
        %1820 = vst [vmem:[#allocation3 + $0x28] sm:$0xff] 0.0
        %1821 = vst [vmem:[#allocation3 + $0x30] sm:$0xff] 0.0
        %1822 = vst [vmem:[#allocation3 + $0x38] sm:$0xff] 0.0
        %1823 = vst [vmem:[#allocation3 + $0x40] sm:$0xff] 0.0
        %1824 = vst [vmem:[#allocation3 + $0x48] sm:$0xff] 0.0
        %1825 = vst [vmem:[#allocation3 + $0x50] sm:$0xff] 0.0
        %1826 = vst [vmem:[#allocation3 + $0x58] sm:$0xff] 0.0
        %1827 = vst [vmem:[#allocation3 + $0x60] sm:$0xff] 0.0
        %1828 = vst [vmem:[#allocation3 + $0x68] sm:$0xff] 0.0
        %1829 = vst [vmem:[#allocation3 + $0x70] sm:$0xff] 0.0
        %1830 = vst [vmem:[#allocation3 + $0x78] sm:$0xff] 0.0
        %1831 = vst [vmem:[#allocation3 + $0x80] sm:$0xff] 0.0
        %1832 = vst [vmem:[#allocation3 + $0x88] sm:$0xff] 0.0
        %1833 = vst [vmem:[#allocation3 + $0x90] sm:$0xff] 0.0
        %1834 = vst [vmem:[#allocation3 + $0x98] sm:$0xff] 0.0
        %1835 = vst [vmem:[#allocation3 + $0xa0] sm:$0xff] 0.0
        %1836 = vst [vmem:[#allocation3 + $0xa8] sm:$0xff] 0.0
        %1837 = vst [vmem:[#allocation3 + $0xb0] sm:$0xff] 0.0
        %1838 = vst [vmem:[#allocation3 + $0xb8] sm:$0xff] 0.0
        %1839 = vst [vmem:[#allocation3 + $0xc0] sm:$0xff] 0.0
        %1840 = vst [vmem:[#allocation3 + $0xc8] sm:$0xff] 0.0
        %1841 = vst [vmem:[#allocation3 + $0xd0] sm:$0xff] 0.0
        %1842 = vst [vmem:[#allocation3 + $0xd8] sm:$0xff] 0.0
        %1843 = vst [vmem:[#allocation3 + $0xe0] sm:$0xff] 0.0
        %1844 = vst [vmem:[#allocation3 + $0xe8] sm:$0xff] 0.0
        %1845 = vst [vmem:[#allocation3 + $0xf0] sm:$0xff] 0.0
        %1846 = vst [vmem:[#allocation3 + $0xf8] sm:$0xff] 0.0
        %1847 = vst [vmem:[#allocation3 + $0x100] sm:$0xff] 0.0
        %1848 = vst [vmem:[#allocation3 + $0x108] sm:$0xff] 0.0
        %1849 = vst [vmem:[#allocation3 + $0x110] sm:$0xff] 0.0
        %1850 = vst [vmem:[#allocation3 + $0x118] sm:$0xff] 0.0
        %1851 = vst [vmem:[#allocation3 + $0x120] sm:$0xff] 0.0
        %1852 = vst [vmem:[#allocation3 + $0x128] sm:$0xff] 0.0
        %1853 = vst [vmem:[#allocation3 + $0x130] sm:$0xff] 0.0
        %1854 = vst [vmem:[#allocation3 + $0x138] sm:$0xff] 0.0
        %1855 = vst [vmem:[#allocation3 + $0x140] sm:$0xff] 0.0
        %1856 = vst [vmem:[#allocation3 + $0x148] sm:$0xff] 0.0
        %1857 = vst [vmem:[#allocation3 + $0x150] sm:$0xff] 0.0
        %1858 = vst [vmem:[#allocation3 + $0x158] sm:$0xff] 0.0
        %1859 = vst [vmem:[#allocation3 + $0x160] sm:$0xff] 0.0
        %1860 = vst [vmem:[#allocation3 + $0x168] sm:$0xff] 0.0
        %1861 = vst [vmem:[#allocation3 + $0x170] sm:$0xff] 0.0
        %1862 = vst [vmem:[#allocation3 + $0x178] sm:$0xff] 0.0
        %1863 = vst [vmem:[#allocation3 + $0x180] sm:$0xff] 0.0
        %1864 = vst [vmem:[#allocation3 + $0x188] sm:$0xff] 0.0
        %1865 = vst [vmem:[#allocation3 + $0x190] sm:$0xff] 0.0
        %1866 = vst [vmem:[#allocation3 + $0x198] sm:$0xff] 0.0
        %1867 = vst [vmem:[#allocation3 + $0x1a0] sm:$0xff] 0.0
        %1868 = vst [vmem:[#allocation3 + $0x1a8] sm:$0xff] 0.0
        %1869 = vst [vmem:[#allocation3 + $0x1b0] sm:$0xff] 0.0
        %1870 = vst [vmem:[#allocation3 + $0x1b8] sm:$0xff] 0.0
        %1871 = vst [vmem:[#allocation3 + $0x1c0] sm:$0xff] 0.0
        %1872 = vst [vmem:[#allocation3 + $0x1c8] sm:$0xff] 0.0
        %1873 = vst [vmem:[#allocation3 + $0x1d0] sm:$0xff] 0.0
        %1874 = vst [vmem:[#allocation3 + $0x1d8] sm:$0xff] 0.0
        %1875 = vst [vmem:[#allocation5] sm:$0xff] 0.0
        %1876 = vst [vmem:[#allocation5 + $0x8] sm:$0xff] 0.0
        %1877 = vst [vmem:[#allocation5 + $0x10] sm:$0xff] 0.0
        %1878 = vst [vmem:[#allocation5 + $0x18] sm:$0xff] 0.0
        %1879 = vst [vmem:[#allocation5 + $0x20] sm:$0xff] 0.0
        %1880 = vst [vmem:[#allocation5 + $0x28] sm:$0xff] 0.0
        %1881 = vst [vmem:[#allocation5 + $0x30] sm:$0xff] 0.0
        %1882 = vst [vmem:[#allocation5 + $0x38] sm:$0xff] 0.0
        %1883 = vst [vmem:[#allocation5 + $0x40] sm:$0xff] 0.0
        %1884 = vst [vmem:[#allocation5 + $0x48] sm:$0xff] 0.0
        %1885 = vst [vmem:[#allocation5 + $0x50] sm:$0xff] 0.0
        %1886 = vst [vmem:[#allocation5 + $0x58] sm:$0xff] 0.0
        %1887 = vst [vmem:[#allocation5 + $0x60] sm:$0xff] 0.0
        %1888 = vst [vmem:[#allocation5 + $0x68] sm:$0xff] 0.0
        %1889 = vst [vmem:[#allocation5 + $0x70] sm:$0xff] 0.0
        %1890 = vst [vmem:[#allocation5 + $0x78] sm:$0xff] 0.0
        %1891 = vst [vmem:[#allocation5 + $0x80] sm:$0xff] 0.0
        %1892 = vst [vmem:[#allocation5 + $0x88] sm:$0xff] 0.0
        %1893 = vst [vmem:[#allocation5 + $0x90] sm:$0xff] 0.0
        %1894 = vst [vmem:[#allocation5 + $0x98] sm:$0xff] 0.0
        %1895 = vst [vmem:[#allocation5 + $0xa0] sm:$0xff] 0.0
        %1896 = vst [vmem:[#allocation5 + $0xa8] sm:$0xff] 0.0
        %1897 = vst [vmem:[#allocation5 + $0xb0] sm:$0xff] 0.0
        %1898 = vst [vmem:[#allocation5 + $0xb8] sm:$0xff] 0.0
        %1899 = vst [vmem:[#allocation5 + $0xc0] sm:$0x3f] 0.0
        %v1900 = vld [vmem:[#allocation2] ss:$2 sm:$0xff]
        %s1901 = scalar_lea.vmem [#allocation2], 16
        %v1902 = vld [vmem:[%s1901] ss:$2 sm:$0xf]
        %s1903 = scalar_lea.vmem [#allocation2], 1
        %v1904 = vld [vmem:[%s1903] ss:$2 sm:$0xff]
        %s1905 = scalar_lea.vmem [#allocation2], 17
        %v1906 = vld [vmem:[%s1905] ss:$2 sm:$0xf]
        %v1907 = vmax.f32 %v1900, %v1904
        %v1908 = vmax.f32 %v1902, %v1906
        %s1909 = scalar_lea.vmem [#allocation2], 24
        %v1910 = vld [vmem:[%s1909] ss:$2 sm:$0xff]
        %s1911 = scalar_lea.vmem [#allocation2], 40
        %v1912 = vld [vmem:[%s1911] ss:$2 sm:$0xf]
        %v1913 = vmax.f32 %v1907, %v1910
        %v1914 = vmax.f32 %v1908, %v1912
        %s1915 = scalar_lea.vmem [#allocation2], 25
        %v1916 = vld [vmem:[%s1915] ss:$2 sm:$0xff]
        %s1917 = scalar_lea.vmem [#allocation2], 41
        %v1918 = vld [vmem:[%s1917] ss:$2 sm:$0xf]
        %v1919 = vmax.f32 %v1913, %v1916
        %v1920 = vmax.f32 %v1914, %v1918
        %1921 = vst [vmem:[#allocation3 + $0x22] sm:$0xff] %v1919
        %1922 = vst [vmem:[#allocation3 + $0x2a] sm:$0xf] %v1920
        %s1923 = scalar_lea.vmem [#allocation2], 48
        %v1924 = vld [vmem:[%s1923] ss:$2 sm:$0xff]
        %s1925 = scalar_lea.vmem [#allocation2], 64
        %v1926 = vld [vmem:[%s1925] ss:$2 sm:$0xf]
        %s1927 = scalar_lea.vmem [#allocation2], 49
        %v1928 = vld [vmem:[%s1927] ss:$2 sm:$0xff]
        %s1929 = scalar_lea.vmem [#allocation2], 65
        %v1930 = vld [vmem:[%s1929] ss:$2 sm:$0xf]
        %v1931 = vmax.f32 %v1924, %v1928
        %v1932 = vmax.f32 %v1926, %v1930
        %s1933 = scalar_lea.vmem [#allocation2], 72
        %v1934 = vld [vmem:[%s1933] ss:$2 sm:$0xff]
        %s1935 = scalar_lea.vmem [#allocation2], 88
        %v1936 = vld [vmem:[%s1935] ss:$2 sm:$0xf]
        %v1937 = vmax.f32 %v1931, %v1934
        %v1938 = vmax.f32 %v1932, %v1936
        %s1939 = scalar_lea.vmem [#allocation2], 73
        %v1940 = vld [vmem:[%s1939] ss:$2 sm:$0xff]
        %s1941 = scalar_lea.vmem [#allocation2], 89
        %v1942 = vld [vmem:[%s1941] ss:$2 sm:$0xf]
        %v1943 = vmax.f32 %v1937, %v1940
        %v1944 = vmax.f32 %v1938, %v1942
        %1945 = vst [vmem:[#allocation3 + $0x32] sm:$0xff] %v1943
        %1946 = vst [vmem:[#allocation3 + $0x3a] sm:$0xf] %v1944
        %s1947 = scalar_lea.vmem [#allocation2], 96
        %v1948 = vld [vmem:[%s1947] ss:$2 sm:$0xff]
        %s1949 = scalar_lea.vmem [#allocation2], 112
        %v1950 = vld [vmem:[%s1949] ss:$2 sm:$0xf]
        %s1951 = scalar_lea.vmem [#allocation2], 97
        %v1952 = vld [vmem:[%s1951] ss:$2 sm:$0xff]
        %s1953 = scalar_lea.vmem [#allocation2], 113
        %v1954 = vld [vmem:[%s1953] ss:$2 sm:$0xf]
        %v1955 = vmax.f32 %v1948, %v1952
        %v1956 = vmax.f32 %v1950, %v1954
        %s1957 = scalar_lea.vmem [#allocation2], 120
        %v1958 = vld [vmem:[%s1957] ss:$2 sm:$0xff]
        %s1959 = scalar_lea.vmem [#allocation2], 136
        %v1960 = vld [vmem:[%s1959] ss:$2 sm:$0xf]
        %v1961 = vmax.f32 %v1955, %v1958
        %v1962 = vmax.f32 %v1956, %v1960
        %s1963 = scalar_lea.vmem [#allocation2], 121
        %v1964 = vld [vmem:[%s1963] ss:$2 sm:$0xff]
        %s1965 = scalar_lea.vmem [#allocation2], 137
        %v1966 = vld [vmem:[%s1965] ss:$2 sm:$0xf]
        %v1967 = vmax.f32 %v1961, %v1964
        %v1968 = vmax.f32 %v1962, %v1966
        %1969 = vst [vmem:[#allocation3 + $0x42] sm:$0xff] %v1967
        %1970 = vst [vmem:[#allocation3 + $0x4a] sm:$0xf] %v1968
        %s1971 = scalar_lea.vmem [#allocation2], 144
        %v1972 = vld [vmem:[%s1971] ss:$2 sm:$0xff]
        %s1973 = scalar_lea.vmem [#allocation2], 160
        %v1974 = vld [vmem:[%s1973] ss:$2 sm:$0xf]
        %s1975 = scalar_lea.vmem [#allocation2], 145
        %v1976 = vld [vmem:[%s1975] ss:$2 sm:$0xff]
        %s1977 = scalar_lea.vmem [#allocation2], 161
        %v1978 = vld [vmem:[%s1977] ss:$2 sm:$0xf]
        %v1979 = vmax.f32 %v1972, %v1976
        %v1980 = vmax.f32 %v1974, %v1978
        %s1981 = scalar_lea.vmem [#allocation2], 168
        %v1982 = vld [vmem:[%s1981] ss:$2 sm:$0xff]
        %s1983 = scalar_lea.vmem [#allocation2], 184
        %v1984 = vld [vmem:[%s1983] ss:$2 sm:$0xf]
        %v1985 = vmax.f32 %v1979, %v1982
        %v1986 = vmax.f32 %v1980, %v1984
        %s1987 = scalar_lea.vmem [#allocation2], 169
        %v1988 = vld [vmem:[%s1987] ss:$2 sm:$0xff]
        %s1989 = scalar_lea.vmem [#allocation2], 185
        %v1990 = vld [vmem:[%s1989] ss:$2 sm:$0xf]
        %v1991 = vmax.f32 %v1985, %v1988
        %v1992 = vmax.f32 %v1986, %v1990
        %1993 = vst [vmem:[#allocation3 + $0x52] sm:$0xff] %v1991
        %1994 = vst [vmem:[#allocation3 + $0x5a] sm:$0xf] %v1992
        %s1995 = scalar_lea.vmem [#allocation2], 192
        %v1996 = vld [vmem:[%s1995] ss:$2 sm:$0xff]
        %s1997 = scalar_lea.vmem [#allocation2], 208
        %v1998 = vld [vmem:[%s1997] ss:$2 sm:$0xf]
        %s1999 = scalar_lea.vmem [#allocation2], 193
        %v2000 = vld [vmem:[%s1999] ss:$2 sm:$0xff]
        %s2001 = scalar_lea.vmem [#allocation2], 209
        %v2002 = vld [vmem:[%s2001] ss:$2 sm:$0xf]
        %v2003 = vmax.f32 %v1996, %v2000
        %v2004 = vmax.f32 %v1998, %v2002
        %s2005 = scalar_lea.vmem [#allocation2], 216
        %v2006 = vld [vmem:[%s2005] ss:$2 sm:$0xff]
        %s2007 = scalar_lea.vmem [#allocation2], 232
        %v2008 = vld [vmem:[%s2007] ss:$2 sm:$0xf]
        %v2009 = vmax.f32 %v2003, %v2006
        %v2010 = vmax.f32 %v2004, %v2008
        %s2011 = scalar_lea.vmem [#allocation2], 217
        %v2012 = vld [vmem:[%s2011] ss:$2 sm:$0xff]
        %s2013 = scalar_lea.vmem [#allocation2], 233
        %v2014 = vld [vmem:[%s2013] ss:$2 sm:$0xf]
        %v2015 = vmax.f32 %v2009, %v2012
        %v2016 = vmax.f32 %v2010, %v2014
        %2017 = vst [vmem:[#allocation3 + $0x62] sm:$0xff] %v2015
        %2018 = vst [vmem:[#allocation3 + $0x6a] sm:$0xf] %v2016
        %s2019 = scalar_lea.vmem [#allocation2], 240
        %v2020 = vld [vmem:[%s2019] ss:$2 sm:$0xff]
        %s2021 = scalar_lea.vmem [#allocation2], 256
        %v2022 = vld [vmem:[%s2021] ss:$2 sm:$0xf]
        %s2023 = scalar_lea.vmem [#allocation2], 241
        %v2024 = vld [vmem:[%s2023] ss:$2 sm:$0xff]
        %s2025 = scalar_lea.vmem [#allocation2], 257
        %v2026 = vld [vmem:[%s2025] ss:$2 sm:$0xf]
        %v2027 = vmax.f32 %v2020, %v2024
        %v2028 = vmax.f32 %v2022, %v2026
        %s2029 = scalar_lea.vmem [#allocation2], 264
        %v2030 = vld [vmem:[%s2029] ss:$2 sm:$0xff]
        %s2031 = scalar_lea.vmem [#allocation2], 280
        %v2032 = vld [vmem:[%s2031] ss:$2 sm:$0xf]
        %v2033 = vmax.f32 %v2027, %v2030
        %v2034 = vmax.f32 %v2028, %v2032
        %s2035 = scalar_lea.vmem [#allocation2], 265
        %v2036 = vld [vmem:[%s2035] ss:$2 sm:$0xff]
        %s2037 = scalar_lea.vmem [#allocation2], 281
        %v2038 = vld [vmem:[%s2037] ss:$2 sm:$0xf]
        %v2039 = vmax.f32 %v2033, %v2036
        %v2040 = vmax.f32 %v2034, %v2038
        %2041 = vst [vmem:[#allocation3 + $0x72] sm:$0xff] %v2039
        %2042 = vst [vmem:[#allocation3 + $0x7a] sm:$0xf] %v2040
        %s2043 = scalar_lea.vmem [#allocation2], 288
        %v2044 = vld [vmem:[%s2043] ss:$2 sm:$0xff]
        %s2045 = scalar_lea.vmem [#allocation2], 304
        %v2046 = vld [vmem:[%s2045] ss:$2 sm:$0xf]
        %s2047 = scalar_lea.vmem [#allocation2], 289
        %v2048 = vld [vmem:[%s2047] ss:$2 sm:$0xff]
        %s2049 = scalar_lea.vmem [#allocation2], 305
        %v2050 = vld [vmem:[%s2049] ss:$2 sm:$0xf]
        %v2051 = vmax.f32 %v2044, %v2048
        %v2052 = vmax.f32 %v2046, %v2050
        %s2053 = scalar_lea.vmem [#allocation2], 312
        %v2054 = vld [vmem:[%s2053] ss:$2 sm:$0xff]
        %s2055 = scalar_lea.vmem [#allocation2], 328
        %v2056 = vld [vmem:[%s2055] ss:$2 sm:$0xf]
        %v2057 = vmax.f32 %v2051, %v2054
        %v2058 = vmax.f32 %v2052, %v2056
        %s2059 = scalar_lea.vmem [#allocation2], 313
        %v2060 = vld [vmem:[%s2059] ss:$2 sm:$0xff]
        %s2061 = scalar_lea.vmem [#allocation2], 329
        %v2062 = vld [vmem:[%s2061] ss:$2 sm:$0xf]
        %v2063 = vmax.f32 %v2057, %v2060
        %v2064 = vmax.f32 %v2058, %v2062
        %2065 = vst [vmem:[#allocation3 + $0x82] sm:$0xff] %v2063
        %2066 = vst [vmem:[#allocation3 + $0x8a] sm:$0xf] %v2064
        %s2067 = scalar_lea.vmem [#allocation2], 336
        %v2068 = vld [vmem:[%s2067] ss:$2 sm:$0xff]
        %s2069 = scalar_lea.vmem [#allocation2], 352
        %v2070 = vld [vmem:[%s2069] ss:$2 sm:$0xf]
        %s2071 = scalar_lea.vmem [#allocation2], 337
        %v2072 = vld [vmem:[%s2071] ss:$2 sm:$0xff]
        %s2073 = scalar_lea.vmem [#allocation2], 353
        %v2074 = vld [vmem:[%s2073] ss:$2 sm:$0xf]
        %v2075 = vmax.f32 %v2068, %v2072
        %v2076 = vmax.f32 %v2070, %v2074
        %s2077 = scalar_lea.vmem [#allocation2], 360
        %v2078 = vld [vmem:[%s2077] ss:$2 sm:$0xff]
        %s2079 = scalar_lea.vmem [#allocation2], 376
        %v2080 = vld [vmem:[%s2079] ss:$2 sm:$0xf]
        %v2081 = vmax.f32 %v2075, %v2078
        %v2082 = vmax.f32 %v2076, %v2080
        %s2083 = scalar_lea.vmem [#allocation2], 361
        %v2084 = vld [vmem:[%s2083] ss:$2 sm:$0xff]
        %s2085 = scalar_lea.vmem [#allocation2], 377
        %v2086 = vld [vmem:[%s2085] ss:$2 sm:$0xf]
        %v2087 = vmax.f32 %v2081, %v2084
        %v2088 = vmax.f32 %v2082, %v2086
        %2089 = vst [vmem:[#allocation3 + $0x92] sm:$0xff] %v2087
        %2090 = vst [vmem:[#allocation3 + $0x9a] sm:$0xf] %v2088
        %s2091 = scalar_lea.vmem [#allocation2], 384
        %v2092 = vld [vmem:[%s2091] ss:$2 sm:$0xff]
        %s2093 = scalar_lea.vmem [#allocation2], 400
        %v2094 = vld [vmem:[%s2093] ss:$2 sm:$0xf]
        %s2095 = scalar_lea.vmem [#allocation2], 385
        %v2096 = vld [vmem:[%s2095] ss:$2 sm:$0xff]
        %s2097 = scalar_lea.vmem [#allocation2], 401
        %v2098 = vld [vmem:[%s2097] ss:$2 sm:$0xf]
        %v2099 = vmax.f32 %v2092, %v2096
        %v2100 = vmax.f32 %v2094, %v2098
        %s2101 = scalar_lea.vmem [#allocation2], 408
        %v2102 = vld [vmem:[%s2101] ss:$2 sm:$0xff]
        %s2103 = scalar_lea.vmem [#allocation2], 424
        %v2104 = vld [vmem:[%s2103] ss:$2 sm:$0xf]
        %v2105 = vmax.f32 %v2099, %v2102
        %v2106 = vmax.f32 %v2100, %v2104
        %s2107 = scalar_lea.vmem [#allocation2], 409
        %v2108 = vld [vmem:[%s2107] ss:$2 sm:$0xff]
        %s2109 = scalar_lea.vmem [#allocation2], 425
        %v2110 = vld [vmem:[%s2109] ss:$2 sm:$0xf]
        %v2111 = vmax.f32 %v2105, %v2108
        %v2112 = vmax.f32 %v2106, %v2110
        %2113 = vst [vmem:[#allocation3 + $0xa2] sm:$0xff] %v2111
        %2114 = vst [vmem:[#allocation3 + $0xaa] sm:$0xf] %v2112
        %s2115 = scalar_lea.vmem [#allocation2], 432
        %v2116 = vld [vmem:[%s2115] ss:$2 sm:$0xff]
        %s2117 = scalar_lea.vmem [#allocation2], 448
        %v2118 = vld [vmem:[%s2117] ss:$2 sm:$0xf]
        %s2119 = scalar_lea.vmem [#allocation2], 433
        %v2120 = vld [vmem:[%s2119] ss:$2 sm:$0xff]
        %s2121 = scalar_lea.vmem [#allocation2], 449
        %v2122 = vld [vmem:[%s2121] ss:$2 sm:$0xf]
        %v2123 = vmax.f32 %v2116, %v2120
        %v2124 = vmax.f32 %v2118, %v2122
        %s2125 = scalar_lea.vmem [#allocation2], 456
        %v2126 = vld [vmem:[%s2125] ss:$2 sm:$0xff]
        %s2127 = scalar_lea.vmem [#allocation2], 472
        %v2128 = vld [vmem:[%s2127] ss:$2 sm:$0xf]
        %v2129 = vmax.f32 %v2123, %v2126
        %v2130 = vmax.f32 %v2124, %v2128
        %s2131 = scalar_lea.vmem [#allocation2], 457
        %v2132 = vld [vmem:[%s2131] ss:$2 sm:$0xff]
        %s2133 = scalar_lea.vmem [#allocation2], 473
        %v2134 = vld [vmem:[%s2133] ss:$2 sm:$0xf]
        %v2135 = vmax.f32 %v2129, %v2132
        %v2136 = vmax.f32 %v2130, %v2134
        %2137 = vst [vmem:[#allocation3 + $0xb2] sm:$0xff] %v2135
        %2138 = vst [vmem:[#allocation3 + $0xba] sm:$0xf] %v2136
        %s2139 = scalar_lea.vmem [#allocation2], 480
        %v2140 = vld [vmem:[%s2139] ss:$2 sm:$0xff]
        %s2141 = scalar_lea.vmem [#allocation2], 496
        %v2142 = vld [vmem:[%s2141] ss:$2 sm:$0xf]
        %s2143 = scalar_lea.vmem [#allocation2], 481
        %v2144 = vld [vmem:[%s2143] ss:$2 sm:$0xff]
        %s2145 = scalar_lea.vmem [#allocation2], 497
        %v2146 = vld [vmem:[%s2145] ss:$2 sm:$0xf]
        %v2147 = vmax.f32 %v2140, %v2144
        %v2148 = vmax.f32 %v2142, %v2146
        %s2149 = scalar_lea.vmem [#allocation2], 504
        %v2150 = vld [vmem:[%s2149] ss:$2 sm:$0xff]
        %s2151 = scalar_lea.vmem [#allocation2], 520
        %v2152 = vld [vmem:[%s2151] ss:$2 sm:$0xf]
        %v2153 = vmax.f32 %v2147, %v2150
        %v2154 = vmax.f32 %v2148, %v2152
        %s2155 = scalar_lea.vmem [#allocation2], 505
        %v2156 = vld [vmem:[%s2155] ss:$2 sm:$0xff]
        %s2157 = scalar_lea.vmem [#allocation2], 521
        %v2158 = vld [vmem:[%s2157] ss:$2 sm:$0xf]
        %v2159 = vmax.f32 %v2153, %v2156
        %v2160 = vmax.f32 %v2154, %v2158
        %2161 = vst [vmem:[#allocation3 + $0xc2] sm:$0xff] %v2159
        %2162 = vst [vmem:[#allocation3 + $0xca] sm:$0xf] %v2160
        %s2163 = scalar_lea.vmem [#allocation2], 528
        %v2164 = vld [vmem:[%s2163] ss:$2 sm:$0xff]
        %s2165 = scalar_lea.vmem [#allocation2], 544
        %v2166 = vld [vmem:[%s2165] ss:$2 sm:$0xf]
        %s2167 = scalar_lea.vmem [#allocation2], 529
        %v2168 = vld [vmem:[%s2167] ss:$2 sm:$0xff]
        %s2169 = scalar_lea.vmem [#allocation2], 545
        %v2170 = vld [vmem:[%s2169] ss:$2 sm:$0xf]
        %v2171 = vmax.f32 %v2164, %v2168
        %v2172 = vmax.f32 %v2166, %v2170
        %s2173 = scalar_lea.vmem [#allocation2], 552
        %v2174 = vld [vmem:[%s2173] ss:$2 sm:$0xff]
        %s2175 = scalar_lea.vmem [#allocation2], 568
        %v2176 = vld [vmem:[%s2175] ss:$2 sm:$0xf]
        %v2177 = vmax.f32 %v2171, %v2174
        %v2178 = vmax.f32 %v2172, %v2176
        %s2179 = scalar_lea.vmem [#allocation2], 553
        %v2180 = vld [vmem:[%s2179] ss:$2 sm:$0xff]
        %s2181 = scalar_lea.vmem [#allocation2], 569
        %v2182 = vld [vmem:[%s2181] ss:$2 sm:$0xf]
        %v2183 = vmax.f32 %v2177, %v2180
        %v2184 = vmax.f32 %v2178, %v2182
        %2185 = vst [vmem:[#allocation3 + $0xd2] sm:$0xff] %v2183
        %2186 = vst [vmem:[#allocation3 + $0xda] sm:$0xf] %v2184
        %s2187 = scalar_lea.vmem [#allocation2], 576
        %v2188 = vld [vmem:[%s2187] ss:$2 sm:$0xff]
        %s2189 = scalar_lea.vmem [#allocation2], 592
        %v2190 = vld [vmem:[%s2189] ss:$2 sm:$0xf]
        %s2191 = scalar_lea.vmem [#allocation2], 577
        %v2192 = vld [vmem:[%s2191] ss:$2 sm:$0xff]
        %s2193 = scalar_lea.vmem [#allocation2], 593
        %v2194 = vld [vmem:[%s2193] ss:$2 sm:$0xf]
        %v2195 = vmax.f32 %v2188, %v2192
        %v2196 = vmax.f32 %v2190, %v2194
        %s2197 = scalar_lea.vmem [#allocation2], 600
        %v2198 = vld [vmem:[%s2197] ss:$2 sm:$0xff]
        %s2199 = scalar_lea.vmem [#allocation2], 616
        %v2200 = vld [vmem:[%s2199] ss:$2 sm:$0xf]
        %v2201 = vmax.f32 %v2195, %v2198
        %v2202 = vmax.f32 %v2196, %v2200
        %s2203 = scalar_lea.vmem [#allocation2], 601
        %v2204 = vld [vmem:[%s2203] ss:$2 sm:$0xff]
        %s2205 = scalar_lea.vmem [#allocation2], 617
        %v2206 = vld [vmem:[%s2205] ss:$2 sm:$0xf]
        %v2207 = vmax.f32 %v2201, %v2204
        %v2208 = vmax.f32 %v2202, %v2206
        %2209 = vst [vmem:[#allocation3 + $0xe2] sm:$0xff] %v2207
        %2210 = vst [vmem:[#allocation3 + $0xea] sm:$0xf] %v2208
        %s2211 = scalar_lea.vmem [#allocation2], 624
        %v2212 = vld [vmem:[%s2211] ss:$2 sm:$0xff]
        %s2213 = scalar_lea.vmem [#allocation2], 640
        %v2214 = vld [vmem:[%s2213] ss:$2 sm:$0xf]
        %s2215 = scalar_lea.vmem [#allocation2], 625
        %v2216 = vld [vmem:[%s2215] ss:$2 sm:$0xff]
        %s2217 = scalar_lea.vmem [#allocation2], 641
        %v2218 = vld [vmem:[%s2217] ss:$2 sm:$0xf]
        %v2219 = vmax.f32 %v2212, %v2216
        %v2220 = vmax.f32 %v2214, %v2218
        %s2221 = scalar_lea.vmem [#allocation2], 648
        %v2222 = vld [vmem:[%s2221] ss:$2 sm:$0xff]
        %s2223 = scalar_lea.vmem [#allocation2], 664
        %v2224 = vld [vmem:[%s2223] ss:$2 sm:$0xf]
        %v2225 = vmax.f32 %v2219, %v2222
        %v2226 = vmax.f32 %v2220, %v2224
        %s2227 = scalar_lea.vmem [#allocation2], 649
        %v2228 = vld [vmem:[%s2227] ss:$2 sm:$0xff]
        %s2229 = scalar_lea.vmem [#allocation2], 665
        %v2230 = vld [vmem:[%s2229] ss:$2 sm:$0xf]
        %v2231 = vmax.f32 %v2225, %v2228
        %v2232 = vmax.f32 %v2226, %v2230
        %2233 = vst [vmem:[#allocation3 + $0xf2] sm:$0xff] %v2231
        %2234 = vst [vmem:[#allocation3 + $0xfa] sm:$0xf] %v2232
        %s2235 = scalar_lea.vmem [#allocation2], 672
        %v2236 = vld [vmem:[%s2235] ss:$2 sm:$0xff]
        %s2237 = scalar_lea.vmem [#allocation2], 688
        %v2238 = vld [vmem:[%s2237] ss:$2 sm:$0xf]
        %s2239 = scalar_lea.vmem [#allocation2], 673
        %v2240 = vld [vmem:[%s2239] ss:$2 sm:$0xff]
        %s2241 = scalar_lea.vmem [#allocation2], 689
        %v2242 = vld [vmem:[%s2241] ss:$2 sm:$0xf]
        %v2243 = vmax.f32 %v2236, %v2240
        %v2244 = vmax.f32 %v2238, %v2242
        %s2245 = scalar_lea.vmem [#allocation2], 696
        %v2246 = vld [vmem:[%s2245] ss:$2 sm:$0xff]
        %s2247 = scalar_lea.vmem [#allocation2], 712
        %v2248 = vld [vmem:[%s2247] ss:$2 sm:$0xf]
        %v2249 = vmax.f32 %v2243, %v2246
        %v2250 = vmax.f32 %v2244, %v2248
        %s2251 = scalar_lea.vmem [#allocation2], 697
        %v2252 = vld [vmem:[%s2251] ss:$2 sm:$0xff]
        %s2253 = scalar_lea.vmem [#allocation2], 713
        %v2254 = vld [vmem:[%s2253] ss:$2 sm:$0xf]
        %v2255 = vmax.f32 %v2249, %v2252
        %v2256 = vmax.f32 %v2250, %v2254
        %2257 = vst [vmem:[#allocation3 + $0x102] sm:$0xff] %v2255
        %2258 = vst [vmem:[#allocation3 + $0x10a] sm:$0xf] %v2256
        %s2259 = scalar_lea.vmem [#allocation2], 720
        %v2260 = vld [vmem:[%s2259] ss:$2 sm:$0xff]
        %s2261 = scalar_lea.vmem [#allocation2], 736
        %v2262 = vld [vmem:[%s2261] ss:$2 sm:$0xf]
        %s2263 = scalar_lea.vmem [#allocation2], 721
        %v2264 = vld [vmem:[%s2263] ss:$2 sm:$0xff]
        %s2265 = scalar_lea.vmem [#allocation2], 737
        %v2266 = vld [vmem:[%s2265] ss:$2 sm:$0xf]
        %v2267 = vmax.f32 %v2260, %v2264
        %v2268 = vmax.f32 %v2262, %v2266
        %s2269 = scalar_lea.vmem [#allocation2], 744
        %v2270 = vld [vmem:[%s2269] ss:$2 sm:$0xff]
        %s2271 = scalar_lea.vmem [#allocation2], 760
        %v2272 = vld [vmem:[%s2271] ss:$2 sm:$0xf]
        %v2273 = vmax.f32 %v2267, %v2270
        %v2274 = vmax.f32 %v2268, %v2272
        %s2275 = scalar_lea.vmem [#allocation2], 745
        %v2276 = vld [vmem:[%s2275] ss:$2 sm:$0xff]
        %s2277 = scalar_lea.vmem [#allocation2], 761
        %v2278 = vld [vmem:[%s2277] ss:$2 sm:$0xf]
        %v2279 = vmax.f32 %v2273, %v2276
        %v2280 = vmax.f32 %v2274, %v2278
        %2281 = vst [vmem:[#allocation3 + $0x112] sm:$0xff] %v2279
        %2282 = vst [vmem:[#allocation3 + $0x11a] sm:$0xf] %v2280
        %s2283 = scalar_lea.vmem [#allocation2], 768
        %v2284 = vld [vmem:[%s2283] ss:$2 sm:$0xff]
        %s2285 = scalar_lea.vmem [#allocation2], 784
        %v2286 = vld [vmem:[%s2285] ss:$2 sm:$0xf]
        %s2287 = scalar_lea.vmem [#allocation2], 769
        %v2288 = vld [vmem:[%s2287] ss:$2 sm:$0xff]
        %s2289 = scalar_lea.vmem [#allocation2], 785
        %v2290 = vld [vmem:[%s2289] ss:$2 sm:$0xf]
        %v2291 = vmax.f32 %v2284, %v2288
        %v2292 = vmax.f32 %v2286, %v2290
        %s2293 = scalar_lea.vmem [#allocation2], 792
        %v2294 = vld [vmem:[%s2293] ss:$2 sm:$0xff]
        %s2295 = scalar_lea.vmem [#allocation2], 808
        %v2296 = vld [vmem:[%s2295] ss:$2 sm:$0xf]
        %v2297 = vmax.f32 %v2291, %v2294
        %v2298 = vmax.f32 %v2292, %v2296
        %s2299 = scalar_lea.vmem [#allocation2], 793
        %v2300 = vld [vmem:[%s2299] ss:$2 sm:$0xff]
        %s2301 = scalar_lea.vmem [#allocation2], 809
        %v2302 = vld [vmem:[%s2301] ss:$2 sm:$0xf]
        %v2303 = vmax.f32 %v2297, %v2300
        %v2304 = vmax.f32 %v2298, %v2302
        %2305 = vst [vmem:[#allocation3 + $0x122] sm:$0xff] %v2303
        %2306 = vst [vmem:[#allocation3 + $0x12a] sm:$0xf] %v2304
        %s2307 = scalar_lea.vmem [#allocation2], 816
        %v2308 = vld [vmem:[%s2307] ss:$2 sm:$0xff]
        %s2309 = scalar_lea.vmem [#allocation2], 832
        %v2310 = vld [vmem:[%s2309] ss:$2 sm:$0xf]
        %s2311 = scalar_lea.vmem [#allocation2], 817
        %v2312 = vld [vmem:[%s2311] ss:$2 sm:$0xff]
        %s2313 = scalar_lea.vmem [#allocation2], 833
        %v2314 = vld [vmem:[%s2313] ss:$2 sm:$0xf]
        %v2315 = vmax.f32 %v2308, %v2312
        %v2316 = vmax.f32 %v2310, %v2314
        %s2317 = scalar_lea.vmem [#allocation2], 840
        %v2318 = vld [vmem:[%s2317] ss:$2 sm:$0xff]
        %s2319 = scalar_lea.vmem [#allocation2], 856
        %v2320 = vld [vmem:[%s2319] ss:$2 sm:$0xf]
        %v2321 = vmax.f32 %v2315, %v2318
        %v2322 = vmax.f32 %v2316, %v2320
        %s2323 = scalar_lea.vmem [#allocation2], 841
        %v2324 = vld [vmem:[%s2323] ss:$2 sm:$0xff]
        %s2325 = scalar_lea.vmem [#allocation2], 857
        %v2326 = vld [vmem:[%s2325] ss:$2 sm:$0xf]
        %v2327 = vmax.f32 %v2321, %v2324
        %v2328 = vmax.f32 %v2322, %v2326
        %2329 = vst [vmem:[#allocation3 + $0x132] sm:$0xff] %v2327
        %2330 = vst [vmem:[#allocation3 + $0x13a] sm:$0xf] %v2328
        %s2331 = scalar_lea.vmem [#allocation2], 864
        %v2332 = vld [vmem:[%s2331] ss:$2 sm:$0xff]
        %s2333 = scalar_lea.vmem [#allocation2], 880
        %v2334 = vld [vmem:[%s2333] ss:$2 sm:$0xf]
        %s2335 = scalar_lea.vmem [#allocation2], 865
        %v2336 = vld [vmem:[%s2335] ss:$2 sm:$0xff]
        %s2337 = scalar_lea.vmem [#allocation2], 881
        %v2338 = vld [vmem:[%s2337] ss:$2 sm:$0xf]
        %v2339 = vmax.f32 %v2332, %v2336
        %v2340 = vmax.f32 %v2334, %v2338
        %s2341 = scalar_lea.vmem [#allocation2], 888
        %v2342 = vld [vmem:[%s2341] ss:$2 sm:$0xff]
        %s2343 = scalar_lea.vmem [#allocation2], 904
        %v2344 = vld [vmem:[%s2343] ss:$2 sm:$0xf]
        %v2345 = vmax.f32 %v2339, %v2342
        %v2346 = vmax.f32 %v2340, %v2344
        %s2347 = scalar_lea.vmem [#allocation2], 889
        %v2348 = vld [vmem:[%s2347] ss:$2 sm:$0xff]
        %s2349 = scalar_lea.vmem [#allocation2], 905
        %v2350 = vld [vmem:[%s2349] ss:$2 sm:$0xf]
        %v2351 = vmax.f32 %v2345, %v2348
        %v2352 = vmax.f32 %v2346, %v2350
        %2353 = vst [vmem:[#allocation3 + $0x142] sm:$0xff] %v2351
        %2354 = vst [vmem:[#allocation3 + $0x14a] sm:$0xf] %v2352
        %s2355 = scalar_lea.vmem [#allocation2], 912
        %v2356 = vld [vmem:[%s2355] ss:$2 sm:$0xff]
        %s2357 = scalar_lea.vmem [#allocation2], 928
        %v2358 = vld [vmem:[%s2357] ss:$2 sm:$0xf]
        %s2359 = scalar_lea.vmem [#allocation2], 913
        %v2360 = vld [vmem:[%s2359] ss:$2 sm:$0xff]
        %s2361 = scalar_lea.vmem [#allocation2], 929
        %v2362 = vld [vmem:[%s2361] ss:$2 sm:$0xf]
        %v2363 = vmax.f32 %v2356, %v2360
        %v2364 = vmax.f32 %v2358, %v2362
        %s2365 = scalar_lea.vmem [#allocation2], 936
        %v2366 = vld [vmem:[%s2365] ss:$2 sm:$0xff]
        %s2367 = scalar_lea.vmem [#allocation2], 952
        %v2368 = vld [vmem:[%s2367] ss:$2 sm:$0xf]
        %v2369 = vmax.f32 %v2363, %v2366
        %v2370 = vmax.f32 %v2364, %v2368
        %s2371 = scalar_lea.vmem [#allocation2], 937
        %v2372 = vld [vmem:[%s2371] ss:$2 sm:$0xff]
        %s2373 = scalar_lea.vmem [#allocation2], 953
        %v2374 = vld [vmem:[%s2373] ss:$2 sm:$0xf]
        %v2375 = vmax.f32 %v2369, %v2372
        %v2376 = vmax.f32 %v2370, %v2374
        %2377 = vst [vmem:[#allocation3 + $0x152] sm:$0xff] %v2375
        %2378 = vst [vmem:[#allocation3 + $0x15a] sm:$0xf] %v2376
        %s2379 = scalar_lea.vmem [#allocation2], 960
        %v2380 = vld [vmem:[%s2379] ss:$2 sm:$0xff]
        %s2381 = scalar_lea.vmem [#allocation2], 976
        %v2382 = vld [vmem:[%s2381] ss:$2 sm:$0xf]
        %s2383 = scalar_lea.vmem [#allocation2], 961
        %v2384 = vld [vmem:[%s2383] ss:$2 sm:$0xff]
        %s2385 = scalar_lea.vmem [#allocation2], 977
        %v2386 = vld [vmem:[%s2385] ss:$2 sm:$0xf]
        %v2387 = vmax.f32 %v2380, %v2384
        %v2388 = vmax.f32 %v2382, %v2386
        %s2389 = scalar_lea.vmem [#allocation2], 984
        %v2390 = vld [vmem:[%s2389] ss:$2 sm:$0xff]
        %s2391 = scalar_lea.vmem [#allocation2], 1000
        %v2392 = vld [vmem:[%s2391] ss:$2 sm:$0xf]
        %v2393 = vmax.f32 %v2387, %v2390
        %v2394 = vmax.f32 %v2388, %v2392
        %s2395 = scalar_lea.vmem [#allocation2], 985
        %v2396 = vld [vmem:[%s2395] ss:$2 sm:$0xff]
        %s2397 = scalar_lea.vmem [#allocation2], 1001
        %v2398 = vld [vmem:[%s2397] ss:$2 sm:$0xf]
        %v2399 = vmax.f32 %v2393, %v2396
        %v2400 = vmax.f32 %v2394, %v2398
        %2401 = vst [vmem:[#allocation3 + $0x162] sm:$0xff] %v2399
        %2402 = vst [vmem:[#allocation3 + $0x16a] sm:$0xf] %v2400
        %s2403 = scalar_lea.vmem [#allocation2], 1008
        %v2404 = vld [vmem:[%s2403] ss:$2 sm:$0xff]
        %s2405 = scalar_lea.vmem [#allocation2], 1024
        %v2406 = vld [vmem:[%s2405] ss:$2 sm:$0xf]
        %s2407 = scalar_lea.vmem [#allocation2], 1009
        %v2408 = vld [vmem:[%s2407] ss:$2 sm:$0xff]
        %s2409 = scalar_lea.vmem [#allocation2], 1025
        %v2410 = vld [vmem:[%s2409] ss:$2 sm:$0xf]
        %v2411 = vmax.f32 %v2404, %v2408
        %v2412 = vmax.f32 %v2406, %v2410
        %s2413 = scalar_lea.vmem [#allocation2], 1032
        %v2414 = vld [vmem:[%s2413] ss:$2 sm:$0xff]
        %s2415 = scalar_lea.vmem [#allocation2], 1048
        %v2416 = vld [vmem:[%s2415] ss:$2 sm:$0xf]
        %v2417 = vmax.f32 %v2411, %v2414
        %v2418 = vmax.f32 %v2412, %v2416
        %s2419 = scalar_lea.vmem [#allocation2], 1033
        %v2420 = vld [vmem:[%s2419] ss:$2 sm:$0xff]
        %s2421 = scalar_lea.vmem [#allocation2], 1049
        %v2422 = vld [vmem:[%s2421] ss:$2 sm:$0xf]
        %v2423 = vmax.f32 %v2417, %v2420
        %v2424 = vmax.f32 %v2418, %v2422
        %2425 = vst [vmem:[#allocation3 + $0x172] sm:$0xff] %v2423
        %2426 = vst [vmem:[#allocation3 + $0x17a] sm:$0xf] %v2424
        %s2427 = scalar_lea.vmem [#allocation2], 1056
        %v2428 = vld [vmem:[%s2427] ss:$2 sm:$0xff]
        %s2429 = scalar_lea.vmem [#allocation2], 1072
        %v2430 = vld [vmem:[%s2429] ss:$2 sm:$0xf]
        %s2431 = scalar_lea.vmem [#allocation2], 1057
        %v2432 = vld [vmem:[%s2431] ss:$2 sm:$0xff]
        %s2433 = scalar_lea.vmem [#allocation2], 1073
        %v2434 = vld [vmem:[%s2433] ss:$2 sm:$0xf]
        %v2435 = vmax.f32 %v2428, %v2432
        %v2436 = vmax.f32 %v2430, %v2434
        %s2437 = scalar_lea.vmem [#allocation2], 1080
        %v2438 = vld [vmem:[%s2437] ss:$2 sm:$0xff]
        %s2439 = scalar_lea.vmem [#allocation2], 1096
        %v2440 = vld [vmem:[%s2439] ss:$2 sm:$0xf]
        %v2441 = vmax.f32 %v2435, %v2438
        %v2442 = vmax.f32 %v2436, %v2440
        %s2443 = scalar_lea.vmem [#allocation2], 1081
        %v2444 = vld [vmem:[%s2443] ss:$2 sm:$0xff]
        %s2445 = scalar_lea.vmem [#allocation2], 1097
        %v2446 = vld [vmem:[%s2445] ss:$2 sm:$0xf]
        %v2447 = vmax.f32 %v2441, %v2444
        %v2448 = vmax.f32 %v2442, %v2446
        %2449 = vst [vmem:[#allocation3 + $0x182] sm:$0xff] %v2447
        %2450 = vst [vmem:[#allocation3 + $0x18a] sm:$0xf] %v2448
        %s2451 = scalar_lea.vmem [#allocation2], 1104
        %v2452 = vld [vmem:[%s2451] ss:$2 sm:$0xff]
        %s2453 = scalar_lea.vmem [#allocation2], 1120
        %v2454 = vld [vmem:[%s2453] ss:$2 sm:$0xf]
        %s2455 = scalar_lea.vmem [#allocation2], 1105
        %v2456 = vld [vmem:[%s2455] ss:$2 sm:$0xff]
        %s2457 = scalar_lea.vmem [#allocation2], 1121
        %v2458 = vld [vmem:[%s2457] ss:$2 sm:$0xf]
        %v2459 = vmax.f32 %v2452, %v2456
        %v2460 = vmax.f32 %v2454, %v2458
        %s2461 = scalar_lea.vmem [#allocation2], 1128
        %v2462 = vld [vmem:[%s2461] ss:$2 sm:$0xff]
        %s2463 = scalar_lea.vmem [#allocation2], 1144
        %v2464 = vld [vmem:[%s2463] ss:$2 sm:$0xf]
        %v2465 = vmax.f32 %v2459, %v2462
        %v2466 = vmax.f32 %v2460, %v2464
        %s2467 = scalar_lea.vmem [#allocation2], 1129
        %v2468 = vld [vmem:[%s2467] ss:$2 sm:$0xff]
        %s2469 = scalar_lea.vmem [#allocation2], 1145
        %v2470 = vld [vmem:[%s2469] ss:$2 sm:$0xf]
        %v2471 = vmax.f32 %v2465, %v2468
        %v2472 = vmax.f32 %v2466, %v2470
        %2473 = vst [vmem:[#allocation3 + $0x192] sm:$0xff] %v2471
        %2474 = vst [vmem:[#allocation3 + $0x19a] sm:$0xf] %v2472
        %s2475 = scalar_lea.vmem [#allocation2], 1152
        %v2476 = vld [vmem:[%s2475] ss:$2 sm:$0xff]
        %s2477 = scalar_lea.vmem [#allocation2], 1168
        %v2478 = vld [vmem:[%s2477] ss:$2 sm:$0xf]
        %s2479 = scalar_lea.vmem [#allocation2], 1153
        %v2480 = vld [vmem:[%s2479] ss:$2 sm:$0xff]
        %s2481 = scalar_lea.vmem [#allocation2], 1169
        %v2482 = vld [vmem:[%s2481] ss:$2 sm:$0xf]
        %v2483 = vmax.f32 %v2476, %v2480
        %v2484 = vmax.f32 %v2478, %v2482
        %s2485 = scalar_lea.vmem [#allocation2], 1176
        %v2486 = vld [vmem:[%s2485] ss:$2 sm:$0xff]
        %s2487 = scalar_lea.vmem [#allocation2], 1192
        %v2488 = vld [vmem:[%s2487] ss:$2 sm:$0xf]
        %v2489 = vmax.f32 %v2483, %v2486
        %v2490 = vmax.f32 %v2484, %v2488
        %s2491 = scalar_lea.vmem [#allocation2], 1177
        %v2492 = vld [vmem:[%s2491] ss:$2 sm:$0xff]
        %s2493 = scalar_lea.vmem [#allocation2], 1193
        %v2494 = vld [vmem:[%s2493] ss:$2 sm:$0xf]
        %v2495 = vmax.f32 %v2489, %v2492
        %v2496 = vmax.f32 %v2490, %v2494
        %2497 = vst [vmem:[#allocation3 + $0x1a2] sm:$0xff] %v2495
        %2498 = vst [vmem:[#allocation3 + $0x1aa] sm:$0xf] %v2496
        %s2499 = scalar_lea.vmem [#allocation2], 1200
        %v2500 = vld [vmem:[%s2499] ss:$2 sm:$0xff]
        %s2501 = scalar_lea.vmem [#allocation2], 1216
        %v2502 = vld [vmem:[%s2501] ss:$2 sm:$0xf]
        %s2503 = scalar_lea.vmem [#allocation2], 1201
        %v2504 = vld [vmem:[%s2503] ss:$2 sm:$0xff]
        %s2505 = scalar_lea.vmem [#allocation2], 1217
        %v2506 = vld [vmem:[%s2505] ss:$2 sm:$0xf]
        %v2507 = vmax.f32 %v2500, %v2504
        %v2508 = vmax.f32 %v2502, %v2506
        %s2509 = scalar_lea.vmem [#allocation2], 1224
        %v2510 = vld [vmem:[%s2509] ss:$2 sm:$0xff]
        %s2511 = scalar_lea.vmem [#allocation2], 1240
        %v2512 = vld [vmem:[%s2511] ss:$2 sm:$0xf]
        %v2513 = vmax.f32 %v2507, %v2510
        %v2514 = vmax.f32 %v2508, %v2512
        %s2515 = scalar_lea.vmem [#allocation2], 1225
        %v2516 = vld [vmem:[%s2515] ss:$2 sm:$0xff]
        %s2517 = scalar_lea.vmem [#allocation2], 1241
        %v2518 = vld [vmem:[%s2517] ss:$2 sm:$0xf]
        %v2519 = vmax.f32 %v2513, %v2516
        %v2520 = vmax.f32 %v2514, %v2518
        %2521 = vst [vmem:[#allocation3 + $0x1b2] sm:$0xff] %v2519
        %2522 = vst [vmem:[#allocation3 + $0x1ba] sm:$0xf] %v2520
        %v2523 = vld [vmem:[#allocation3] sm:$0xff]
        %v2524 = vld [vmem:[#allocation3 + $0x8] sm:$0xff]
        %v2525 = vld [vmem:[#allocation3 + $0x10] sm:$0xff]
        %v2526 = vld [vmem:[#allocation3 + $0x18] sm:$0xff]
        %v2527 = vld [vmem:[#allocation3 + $0x20] sm:$0xff]
        %v2528 = vld [vmem:[#allocation3 + $0x28] sm:$0xff]
        %v2529 = vld [vmem:[#allocation3 + $0x30] sm:$0xff]
        %v2530 = vld [vmem:[#allocation3 + $0x38] sm:$0xff]
        %v2531 = vld [vmem:[#allocation3 + $0x40] sm:$0xff]
        %v2532 = vld [vmem:[#allocation3 + $0x48] sm:$0xff]
        %v2533 = vld [vmem:[#allocation3 + $0x50] sm:$0xff]
        %v2534 = vld [vmem:[#allocation3 + $0x58] sm:$0xff]
        %v2535 = vld [vmem:[#allocation3 + $0x60] sm:$0xff]
        %v2536 = vld [vmem:[#allocation3 + $0x68] sm:$0xff]
        %v2537 = vld [vmem:[#allocation3 + $0x70] sm:$0xff]
        %v2538 = vld [vmem:[#allocation3 + $0x78] sm:$0xff]
        %v2539 = vld [vmem:[#allocation3 + $0x80] sm:$0xff]
        %v2540 = vld [vmem:[#allocation3 + $0x88] sm:$0xff]
        %v2541 = vld [vmem:[#allocation3 + $0x90] sm:$0xff]
        %v2542 = vld [vmem:[#allocation3 + $0x98] sm:$0xff]
        %v2543 = vld [vmem:[#allocation3 + $0xa0] sm:$0xff]
        %v2544 = vld [vmem:[#allocation3 + $0xa8] sm:$0xff]
        %v2545 = vld [vmem:[#allocation3 + $0xb0] sm:$0xff]
        %v2546 = vld [vmem:[#allocation3 + $0xb8] sm:$0xff]
        %v2547 = vld [vmem:[#allocation3 + $0xc0] sm:$0xff]
        %v2548 = vld [vmem:[#allocation3 + $0xc8] sm:$0xff]
        %v2549 = vld [vmem:[#allocation3 + $0xd0] sm:$0xff]
        %v2550 = vld [vmem:[#allocation3 + $0xd8] sm:$0xff]
        %v2551 = vld [vmem:[#allocation3 + $0xe0] sm:$0xff]
        %v2552 = vld [vmem:[#allocation3 + $0xe8] sm:$0xff]
        %v2553 = vld [vmem:[#allocation3 + $0xf0] sm:$0xff]
        %v2554 = vld [vmem:[#allocation3 + $0xf8] sm:$0xff]
        %v2555 = vld [vmem:[#allocation3 + $0x100] sm:$0xff]
        %v2556 = vld [vmem:[#allocation3 + $0x108] sm:$0xff]
        %v2557 = vld [vmem:[#allocation3 + $0x110] sm:$0xff]
        %v2558 = vld [vmem:[#allocation3 + $0x118] sm:$0xff]
        %v2559 = vld [vmem:[#allocation3 + $0x120] sm:$0xff]
        %v2560 = vld [vmem:[#allocation3 + $0x128] sm:$0xff]
        %v2561 = vld [vmem:[#allocation3 + $0x130] sm:$0xff]
        %v2562 = vld [vmem:[#allocation3 + $0x138] sm:$0xff]
        %v2563 = vld [vmem:[#allocation3 + $0x140] sm:$0xff]
        %v2564 = vld [vmem:[#allocation3 + $0x148] sm:$0xff]
        %v2565 = vld [vmem:[#allocation3 + $0x150] sm:$0xff]
        %v2566 = vld [vmem:[#allocation3 + $0x158] sm:$0xff]
        %v2567 = vld [vmem:[#allocation3 + $0x160] sm:$0xff]
        %v2568 = vld [vmem:[#allocation3 + $0x168] sm:$0xff]
        %v2569 = vld [vmem:[#allocation3 + $0x170] sm:$0xff]
        %v2570 = vld [vmem:[#allocation3 + $0x178] sm:$0xff]
        %v2571 = vld [vmem:[#allocation3 + $0x180] sm:$0xff]
        %v2572 = vld [vmem:[#allocation3 + $0x188] sm:$0xff]
        %v2573 = vld [vmem:[#allocation3 + $0x190] sm:$0xff]
        %v2574 = vld [vmem:[#allocation3 + $0x198] sm:$0xff]
        %v2575 = vld [vmem:[#allocation3 + $0x1a0] sm:$0xff]
        %v2576 = vld [vmem:[#allocation3 + $0x1a8] sm:$0xff]
        %v2577 = vld [vmem:[#allocation3 + $0x1b0] sm:$0xff]
        %v2578 = vld [vmem:[#allocation3 + $0x1b8] sm:$0xff]
        %v2579 = vld [vmem:[%s3] sm:$0xff]
        %v2580 = vld [vmem:[%s3 + $0x8] sm:$0xff]
        %v2581 = vld [vmem:[%s3 + $0x10] sm:$0xff]
        %v2582 = vld [vmem:[%s3 + $0x18] sm:$0xff]
        %v2583 = vld [vmem:[%s3 + $0x20] sm:$0xff]
        %v2584 = vld [vmem:[%s3 + $0x28] sm:$0xff]
        %v2585 = vld [vmem:[%s3 + $0x30] sm:$0xff]
        %v2586 = vld [vmem:[%s3 + $0x38] sm:$0xff]
        %v2587 = vld [vmem:[%s3 + $0x40] sm:$0xff]
        %v2588 = vld [vmem:[%s3 + $0x48] sm:$0xff]
        %v2589 = vld [vmem:[%s3 + $0x50] sm:$0xff]
        %v2590 = vld [vmem:[%s3 + $0x58] sm:$0xff]
        %v2591 = vld [vmem:[%s3 + $0x60] sm:$0xff]
        %v2592 = vld [vmem:[%s3 + $0x68] sm:$0xff]
        %v2593 = vld [vmem:[%s3 + $0x70] sm:$0xff]
        %v2594 = vld [vmem:[%s3 + $0x78] sm:$0xff]
        %v2595 = vld [vmem:[#allocation3 + $0x1] sm:$0xff]
        %v2596 = vld [vmem:[#allocation3 + $0x9] sm:$0xff]
        %v2597 = vld [vmem:[#allocation3 + $0x11] sm:$0xff]
        %v2598 = vld [vmem:[#allocation3 + $0x19] sm:$0xff]
        %v2599 = vld [vmem:[#allocation3 + $0x21] sm:$0xff]
        %v2600 = vld [vmem:[#allocation3 + $0x29] sm:$0xff]
        %v2601 = vld [vmem:[#allocation3 + $0x31] sm:$0xff]
        %v2602 = vld [vmem:[#allocation3 + $0x39] sm:$0xff]
        %v2603 = vld [vmem:[#allocation3 + $0x41] sm:$0xff]
        %v2604 = vld [vmem:[#allocation3 + $0x49] sm:$0xff]
        %v2605 = vld [vmem:[#allocation3 + $0x51] sm:$0xff]
        %v2606 = vld [vmem:[#allocation3 + $0x59] sm:$0xff]
        %v2607 = vld [vmem:[#allocation3 + $0x61] sm:$0xff]
        %v2608 = vld [vmem:[#allocation3 + $0x69] sm:$0xff]
        %v2609 = vld [vmem:[#allocation3 + $0x71] sm:$0xff]
        %v2610 = vld [vmem:[#allocation3 + $0x79] sm:$0xff]
        %v2611 = vld [vmem:[#allocation3 + $0x81] sm:$0xff]
        %v2612 = vld [vmem:[#allocation3 + $0x89] sm:$0xff]
        %v2613 = vld [vmem:[#allocation3 + $0x91] sm:$0xff]
        %v2614 = vld [vmem:[#allocation3 + $0x99] sm:$0xff]
        %v2615 = vld [vmem:[#allocation3 + $0xa1] sm:$0xff]
        %v2616 = vld [vmem:[#allocation3 + $0xa9] sm:$0xff]
        %v2617 = vld [vmem:[#allocation3 + $0xb1] sm:$0xff]
        %v2618 = vld [vmem:[#allocation3 + $0xb9] sm:$0xff]
        %v2619 = vld [vmem:[#allocation3 + $0xc1] sm:$0xff]
        %v2620 = vld [vmem:[#allocation3 + $0xc9] sm:$0xff]
        %v2621 = vld [vmem:[#allocation3 + $0xd1] sm:$0xff]
        %v2622 = vld [vmem:[#allocation3 + $0xd9] sm:$0xff]
        %v2623 = vld [vmem:[#allocation3 + $0xe1] sm:$0xff]
        %v2624 = vld [vmem:[#allocation3 + $0xe9] sm:$0xff]
        %v2625 = vld [vmem:[#allocation3 + $0xf1] sm:$0xff]
        %v2626 = vld [vmem:[#allocation3 + $0xf9] sm:$0xff]
        %v2627 = vld [vmem:[#allocation3 + $0x101] sm:$0xff]
        %v2628 = vld [vmem:[#allocation3 + $0x109] sm:$0xff]
        %v2629 = vld [vmem:[#allocation3 + $0x111] sm:$0xff]
        %v2630 = vld [vmem:[#allocation3 + $0x119] sm:$0xff]
        %v2631 = vld [vmem:[#allocation3 + $0x121] sm:$0xff]
        %v2632 = vld [vmem:[#allocation3 + $0x129] sm:$0xff]
        %v2633 = vld [vmem:[#allocation3 + $0x131] sm:$0xff]
        %v2634 = vld [vmem:[#allocation3 + $0x139] sm:$0xff]
        %v2635 = vld [vmem:[#allocation3 + $0x141] sm:$0xff]
        %v2636 = vld [vmem:[#allocation3 + $0x149] sm:$0xff]
        %v2637 = vld [vmem:[#allocation3 + $0x151] sm:$0xff]
        %v2638 = vld [vmem:[#allocation3 + $0x159] sm:$0xff]
        %v2639 = vld [vmem:[#allocation3 + $0x161] sm:$0xff]
        %v2640 = vld [vmem:[#allocation3 + $0x169] sm:$0xff]
        %v2641 = vld [vmem:[#allocation3 + $0x171] sm:$0xff]
        %v2642 = vld [vmem:[#allocation3 + $0x179] sm:$0xff]
        %v2643 = vld [vmem:[#allocation3 + $0x181] sm:$0xff]
        %v2644 = vld [vmem:[#allocation3 + $0x189] sm:$0xff]
        %v2645 = vld [vmem:[#allocation3 + $0x191] sm:$0xff]
        %v2646 = vld [vmem:[#allocation3 + $0x199] sm:$0xff]
        %v2647 = vld [vmem:[#allocation3 + $0x1a1] sm:$0xff]
        %v2648 = vld [vmem:[#allocation3 + $0x1a9] sm:$0xff]
        %v2649 = vld [vmem:[#allocation3 + $0x1b1] sm:$0xff]
        %v2650 = vld [vmem:[#allocation3 + $0x1b9] sm:$0xff]
        %s2651 = scalar_lea.vmem %s3, 128
        %v2652 = vld [vmem:[%s2651] sm:$0xff]
        %v2653 = vld [vmem:[%s2651 + $0x8] sm:$0xff]
        %v2654 = vld [vmem:[%s2651 + $0x10] sm:$0xff]
        %v2655 = vld [vmem:[%s2651 + $0x18] sm:$0xff]
        %v2656 = vld [vmem:[%s2651 + $0x20] sm:$0xff]
        %v2657 = vld [vmem:[%s2651 + $0x28] sm:$0xff]
        %v2658 = vld [vmem:[%s2651 + $0x30] sm:$0xff]
        %v2659 = vld [vmem:[%s2651 + $0x38] sm:$0xff]
        %v2660 = vld [vmem:[%s2651 + $0x40] sm:$0xff]
        %v2661 = vld [vmem:[%s2651 + $0x48] sm:$0xff]
        %v2662 = vld [vmem:[%s2651 + $0x50] sm:$0xff]
        %v2663 = vld [vmem:[%s2651 + $0x58] sm:$0xff]
        %v2664 = vld [vmem:[%s2651 + $0x60] sm:$0xff]
        %v2665 = vld [vmem:[%s2651 + $0x68] sm:$0xff]
        %v2666 = vld [vmem:[%s2651 + $0x70] sm:$0xff]
        %v2667 = vld [vmem:[%s2651 + $0x78] sm:$0xff]
        %2668 = vmatpush.msra.mxu0 %v2667
        %2669 = vmatpush.msra.mxu0 %v2666
        %2670 = vmatpush.msra.mxu0 %v2665
        %2671 = vmatpush.msra.mxu0 %v2664
        %2672 = vmatpush.msra.mxu0 %v2663
        %2673 = vmatpush.msra.mxu0 %v2662
        %2674 = vmatpush.msra.mxu0 %v2661
        %2675 = vmatpush.msra.mxu0 %v2660
        %2676 = vmatpush.msra.mxu0 %v2659
        %2677 = vmatpush.msra.mxu0 %v2658
        %2678 = vmatpush.msra.mxu0 %v2657
        %2679 = vmatpush.msra.mxu0 %v2656
        %2680 = vmatpush.msra.mxu0 %v2655
        %2681 = vmatpush.msra.mxu0 %v2654
        %2682 = vmatpush.msra.mxu0 %v2653
        %2683 = vmatpush.msra.mxu0 %v2652
        %2684 = vmatmul.f32.gmra.mxu0 %v2595
        %v2685 = vpop.f32.mrf.mxu0
        %v2686 = vadd.f32 0.0, %v2685
        %2687 = vmatmul.f32.gmra.mxu0 %v2596
        %v2688 = vpop.f32.mrf.mxu0
        %v2689 = vadd.f32 0.0, %v2688
        %2690 = vmatmul.f32.gmra.mxu0 %v2597
        %v2691 = vpop.f32.mrf.mxu0
        %v2692 = vadd.f32 0.0, %v2691
        %2693 = vmatmul.f32.gmra.mxu0 %v2598
        %v2694 = vpop.f32.mrf.mxu0
        %v2695 = vadd.f32 0.0, %v2694
        %2696 = vmatmul.f32.gmra.mxu0 %v2599
        %v2697 = vpop.f32.mrf.mxu0
        %v2698 = vadd.f32 0.0, %v2697
        %2699 = vmatmul.f32.gmra.mxu0 %v2600
        %v2700 = vpop.f32.mrf.mxu0
        %v2701 = vadd.f32 0.0, %v2700
        %2702 = vmatmul.f32.gmra.mxu0 %v2601
        %v2703 = vpop.f32.mrf.mxu0
        %v2704 = vadd.f32 0.0, %v2703
        %2705 = vmatmul.f32.gmra.mxu0 %v2602
        %v2706 = vpop.f32.mrf.mxu0
        %v2707 = vadd.f32 0.0, %v2706
        %2708 = vmatmul.f32.gmra.mxu0 %v2603
        %v2709 = vpop.f32.mrf.mxu0
        %v2710 = vadd.f32 0.0, %v2709
        %2711 = vmatmul.f32.gmra.mxu0 %v2604
        %v2712 = vpop.f32.mrf.mxu0
        %v2713 = vadd.f32 0.0, %v2712
        %2714 = vmatmul.f32.gmra.mxu0 %v2605
        %v2715 = vpop.f32.mrf.mxu0
        %v2716 = vadd.f32 0.0, %v2715
        %2717 = vmatmul.f32.gmra.mxu0 %v2606
        %v2718 = vpop.f32.mrf.mxu0
        %v2719 = vadd.f32 0.0, %v2718
        %2720 = vmatmul.f32.gmra.mxu0 %v2607
        %v2721 = vpop.f32.mrf.mxu0
        %v2722 = vadd.f32 0.0, %v2721
        %2723 = vmatmul.f32.gmra.mxu0 %v2608
        %v2724 = vpop.f32.mrf.mxu0
        %v2725 = vadd.f32 0.0, %v2724
        %2726 = vmatmul.f32.gmra.mxu0 %v2609
        %v2727 = vpop.f32.mrf.mxu0
        %v2728 = vadd.f32 0.0, %v2727
        %2729 = vmatmul.f32.gmra.mxu0 %v2610
        %v2730 = vpop.f32.mrf.mxu0
        %v2731 = vadd.f32 0.0, %v2730
        %2732 = vmatmul.f32.gmra.mxu0 %v2611
        %v2733 = vpop.f32.mrf.mxu0
        %v2734 = vadd.f32 0.0, %v2733
        %2735 = vmatmul.f32.gmra.mxu0 %v2612
        %v2736 = vpop.f32.mrf.mxu0
        %v2737 = vadd.f32 0.0, %v2736
        %2738 = vmatmul.f32.gmra.mxu0 %v2613
        %v2739 = vpop.f32.mrf.mxu0
        %v2740 = vadd.f32 0.0, %v2739
        %2741 = vmatmul.f32.gmra.mxu0 %v2614
        %v2742 = vpop.f32.mrf.mxu0
        %v2743 = vadd.f32 0.0, %v2742
        %2744 = vmatmul.f32.gmra.mxu0 %v2615
        %v2745 = vpop.f32.mrf.mxu0
        %v2746 = vadd.f32 0.0, %v2745
        %2747 = vmatmul.f32.gmra.mxu0 %v2616
        %v2748 = vpop.f32.mrf.mxu0
        %v2749 = vadd.f32 0.0, %v2748
        %2750 = vmatmul.f32.gmra.mxu0 %v2617
        %v2751 = vpop.f32.mrf.mxu0
        %v2752 = vadd.f32 0.0, %v2751
        %2753 = vmatmul.f32.gmra.mxu0 %v2618
        %v2754 = vpop.f32.mrf.mxu0
        %v2755 = vadd.f32 0.0, %v2754
        %2756 = vmatmul.f32.gmra.mxu0 %v2619
        %v2757 = vpop.f32.mrf.mxu0
        %v2758 = vadd.f32 0.0, %v2757
        %2759 = vmatmul.f32.gmra.mxu0 %v2620
        %v2760 = vpop.f32.mrf.mxu0
        %v2761 = vadd.f32 0.0, %v2760
        %2762 = vmatmul.f32.gmra.mxu0 %v2621
        %v2763 = vpop.f32.mrf.mxu0
        %v2764 = vadd.f32 0.0, %v2763
        %2765 = vmatmul.f32.gmra.mxu0 %v2622
        %v2766 = vpop.f32.mrf.mxu0
        %v2767 = vadd.f32 0.0, %v2766
        %2768 = vmatmul.f32.gmra.mxu0 %v2623
        %v2769 = vpop.f32.mrf.mxu0
        %v2770 = vadd.f32 0.0, %v2769
        %2771 = vmatmul.f32.gmra.mxu0 %v2624
        %v2772 = vpop.f32.mrf.mxu0
        %v2773 = vadd.f32 0.0, %v2772
        %2774 = vmatmul.f32.gmra.mxu0 %v2625
        %v2775 = vpop.f32.mrf.mxu0
        %v2776 = vadd.f32 0.0, %v2775
        %2777 = vmatmul.f32.gmra.mxu0 %v2626
        %v2778 = vpop.f32.mrf.mxu0
        %v2779 = vadd.f32 0.0, %v2778
        %2780 = vmatmul.f32.gmra.mxu0 %v2627
        %v2781 = vpop.f32.mrf.mxu0
        %v2782 = vadd.f32 0.0, %v2781
        %2783 = vmatmul.f32.gmra.mxu0 %v2628
        %v2784 = vpop.f32.mrf.mxu0
        %v2785 = vadd.f32 0.0, %v2784
        %2786 = vmatmul.f32.gmra.mxu0 %v2629
        %v2787 = vpop.f32.mrf.mxu0
        %v2788 = vadd.f32 0.0, %v2787
        %2789 = vmatmul.f32.gmra.mxu0 %v2630
        %v2790 = vpop.f32.mrf.mxu0
        %v2791 = vadd.f32 0.0, %v2790
        %2792 = vmatmul.f32.gmra.mxu0 %v2631
        %v2793 = vpop.f32.mrf.mxu0
        %v2794 = vadd.f32 0.0, %v2793
        %2795 = vmatmul.f32.gmra.mxu0 %v2632
        %v2796 = vpop.f32.mrf.mxu0
        %v2797 = vadd.f32 0.0, %v2796
        %2798 = vmatmul.f32.gmra.mxu0 %v2633
        %v2799 = vpop.f32.mrf.mxu0
        %v2800 = vadd.f32 0.0, %v2799
        %2801 = vmatmul.f32.gmra.mxu0 %v2634
        %v2802 = vpop.f32.mrf.mxu0
        %v2803 = vadd.f32 0.0, %v2802
        %2804 = vmatmul.f32.gmra.mxu0 %v2635
        %v2805 = vpop.f32.mrf.mxu0
        %v2806 = vadd.f32 0.0, %v2805
        %2807 = vmatmul.f32.gmra.mxu0 %v2636
        %v2808 = vpop.f32.mrf.mxu0
        %v2809 = vadd.f32 0.0, %v2808
        %2810 = vmatmul.f32.gmra.mxu0 %v2637
        %v2811 = vpop.f32.mrf.mxu0
        %v2812 = vadd.f32 0.0, %v2811
        %2813 = vmatmul.f32.gmra.mxu0 %v2638
        %v2814 = vpop.f32.mrf.mxu0
        %v2815 = vadd.f32 0.0, %v2814
        %2816 = vmatmul.f32.gmra.mxu0 %v2639
        %v2817 = vpop.f32.mrf.mxu0
        %v2818 = vadd.f32 0.0, %v2817
        %2819 = vmatmul.f32.gmra.mxu0 %v2640
        %v2820 = vpop.f32.mrf.mxu0
        %v2821 = vadd.f32 0.0, %v2820
        %2822 = vmatmul.f32.gmra.mxu0 %v2641
        %v2823 = vpop.f32.mrf.mxu0
        %v2824 = vadd.f32 0.0, %v2823
        %2825 = vmatmul.f32.gmra.mxu0 %v2642
        %v2826 = vpop.f32.mrf.mxu0
        %v2827 = vadd.f32 0.0, %v2826
        %2828 = vmatmul.f32.gmra.mxu0 %v2643
        %v2829 = vpop.f32.mrf.mxu0
        %v2830 = vadd.f32 0.0, %v2829
        %2831 = vmatmul.f32.gmra.mxu0 %v2644
        %v2832 = vpop.f32.mrf.mxu0
        %v2833 = vadd.f32 0.0, %v2832
        %2834 = vmatmul.f32.gmra.mxu0 %v2645
        %v2835 = vpop.f32.mrf.mxu0
        %v2836 = vadd.f32 0.0, %v2835
        %2837 = vmatmul.f32.gmra.mxu0 %v2646
        %v2838 = vpop.f32.mrf.mxu0
        %v2839 = vadd.f32 0.0, %v2838
        %2840 = vmatmul.f32.gmra.mxu0 %v2647
        %v2841 = vpop.f32.mrf.mxu0
        %v2842 = vadd.f32 0.0, %v2841
        %2843 = vmatmul.f32.gmra.mxu0 %v2648
        %v2844 = vpop.f32.mrf.mxu0
        %v2845 = vadd.f32 0.0, %v2844
        %2846 = vmatmul.f32.gmra.mxu0 %v2649
        %v2847 = vpop.f32.mrf.mxu0
        %v2848 = vadd.f32 0.0, %v2847
        %2849 = vmatmul.f32.gmra.mxu0 %v2650
        %v2850 = vpop.f32.mrf.mxu0
        %v2851 = vadd.f32 0.0, %v2850
        %2852 = vdwg.mxu0
        %2853 = vmatpush.msra.mxu0 %v2594
        %2854 = vmatpush.msra.mxu0 %v2593
        %2855 = vmatpush.msra.mxu0 %v2592
        %2856 = vmatpush.msra.mxu0 %v2591
        %2857 = vmatpush.msra.mxu0 %v2590
        %2858 = vmatpush.msra.mxu0 %v2589
        %2859 = vmatpush.msra.mxu0 %v2588
        %2860 = vmatpush.msra.mxu0 %v2587
        %2861 = vmatpush.msra.mxu0 %v2586
        %2862 = vmatpush.msra.mxu0 %v2585
        %2863 = vmatpush.msra.mxu0 %v2584
        %2864 = vmatpush.msra.mxu0 %v2583
        %2865 = vmatpush.msra.mxu0 %v2582
        %2866 = vmatpush.msra.mxu0 %v2581
        %2867 = vmatpush.msra.mxu0 %v2580
        %2868 = vmatpush.msra.mxu0 %v2579
        %2869 = vmatmul.f32.gmra.mxu0 %v2523
        %v2870 = vpop.f32.mrf.mxu0
        %v2871 = vadd.f32 %v2686, %v2870
        %2872 = vmatmul.f32.gmra.mxu0 %v2524
        %v2873 = vpop.f32.mrf.mxu0
        %v2874 = vadd.f32 %v2689, %v2873
        %2875 = vmatmul.f32.gmra.mxu0 %v2525
        %v2876 = vpop.f32.mrf.mxu0
        %v2877 = vadd.f32 %v2692, %v2876
        %2878 = vmatmul.f32.gmra.mxu0 %v2526
        %v2879 = vpop.f32.mrf.mxu0
        %v2880 = vadd.f32 %v2695, %v2879
        %2881 = vmatmul.f32.gmra.mxu0 %v2527
        %v2882 = vpop.f32.mrf.mxu0
        %v2883 = vadd.f32 %v2698, %v2882
        %2884 = vmatmul.f32.gmra.mxu0 %v2528
        %v2885 = vpop.f32.mrf.mxu0
        %v2886 = vadd.f32 %v2701, %v2885
        %2887 = vmatmul.f32.gmra.mxu0 %v2529
        %v2888 = vpop.f32.mrf.mxu0
        %v2889 = vadd.f32 %v2704, %v2888
        %2890 = vmatmul.f32.gmra.mxu0 %v2530
        %v2891 = vpop.f32.mrf.mxu0
        %v2892 = vadd.f32 %v2707, %v2891
        %2893 = vmatmul.f32.gmra.mxu0 %v2531
        %v2894 = vpop.f32.mrf.mxu0
        %v2895 = vadd.f32 %v2710, %v2894
        %2896 = vmatmul.f32.gmra.mxu0 %v2532
        %v2897 = vpop.f32.mrf.mxu0
        %v2898 = vadd.f32 %v2713, %v2897
        %2899 = vmatmul.f32.gmra.mxu0 %v2533
        %v2900 = vpop.f32.mrf.mxu0
        %v2901 = vadd.f32 %v2716, %v2900
        %2902 = vmatmul.f32.gmra.mxu0 %v2534
        %v2903 = vpop.f32.mrf.mxu0
        %v2904 = vadd.f32 %v2719, %v2903
        %2905 = vmatmul.f32.gmra.mxu0 %v2535
        %v2906 = vpop.f32.mrf.mxu0
        %v2907 = vadd.f32 %v2722, %v2906
        %2908 = vmatmul.f32.gmra.mxu0 %v2536
        %v2909 = vpop.f32.mrf.mxu0
        %v2910 = vadd.f32 %v2725, %v2909
        %2911 = vmatmul.f32.gmra.mxu0 %v2537
        %v2912 = vpop.f32.mrf.mxu0
        %v2913 = vadd.f32 %v2728, %v2912
        %2914 = vmatmul.f32.gmra.mxu0 %v2538
        %v2915 = vpop.f32.mrf.mxu0
        %v2916 = vadd.f32 %v2731, %v2915
        %2917 = vmatmul.f32.gmra.mxu0 %v2539
        %v2918 = vpop.f32.mrf.mxu0
        %v2919 = vadd.f32 %v2734, %v2918
        %2920 = vmatmul.f32.gmra.mxu0 %v2540
        %v2921 = vpop.f32.mrf.mxu0
        %v2922 = vadd.f32 %v2737, %v2921
        %2923 = vmatmul.f32.gmra.mxu0 %v2541
        %v2924 = vpop.f32.mrf.mxu0
        %v2925 = vadd.f32 %v2740, %v2924
        %2926 = vmatmul.f32.gmra.mxu0 %v2542
        %v2927 = vpop.f32.mrf.mxu0
        %v2928 = vadd.f32 %v2743, %v2927
        %2929 = vmatmul.f32.gmra.mxu0 %v2543
        %v2930 = vpop.f32.mrf.mxu0
        %v2931 = vadd.f32 %v2746, %v2930
        %2932 = vmatmul.f32.gmra.mxu0 %v2544
        %v2933 = vpop.f32.mrf.mxu0
        %v2934 = vadd.f32 %v2749, %v2933
        %2935 = vmatmul.f32.gmra.mxu0 %v2545
        %v2936 = vpop.f32.mrf.mxu0
        %v2937 = vadd.f32 %v2752, %v2936
        %2938 = vmatmul.f32.gmra.mxu0 %v2546
        %v2939 = vpop.f32.mrf.mxu0
        %v2940 = vadd.f32 %v2755, %v2939
        %2941 = vmatmul.f32.gmra.mxu0 %v2547
        %v2942 = vpop.f32.mrf.mxu0
        %v2943 = vadd.f32 %v2758, %v2942
        %2944 = vmatmul.f32.gmra.mxu0 %v2548
        %v2945 = vpop.f32.mrf.mxu0
        %v2946 = vadd.f32 %v2761, %v2945
        %2947 = vmatmul.f32.gmra.mxu0 %v2549
        %v2948 = vpop.f32.mrf.mxu0
        %v2949 = vadd.f32 %v2764, %v2948
        %2950 = vmatmul.f32.gmra.mxu0 %v2550
        %v2951 = vpop.f32.mrf.mxu0
        %v2952 = vadd.f32 %v2767, %v2951
        %2953 = vmatmul.f32.gmra.mxu0 %v2551
        %v2954 = vpop.f32.mrf.mxu0
        %v2955 = vadd.f32 %v2770, %v2954
        %2956 = vmatmul.f32.gmra.mxu0 %v2552
        %v2957 = vpop.f32.mrf.mxu0
        %v2958 = vadd.f32 %v2773, %v2957
        %2959 = vmatmul.f32.gmra.mxu0 %v2553
        %v2960 = vpop.f32.mrf.mxu0
        %v2961 = vadd.f32 %v2776, %v2960
        %2962 = vmatmul.f32.gmra.mxu0 %v2554
        %v2963 = vpop.f32.mrf.mxu0
        %v2964 = vadd.f32 %v2779, %v2963
        %2965 = vmatmul.f32.gmra.mxu0 %v2555
        %v2966 = vpop.f32.mrf.mxu0
        %v2967 = vadd.f32 %v2782, %v2966
        %2968 = vmatmul.f32.gmra.mxu0 %v2556
        %v2969 = vpop.f32.mrf.mxu0
        %v2970 = vadd.f32 %v2785, %v2969
        %2971 = vmatmul.f32.gmra.mxu0 %v2557
        %v2972 = vpop.f32.mrf.mxu0
        %v2973 = vadd.f32 %v2788, %v2972
        %2974 = vmatmul.f32.gmra.mxu0 %v2558
        %v2975 = vpop.f32.mrf.mxu0
        %v2976 = vadd.f32 %v2791, %v2975
        %2977 = vmatmul.f32.gmra.mxu0 %v2559
        %v2978 = vpop.f32.mrf.mxu0
        %v2979 = vadd.f32 %v2794, %v2978
        %2980 = vmatmul.f32.gmra.mxu0 %v2560
        %v2981 = vpop.f32.mrf.mxu0
        %v2982 = vadd.f32 %v2797, %v2981
        %2983 = vmatmul.f32.gmra.mxu0 %v2561
        %v2984 = vpop.f32.mrf.mxu0
        %v2985 = vadd.f32 %v2800, %v2984
        %2986 = vmatmul.f32.gmra.mxu0 %v2562
        %v2987 = vpop.f32.mrf.mxu0
        %v2988 = vadd.f32 %v2803, %v2987
        %2989 = vmatmul.f32.gmra.mxu0 %v2563
        %v2990 = vpop.f32.mrf.mxu0
        %v2991 = vadd.f32 %v2806, %v2990
        %2992 = vmatmul.f32.gmra.mxu0 %v2564
        %v2993 = vpop.f32.mrf.mxu0
        %v2994 = vadd.f32 %v2809, %v2993
        %2995 = vmatmul.f32.gmra.mxu0 %v2565
        %v2996 = vpop.f32.mrf.mxu0
        %v2997 = vadd.f32 %v2812, %v2996
        %2998 = vmatmul.f32.gmra.mxu0 %v2566
        %v2999 = vpop.f32.mrf.mxu0
        %v3000 = vadd.f32 %v2815, %v2999
        %3001 = vmatmul.f32.gmra.mxu0 %v2567
        %v3002 = vpop.f32.mrf.mxu0
        %v3003 = vadd.f32 %v2818, %v3002
        %3004 = vmatmul.f32.gmra.mxu0 %v2568
        %v3005 = vpop.f32.mrf.mxu0
        %v3006 = vadd.f32 %v2821, %v3005
        %3007 = vmatmul.f32.gmra.mxu0 %v2569
        %v3008 = vpop.f32.mrf.mxu0
        %v3009 = vadd.f32 %v2824, %v3008
        %3010 = vmatmul.f32.gmra.mxu0 %v2570
        %v3011 = vpop.f32.mrf.mxu0
        %v3012 = vadd.f32 %v2827, %v3011
        %3013 = vmatmul.f32.gmra.mxu0 %v2571
        %v3014 = vpop.f32.mrf.mxu0
        %v3015 = vadd.f32 %v2830, %v3014
        %3016 = vmatmul.f32.gmra.mxu0 %v2572
        %v3017 = vpop.f32.mrf.mxu0
        %v3018 = vadd.f32 %v2833, %v3017
        %3019 = vmatmul.f32.gmra.mxu0 %v2573
        %v3020 = vpop.f32.mrf.mxu0
        %v3021 = vadd.f32 %v2836, %v3020
        %3022 = vmatmul.f32.gmra.mxu0 %v2574
        %v3023 = vpop.f32.mrf.mxu0
        %v3024 = vadd.f32 %v2839, %v3023
        %3025 = vmatmul.f32.gmra.mxu0 %v2575
        %v3026 = vpop.f32.mrf.mxu0
        %v3027 = vadd.f32 %v2842, %v3026
        %3028 = vmatmul.f32.gmra.mxu0 %v2576
        %v3029 = vpop.f32.mrf.mxu0
        %v3030 = vadd.f32 %v2845, %v3029
        %3031 = vmatmul.f32.gmra.mxu0 %v2577
        %v3032 = vpop.f32.mrf.mxu0
        %v3033 = vadd.f32 %v2848, %v3032
        %3034 = vmatmul.f32.gmra.mxu0 %v2578
        %v3035 = vpop.f32.mrf.mxu0
        %v3036 = vadd.f32 %v2851, %v3035
        %3037 = vdwg.mxu0
        %v3038 = vld [vmem:[#allocation3 + $0x10] sm:$0xff]
        %v3039 = vld [vmem:[#allocation3 + $0x18] sm:$0xff]
        %v3040 = vld [vmem:[#allocation3 + $0x20] sm:$0xff]
        %v3041 = vld [vmem:[#allocation3 + $0x28] sm:$0xff]
        %v3042 = vld [vmem:[#allocation3 + $0x30] sm:$0xff]
        %v3043 = vld [vmem:[#allocation3 + $0x38] sm:$0xff]
        %v3044 = vld [vmem:[#allocation3 + $0x40] sm:$0xff]
        %v3045 = vld [vmem:[#allocation3 + $0x48] sm:$0xff]
        %v3046 = vld [vmem:[#allocation3 + $0x50] sm:$0xff]
        %v3047 = vld [vmem:[#allocation3 + $0x58] sm:$0xff]
        %v3048 = vld [vmem:[#allocation3 + $0x60] sm:$0xff]
        %v3049 = vld [vmem:[#allocation3 + $0x68] sm:$0xff]
        %v3050 = vld [vmem:[#allocation3 + $0x70] sm:$0xff]
        %v3051 = vld [vmem:[#allocation3 + $0x78] sm:$0xff]
        %v3052 = vld [vmem:[#allocation3 + $0x80] sm:$0xff]
        %v3053 = vld [vmem:[#allocation3 + $0x88] sm:$0xff]
        %v3054 = vld [vmem:[#allocation3 + $0x90] sm:$0xff]
        %v3055 = vld [vmem:[#allocation3 + $0x98] sm:$0xff]
        %v3056 = vld [vmem:[#allocation3 + $0xa0] sm:$0xff]
        %v3057 = vld [vmem:[#allocation3 + $0xa8] sm:$0xff]
        %v3058 = vld [vmem:[#allocation3 + $0xb0] sm:$0xff]
        %v3059 = vld [vmem:[#allocation3 + $0xb8] sm:$0xff]
        %v3060 = vld [vmem:[#allocation3 + $0xc0] sm:$0xff]
        %v3061 = vld [vmem:[#allocation3 + $0xc8] sm:$0xff]
        %v3062 = vld [vmem:[#allocation3 + $0xd0] sm:$0xff]
        %v3063 = vld [vmem:[#allocation3 + $0xd8] sm:$0xff]
        %v3064 = vld [vmem:[#allocation3 + $0xe0] sm:$0xff]
        %v3065 = vld [vmem:[#allocation3 + $0xe8] sm:$0xff]
        %v3066 = vld [vmem:[#allocation3 + $0xf0] sm:$0xff]
        %v3067 = vld [vmem:[#allocation3 + $0xf8] sm:$0xff]
        %v3068 = vld [vmem:[#allocation3 + $0x100] sm:$0xff]
        %v3069 = vld [vmem:[#allocation3 + $0x108] sm:$0xff]
        %v3070 = vld [vmem:[#allocation3 + $0x110] sm:$0xff]
        %v3071 = vld [vmem:[#allocation3 + $0x118] sm:$0xff]
        %v3072 = vld [vmem:[#allocation3 + $0x120] sm:$0xff]
        %v3073 = vld [vmem:[#allocation3 + $0x128] sm:$0xff]
        %v3074 = vld [vmem:[#allocation3 + $0x130] sm:$0xff]
        %v3075 = vld [vmem:[#allocation3 + $0x138] sm:$0xff]
        %v3076 = vld [vmem:[#allocation3 + $0x140] sm:$0xff]
        %v3077 = vld [vmem:[#allocation3 + $0x148] sm:$0xff]
        %v3078 = vld [vmem:[#allocation3 + $0x150] sm:$0xff]
        %v3079 = vld [vmem:[#allocation3 + $0x158] sm:$0xff]
        %v3080 = vld [vmem:[#allocation3 + $0x160] sm:$0xff]
        %v3081 = vld [vmem:[#allocation3 + $0x168] sm:$0xff]
        %v3082 = vld [vmem:[#allocation3 + $0x170] sm:$0xff]
        %v3083 = vld [vmem:[#allocation3 + $0x178] sm:$0xff]
        %v3084 = vld [vmem:[#allocation3 + $0x180] sm:$0xff]
        %v3085 = vld [vmem:[#allocation3 + $0x188] sm:$0xff]
        %v3086 = vld [vmem:[#allocation3 + $0x190] sm:$0xff]
        %v3087 = vld [vmem:[#allocation3 + $0x198] sm:$0xff]
        %v3088 = vld [vmem:[#allocation3 + $0x1a0] sm:$0xff]
        %v3089 = vld [vmem:[#allocation3 + $0x1a8] sm:$0xff]
        %v3090 = vld [vmem:[#allocation3 + $0x1b0] sm:$0xff]
        %v3091 = vld [vmem:[#allocation3 + $0x1b8] sm:$0xff]
        %v3092 = vld [vmem:[#allocation3 + $0x1c0] sm:$0xff]
        %v3093 = vld [vmem:[#allocation3 + $0x1c8] sm:$0xff]
        %s3094 = scalar_lea.vmem %s3, 256
        %v3095 = vld [vmem:[%s3094] sm:$0xff]
        %v3096 = vld [vmem:[%s3094 + $0x8] sm:$0xff]
        %v3097 = vld [vmem:[%s3094 + $0x10] sm:$0xff]
        %v3098 = vld [vmem:[%s3094 + $0x18] sm:$0xff]
        %v3099 = vld [vmem:[%s3094 + $0x20] sm:$0xff]
        %v3100 = vld [vmem:[%s3094 + $0x28] sm:$0xff]
        %v3101 = vld [vmem:[%s3094 + $0x30] sm:$0xff]
        %v3102 = vld [vmem:[%s3094 + $0x38] sm:$0xff]
        %v3103 = vld [vmem:[%s3094 + $0x40] sm:$0xff]
        %v3104 = vld [vmem:[%s3094 + $0x48] sm:$0xff]
        %v3105 = vld [vmem:[%s3094 + $0x50] sm:$0xff]
        %v3106 = vld [vmem:[%s3094 + $0x58] sm:$0xff]
        %v3107 = vld [vmem:[%s3094 + $0x60] sm:$0xff]
        %v3108 = vld [vmem:[%s3094 + $0x68] sm:$0xff]
        %v3109 = vld [vmem:[%s3094 + $0x70] sm:$0xff]
        %v3110 = vld [vmem:[%s3094 + $0x78] sm:$0xff]
        %3111 = vmatpush.msra.mxu0 %v3110
        %3112 = vmatpush.msra.mxu0 %v3109
        %3113 = vmatpush.msra.mxu0 %v3108
        %3114 = vmatpush.msra.mxu0 %v3107
        %3115 = vmatpush.msra.mxu0 %v3106
        %3116 = vmatpush.msra.mxu0 %v3105
        %3117 = vmatpush.msra.mxu0 %v3104
        %3118 = vmatpush.msra.mxu0 %v3103
        %3119 = vmatpush.msra.mxu0 %v3102
        %3120 = vmatpush.msra.mxu0 %v3101
        %3121 = vmatpush.msra.mxu0 %v3100
        %3122 = vmatpush.msra.mxu0 %v3099
        %3123 = vmatpush.msra.mxu0 %v3098
        %3124 = vmatpush.msra.mxu0 %v3097
        %3125 = vmatpush.msra.mxu0 %v3096
        %3126 = vmatpush.msra.mxu0 %v3095
        %3127 = vmatmul.f32.gmra.mxu0 %v3038
        %v3128 = vpop.f32.mrf.mxu0
        %v3129 = vadd.f32 0.0, %v3128
        %3130 = vmatmul.f32.gmra.mxu0 %v3039
        %v3131 = vpop.f32.mrf.mxu0
        %v3132 = vadd.f32 0.0, %v3131
        %3133 = vmatmul.f32.gmra.mxu0 %v3040
        %v3134 = vpop.f32.mrf.mxu0
        %v3135 = vadd.f32 0.0, %v3134
        %3136 = vmatmul.f32.gmra.mxu0 %v3041
        %v3137 = vpop.f32.mrf.mxu0
        %v3138 = vadd.f32 0.0, %v3137
        %3139 = vmatmul.f32.gmra.mxu0 %v3042
        %v3140 = vpop.f32.mrf.mxu0
        %v3141 = vadd.f32 0.0, %v3140
        %3142 = vmatmul.f32.gmra.mxu0 %v3043
        %v3143 = vpop.f32.mrf.mxu0
        %v3144 = vadd.f32 0.0, %v3143
        %3145 = vmatmul.f32.gmra.mxu0 %v3044
        %v3146 = vpop.f32.mrf.mxu0
        %v3147 = vadd.f32 0.0, %v3146
        %3148 = vmatmul.f32.gmra.mxu0 %v3045
        %v3149 = vpop.f32.mrf.mxu0
        %v3150 = vadd.f32 0.0, %v3149
        %3151 = vmatmul.f32.gmra.mxu0 %v3046
        %v3152 = vpop.f32.mrf.mxu0
        %v3153 = vadd.f32 0.0, %v3152
        %3154 = vmatmul.f32.gmra.mxu0 %v3047
        %v3155 = vpop.f32.mrf.mxu0
        %v3156 = vadd.f32 0.0, %v3155
        %3157 = vmatmul.f32.gmra.mxu0 %v3048
        %v3158 = vpop.f32.mrf.mxu0
        %v3159 = vadd.f32 0.0, %v3158
        %3160 = vmatmul.f32.gmra.mxu0 %v3049
        %v3161 = vpop.f32.mrf.mxu0
        %v3162 = vadd.f32 0.0, %v3161
        %3163 = vmatmul.f32.gmra.mxu0 %v3050
        %v3164 = vpop.f32.mrf.mxu0
        %v3165 = vadd.f32 0.0, %v3164
        %3166 = vmatmul.f32.gmra.mxu0 %v3051
        %v3167 = vpop.f32.mrf.mxu0
        %v3168 = vadd.f32 0.0, %v3167
        %3169 = vmatmul.f32.gmra.mxu0 %v3052
        %v3170 = vpop.f32.mrf.mxu0
        %v3171 = vadd.f32 0.0, %v3170
        %3172 = vmatmul.f32.gmra.mxu0 %v3053
        %v3173 = vpop.f32.mrf.mxu0
        %v3174 = vadd.f32 0.0, %v3173
        %3175 = vmatmul.f32.gmra.mxu0 %v3054
        %v3176 = vpop.f32.mrf.mxu0
        %v3177 = vadd.f32 0.0, %v3176
        %3178 = vmatmul.f32.gmra.mxu0 %v3055
        %v3179 = vpop.f32.mrf.mxu0
        %v3180 = vadd.f32 0.0, %v3179
        %3181 = vmatmul.f32.gmra.mxu0 %v3056
        %v3182 = vpop.f32.mrf.mxu0
        %v3183 = vadd.f32 0.0, %v3182
        %3184 = vmatmul.f32.gmra.mxu0 %v3057
        %v3185 = vpop.f32.mrf.mxu0
        %v3186 = vadd.f32 0.0, %v3185
        %3187 = vmatmul.f32.gmra.mxu0 %v3058
        %v3188 = vpop.f32.mrf.mxu0
        %v3189 = vadd.f32 0.0, %v3188
        %3190 = vmatmul.f32.gmra.mxu0 %v3059
        %v3191 = vpop.f32.mrf.mxu0
        %v3192 = vadd.f32 0.0, %v3191
        %3193 = vmatmul.f32.gmra.mxu0 %v3060
        %v3194 = vpop.f32.mrf.mxu0
        %v3195 = vadd.f32 0.0, %v3194
        %3196 = vmatmul.f32.gmra.mxu0 %v3061
        %v3197 = vpop.f32.mrf.mxu0
        %v3198 = vadd.f32 0.0, %v3197
        %3199 = vmatmul.f32.gmra.mxu0 %v3062
        %v3200 = vpop.f32.mrf.mxu0
        %v3201 = vadd.f32 0.0, %v3200
        %3202 = vmatmul.f32.gmra.mxu0 %v3063
        %v3203 = vpop.f32.mrf.mxu0
        %v3204 = vadd.f32 0.0, %v3203
        %3205 = vmatmul.f32.gmra.mxu0 %v3064
        %v3206 = vpop.f32.mrf.mxu0
        %v3207 = vadd.f32 0.0, %v3206
        %3208 = vmatmul.f32.gmra.mxu0 %v3065
        %v3209 = vpop.f32.mrf.mxu0
        %v3210 = vadd.f32 0.0, %v3209
        %3211 = vmatmul.f32.gmra.mxu0 %v3066
        %v3212 = vpop.f32.mrf.mxu0
        %v3213 = vadd.f32 0.0, %v3212
        %3214 = vmatmul.f32.gmra.mxu0 %v3067
        %v3215 = vpop.f32.mrf.mxu0
        %v3216 = vadd.f32 0.0, %v3215
        %3217 = vmatmul.f32.gmra.mxu0 %v3068
        %v3218 = vpop.f32.mrf.mxu0
        %v3219 = vadd.f32 0.0, %v3218
        %3220 = vmatmul.f32.gmra.mxu0 %v3069
        %v3221 = vpop.f32.mrf.mxu0
        %v3222 = vadd.f32 0.0, %v3221
        %3223 = vmatmul.f32.gmra.mxu0 %v3070
        %v3224 = vpop.f32.mrf.mxu0
        %v3225 = vadd.f32 0.0, %v3224
        %3226 = vmatmul.f32.gmra.mxu0 %v3071
        %v3227 = vpop.f32.mrf.mxu0
        %v3228 = vadd.f32 0.0, %v3227
        %3229 = vmatmul.f32.gmra.mxu0 %v3072
        %v3230 = vpop.f32.mrf.mxu0
        %v3231 = vadd.f32 0.0, %v3230
        %3232 = vmatmul.f32.gmra.mxu0 %v3073
        %v3233 = vpop.f32.mrf.mxu0
        %v3234 = vadd.f32 0.0, %v3233
        %3235 = vmatmul.f32.gmra.mxu0 %v3074
        %v3236 = vpop.f32.mrf.mxu0
        %v3237 = vadd.f32 0.0, %v3236
        %3238 = vmatmul.f32.gmra.mxu0 %v3075
        %v3239 = vpop.f32.mrf.mxu0
        %v3240 = vadd.f32 0.0, %v3239
        %3241 = vmatmul.f32.gmra.mxu0 %v3076
        %v3242 = vpop.f32.mrf.mxu0
        %v3243 = vadd.f32 0.0, %v3242
        %3244 = vmatmul.f32.gmra.mxu0 %v3077
        %v3245 = vpop.f32.mrf.mxu0
        %v3246 = vadd.f32 0.0, %v3245
        %3247 = vmatmul.f32.gmra.mxu0 %v3078
        %v3248 = vpop.f32.mrf.mxu0
        %v3249 = vadd.f32 0.0, %v3248
        %3250 = vmatmul.f32.gmra.mxu0 %v3079
        %v3251 = vpop.f32.mrf.mxu0
        %v3252 = vadd.f32 0.0, %v3251
        %3253 = vmatmul.f32.gmra.mxu0 %v3080
        %v3254 = vpop.f32.mrf.mxu0
        %v3255 = vadd.f32 0.0, %v3254
        %3256 = vmatmul.f32.gmra.mxu0 %v3081
        %v3257 = vpop.f32.mrf.mxu0
        %v3258 = vadd.f32 0.0, %v3257
        %3259 = vmatmul.f32.gmra.mxu0 %v3082
        %v3260 = vpop.f32.mrf.mxu0
        %v3261 = vadd.f32 0.0, %v3260
        %3262 = vmatmul.f32.gmra.mxu0 %v3083
        %v3263 = vpop.f32.mrf.mxu0
        %v3264 = vadd.f32 0.0, %v3263
        %3265 = vmatmul.f32.gmra.mxu0 %v3084
        %v3266 = vpop.f32.mrf.mxu0
        %v3267 = vadd.f32 0.0, %v3266
        %3268 = vmatmul.f32.gmra.mxu0 %v3085
        %v3269 = vpop.f32.mrf.mxu0
        %v3270 = vadd.f32 0.0, %v3269
        %3271 = vmatmul.f32.gmra.mxu0 %v3086
        %v3272 = vpop.f32.mrf.mxu0
        %v3273 = vadd.f32 0.0, %v3272
        %3274 = vmatmul.f32.gmra.mxu0 %v3087
        %v3275 = vpop.f32.mrf.mxu0
        %v3276 = vadd.f32 0.0, %v3275
        %3277 = vmatmul.f32.gmra.mxu0 %v3088
        %v3278 = vpop.f32.mrf.mxu0
        %v3279 = vadd.f32 0.0, %v3278
        %3280 = vmatmul.f32.gmra.mxu0 %v3089
        %v3281 = vpop.f32.mrf.mxu0
        %v3282 = vadd.f32 0.0, %v3281
        %3283 = vmatmul.f32.gmra.mxu0 %v3090
        %v3284 = vpop.f32.mrf.mxu0
        %v3285 = vadd.f32 0.0, %v3284
        %3286 = vmatmul.f32.gmra.mxu0 %v3091
        %v3287 = vpop.f32.mrf.mxu0
        %v3288 = vadd.f32 0.0, %v3287
        %3289 = vmatmul.f32.gmra.mxu0 %v3092
        %v3290 = vpop.f32.mrf.mxu0
        %v3291 = vadd.f32 0.0, %v3290
        %3292 = vmatmul.f32.gmra.mxu0 %v3093
        %v3293 = vpop.f32.mrf.mxu0
        %v3294 = vadd.f32 0.0, %v3293
        %3295 = vdwg.mxu0
        %v3296 = vadd.f32 %v2871, %v3129
        %v3297 = vadd.f32 %v2874, %v3132
        %v3298 = vadd.f32 %v2877, %v3135
        %v3299 = vadd.f32 %v2880, %v3138
        %v3300 = vadd.f32 %v2883, %v3141
        %v3301 = vadd.f32 %v2886, %v3144
        %v3302 = vadd.f32 %v2889, %v3147
        %v3303 = vadd.f32 %v2892, %v3150
        %v3304 = vadd.f32 %v2895, %v3153
        %v3305 = vadd.f32 %v2898, %v3156
        %v3306 = vadd.f32 %v2901, %v3159
        %v3307 = vadd.f32 %v2904, %v3162
        %v3308 = vadd.f32 %v2907, %v3165
        %v3309 = vadd.f32 %v2910, %v3168
        %v3310 = vadd.f32 %v2913, %v3171
        %v3311 = vadd.f32 %v2916, %v3174
        %v3312 = vadd.f32 %v2919, %v3177
        %v3313 = vadd.f32 %v2922, %v3180
        %v3314 = vadd.f32 %v2925, %v3183
        %v3315 = vadd.f32 %v2928, %v3186
        %v3316 = vadd.f32 %v2931, %v3189
        %v3317 = vadd.f32 %v2934, %v3192
        %v3318 = vadd.f32 %v2937, %v3195
        %v3319 = vadd.f32 %v2940, %v3198
        %v3320 = vadd.f32 %v2943, %v3201
        %v3321 = vadd.f32 %v2946, %v3204
        %v3322 = vadd.f32 %v2949, %v3207
        %v3323 = vadd.f32 %v2952, %v3210
        %v3324 = vadd.f32 %v2955, %v3213
        %v3325 = vadd.f32 %v2958, %v3216
        %v3326 = vadd.f32 %v2961, %v3219
        %v3327 = vadd.f32 %v2964, %v3222
        %v3328 = vadd.f32 %v2967, %v3225
        %v3329 = vadd.f32 %v2970, %v3228
        %v3330 = vadd.f32 %v2973, %v3231
        %v3331 = vadd.f32 %v2976, %v3234
        %v3332 = vadd.f32 %v2979, %v3237
        %v3333 = vadd.f32 %v2982, %v3240
        %v3334 = vadd.f32 %v2985, %v3243
        %v3335 = vadd.f32 %v2988, %v3246
        %v3336 = vadd.f32 %v2991, %v3249
        %v3337 = vadd.f32 %v2994, %v3252
        %v3338 = vadd.f32 %v2997, %v3255
        %v3339 = vadd.f32 %v3000, %v3258
        %v3340 = vadd.f32 %v3003, %v3261
        %v3341 = vadd.f32 %v3006, %v3264
        %v3342 = vadd.f32 %v3009, %v3267
        %v3343 = vadd.f32 %v3012, %v3270
        %v3344 = vadd.f32 %v3015, %v3273
        %v3345 = vadd.f32 %v3018, %v3276
        %v3346 = vadd.f32 %v3021, %v3279
        %v3347 = vadd.f32 %v3024, %v3282
        %v3348 = vadd.f32 %v3027, %v3285
        %v3349 = vadd.f32 %v3030, %v3288
        %v3350 = vadd.f32 %v3033, %v3291
        %v3351 = vadd.f32 %v3036, %v3294
        %v3352 = vld [vmem:[#allocation3 + $0x11] sm:$0xff]
        %v3353 = vld [vmem:[#allocation3 + $0x19] sm:$0xff]
        %v3354 = vld [vmem:[#allocation3 + $0x21] sm:$0xff]
        %v3355 = vld [vmem:[#allocation3 + $0x29] sm:$0xff]
        %v3356 = vld [vmem:[#allocation3 + $0x31] sm:$0xff]
        %v3357 = vld [vmem:[#allocation3 + $0x39] sm:$0xff]
        %v3358 = vld [vmem:[#allocation3 + $0x41] sm:$0xff]
        %v3359 = vld [vmem:[#allocation3 + $0x49] sm:$0xff]
        %v3360 = vld [vmem:[#allocation3 + $0x51] sm:$0xff]
        %v3361 = vld [vmem:[#allocation3 + $0x59] sm:$0xff]
        %v3362 = vld [vmem:[#allocation3 + $0x61] sm:$0xff]
        %v3363 = vld [vmem:[#allocation3 + $0x69] sm:$0xff]
        %v3364 = vld [vmem:[#allocation3 + $0x71] sm:$0xff]
        %v3365 = vld [vmem:[#allocation3 + $0x79] sm:$0xff]
        %v3366 = vld [vmem:[#allocation3 + $0x81] sm:$0xff]
        %v3367 = vld [vmem:[#allocation3 + $0x89] sm:$0xff]
        %v3368 = vld [vmem:[#allocation3 + $0x91] sm:$0xff]
        %v3369 = vld [vmem:[#allocation3 + $0x99] sm:$0xff]
        %v3370 = vld [vmem:[#allocation3 + $0xa1] sm:$0xff]
        %v3371 = vld [vmem:[#allocation3 + $0xa9] sm:$0xff]
        %v3372 = vld [vmem:[#allocation3 + $0xb1] sm:$0xff]
        %v3373 = vld [vmem:[#allocation3 + $0xb9] sm:$0xff]
        %v3374 = vld [vmem:[#allocation3 + $0xc1] sm:$0xff]
        %v3375 = vld [vmem:[#allocation3 + $0xc9] sm:$0xff]
        %v3376 = vld [vmem:[#allocation3 + $0xd1] sm:$0xff]
        %v3377 = vld [vmem:[#allocation3 + $0xd9] sm:$0xff]
        %v3378 = vld [vmem:[#allocation3 + $0xe1] sm:$0xff]
        %v3379 = vld [vmem:[#allocation3 + $0xe9] sm:$0xff]
        %v3380 = vld [vmem:[#allocation3 + $0xf1] sm:$0xff]
        %v3381 = vld [vmem:[#allocation3 + $0xf9] sm:$0xff]
        %v3382 = vld [vmem:[#allocation3 + $0x101] sm:$0xff]
        %v3383 = vld [vmem:[#allocation3 + $0x109] sm:$0xff]
        %v3384 = vld [vmem:[#allocation3 + $0x111] sm:$0xff]
        %v3385 = vld [vmem:[#allocation3 + $0x119] sm:$0xff]
        %v3386 = vld [vmem:[#allocation3 + $0x121] sm:$0xff]
        %v3387 = vld [vmem:[#allocation3 + $0x129] sm:$0xff]
        %v3388 = vld [vmem:[#allocation3 + $0x131] sm:$0xff]
        %v3389 = vld [vmem:[#allocation3 + $0x139] sm:$0xff]
        %v3390 = vld [vmem:[#allocation3 + $0x141] sm:$0xff]
        %v3391 = vld [vmem:[#allocation3 + $0x149] sm:$0xff]
        %v3392 = vld [vmem:[#allocation3 + $0x151] sm:$0xff]
        %v3393 = vld [vmem:[#allocation3 + $0x159] sm:$0xff]
        %v3394 = vld [vmem:[#allocation3 + $0x161] sm:$0xff]
        %v3395 = vld [vmem:[#allocation3 + $0x169] sm:$0xff]
        %v3396 = vld [vmem:[#allocation3 + $0x171] sm:$0xff]
        %v3397 = vld [vmem:[#allocation3 + $0x179] sm:$0xff]
        %v3398 = vld [vmem:[#allocation3 + $0x181] sm:$0xff]
        %v3399 = vld [vmem:[#allocation3 + $0x189] sm:$0xff]
        %v3400 = vld [vmem:[#allocation3 + $0x191] sm:$0xff]
        %v3401 = vld [vmem:[#allocation3 + $0x199] sm:$0xff]
        %v3402 = vld [vmem:[#allocation3 + $0x1a1] sm:$0xff]
        %v3403 = vld [vmem:[#allocation3 + $0x1a9] sm:$0xff]
        %v3404 = vld [vmem:[#allocation3 + $0x1b1] sm:$0xff]
        %v3405 = vld [vmem:[#allocation3 + $0x1b9] sm:$0xff]
        %v3406 = vld [vmem:[#allocation3 + $0x1c1] sm:$0xff]
        %v3407 = vld [vmem:[#allocation3 + $0x1c9] sm:$0xff]
        %s3408 = scalar_lea.vmem %s3, 384
        %v3409 = vld [vmem:[%s3408] sm:$0xff]
        %v3410 = vld [vmem:[%s3408 + $0x8] sm:$0xff]
        %v3411 = vld [vmem:[%s3408 + $0x10] sm:$0xff]
        %v3412 = vld [vmem:[%s3408 + $0x18] sm:$0xff]
        %v3413 = vld [vmem:[%s3408 + $0x20] sm:$0xff]
        %v3414 = vld [vmem:[%s3408 + $0x28] sm:$0xff]
        %v3415 = vld [vmem:[%s3408 + $0x30] sm:$0xff]
        %v3416 = vld [vmem:[%s3408 + $0x38] sm:$0xff]
        %v3417 = vld [vmem:[%s3408 + $0x40] sm:$0xff]
        %v3418 = vld [vmem:[%s3408 + $0x48] sm:$0xff]
        %v3419 = vld [vmem:[%s3408 + $0x50] sm:$0xff]
        %v3420 = vld [vmem:[%s3408 + $0x58] sm:$0xff]
        %v3421 = vld [vmem:[%s3408 + $0x60] sm:$0xff]
        %v3422 = vld [vmem:[%s3408 + $0x68] sm:$0xff]
        %v3423 = vld [vmem:[%s3408 + $0x70] sm:$0xff]
        %v3424 = vld [vmem:[%s3408 + $0x78] sm:$0xff]
        %3425 = vmatpush.msra.mxu0 %v3424
        %3426 = vmatpush.msra.mxu0 %v3423
        %3427 = vmatpush.msra.mxu0 %v3422
        %3428 = vmatpush.msra.mxu0 %v3421
        %3429 = vmatpush.msra.mxu0 %v3420
        %3430 = vmatpush.msra.mxu0 %v3419
        %3431 = vmatpush.msra.mxu0 %v3418
        %3432 = vmatpush.msra.mxu0 %v3417
        %3433 = vmatpush.msra.mxu0 %v3416
        %3434 = vmatpush.msra.mxu0 %v3415
        %3435 = vmatpush.msra.mxu0 %v3414
        %3436 = vmatpush.msra.mxu0 %v3413
        %3437 = vmatpush.msra.mxu0 %v3412
        %3438 = vmatpush.msra.mxu0 %v3411
        %3439 = vmatpush.msra.mxu0 %v3410
        %3440 = vmatpush.msra.mxu0 %v3409
        %3441 = vmatmul.f32.gmra.mxu0 %v3352
        %v3442 = vpop.f32.mrf.mxu0
        %v3443 = vadd.f32 0.0, %v3442
        %3444 = vmatmul.f32.gmra.mxu0 %v3353
        %v3445 = vpop.f32.mrf.mxu0
        %v3446 = vadd.f32 0.0, %v3445
        %3447 = vmatmul.f32.gmra.mxu0 %v3354
        %v3448 = vpop.f32.mrf.mxu0
        %v3449 = vadd.f32 0.0, %v3448
        %3450 = vmatmul.f32.gmra.mxu0 %v3355
        %v3451 = vpop.f32.mrf.mxu0
        %v3452 = vadd.f32 0.0, %v3451
        %3453 = vmatmul.f32.gmra.mxu0 %v3356
        %v3454 = vpop.f32.mrf.mxu0
        %v3455 = vadd.f32 0.0, %v3454
        %3456 = vmatmul.f32.gmra.mxu0 %v3357
        %v3457 = vpop.f32.mrf.mxu0
        %v3458 = vadd.f32 0.0, %v3457
        %3459 = vmatmul.f32.gmra.mxu0 %v3358
        %v3460 = vpop.f32.mrf.mxu0
        %v3461 = vadd.f32 0.0, %v3460
        %3462 = vmatmul.f32.gmra.mxu0 %v3359
        %v3463 = vpop.f32.mrf.mxu0
        %v3464 = vadd.f32 0.0, %v3463
        %3465 = vmatmul.f32.gmra.mxu0 %v3360
        %v3466 = vpop.f32.mrf.mxu0
        %v3467 = vadd.f32 0.0, %v3466
        %3468 = vmatmul.f32.gmra.mxu0 %v3361
        %v3469 = vpop.f32.mrf.mxu0
        %v3470 = vadd.f32 0.0, %v3469
        %3471 = vmatmul.f32.gmra.mxu0 %v3362
        %v3472 = vpop.f32.mrf.mxu0
        %v3473 = vadd.f32 0.0, %v3472
        %3474 = vmatmul.f32.gmra.mxu0 %v3363
        %v3475 = vpop.f32.mrf.mxu0
        %v3476 = vadd.f32 0.0, %v3475
        %3477 = vmatmul.f32.gmra.mxu0 %v3364
        %v3478 = vpop.f32.mrf.mxu0
        %v3479 = vadd.f32 0.0, %v3478
        %3480 = vmatmul.f32.gmra.mxu0 %v3365
        %v3481 = vpop.f32.mrf.mxu0
        %v3482 = vadd.f32 0.0, %v3481
        %3483 = vmatmul.f32.gmra.mxu0 %v3366
        %v3484 = vpop.f32.mrf.mxu0
        %v3485 = vadd.f32 0.0, %v3484
        %3486 = vmatmul.f32.gmra.mxu0 %v3367
        %v3487 = vpop.f32.mrf.mxu0
        %v3488 = vadd.f32 0.0, %v3487
        %3489 = vmatmul.f32.gmra.mxu0 %v3368
        %v3490 = vpop.f32.mrf.mxu0
        %v3491 = vadd.f32 0.0, %v3490
        %3492 = vmatmul.f32.gmra.mxu0 %v3369
        %v3493 = vpop.f32.mrf.mxu0
        %v3494 = vadd.f32 0.0, %v3493
        %3495 = vmatmul.f32.gmra.mxu0 %v3370
        %v3496 = vpop.f32.mrf.mxu0
        %v3497 = vadd.f32 0.0, %v3496
        %3498 = vmatmul.f32.gmra.mxu0 %v3371
        %v3499 = vpop.f32.mrf.mxu0
        %v3500 = vadd.f32 0.0, %v3499
        %3501 = vmatmul.f32.gmra.mxu0 %v3372
        %v3502 = vpop.f32.mrf.mxu0
        %v3503 = vadd.f32 0.0, %v3502
        %3504 = vmatmul.f32.gmra.mxu0 %v3373
        %v3505 = vpop.f32.mrf.mxu0
        %v3506 = vadd.f32 0.0, %v3505
        %3507 = vmatmul.f32.gmra.mxu0 %v3374
        %v3508 = vpop.f32.mrf.mxu0
        %v3509 = vadd.f32 0.0, %v3508
        %3510 = vmatmul.f32.gmra.mxu0 %v3375
        %v3511 = vpop.f32.mrf.mxu0
        %v3512 = vadd.f32 0.0, %v3511
        %3513 = vmatmul.f32.gmra.mxu0 %v3376
        %v3514 = vpop.f32.mrf.mxu0
        %v3515 = vadd.f32 0.0, %v3514
        %3516 = vmatmul.f32.gmra.mxu0 %v3377
        %v3517 = vpop.f32.mrf.mxu0
        %v3518 = vadd.f32 0.0, %v3517
        %3519 = vmatmul.f32.gmra.mxu0 %v3378
        %v3520 = vpop.f32.mrf.mxu0
        %v3521 = vadd.f32 0.0, %v3520
        %3522 = vmatmul.f32.gmra.mxu0 %v3379
        %v3523 = vpop.f32.mrf.mxu0
        %v3524 = vadd.f32 0.0, %v3523
        %3525 = vmatmul.f32.gmra.mxu0 %v3380
        %v3526 = vpop.f32.mrf.mxu0
        %v3527 = vadd.f32 0.0, %v3526
        %3528 = vmatmul.f32.gmra.mxu0 %v3381
        %v3529 = vpop.f32.mrf.mxu0
        %v3530 = vadd.f32 0.0, %v3529
        %3531 = vmatmul.f32.gmra.mxu0 %v3382
        %v3532 = vpop.f32.mrf.mxu0
        %v3533 = vadd.f32 0.0, %v3532
        %3534 = vmatmul.f32.gmra.mxu0 %v3383
        %v3535 = vpop.f32.mrf.mxu0
        %v3536 = vadd.f32 0.0, %v3535
        %3537 = vmatmul.f32.gmra.mxu0 %v3384
        %v3538 = vpop.f32.mrf.mxu0
        %v3539 = vadd.f32 0.0, %v3538
        %3540 = vmatmul.f32.gmra.mxu0 %v3385
        %v3541 = vpop.f32.mrf.mxu0
        %v3542 = vadd.f32 0.0, %v3541
        %3543 = vmatmul.f32.gmra.mxu0 %v3386
        %v3544 = vpop.f32.mrf.mxu0
        %v3545 = vadd.f32 0.0, %v3544
        %3546 = vmatmul.f32.gmra.mxu0 %v3387
        %v3547 = vpop.f32.mrf.mxu0
        %v3548 = vadd.f32 0.0, %v3547
        %3549 = vmatmul.f32.gmra.mxu0 %v3388
        %v3550 = vpop.f32.mrf.mxu0
        %v3551 = vadd.f32 0.0, %v3550
        %3552 = vmatmul.f32.gmra.mxu0 %v3389
        %v3553 = vpop.f32.mrf.mxu0
        %v3554 = vadd.f32 0.0, %v3553
        %3555 = vmatmul.f32.gmra.mxu0 %v3390
        %v3556 = vpop.f32.mrf.mxu0
        %v3557 = vadd.f32 0.0, %v3556
        %3558 = vmatmul.f32.gmra.mxu0 %v3391
        %v3559 = vpop.f32.mrf.mxu0
        %v3560 = vadd.f32 0.0, %v3559
        %3561 = vmatmul.f32.gmra.mxu0 %v3392
        %v3562 = vpop.f32.mrf.mxu0
        %v3563 = vadd.f32 0.0, %v3562
        %3564 = vmatmul.f32.gmra.mxu0 %v3393
        %v3565 = vpop.f32.mrf.mxu0
        %v3566 = vadd.f32 0.0, %v3565
        %3567 = vmatmul.f32.gmra.mxu0 %v3394
        %v3568 = vpop.f32.mrf.mxu0
        %v3569 = vadd.f32 0.0, %v3568
        %3570 = vmatmul.f32.gmra.mxu0 %v3395
        %v3571 = vpop.f32.mrf.mxu0
        %v3572 = vadd.f32 0.0, %v3571
        %3573 = vmatmul.f32.gmra.mxu0 %v3396
        %v3574 = vpop.f32.mrf.mxu0
        %v3575 = vadd.f32 0.0, %v3574
        %3576 = vmatmul.f32.gmra.mxu0 %v3397
        %v3577 = vpop.f32.mrf.mxu0
        %v3578 = vadd.f32 0.0, %v3577
        %3579 = vmatmul.f32.gmra.mxu0 %v3398
        %v3580 = vpop.f32.mrf.mxu0
        %v3581 = vadd.f32 0.0, %v3580
        %3582 = vmatmul.f32.gmra.mxu0 %v3399
        %v3583 = vpop.f32.mrf.mxu0
        %v3584 = vadd.f32 0.0, %v3583
        %3585 = vmatmul.f32.gmra.mxu0 %v3400
        %v3586 = vpop.f32.mrf.mxu0
        %v3587 = vadd.f32 0.0, %v3586
        %3588 = vmatmul.f32.gmra.mxu0 %v3401
        %v3589 = vpop.f32.mrf.mxu0
        %v3590 = vadd.f32 0.0, %v3589
        %3591 = vmatmul.f32.gmra.mxu0 %v3402
        %v3592 = vpop.f32.mrf.mxu0
        %v3593 = vadd.f32 0.0, %v3592
        %3594 = vmatmul.f32.gmra.mxu0 %v3403
        %v3595 = vpop.f32.mrf.mxu0
        %v3596 = vadd.f32 0.0, %v3595
        %3597 = vmatmul.f32.gmra.mxu0 %v3404
        %v3598 = vpop.f32.mrf.mxu0
        %v3599 = vadd.f32 0.0, %v3598
        %3600 = vmatmul.f32.gmra.mxu0 %v3405
        %v3601 = vpop.f32.mrf.mxu0
        %v3602 = vadd.f32 0.0, %v3601
        %3603 = vmatmul.f32.gmra.mxu0 %v3406
        %v3604 = vpop.f32.mrf.mxu0
        %v3605 = vadd.f32 0.0, %v3604
        %3606 = vmatmul.f32.gmra.mxu0 %v3407
        %v3607 = vpop.f32.mrf.mxu0
        %v3608 = vadd.f32 0.0, %v3607
        %3609 = vdwg.mxu0
        %v3610 = vadd.f32 %v3296, %v3443
        %v3611 = vadd.f32 %v3297, %v3446
        %v3612 = vadd.f32 %v3298, %v3449
        %v3613 = vadd.f32 %v3299, %v3452
        %v3614 = vadd.f32 %v3300, %v3455
        %v3615 = vadd.f32 %v3301, %v3458
        %v3616 = vadd.f32 %v3302, %v3461
        %v3617 = vadd.f32 %v3303, %v3464
        %v3618 = vadd.f32 %v3304, %v3467
        %v3619 = vadd.f32 %v3305, %v3470
        %v3620 = vadd.f32 %v3306, %v3473
        %v3621 = vadd.f32 %v3307, %v3476
        %v3622 = vadd.f32 %v3308, %v3479
        %v3623 = vadd.f32 %v3309, %v3482
        %v3624 = vadd.f32 %v3310, %v3485
        %v3625 = vadd.f32 %v3311, %v3488
        %v3626 = vadd.f32 %v3312, %v3491
        %v3627 = vadd.f32 %v3313, %v3494
        %v3628 = vadd.f32 %v3314, %v3497
        %v3629 = vadd.f32 %v3315, %v3500
        %v3630 = vadd.f32 %v3316, %v3503
        %v3631 = vadd.f32 %v3317, %v3506
        %v3632 = vadd.f32 %v3318, %v3509
        %v3633 = vadd.f32 %v3319, %v3512
        %v3634 = vadd.f32 %v3320, %v3515
        %v3635 = vadd.f32 %v3321, %v3518
        %v3636 = vadd.f32 %v3322, %v3521
        %v3637 = vadd.f32 %v3323, %v3524
        %v3638 = vadd.f32 %v3324, %v3527
        %v3639 = vadd.f32 %v3325, %v3530
        %v3640 = vadd.f32 %v3326, %v3533
        %v3641 = vadd.f32 %v3327, %v3536
        %v3642 = vadd.f32 %v3328, %v3539
        %v3643 = vadd.f32 %v3329, %v3542
        %v3644 = vadd.f32 %v3330, %v3545
        %v3645 = vadd.f32 %v3331, %v3548
        %v3646 = vadd.f32 %v3332, %v3551
        %v3647 = vadd.f32 %v3333, %v3554
        %v3648 = vadd.f32 %v3334, %v3557
        %v3649 = vadd.f32 %v3335, %v3560
        %v3650 = vadd.f32 %v3336, %v3563
        %v3651 = vadd.f32 %v3337, %v3566
        %v3652 = vadd.f32 %v3338, %v3569
        %v3653 = vadd.f32 %v3339, %v3572
        %v3654 = vadd.f32 %v3340, %v3575
        %v3655 = vadd.f32 %v3341, %v3578
        %v3656 = vadd.f32 %v3342, %v3581
        %v3657 = vadd.f32 %v3343, %v3584
        %v3658 = vadd.f32 %v3344, %v3587
        %v3659 = vadd.f32 %v3345, %v3590
        %v3660 = vadd.f32 %v3346, %v3593
        %v3661 = vadd.f32 %v3347, %v3596
        %v3662 = vadd.f32 %v3348, %v3599
        %v3663 = vadd.f32 %v3349, %v3602
        %v3664 = vadd.f32 %v3350, %v3605
        %v3665 = vadd.f32 %v3351, %v3608
        %v3666 = vld [vmem:[%s4] sm:$0x1]
        %v3668 = vperm.slane %v3666, 0
        %v3670 = vadd.f32 %v3610, %v3668
        %v3671 = vadd.f32 %v3611, %v3668
        %v3672 = vadd.f32 %v3612, %v3668
        %v3673 = vadd.f32 %v3613, %v3668
        %v3674 = vadd.f32 %v3614, %v3668
        %v3675 = vadd.f32 %v3615, %v3668
        %v3676 = vadd.f32 %v3616, %v3668
        %v3677 = vadd.f32 %v3617, %v3668
        %v3678 = vadd.f32 %v3618, %v3668
        %v3679 = vadd.f32 %v3619, %v3668
        %v3680 = vadd.f32 %v3620, %v3668
        %v3681 = vadd.f32 %v3621, %v3668
        %v3682 = vadd.f32 %v3622, %v3668
        %v3683 = vadd.f32 %v3623, %v3668
        %v3684 = vadd.f32 %v3624, %v3668
        %v3685 = vadd.f32 %v3625, %v3668
        %v3686 = vadd.f32 %v3626, %v3668
        %v3687 = vadd.f32 %v3627, %v3668
        %v3688 = vadd.f32 %v3628, %v3668
        %v3689 = vadd.f32 %v3629, %v3668
        %v3690 = vadd.f32 %v3630, %v3668
        %v3691 = vadd.f32 %v3631, %v3668
        %v3692 = vadd.f32 %v3632, %v3668
        %v3693 = vadd.f32 %v3633, %v3668
        %v3694 = vadd.f32 %v3634, %v3668
        %v3695 = vadd.f32 %v3635, %v3668
        %v3696 = vadd.f32 %v3636, %v3668
        %v3697 = vadd.f32 %v3637, %v3668
        %v3698 = vadd.f32 %v3638, %v3668
        %v3699 = vadd.f32 %v3639, %v3668
        %v3700 = vadd.f32 %v3640, %v3668
        %v3701 = vadd.f32 %v3641, %v3668
        %v3702 = vadd.f32 %v3642, %v3668
        %v3703 = vadd.f32 %v3643, %v3668
        %v3704 = vadd.f32 %v3644, %v3668
        %v3705 = vadd.f32 %v3645, %v3668
        %v3706 = vadd.f32 %v3646, %v3668
        %v3707 = vadd.f32 %v3647, %v3668
        %v3708 = vadd.f32 %v3648, %v3668
        %v3709 = vadd.f32 %v3649, %v3668
        %v3710 = vadd.f32 %v3650, %v3668
        %v3711 = vadd.f32 %v3651, %v3668
        %v3712 = vadd.f32 %v3652, %v3668
        %v3713 = vadd.f32 %v3653, %v3668
        %v3714 = vadd.f32 %v3654, %v3668
        %v3715 = vadd.f32 %v3655, %v3668
        %v3716 = vadd.f32 %v3656, %v3668
        %v3717 = vadd.f32 %v3657, %v3668
        %v3718 = vadd.f32 %v3658, %v3668
        %v3719 = vadd.f32 %v3659, %v3668
        %v3720 = vadd.f32 %v3660, %v3668
        %v3721 = vadd.f32 %v3661, %v3668
        %v3722 = vadd.f32 %v3662, %v3668
        %v3723 = vadd.f32 %v3663, %v3668
        %v3724 = vadd.f32 %v3664, %v3668
        %v3725 = vadd.f32 %v3665, %v3668
        %v3726 = vmax.f32 %v3670, 0.0
        %v3727 = vmax.f32 %v3671, 0.0
        %v3728 = vmax.f32 %v3672, 0.0
        %v3729 = vmax.f32 %v3673, 0.0
        %v3730 = vmax.f32 %v3674, 0.0
        %v3731 = vmax.f32 %v3675, 0.0
        %v3732 = vmax.f32 %v3676, 0.0
        %v3733 = vmax.f32 %v3677, 0.0
        %v3734 = vmax.f32 %v3678, 0.0
        %v3735 = vmax.f32 %v3679, 0.0
        %v3736 = vmax.f32 %v3680, 0.0
        %v3737 = vmax.f32 %v3681, 0.0
        %v3738 = vmax.f32 %v3682, 0.0
        %v3739 = vmax.f32 %v3683, 0.0
        %v3740 = vmax.f32 %v3684, 0.0
        %v3741 = vmax.f32 %v3685, 0.0
        %v3742 = vmax.f32 %v3686, 0.0
        %v3743 = vmax.f32 %v3687, 0.0
        %v3744 = vmax.f32 %v3688, 0.0
        %v3745 = vmax.f32 %v3689, 0.0
        %v3746 = vmax.f32 %v3690, 0.0
        %v3747 = vmax.f32 %v3691, 0.0
        %v3748 = vmax.f32 %v3692, 0.0
        %v3749 = vmax.f32 %v3693, 0.0
        %v3750 = vmax.f32 %v3694, 0.0
        %v3751 = vmax.f32 %v3695, 0.0
        %v3752 = vmax.f32 %v3696, 0.0
        %v3753 = vmax.f32 %v3697, 0.0
        %v3754 = vmax.f32 %v3698, 0.0
        %v3755 = vmax.f32 %v3699, 0.0
        %v3756 = vmax.f32 %v3700, 0.0
        %v3757 = vmax.f32 %v3701, 0.0
        %v3758 = vmax.f32 %v3702, 0.0
        %v3759 = vmax.f32 %v3703, 0.0
        %v3760 = vmax.f32 %v3704, 0.0
        %v3761 = vmax.f32 %v3705, 0.0
        %v3762 = vmax.f32 %v3706, 0.0
        %v3763 = vmax.f32 %v3707, 0.0
        %v3764 = vmax.f32 %v3708, 0.0
        %v3765 = vmax.f32 %v3709, 0.0
        %v3766 = vmax.f32 %v3710, 0.0
        %v3767 = vmax.f32 %v3711, 0.0
        %v3768 = vmax.f32 %v3712, 0.0
        %v3769 = vmax.f32 %v3713, 0.0
        %v3770 = vmax.f32 %v3714, 0.0
        %v3771 = vmax.f32 %v3715, 0.0
        %v3772 = vmax.f32 %v3716, 0.0
        %v3773 = vmax.f32 %v3717, 0.0
        %v3774 = vmax.f32 %v3718, 0.0
        %v3775 = vmax.f32 %v3719, 0.0
        %v3776 = vmax.f32 %v3720, 0.0
        %v3777 = vmax.f32 %v3721, 0.0
        %v3778 = vmax.f32 %v3722, 0.0
        %v3779 = vmax.f32 %v3723, 0.0
        %v3780 = vmax.f32 %v3724, 0.0
        %v3781 = vmax.f32 %v3725, 0.0
        %3782 = vst [vmem:[#allocation4] sm:$0xff] %v3726
        %3783 = vst [vmem:[#allocation4 + $0x8] sm:$0xff] %v3727
        %3784 = vst [vmem:[#allocation4 + $0x10] sm:$0xff] %v3728
        %3785 = vst [vmem:[#allocation4 + $0x18] sm:$0xff] %v3729
        %3786 = vst [vmem:[#allocation4 + $0x20] sm:$0xff] %v3730
        %3787 = vst [vmem:[#allocation4 + $0x28] sm:$0xff] %v3731
        %3788 = vst [vmem:[#allocation4 + $0x30] sm:$0xff] %v3732
        %3789 = vst [vmem:[#allocation4 + $0x38] sm:$0xff] %v3733
        %3790 = vst [vmem:[#allocation4 + $0x40] sm:$0xff] %v3734
        %3791 = vst [vmem:[#allocation4 + $0x48] sm:$0xff] %v3735
        %3792 = vst [vmem:[#allocation4 + $0x50] sm:$0xff] %v3736
        %3793 = vst [vmem:[#allocation4 + $0x58] sm:$0xff] %v3737
        %3794 = vst [vmem:[#allocation4 + $0x60] sm:$0xff] %v3738
        %3795 = vst [vmem:[#allocation4 + $0x68] sm:$0xff] %v3739
        %3796 = vst [vmem:[#allocation4 + $0x70] sm:$0xff] %v3740
        %3797 = vst [vmem:[#allocation4 + $0x78] sm:$0xff] %v3741
        %3798 = vst [vmem:[#allocation4 + $0x80] sm:$0xff] %v3742
        %3799 = vst [vmem:[#allocation4 + $0x88] sm:$0xff] %v3743
        %3800 = vst [vmem:[#allocation4 + $0x90] sm:$0xff] %v3744
        %3801 = vst [vmem:[#allocation4 + $0x98] sm:$0xff] %v3745
        %3802 = vst [vmem:[#allocation4 + $0xa0] sm:$0xff] %v3746
        %3803 = vst [vmem:[#allocation4 + $0xa8] sm:$0xff] %v3747
        %3804 = vst [vmem:[#allocation4 + $0xb0] sm:$0xff] %v3748
        %3805 = vst [vmem:[#allocation4 + $0xb8] sm:$0xff] %v3749
        %3806 = vst [vmem:[#allocation4 + $0xc0] sm:$0xff] %v3750
        %3807 = vst [vmem:[#allocation4 + $0xc8] sm:$0xff] %v3751
        %3808 = vst [vmem:[#allocation4 + $0xd0] sm:$0xff] %v3752
        %3809 = vst [vmem:[#allocation4 + $0xd8] sm:$0xff] %v3753
        %3810 = vst [vmem:[#allocation4 + $0xe0] sm:$0xff] %v3754
        %3811 = vst [vmem:[#allocation4 + $0xe8] sm:$0xff] %v3755
        %3812 = vst [vmem:[#allocation4 + $0xf0] sm:$0xff] %v3756
        %3813 = vst [vmem:[#allocation4 + $0xf8] sm:$0xff] %v3757
        %3814 = vst [vmem:[#allocation4 + $0x100] sm:$0xff] %v3758
        %3815 = vst [vmem:[#allocation4 + $0x108] sm:$0xff] %v3759
        %3816 = vst [vmem:[#allocation4 + $0x110] sm:$0xff] %v3760
        %3817 = vst [vmem:[#allocation4 + $0x118] sm:$0xff] %v3761
        %3818 = vst [vmem:[#allocation4 + $0x120] sm:$0xff] %v3762
        %3819 = vst [vmem:[#allocation4 + $0x128] sm:$0xff] %v3763
        %3820 = vst [vmem:[#allocation4 + $0x130] sm:$0xff] %v3764
        %3821 = vst [vmem:[#allocation4 + $0x138] sm:$0xff] %v3765
        %3822 = vst [vmem:[#allocation4 + $0x140] sm:$0xff] %v3766
        %3823 = vst [vmem:[#allocation4 + $0x148] sm:$0xff] %v3767
        %3824 = vst [vmem:[#allocation4 + $0x150] sm:$0xff] %v3768
        %3825 = vst [vmem:[#allocation4 + $0x158] sm:$0xff] %v3769
        %3826 = vst [vmem:[#allocation4 + $0x160] sm:$0xff] %v3770
        %3827 = vst [vmem:[#allocation4 + $0x168] sm:$0xff] %v3771
        %3828 = vst [vmem:[#allocation4 + $0x170] sm:$0xff] %v3772
        %3829 = vst [vmem:[#allocation4 + $0x178] sm:$0xff] %v3773
        %3830 = vst [vmem:[#allocation4 + $0x180] sm:$0xff] %v3774
        %3831 = vst [vmem:[#allocation4 + $0x188] sm:$0xff] %v3775
        %3832 = vst [vmem:[#allocation4 + $0x190] sm:$0xff] %v3776
        %3833 = vst [vmem:[#allocation4 + $0x198] sm:$0xff] %v3777
        %3834 = vst [vmem:[#allocation4 + $0x1a0] sm:$0xff] %v3778
        %3835 = vst [vmem:[#allocation4 + $0x1a8] sm:$0xff] %v3779
        %3836 = vst [vmem:[#allocation4 + $0x1b0] sm:$0xff] %v3780
        %3837 = vst [vmem:[#allocation4 + $0x1b8] sm:$0xff] %v3781
        %v3838 = vld [vmem:[#allocation4] ss:$2 sm:$0x7f]
        %s3839 = scalar_lea.vmem [#allocation4], 1
        %v3840 = vld [vmem:[%s3839] ss:$2 sm:$0x7f]
        %v3841 = vmax.f32 %v3838, %v3840
        %s3842 = scalar_lea.vmem [#allocation4], 16
        %v3843 = vld [vmem:[%s3842] ss:$2 sm:$0x7f]
        %v3844 = vmax.f32 %v3841, %v3843
        %s3845 = scalar_lea.vmem [#allocation4], 17
        %v3846 = vld [vmem:[%s3845] ss:$2 sm:$0x7f]
        %v3847 = vmax.f32 %v3844, %v3846
        %3848 = vst [vmem:[#allocation5 + $0x18] sm:$0x7f] %v3847
        %s3849 = scalar_lea.vmem [#allocation4], 32
        %v3850 = vld [vmem:[%s3849] ss:$2 sm:$0x7f]
        %s3851 = scalar_lea.vmem [#allocation4], 33
        %v3852 = vld [vmem:[%s3851] ss:$2 sm:$0x7f]
        %v3853 = vmax.f32 %v3850, %v3852
        %s3854 = scalar_lea.vmem [#allocation4], 48
        %v3855 = vld [vmem:[%s3854] ss:$2 sm:$0x7f]
        %v3856 = vmax.f32 %v3853, %v3855
        %s3857 = scalar_lea.vmem [#allocation4], 49
        %v3858 = vld [vmem:[%s3857] ss:$2 sm:$0x7f]
        %v3859 = vmax.f32 %v3856, %v3858
        %3860 = vst [vmem:[#allocation5 + $0x23] sm:$0x7f] %v3859
        %s3861 = scalar_lea.vmem [#allocation4], 64
        %v3862 = vld [vmem:[%s3861] ss:$2 sm:$0x7f]
        %s3863 = scalar_lea.vmem [#allocation4], 65
        %v3864 = vld [vmem:[%s3863] ss:$2 sm:$0x7f]
        %v3865 = vmax.f32 %v3862, %v3864
        %s3866 = scalar_lea.vmem [#allocation4], 80
        %v3867 = vld [vmem:[%s3866] ss:$2 sm:$0x7f]
        %v3868 = vmax.f32 %v3865, %v3867
        %s3869 = scalar_lea.vmem [#allocation4], 81
        %v3870 = vld [vmem:[%s3869] ss:$2 sm:$0x7f]
        %v3871 = vmax.f32 %v3868, %v3870
        %3872 = vst [vmem:[#allocation5 + $0x2e] sm:$0x7f] %v3871
        %s3873 = scalar_lea.vmem [#allocation4], 96
        %v3874 = vld [vmem:[%s3873] ss:$2 sm:$0x7f]
        %s3875 = scalar_lea.vmem [#allocation4], 97
        %v3876 = vld [vmem:[%s3875] ss:$2 sm:$0x7f]
        %v3877 = vmax.f32 %v3874, %v3876
        %s3878 = scalar_lea.vmem [#allocation4], 112
        %v3879 = vld [vmem:[%s3878] ss:$2 sm:$0x7f]
        %v3880 = vmax.f32 %v3877, %v3879
        %s3881 = scalar_lea.vmem [#allocation4], 113
        %v3882 = vld [vmem:[%s3881] ss:$2 sm:$0x7f]
        %v3883 = vmax.f32 %v3880, %v3882
        %3884 = vst [vmem:[#allocation5 + $0x39] sm:$0x7f] %v3883
        %s3885 = scalar_lea.vmem [#allocation4], 128
        %v3886 = vld [vmem:[%s3885] ss:$2 sm:$0x7f]
        %s3887 = scalar_lea.vmem [#allocation4], 129
        %v3888 = vld [vmem:[%s3887] ss:$2 sm:$0x7f]
        %v3889 = vmax.f32 %v3886, %v3888
        %s3890 = scalar_lea.vmem [#allocation4], 144
        %v3891 = vld [vmem:[%s3890] ss:$2 sm:$0x7f]
        %v3892 = vmax.f32 %v3889, %v3891
        %s3893 = scalar_lea.vmem [#allocation4], 145
        %v3894 = vld [vmem:[%s3893] ss:$2 sm:$0x7f]
        %v3895 = vmax.f32 %v3892, %v3894
        %3896 = vst [vmem:[#allocation5 + $0x44] sm:$0x7f] %v3895
        %s3897 = scalar_lea.vmem [#allocation4], 160
        %v3898 = vld [vmem:[%s3897] ss:$2 sm:$0x7f]
        %s3899 = scalar_lea.vmem [#allocation4], 161
        %v3900 = vld [vmem:[%s3899] ss:$2 sm:$0x7f]
        %v3901 = vmax.f32 %v3898, %v3900
        %s3902 = scalar_lea.vmem [#allocation4], 176
        %v3903 = vld [vmem:[%s3902] ss:$2 sm:$0x7f]
        %v3904 = vmax.f32 %v3901, %v3903
        %s3905 = scalar_lea.vmem [#allocation4], 177
        %v3906 = vld [vmem:[%s3905] ss:$2 sm:$0x7f]
        %v3907 = vmax.f32 %v3904, %v3906
        %3908 = vst [vmem:[#allocation5 + $0x4f] sm:$0x7f] %v3907
        %s3909 = scalar_lea.vmem [#allocation4], 192
        %v3910 = vld [vmem:[%s3909] ss:$2 sm:$0x7f]
        %s3911 = scalar_lea.vmem [#allocation4], 193
        %v3912 = vld [vmem:[%s3911] ss:$2 sm:$0x7f]
        %v3913 = vmax.f32 %v3910, %v3912
        %s3914 = scalar_lea.vmem [#allocation4], 208
        %v3915 = vld [vmem:[%s3914] ss:$2 sm:$0x7f]
        %v3916 = vmax.f32 %v3913, %v3915
        %s3917 = scalar_lea.vmem [#allocation4], 209
        %v3918 = vld [vmem:[%s3917] ss:$2 sm:$0x7f]
        %v3919 = vmax.f32 %v3916, %v3918
        %3920 = vst [vmem:[#allocation5 + $0x5a] sm:$0x7f] %v3919
        %s3921 = scalar_lea.vmem [#allocation4], 224
        %v3922 = vld [vmem:[%s3921] ss:$2 sm:$0x7f]
        %s3923 = scalar_lea.vmem [#allocation4], 225
        %v3924 = vld [vmem:[%s3923] ss:$2 sm:$0x7f]
        %v3925 = vmax.f32 %v3922, %v3924
        %s3926 = scalar_lea.vmem [#allocation4], 240
        %v3927 = vld [vmem:[%s3926] ss:$2 sm:$0x7f]
        %v3928 = vmax.f32 %v3925, %v3927
        %s3929 = scalar_lea.vmem [#allocation4], 241
        %v3930 = vld [vmem:[%s3929] ss:$2 sm:$0x7f]
        %v3931 = vmax.f32 %v3928, %v3930
        %3932 = vst [vmem:[#allocation5 + $0x65] sm:$0x7f] %v3931
        %s3933 = scalar_lea.vmem [#allocation4], 256
        %v3934 = vld [vmem:[%s3933] ss:$2 sm:$0x7f]
        %s3935 = scalar_lea.vmem [#allocation4], 257
        %v3936 = vld [vmem:[%s3935] ss:$2 sm:$0x7f]
        %v3937 = vmax.f32 %v3934, %v3936
        %s3938 = scalar_lea.vmem [#allocation4], 272
        %v3939 = vld [vmem:[%s3938] ss:$2 sm:$0x7f]
        %v3940 = vmax.f32 %v3937, %v3939
        %s3941 = scalar_lea.vmem [#allocation4], 273
        %v3942 = vld [vmem:[%s3941] ss:$2 sm:$0x7f]
        %v3943 = vmax.f32 %v3940, %v3942
        %3944 = vst [vmem:[#allocation5 + $0x70] sm:$0x7f] %v3943
        %s3945 = scalar_lea.vmem [#allocation4], 288
        %v3946 = vld [vmem:[%s3945] ss:$2 sm:$0x7f]
        %s3947 = scalar_lea.vmem [#allocation4], 289
        %v3948 = vld [vmem:[%s3947] ss:$2 sm:$0x7f]
        %v3949 = vmax.f32 %v3946, %v3948
        %s3950 = scalar_lea.vmem [#allocation4], 304
        %v3951 = vld [vmem:[%s3950] ss:$2 sm:$0x7f]
        %v3952 = vmax.f32 %v3949, %v3951
        %s3953 = scalar_lea.vmem [#allocation4], 305
        %v3954 = vld [vmem:[%s3953] ss:$2 sm:$0x7f]
        %v3955 = vmax.f32 %v3952, %v3954
        %3956 = vst [vmem:[#allocation5 + $0x7b] sm:$0x7f] %v3955
        %s3957 = scalar_lea.vmem [#allocation4], 320
        %v3958 = vld [vmem:[%s3957] ss:$2 sm:$0x7f]
        %s3959 = scalar_lea.vmem [#allocation4], 321
        %v3960 = vld [vmem:[%s3959] ss:$2 sm:$0x7f]
        %v3961 = vmax.f32 %v3958, %v3960
        %s3962 = scalar_lea.vmem [#allocation4], 336
        %v3963 = vld [vmem:[%s3962] ss:$2 sm:$0x7f]
        %v3964 = vmax.f32 %v3961, %v3963
        %s3965 = scalar_lea.vmem [#allocation4], 337
        %v3966 = vld [vmem:[%s3965] ss:$2 sm:$0x7f]
        %v3967 = vmax.f32 %v3964, %v3966
        %3968 = vst [vmem:[#allocation5 + $0x86] sm:$0x7f] %v3967
        %s3969 = scalar_lea.vmem [#allocation4], 352
        %v3970 = vld [vmem:[%s3969] ss:$2 sm:$0x7f]
        %s3971 = scalar_lea.vmem [#allocation4], 353
        %v3972 = vld [vmem:[%s3971] ss:$2 sm:$0x7f]
        %v3973 = vmax.f32 %v3970, %v3972
        %s3974 = scalar_lea.vmem [#allocation4], 368
        %v3975 = vld [vmem:[%s3974] ss:$2 sm:$0x7f]
        %v3976 = vmax.f32 %v3973, %v3975
        %s3977 = scalar_lea.vmem [#allocation4], 369
        %v3978 = vld [vmem:[%s3977] ss:$2 sm:$0x7f]
        %v3979 = vmax.f32 %v3976, %v3978
        %3980 = vst [vmem:[#allocation5 + $0x91] sm:$0x7f] %v3979
        %s3981 = scalar_lea.vmem [#allocation4], 384
        %v3982 = vld [vmem:[%s3981] ss:$2 sm:$0x7f]
        %s3983 = scalar_lea.vmem [#allocation4], 385
        %v3984 = vld [vmem:[%s3983] ss:$2 sm:$0x7f]
        %v3985 = vmax.f32 %v3982, %v3984
        %s3986 = scalar_lea.vmem [#allocation4], 400
        %v3987 = vld [vmem:[%s3986] ss:$2 sm:$0x7f]
        %v3988 = vmax.f32 %v3985, %v3987
        %s3989 = scalar_lea.vmem [#allocation4], 401
        %v3990 = vld [vmem:[%s3989] ss:$2 sm:$0x7f]
        %v3991 = vmax.f32 %v3988, %v3990
        %3992 = vst [vmem:[#allocation5 + $0x9c] sm:$0x7f] %v3991
        %s3993 = scalar_lea.vmem [#allocation4], 416
        %v3994 = vld [vmem:[%s3993] ss:$2 sm:$0x7f]
        %s3995 = scalar_lea.vmem [#allocation4], 417
        %v3996 = vld [vmem:[%s3995] ss:$2 sm:$0x7f]
        %v3997 = vmax.f32 %v3994, %v3996
        %s3998 = scalar_lea.vmem [#allocation4], 432
        %v3999 = vld [vmem:[%s3998] ss:$2 sm:$0x7f]
        %v4000 = vmax.f32 %v3997, %v3999
        %s4001 = scalar_lea.vmem [#allocation4], 433
        %v4002 = vld [vmem:[%s4001] ss:$2 sm:$0x7f]
        %v4003 = vmax.f32 %v4000, %v4002
        %4004 = vst [vmem:[#allocation5 + $0xa7] sm:$0x7f] %v4003
        %v4005 = vld [vmem:[#allocation5] sm:$0xff]
        %v4006 = vld [vmem:[#allocation5 + $0x8] sm:$0xff]
        %v4007 = vld [vmem:[#allocation5 + $0x10] sm:$0xff]
        %v4008 = vld [vmem:[#allocation5 + $0x18] sm:$0xff]
        %v4009 = vld [vmem:[#allocation5 + $0x20] sm:$0xff]
        %v4010 = vld [vmem:[#allocation5 + $0x28] sm:$0xff]
        %v4011 = vld [vmem:[#allocation5 + $0x30] sm:$0xff]
        %v4012 = vld [vmem:[#allocation5 + $0x38] sm:$0xff]
        %v4013 = vld [vmem:[#allocation5 + $0x40] sm:$0xff]
        %v4014 = vld [vmem:[#allocation5 + $0x48] sm:$0xff]
        %v4015 = vld [vmem:[#allocation5 + $0x50] sm:$0xff]
        %v4016 = vld [vmem:[#allocation5 + $0x58] sm:$0xff]
        %v4017 = vld [vmem:[#allocation5 + $0x60] sm:$0xff]
        %v4018 = vld [vmem:[#allocation5 + $0x68] sm:$0xff]
        %v4019 = vld [vmem:[#allocation5 + $0x70] sm:$0xff]
        %v4020 = vld [vmem:[#allocation5 + $0x78] sm:$0xff]
        %v4021 = vld [vmem:[#allocation5 + $0x80] sm:$0xff]
        %v4022 = vld [vmem:[#allocation5 + $0x88] sm:$0xff]
        %v4023 = vld [vmem:[#allocation5 + $0x90] sm:$0xff]
        %v4024 = vld [vmem:[#allocation5 + $0x98] sm:$0xff]
        %v4025 = vld [vmem:[#allocation5 + $0xa0] sm:$0xff]
        %v4026 = vld [vmem:[#allocation5 + $0xa8] sm:$0xff]
        %v4027 = vld [vmem:[%s5] sm:$0xff]
        %v4028 = vld [vmem:[%s5 + $0x8] sm:$0xff]
        %v4029 = vld [vmem:[%s5 + $0x10] sm:$0xff]
        %v4030 = vld [vmem:[%s5 + $0x18] sm:$0xff]
        %v4031 = vld [vmem:[%s5 + $0x20] sm:$0xff]
        %v4032 = vld [vmem:[%s5 + $0x28] sm:$0xff]
        %v4033 = vld [vmem:[%s5 + $0x30] sm:$0xff]
        %v4034 = vld [vmem:[%s5 + $0x38] sm:$0xff]
        %v4035 = vld [vmem:[%s5 + $0x40] sm:$0xff]
        %v4036 = vld [vmem:[%s5 + $0x48] sm:$0xff]
        %v4037 = vld [vmem:[%s5 + $0x50] sm:$0xff]
        %v4038 = vld [vmem:[%s5 + $0x58] sm:$0xff]
        %v4039 = vld [vmem:[%s5 + $0x60] sm:$0xff]
        %v4040 = vld [vmem:[%s5 + $0x68] sm:$0xff]
        %v4041 = vld [vmem:[%s5 + $0x70] sm:$0xff]
        %v4042 = vld [vmem:[%s5 + $0x78] sm:$0xff]
        %v4043 = vld [vmem:[#allocation5 + $0x1] sm:$0xff]
        %v4044 = vld [vmem:[#allocation5 + $0x9] sm:$0xff]
        %v4045 = vld [vmem:[#allocation5 + $0x11] sm:$0xff]
        %v4046 = vld [vmem:[#allocation5 + $0x19] sm:$0xff]
        %v4047 = vld [vmem:[#allocation5 + $0x21] sm:$0xff]
        %v4048 = vld [vmem:[#allocation5 + $0x29] sm:$0xff]
        %v4049 = vld [vmem:[#allocation5 + $0x31] sm:$0xff]
        %v4050 = vld [vmem:[#allocation5 + $0x39] sm:$0xff]
        %v4051 = vld [vmem:[#allocation5 + $0x41] sm:$0xff]
        %v4052 = vld [vmem:[#allocation5 + $0x49] sm:$0xff]
        %v4053 = vld [vmem:[#allocation5 + $0x51] sm:$0xff]
        %v4054 = vld [vmem:[#allocation5 + $0x59] sm:$0xff]
        %v4055 = vld [vmem:[#allocation5 + $0x61] sm:$0xff]
        %v4056 = vld [vmem:[#allocation5 + $0x69] sm:$0xff]
        %v4057 = vld [vmem:[#allocation5 + $0x71] sm:$0xff]
        %v4058 = vld [vmem:[#allocation5 + $0x79] sm:$0xff]
        %v4059 = vld [vmem:[#allocation5 + $0x81] sm:$0xff]
        %v4060 = vld [vmem:[#allocation5 + $0x89] sm:$0xff]
        %v4061 = vld [vmem:[#allocation5 + $0x91] sm:$0xff]
        %v4062 = vld [vmem:[#allocation5 + $0x99] sm:$0xff]
        %v4063 = vld [vmem:[#allocation5 + $0xa1] sm:$0xff]
        %v4064 = vld [vmem:[#allocation5 + $0xa9] sm:$0xff]
        %s4065 = scalar_lea.vmem %s5, 128
        %v4066 = vld [vmem:[%s4065] sm:$0xff]
        %v4067 = vld [vmem:[%s4065 + $0x8] sm:$0xff]
        %v4068 = vld [vmem:[%s4065 + $0x10] sm:$0xff]
        %v4069 = vld [vmem:[%s4065 + $0x18] sm:$0xff]
        %v4070 = vld [vmem:[%s4065 + $0x20] sm:$0xff]
        %v4071 = vld [vmem:[%s4065 + $0x28] sm:$0xff]
        %v4072 = vld [vmem:[%s4065 + $0x30] sm:$0xff]
        %v4073 = vld [vmem:[%s4065 + $0x38] sm:$0xff]
        %v4074 = vld [vmem:[%s4065 + $0x40] sm:$0xff]
        %v4075 = vld [vmem:[%s4065 + $0x48] sm:$0xff]
        %v4076 = vld [vmem:[%s4065 + $0x50] sm:$0xff]
        %v4077 = vld [vmem:[%s4065 + $0x58] sm:$0xff]
        %v4078 = vld [vmem:[%s4065 + $0x60] sm:$0xff]
        %v4079 = vld [vmem:[%s4065 + $0x68] sm:$0xff]
        %v4080 = vld [vmem:[%s4065 + $0x70] sm:$0xff]
        %v4081 = vld [vmem:[%s4065 + $0x78] sm:$0xff]
        %4082 = vmatpush.msra.mxu0 %v4081
        %4083 = vmatpush.msra.mxu0 %v4080
        %4084 = vmatpush.msra.mxu0 %v4079
        %4085 = vmatpush.msra.mxu0 %v4078
        %4086 = vmatpush.msra.mxu0 %v4077
        %4087 = vmatpush.msra.mxu0 %v4076
        %4088 = vmatpush.msra.mxu0 %v4075
        %4089 = vmatpush.msra.mxu0 %v4074
        %4090 = vmatpush.msra.mxu0 %v4073
        %4091 = vmatpush.msra.mxu0 %v4072
        %4092 = vmatpush.msra.mxu0 %v4071
        %4093 = vmatpush.msra.mxu0 %v4070
        %4094 = vmatpush.msra.mxu0 %v4069
        %4095 = vmatpush.msra.mxu0 %v4068
        %4096 = vmatpush.msra.mxu0 %v4067
        %4097 = vmatpush.msra.mxu0 %v4066
        %4098 = vmatmul.f32.gmra.mxu0 %v4043
        %v4099 = vpop.f32.mrf.mxu0
        %v4100 = vadd.f32 0.0, %v4099
        %4101 = vmatmul.f32.gmra.mxu0 %v4044
        %v4102 = vpop.f32.mrf.mxu0
        %v4103 = vadd.f32 0.0, %v4102
        %4104 = vmatmul.f32.gmra.mxu0 %v4045
        %v4105 = vpop.f32.mrf.mxu0
        %v4106 = vadd.f32 0.0, %v4105
        %4107 = vmatmul.f32.gmra.mxu0 %v4046
        %v4108 = vpop.f32.mrf.mxu0
        %v4109 = vadd.f32 0.0, %v4108
        %4110 = vmatmul.f32.gmra.mxu0 %v4047
        %v4111 = vpop.f32.mrf.mxu0
        %v4112 = vadd.f32 0.0, %v4111
        %4113 = vmatmul.f32.gmra.mxu0 %v4048
        %v4114 = vpop.f32.mrf.mxu0
        %v4115 = vadd.f32 0.0, %v4114
        %4116 = vmatmul.f32.gmra.mxu0 %v4049
        %v4117 = vpop.f32.mrf.mxu0
        %v4118 = vadd.f32 0.0, %v4117
        %4119 = vmatmul.f32.gmra.mxu0 %v4050
        %v4120 = vpop.f32.mrf.mxu0
        %v4121 = vadd.f32 0.0, %v4120
        %4122 = vmatmul.f32.gmra.mxu0 %v4051
        %v4123 = vpop.f32.mrf.mxu0
        %v4124 = vadd.f32 0.0, %v4123
        %4125 = vmatmul.f32.gmra.mxu0 %v4052
        %v4126 = vpop.f32.mrf.mxu0
        %v4127 = vadd.f32 0.0, %v4126
        %4128 = vmatmul.f32.gmra.mxu0 %v4053
        %v4129 = vpop.f32.mrf.mxu0
        %v4130 = vadd.f32 0.0, %v4129
        %4131 = vmatmul.f32.gmra.mxu0 %v4054
        %v4132 = vpop.f32.mrf.mxu0
        %v4133 = vadd.f32 0.0, %v4132
        %4134 = vmatmul.f32.gmra.mxu0 %v4055
        %v4135 = vpop.f32.mrf.mxu0
        %v4136 = vadd.f32 0.0, %v4135
        %4137 = vmatmul.f32.gmra.mxu0 %v4056
        %v4138 = vpop.f32.mrf.mxu0
        %v4139 = vadd.f32 0.0, %v4138
        %4140 = vmatmul.f32.gmra.mxu0 %v4057
        %v4141 = vpop.f32.mrf.mxu0
        %v4142 = vadd.f32 0.0, %v4141
        %4143 = vmatmul.f32.gmra.mxu0 %v4058
        %v4144 = vpop.f32.mrf.mxu0
        %v4145 = vadd.f32 0.0, %v4144
        %4146 = vmatmul.f32.gmra.mxu0 %v4059
        %v4147 = vpop.f32.mrf.mxu0
        %v4148 = vadd.f32 0.0, %v4147
        %4149 = vmatmul.f32.gmra.mxu0 %v4060
        %v4150 = vpop.f32.mrf.mxu0
        %v4151 = vadd.f32 0.0, %v4150
        %4152 = vmatmul.f32.gmra.mxu0 %v4061
        %v4153 = vpop.f32.mrf.mxu0
        %v4154 = vadd.f32 0.0, %v4153
        %4155 = vmatmul.f32.gmra.mxu0 %v4062
        %v4156 = vpop.f32.mrf.mxu0
        %v4157 = vadd.f32 0.0, %v4156
        %4158 = vmatmul.f32.gmra.mxu0 %v4063
        %v4159 = vpop.f32.mrf.mxu0
        %v4160 = vadd.f32 0.0, %v4159
        %4161 = vmatmul.f32.gmra.mxu0 %v4064
        %v4162 = vpop.f32.mrf.mxu0
        %v4163 = vadd.f32 0.0, %v4162
        %4164 = vdwg.mxu0
        %4165 = vmatpush.msra.mxu0 %v4042
        %4166 = vmatpush.msra.mxu0 %v4041
        %4167 = vmatpush.msra.mxu0 %v4040
        %4168 = vmatpush.msra.mxu0 %v4039
        %4169 = vmatpush.msra.mxu0 %v4038
        %4170 = vmatpush.msra.mxu0 %v4037
        %4171 = vmatpush.msra.mxu0 %v4036
        %4172 = vmatpush.msra.mxu0 %v4035
        %4173 = vmatpush.msra.mxu0 %v4034
        %4174 = vmatpush.msra.mxu0 %v4033
        %4175 = vmatpush.msra.mxu0 %v4032
        %4176 = vmatpush.msra.mxu0 %v4031
        %4177 = vmatpush.msra.mxu0 %v4030
        %4178 = vmatpush.msra.mxu0 %v4029
        %4179 = vmatpush.msra.mxu0 %v4028
        %4180 = vmatpush.msra.mxu0 %v4027
        %4181 = vmatmul.f32.gmra.mxu0 %v4005
        %v4182 = vpop.f32.mrf.mxu0
        %v4183 = vadd.f32 %v4100, %v4182
        %4184 = vmatmul.f32.gmra.mxu0 %v4006
        %v4185 = vpop.f32.mrf.mxu0
        %v4186 = vadd.f32 %v4103, %v4185
        %4187 = vmatmul.f32.gmra.mxu0 %v4007
        %v4188 = vpop.f32.mrf.mxu0
        %v4189 = vadd.f32 %v4106, %v4188
        %4190 = vmatmul.f32.gmra.mxu0 %v4008
        %v4191 = vpop.f32.mrf.mxu0
        %v4192 = vadd.f32 %v4109, %v4191
        %4193 = vmatmul.f32.gmra.mxu0 %v4009
        %v4194 = vpop.f32.mrf.mxu0
        %v4195 = vadd.f32 %v4112, %v4194
        %4196 = vmatmul.f32.gmra.mxu0 %v4010
        %v4197 = vpop.f32.mrf.mxu0
        %v4198 = vadd.f32 %v4115, %v4197
        %4199 = vmatmul.f32.gmra.mxu0 %v4011
        %v4200 = vpop.f32.mrf.mxu0
        %v4201 = vadd.f32 %v4118, %v4200
        %4202 = vmatmul.f32.gmra.mxu0 %v4012
        %v4203 = vpop.f32.mrf.mxu0
        %v4204 = vadd.f32 %v4121, %v4203
        %4205 = vmatmul.f32.gmra.mxu0 %v4013
        %v4206 = vpop.f32.mrf.mxu0
        %v4207 = vadd.f32 %v4124, %v4206
        %4208 = vmatmul.f32.gmra.mxu0 %v4014
        %v4209 = vpop.f32.mrf.mxu0
        %v4210 = vadd.f32 %v4127, %v4209
        %4211 = vmatmul.f32.gmra.mxu0 %v4015
        %v4212 = vpop.f32.mrf.mxu0
        %v4213 = vadd.f32 %v4130, %v4212
        %4214 = vmatmul.f32.gmra.mxu0 %v4016
        %v4215 = vpop.f32.mrf.mxu0
        %v4216 = vadd.f32 %v4133, %v4215
        %4217 = vmatmul.f32.gmra.mxu0 %v4017
        %v4218 = vpop.f32.mrf.mxu0
        %v4219 = vadd.f32 %v4136, %v4218
        %4220 = vmatmul.f32.gmra.mxu0 %v4018
        %v4221 = vpop.f32.mrf.mxu0
        %v4222 = vadd.f32 %v4139, %v4221
        %4223 = vmatmul.f32.gmra.mxu0 %v4019
        %v4224 = vpop.f32.mrf.mxu0
        %v4225 = vadd.f32 %v4142, %v4224
        %4226 = vmatmul.f32.gmra.mxu0 %v4020
        %v4227 = vpop.f32.mrf.mxu0
        %v4228 = vadd.f32 %v4145, %v4227
        %4229 = vmatmul.f32.gmra.mxu0 %v4021
        %v4230 = vpop.f32.mrf.mxu0
        %v4231 = vadd.f32 %v4148, %v4230
        %4232 = vmatmul.f32.gmra.mxu0 %v4022
        %v4233 = vpop.f32.mrf.mxu0
        %v4234 = vadd.f32 %v4151, %v4233
        %4235 = vmatmul.f32.gmra.mxu0 %v4023
        %v4236 = vpop.f32.mrf.mxu0
        %v4237 = vadd.f32 %v4154, %v4236
        %4238 = vmatmul.f32.gmra.mxu0 %v4024
        %v4239 = vpop.f32.mrf.mxu0
        %v4240 = vadd.f32 %v4157, %v4239
        %4241 = vmatmul.f32.gmra.mxu0 %v4025
        %v4242 = vpop.f32.mrf.mxu0
        %v4243 = vadd.f32 %v4160, %v4242
        %4244 = vmatmul.f32.gmra.mxu0 %v4026
        %v4245 = vpop.f32.mrf.mxu0
        %v4246 = vadd.f32 %v4163, %v4245
        %4247 = vdwg.mxu0
        %v4248 = vld [vmem:[#allocation5 + $0xb] sm:$0xff]
        %v4249 = vld [vmem:[#allocation5 + $0x13] sm:$0xff]
        %v4250 = vld [vmem:[#allocation5 + $0x1b] sm:$0xff]
        %v4251 = vld [vmem:[#allocation5 + $0x23] sm:$0xff]
        %v4252 = vld [vmem:[#allocation5 + $0x2b] sm:$0xff]
        %v4253 = vld [vmem:[#allocation5 + $0x33] sm:$0xff]
        %v4254 = vld [vmem:[#allocation5 + $0x3b] sm:$0xff]
        %v4255 = vld [vmem:[#allocation5 + $0x43] sm:$0xff]
        %v4256 = vld [vmem:[#allocation5 + $0x4b] sm:$0xff]
        %v4257 = vld [vmem:[#allocation5 + $0x53] sm:$0xff]
        %v4258 = vld [vmem:[#allocation5 + $0x5b] sm:$0xff]
        %v4259 = vld [vmem:[#allocation5 + $0x63] sm:$0xff]
        %v4260 = vld [vmem:[#allocation5 + $0x6b] sm:$0xff]
        %v4261 = vld [vmem:[#allocation5 + $0x73] sm:$0xff]
        %v4262 = vld [vmem:[#allocation5 + $0x7b] sm:$0xff]
        %v4263 = vld [vmem:[#allocation5 + $0x83] sm:$0xff]
        %v4264 = vld [vmem:[#allocation5 + $0x8b] sm:$0xff]
        %v4265 = vld [vmem:[#allocation5 + $0x93] sm:$0xff]
        %v4266 = vld [vmem:[#allocation5 + $0x9b] sm:$0xff]
        %v4267 = vld [vmem:[#allocation5 + $0xa3] sm:$0xff]
        %v4268 = vld [vmem:[#allocation5 + $0xab] sm:$0xff]
        %v4269 = vld [vmem:[#allocation5 + $0xb3] sm:$0xff]
        %s4270 = scalar_lea.vmem %s5, 256
        %v4271 = vld [vmem:[%s4270] sm:$0xff]
        %v4272 = vld [vmem:[%s4270 + $0x8] sm:$0xff]
        %v4273 = vld [vmem:[%s4270 + $0x10] sm:$0xff]
        %v4274 = vld [vmem:[%s4270 + $0x18] sm:$0xff]
        %v4275 = vld [vmem:[%s4270 + $0x20] sm:$0xff]
        %v4276 = vld [vmem:[%s4270 + $0x28] sm:$0xff]
        %v4277 = vld [vmem:[%s4270 + $0x30] sm:$0xff]
        %v4278 = vld [vmem:[%s4270 + $0x38] sm:$0xff]
        %v4279 = vld [vmem:[%s4270 + $0x40] sm:$0xff]
        %v4280 = vld [vmem:[%s4270 + $0x48] sm:$0xff]
        %v4281 = vld [vmem:[%s4270 + $0x50] sm:$0xff]
        %v4282 = vld [vmem:[%s4270 + $0x58] sm:$0xff]
        %v4283 = vld [vmem:[%s4270 + $0x60] sm:$0xff]
        %v4284 = vld [vmem:[%s4270 + $0x68] sm:$0xff]
        %v4285 = vld [vmem:[%s4270 + $0x70] sm:$0xff]
        %v4286 = vld [vmem:[%s4270 + $0x78] sm:$0xff]
        %4287 = vmatpush.msra.mxu0 %v4286
        %4288 = vmatpush.msra.mxu0 %v4285
        %4289 = vmatpush.msra.mxu0 %v4284
        %4290 = vmatpush.msra.mxu0 %v4283
        %4291 = vmatpush.msra.mxu0 %v4282
        %4292 = vmatpush.msra.mxu0 %v4281
        %4293 = vmatpush.msra.mxu0 %v4280
        %4294 = vmatpush.msra.mxu0 %v4279
        %4295 = vmatpush.msra.mxu0 %v4278
        %4296 = vmatpush.msra.mxu0 %v4277
        %4297 = vmatpush.msra.mxu0 %v4276
        %4298 = vmatpush.msra.mxu0 %v4275
        %4299 = vmatpush.msra.mxu0 %v4274
        %4300 = vmatpush.msra.mxu0 %v4273
        %4301 = vmatpush.msra.mxu0 %v4272
        %4302 = vmatpush.msra.mxu0 %v4271
        %4303 = vmatmul.f32.gmra.mxu0 %v4248
        %v4304 = vpop.f32.mrf.mxu0
        %v4305 = vadd.f32 0.0, %v4304
        %4306 = vmatmul.f32.gmra.mxu0 %v4249
        %v4307 = vpop.f32.mrf.mxu0
        %v4308 = vadd.f32 0.0, %v4307
        %4309 = vmatmul.f32.gmra.mxu0 %v4250
        %v4310 = vpop.f32.mrf.mxu0
        %v4311 = vadd.f32 0.0, %v4310
        %4312 = vmatmul.f32.gmra.mxu0 %v4251
        %v4313 = vpop.f32.mrf.mxu0
        %v4314 = vadd.f32 0.0, %v4313
        %4315 = vmatmul.f32.gmra.mxu0 %v4252
        %v4316 = vpop.f32.mrf.mxu0
        %v4317 = vadd.f32 0.0, %v4316
        %4318 = vmatmul.f32.gmra.mxu0 %v4253
        %v4319 = vpop.f32.mrf.mxu0
        %v4320 = vadd.f32 0.0, %v4319
        %4321 = vmatmul.f32.gmra.mxu0 %v4254
        %v4322 = vpop.f32.mrf.mxu0
        %v4323 = vadd.f32 0.0, %v4322
        %4324 = vmatmul.f32.gmra.mxu0 %v4255
        %v4325 = vpop.f32.mrf.mxu0
        %v4326 = vadd.f32 0.0, %v4325
        %4327 = vmatmul.f32.gmra.mxu0 %v4256
        %v4328 = vpop.f32.mrf.mxu0
        %v4329 = vadd.f32 0.0, %v4328
        %4330 = vmatmul.f32.gmra.mxu0 %v4257
        %v4331 = vpop.f32.mrf.mxu0
        %v4332 = vadd.f32 0.0, %v4331
        %4333 = vmatmul.f32.gmra.mxu0 %v4258
        %v4334 = vpop.f32.mrf.mxu0
        %v4335 = vadd.f32 0.0, %v4334
        %4336 = vmatmul.f32.gmra.mxu0 %v4259
        %v4337 = vpop.f32.mrf.mxu0
        %v4338 = vadd.f32 0.0, %v4337
        %4339 = vmatmul.f32.gmra.mxu0 %v4260
        %v4340 = vpop.f32.mrf.mxu0
        %v4341 = vadd.f32 0.0, %v4340
        %4342 = vmatmul.f32.gmra.mxu0 %v4261
        %v4343 = vpop.f32.mrf.mxu0
        %v4344 = vadd.f32 0.0, %v4343
        %4345 = vmatmul.f32.gmra.mxu0 %v4262
        %v4346 = vpop.f32.mrf.mxu0
        %v4347 = vadd.f32 0.0, %v4346
        %4348 = vmatmul.f32.gmra.mxu0 %v4263
        %v4349 = vpop.f32.mrf.mxu0
        %v4350 = vadd.f32 0.0, %v4349
        %4351 = vmatmul.f32.gmra.mxu0 %v4264
        %v4352 = vpop.f32.mrf.mxu0
        %v4353 = vadd.f32 0.0, %v4352
        %4354 = vmatmul.f32.gmra.mxu0 %v4265
        %v4355 = vpop.f32.mrf.mxu0
        %v4356 = vadd.f32 0.0, %v4355
        %4357 = vmatmul.f32.gmra.mxu0 %v4266
        %v4358 = vpop.f32.mrf.mxu0
        %v4359 = vadd.f32 0.0, %v4358
        %4360 = vmatmul.f32.gmra.mxu0 %v4267
        %v4361 = vpop.f32.mrf.mxu0
        %v4362 = vadd.f32 0.0, %v4361
        %4363 = vmatmul.f32.gmra.mxu0 %v4268
        %v4364 = vpop.f32.mrf.mxu0
        %v4365 = vadd.f32 0.0, %v4364
        %4366 = vmatmul.f32.gmra.mxu0 %v4269
        %v4367 = vpop.f32.mrf.mxu0
        %v4368 = vadd.f32 0.0, %v4367
        %4369 = vdwg.mxu0
        %v4370 = vadd.f32 %v4183, %v4305
        %v4371 = vadd.f32 %v4186, %v4308
        %v4372 = vadd.f32 %v4189, %v4311
        %v4373 = vadd.f32 %v4192, %v4314
        %v4374 = vadd.f32 %v4195, %v4317
        %v4375 = vadd.f32 %v4198, %v4320
        %v4376 = vadd.f32 %v4201, %v4323
        %v4377 = vadd.f32 %v4204, %v4326
        %v4378 = vadd.f32 %v4207, %v4329
        %v4379 = vadd.f32 %v4210, %v4332
        %v4380 = vadd.f32 %v4213, %v4335
        %v4381 = vadd.f32 %v4216, %v4338
        %v4382 = vadd.f32 %v4219, %v4341
        %v4383 = vadd.f32 %v4222, %v4344
        %v4384 = vadd.f32 %v4225, %v4347
        %v4385 = vadd.f32 %v4228, %v4350
        %v4386 = vadd.f32 %v4231, %v4353
        %v4387 = vadd.f32 %v4234, %v4356
        %v4388 = vadd.f32 %v4237, %v4359
        %v4389 = vadd.f32 %v4240, %v4362
        %v4390 = vadd.f32 %v4243, %v4365
        %v4391 = vadd.f32 %v4246, %v4368
        %v4392 = vld [vmem:[#allocation5 + $0xc] sm:$0xff]
        %v4393 = vld [vmem:[#allocation5 + $0x14] sm:$0xff]
        %v4394 = vld [vmem:[#allocation5 + $0x1c] sm:$0xff]
        %v4395 = vld [vmem:[#allocation5 + $0x24] sm:$0xff]
        %v4396 = vld [vmem:[#allocation5 + $0x2c] sm:$0xff]
        %v4397 = vld [vmem:[#allocation5 + $0x34] sm:$0xff]
        %v4398 = vld [vmem:[#allocation5 + $0x3c] sm:$0xff]
        %v4399 = vld [vmem:[#allocation5 + $0x44] sm:$0xff]
        %v4400 = vld [vmem:[#allocation5 + $0x4c] sm:$0xff]
        %v4401 = vld [vmem:[#allocation5 + $0x54] sm:$0xff]
        %v4402 = vld [vmem:[#allocation5 + $0x5c] sm:$0xff]
        %v4403 = vld [vmem:[#allocation5 + $0x64] sm:$0xff]
        %v4404 = vld [vmem:[#allocation5 + $0x6c] sm:$0xff]
        %v4405 = vld [vmem:[#allocation5 + $0x74] sm:$0xff]
        %v4406 = vld [vmem:[#allocation5 + $0x7c] sm:$0xff]
        %v4407 = vld [vmem:[#allocation5 + $0x84] sm:$0xff]
        %v4408 = vld [vmem:[#allocation5 + $0x8c] sm:$0xff]
        %v4409 = vld [vmem:[#allocation5 + $0x94] sm:$0xff]
        %v4410 = vld [vmem:[#allocation5 + $0x9c] sm:$0xff]
        %v4411 = vld [vmem:[#allocation5 + $0xa4] sm:$0xff]
        %v4412 = vld [vmem:[#allocation5 + $0xac] sm:$0xff]
        %v4413 = vld [vmem:[#allocation5 + $0xb4] sm:$0xff]
        %s4414 = scalar_lea.vmem %s5, 384
        %v4415 = vld [vmem:[%s4414] sm:$0xff]
        %v4416 = vld [vmem:[%s4414 + $0x8] sm:$0xff]
        %v4417 = vld [vmem:[%s4414 + $0x10] sm:$0xff]
        %v4418 = vld [vmem:[%s4414 + $0x18] sm:$0xff]
        %v4419 = vld [vmem:[%s4414 + $0x20] sm:$0xff]
        %v4420 = vld [vmem:[%s4414 + $0x28] sm:$0xff]
        %v4421 = vld [vmem:[%s4414 + $0x30] sm:$0xff]
        %v4422 = vld [vmem:[%s4414 + $0x38] sm:$0xff]
        %v4423 = vld [vmem:[%s4414 + $0x40] sm:$0xff]
        %v4424 = vld [vmem:[%s4414 + $0x48] sm:$0xff]
        %v4425 = vld [vmem:[%s4414 + $0x50] sm:$0xff]
        %v4426 = vld [vmem:[%s4414 + $0x58] sm:$0xff]
        %v4427 = vld [vmem:[%s4414 + $0x60] sm:$0xff]
        %v4428 = vld [vmem:[%s4414 + $0x68] sm:$0xff]
        %v4429 = vld [vmem:[%s4414 + $0x70] sm:$0xff]
        %v4430 = vld [vmem:[%s4414 + $0x78] sm:$0xff]
        %4431 = vmatpush.msra.mxu0 %v4430
        %4432 = vmatpush.msra.mxu0 %v4429
        %4433 = vmatpush.msra.mxu0 %v4428
        %4434 = vmatpush.msra.mxu0 %v4427
        %4435 = vmatpush.msra.mxu0 %v4426
        %4436 = vmatpush.msra.mxu0 %v4425
        %4437 = vmatpush.msra.mxu0 %v4424
        %4438 = vmatpush.msra.mxu0 %v4423
        %4439 = vmatpush.msra.mxu0 %v4422
        %4440 = vmatpush.msra.mxu0 %v4421
        %4441 = vmatpush.msra.mxu0 %v4420
        %4442 = vmatpush.msra.mxu0 %v4419
        %4443 = vmatpush.msra.mxu0 %v4418
        %4444 = vmatpush.msra.mxu0 %v4417
        %4445 = vmatpush.msra.mxu0 %v4416
        %4446 = vmatpush.msra.mxu0 %v4415
        %4447 = vmatmul.f32.gmra.mxu0 %v4392
        %v4448 = vpop.f32.mrf.mxu0
        %v4449 = vadd.f32 0.0, %v4448
        %4450 = vmatmul.f32.gmra.mxu0 %v4393
        %v4451 = vpop.f32.mrf.mxu0
        %v4452 = vadd.f32 0.0, %v4451
        %4453 = vmatmul.f32.gmra.mxu0 %v4394
        %v4454 = vpop.f32.mrf.mxu0
        %v4455 = vadd.f32 0.0, %v4454
        %4456 = vmatmul.f32.gmra.mxu0 %v4395
        %v4457 = vpop.f32.mrf.mxu0
        %v4458 = vadd.f32 0.0, %v4457
        %4459 = vmatmul.f32.gmra.mxu0 %v4396
        %v4460 = vpop.f32.mrf.mxu0
        %v4461 = vadd.f32 0.0, %v4460
        %4462 = vmatmul.f32.gmra.mxu0 %v4397
        %v4463 = vpop.f32.mrf.mxu0
        %v4464 = vadd.f32 0.0, %v4463
        %4465 = vmatmul.f32.gmra.mxu0 %v4398
        %v4466 = vpop.f32.mrf.mxu0
        %v4467 = vadd.f32 0.0, %v4466
        %4468 = vmatmul.f32.gmra.mxu0 %v4399
        %v4469 = vpop.f32.mrf.mxu0
        %v4470 = vadd.f32 0.0, %v4469
        %4471 = vmatmul.f32.gmra.mxu0 %v4400
        %v4472 = vpop.f32.mrf.mxu0
        %v4473 = vadd.f32 0.0, %v4472
        %4474 = vmatmul.f32.gmra.mxu0 %v4401
        %v4475 = vpop.f32.mrf.mxu0
        %v4476 = vadd.f32 0.0, %v4475
        %4477 = vmatmul.f32.gmra.mxu0 %v4402
        %v4478 = vpop.f32.mrf.mxu0
        %v4479 = vadd.f32 0.0, %v4478
        %4480 = vmatmul.f32.gmra.mxu0 %v4403
        %v4481 = vpop.f32.mrf.mxu0
        %v4482 = vadd.f32 0.0, %v4481
        %4483 = vmatmul.f32.gmra.mxu0 %v4404
        %v4484 = vpop.f32.mrf.mxu0
        %v4485 = vadd.f32 0.0, %v4484
        %4486 = vmatmul.f32.gmra.mxu0 %v4405
        %v4487 = vpop.f32.mrf.mxu0
        %v4488 = vadd.f32 0.0, %v4487
        %4489 = vmatmul.f32.gmra.mxu0 %v4406
        %v4490 = vpop.f32.mrf.mxu0
        %v4491 = vadd.f32 0.0, %v4490
        %4492 = vmatmul.f32.gmra.mxu0 %v4407
        %v4493 = vpop.f32.mrf.mxu0
        %v4494 = vadd.f32 0.0, %v4493
        %4495 = vmatmul.f32.gmra.mxu0 %v4408
        %v4496 = vpop.f32.mrf.mxu0
        %v4497 = vadd.f32 0.0, %v4496
        %4498 = vmatmul.f32.gmra.mxu0 %v4409
        %v4499 = vpop.f32.mrf.mxu0
        %v4500 = vadd.f32 0.0, %v4499
        %4501 = vmatmul.f32.gmra.mxu0 %v4410
        %v4502 = vpop.f32.mrf.mxu0
        %v4503 = vadd.f32 0.0, %v4502
        %4504 = vmatmul.f32.gmra.mxu0 %v4411
        %v4505 = vpop.f32.mrf.mxu0
        %v4506 = vadd.f32 0.0, %v4505
        %4507 = vmatmul.f32.gmra.mxu0 %v4412
        %v4508 = vpop.f32.mrf.mxu0
        %v4509 = vadd.f32 0.0, %v4508
        %4510 = vmatmul.f32.gmra.mxu0 %v4413
        %v4511 = vpop.f32.mrf.mxu0
        %v4512 = vadd.f32 0.0, %v4511
        %4513 = vdwg.mxu0
        %v4514 = vadd.f32 %v4370, %v4449
        %v4515 = vadd.f32 %v4371, %v4452
        %v4516 = vadd.f32 %v4372, %v4455
        %v4517 = vadd.f32 %v4373, %v4458
        %v4518 = vadd.f32 %v4374, %v4461
        %v4519 = vadd.f32 %v4375, %v4464
        %v4520 = vadd.f32 %v4376, %v4467
        %v4521 = vadd.f32 %v4377, %v4470
        %v4522 = vadd.f32 %v4378, %v4473
        %v4523 = vadd.f32 %v4379, %v4476
        %v4524 = vadd.f32 %v4380, %v4479
        %v4525 = vadd.f32 %v4381, %v4482
        %v4526 = vadd.f32 %v4382, %v4485
        %v4527 = vadd.f32 %v4383, %v4488
        %v4528 = vadd.f32 %v4384, %v4491
        %v4529 = vadd.f32 %v4385, %v4494
        %v4530 = vadd.f32 %v4386, %v4497
        %v4531 = vadd.f32 %v4387, %v4500
        %v4532 = vadd.f32 %v4388, %v4503
        %v4533 = vadd.f32 %v4389, %v4506
        %v4534 = vadd.f32 %v4390, %v4509
        %v4535 = vadd.f32 %v4391, %v4512
        %v4536 = vld [vmem:[%s6] sm:$0x1]
        %v4538 = vperm.slane %v4536, 0
        %v4540 = vadd.f32 %v4514, %v4538
        %v4541 = vadd.f32 %v4515, %v4538
        %v4542 = vadd.f32 %v4516, %v4538
        %v4543 = vadd.f32 %v4517, %v4538
        %v4544 = vadd.f32 %v4518, %v4538
        %v4545 = vadd.f32 %v4519, %v4538
        %v4546 = vadd.f32 %v4520, %v4538
        %v4547 = vadd.f32 %v4521, %v4538
        %v4548 = vadd.f32 %v4522, %v4538
        %v4549 = vadd.f32 %v4523, %v4538
        %v4550 = vadd.f32 %v4524, %v4538
        %v4551 = vadd.f32 %v4525, %v4538
        %v4552 = vadd.f32 %v4526, %v4538
        %v4553 = vadd.f32 %v4527, %v4538
        %v4554 = vadd.f32 %v4528, %v4538
        %v4555 = vadd.f32 %v4529, %v4538
        %v4556 = vadd.f32 %v4530, %v4538
        %v4557 = vadd.f32 %v4531, %v4538
        %v4558 = vadd.f32 %v4532, %v4538
        %v4559 = vadd.f32 %v4533, %v4538
        %v4560 = vadd.f32 %v4534, %v4538
        %v4561 = vadd.f32 %v4535, %v4538
        %v4562 = vmax.f32 %v4540, 0.0
        %v4563 = vmax.f32 %v4541, 0.0
        %v4564 = vmax.f32 %v4542, 0.0
        %v4565 = vmax.f32 %v4543, 0.0
        %v4566 = vmax.f32 %v4544, 0.0
        %v4567 = vmax.f32 %v4545, 0.0
        %v4568 = vmax.f32 %v4546, 0.0
        %v4569 = vmax.f32 %v4547, 0.0
        %v4570 = vmax.f32 %v4548, 0.0
        %v4571 = vmax.f32 %v4549, 0.0
        %v4572 = vmax.f32 %v4550, 0.0
        %v4573 = vmax.f32 %v4551, 0.0
        %v4574 = vmax.f32 %v4552, 0.0
        %v4575 = vmax.f32 %v4553, 0.0
        %v4576 = vmax.f32 %v4554, 0.0
        %v4577 = vmax.f32 %v4555, 0.0
        %v4578 = vmax.f32 %v4556, 0.0
        %v4579 = vmax.f32 %v4557, 0.0
        %v4580 = vmax.f32 %v4558, 0.0
        %v4581 = vmax.f32 %v4559, 0.0
        %v4582 = vmax.f32 %v4560, 0.0
        %v4583 = vmax.f32 %v4561, 0.0
        %4584 = vst [vmem:[#allocation6] sm:$0xff] %v4562
        %4585 = vst [vmem:[#allocation6 + $0x8] sm:$0xff] %v4563
        %4586 = vst [vmem:[#allocation6 + $0x10] sm:$0xff] %v4564
        %4587 = vst [vmem:[#allocation6 + $0x18] sm:$0xff] %v4565
        %4588 = vst [vmem:[#allocation6 + $0x20] sm:$0xff] %v4566
        %4589 = vst [vmem:[#allocation6 + $0x28] sm:$0xff] %v4567
        %4590 = vst [vmem:[#allocation6 + $0x30] sm:$0xff] %v4568
        %4591 = vst [vmem:[#allocation6 + $0x38] sm:$0xff] %v4569
        %4592 = vst [vmem:[#allocation6 + $0x40] sm:$0xff] %v4570
        %4593 = vst [vmem:[#allocation6 + $0x48] sm:$0xff] %v4571
        %4594 = vst [vmem:[#allocation6 + $0x50] sm:$0xff] %v4572
        %4595 = vst [vmem:[#allocation6 + $0x58] sm:$0xff] %v4573
        %4596 = vst [vmem:[#allocation6 + $0x60] sm:$0xff] %v4574
        %4597 = vst [vmem:[#allocation6 + $0x68] sm:$0xff] %v4575
        %4598 = vst [vmem:[#allocation6 + $0x70] sm:$0xff] %v4576
        %4599 = vst [vmem:[#allocation6 + $0x78] sm:$0xff] %v4577
        %4600 = vst [vmem:[#allocation6 + $0x80] sm:$0xff] %v4578
        %4601 = vst [vmem:[#allocation6 + $0x88] sm:$0xff] %v4579
        %4602 = vst [vmem:[#allocation6 + $0x90] sm:$0xff] %v4580
        %4603 = vst [vmem:[#allocation6 + $0x98] sm:$0xff] %v4581
        %4604 = vst [vmem:[#allocation6 + $0xa0] sm:$0xff] %v4582
        %4605 = vst [vmem:[#allocation6 + $0xa8] sm:$0xff] %v4583
        %v4606 = vld [vmem:[#allocation6] ss:$2 sm:$0x1f]
        %s4607 = scalar_lea.vmem [#allocation6], 1
        %v4608 = vld [vmem:[%s4607] ss:$2 sm:$0x1f]
        %v4609 = vmax.f32 %v4606, %v4608
        %s4610 = scalar_lea.vmem [#allocation6], 11
        %v4611 = vld [vmem:[%s4610] ss:$2 sm:$0x1f]
        %v4612 = vmax.f32 %v4609, %v4611
        %s4613 = scalar_lea.vmem [#allocation6], 12
        %v4614 = vld [vmem:[%s4613] ss:$2 sm:$0x1f]
        %v4615 = vmax.f32 %v4612, %v4614
        %4616 = vst [vmem:[#allocation7] sm:$0x1f] %v4615
        %s4617 = scalar_lea.vmem [#allocation6], 22
        %v4618 = vld [vmem:[%s4617] ss:$2 sm:$0x1f]
        %s4619 = scalar_lea.vmem [#allocation6], 23
        %v4620 = vld [vmem:[%s4619] ss:$2 sm:$0x1f]
        %v4621 = vmax.f32 %v4618, %v4620
        %s4622 = scalar_lea.vmem [#allocation6], 33
        %v4623 = vld [vmem:[%s4622] ss:$2 sm:$0x1f]
        %v4624 = vmax.f32 %v4621, %v4623
        %s4625 = scalar_lea.vmem [#allocation6], 34
        %v4626 = vld [vmem:[%s4625] ss:$2 sm:$0x1f]
        %v4627 = vmax.f32 %v4624, %v4626
        %4628 = vst [vmem:[#allocation7 + $0x5] sm:$0x1f] %v4627
        %s4629 = scalar_lea.vmem [#allocation6], 44
        %v4630 = vld [vmem:[%s4629] ss:$2 sm:$0x1f]
        %s4631 = scalar_lea.vmem [#allocation6], 45
        %v4632 = vld [vmem:[%s4631] ss:$2 sm:$0x1f]
        %v4633 = vmax.f32 %v4630, %v4632
        %s4634 = scalar_lea.vmem [#allocation6], 55
        %v4635 = vld [vmem:[%s4634] ss:$2 sm:$0x1f]
        %v4636 = vmax.f32 %v4633, %v4635
        %s4637 = scalar_lea.vmem [#allocation6], 56
        %v4638 = vld [vmem:[%s4637] ss:$2 sm:$0x1f]
        %v4639 = vmax.f32 %v4636, %v4638
        %4640 = vst [vmem:[#allocation7 + $0xa] sm:$0x1f] %v4639
        %s4641 = scalar_lea.vmem [#allocation6], 66
        %v4642 = vld [vmem:[%s4641] ss:$2 sm:$0x1f]
        %s4643 = scalar_lea.vmem [#allocation6], 67
        %v4644 = vld [vmem:[%s4643] ss:$2 sm:$0x1f]
        %v4645 = vmax.f32 %v4642, %v4644
        %s4646 = scalar_lea.vmem [#allocation6], 77
        %v4647 = vld [vmem:[%s4646] ss:$2 sm:$0x1f]
        %v4648 = vmax.f32 %v4645, %v4647
        %s4649 = scalar_lea.vmem [#allocation6], 78
        %v4650 = vld [vmem:[%s4649] ss:$2 sm:$0x1f]
        %v4651 = vmax.f32 %v4648, %v4650
        %4652 = vst [vmem:[#allocation7 + $0xf] sm:$0x1f] %v4651
        %s4653 = scalar_lea.vmem [#allocation6], 88
        %v4654 = vld [vmem:[%s4653] ss:$2 sm:$0x1f]
        %s4655 = scalar_lea.vmem [#allocation6], 89
        %v4656 = vld [vmem:[%s4655] ss:$2 sm:$0x1f]
        %v4657 = vmax.f32 %v4654, %v4656
        %s4658 = scalar_lea.vmem [#allocation6], 99
        %v4659 = vld [vmem:[%s4658] ss:$2 sm:$0x1f]
        %v4660 = vmax.f32 %v4657, %v4659
        %s4661 = scalar_lea.vmem [#allocation6], 100
        %v4662 = vld [vmem:[%s4661] ss:$2 sm:$0x1f]
        %v4663 = vmax.f32 %v4660, %v4662
        %4664 = vst [vmem:[#allocation7 + $0x14] sm:$0x1f] %v4663
        %s4665 = scalar_lea.vmem [#allocation6], 110
        %v4666 = vld [vmem:[%s4665] ss:$2 sm:$0x1f]
        %s4667 = scalar_lea.vmem [#allocation6], 111
        %v4668 = vld [vmem:[%s4667] ss:$2 sm:$0x1f]
        %v4669 = vmax.f32 %v4666, %v4668
        %s4670 = scalar_lea.vmem [#allocation6], 121
        %v4671 = vld [vmem:[%s4670] ss:$2 sm:$0x1f]
        %v4672 = vmax.f32 %v4669, %v4671
        %s4673 = scalar_lea.vmem [#allocation6], 122
        %v4674 = vld [vmem:[%s4673] ss:$2 sm:$0x1f]
        %v4675 = vmax.f32 %v4672, %v4674
        %4676 = vst [vmem:[#allocation7 + $0x19] sm:$0x1f] %v4675
        %s4677 = scalar_lea.vmem [#allocation6], 132
        %v4678 = vld [vmem:[%s4677] ss:$2 sm:$0x1f]
        %s4679 = scalar_lea.vmem [#allocation6], 133
        %v4680 = vld [vmem:[%s4679] ss:$2 sm:$0x1f]
        %v4681 = vmax.f32 %v4678, %v4680
        %s4682 = scalar_lea.vmem [#allocation6], 143
        %v4683 = vld [vmem:[%s4682] ss:$2 sm:$0x1f]
        %v4684 = vmax.f32 %v4681, %v4683
        %s4685 = scalar_lea.vmem [#allocation6], 144
        %v4686 = vld [vmem:[%s4685] ss:$2 sm:$0x1f]
        %v4687 = vmax.f32 %v4684, %v4686
        %4688 = vst [vmem:[#allocation7 + $0x1e] sm:$0x1f] %v4687
        %s4689 = scalar_lea.vmem [#allocation6], 154
        %v4690 = vld [vmem:[%s4689] ss:$2 sm:$0x1f]
        %s4691 = scalar_lea.vmem [#allocation6], 155
        %v4692 = vld [vmem:[%s4691] ss:$2 sm:$0x1f]
        %v4693 = vmax.f32 %v4690, %v4692
        %s4694 = scalar_lea.vmem [#allocation6], 165
        %v4695 = vld [vmem:[%s4694] ss:$2 sm:$0x1f]
        %v4696 = vmax.f32 %v4693, %v4695
        %s4697 = scalar_lea.vmem [#allocation6], 166
        %v4698 = vld [vmem:[%s4697] ss:$2 sm:$0x1f]
        %v4699 = vmax.f32 %v4696, %v4698
        %4700 = vst [vmem:[#allocation7 + $0x23] sm:$0x1f] %v4699
        %v4701 = vld [vmem:[#allocation7] sm:$0x1]
        %v4702 = vld [vmem:[%s7] sm:$0xff]
        %v4703 = vld [vmem:[%s7 + $0x8] sm:$0xff]
        %v4704 = vld [vmem:[%s7 + $0x10] sm:$0xff]
        %v4705 = vld [vmem:[%s7 + $0x18] sm:$0xff]
        %v4706 = vld [vmem:[%s7 + $0x20] sm:$0xff]
        %v4707 = vld [vmem:[%s7 + $0x28] sm:$0xff]
        %v4708 = vld [vmem:[%s7 + $0x30] sm:$0xff]
        %v4709 = vld [vmem:[%s7 + $0x38] sm:$0xff]
        %v4710 = vld [vmem:[%s7 + $0x40] sm:$0xff]
        %v4711 = vld [vmem:[%s7 + $0x48] sm:$0xff]
        %v4712 = vld [vmem:[%s7 + $0x50] sm:$0xff]
        %v4713 = vld [vmem:[%s7 + $0x58] sm:$0xff]
        %v4714 = vld [vmem:[%s7 + $0x60] sm:$0xff]
        %v4715 = vld [vmem:[%s7 + $0x68] sm:$0xff]
        %v4716 = vld [vmem:[%s7 + $0x70] sm:$0xff]
        %v4717 = vld [vmem:[%s7 + $0x78] sm:$0xff]
        %v4718 = vld [vmem:[#allocation7 + $0x1] sm:$0x1]
        %s4719 = scalar_lea.vmem %s7, 128
        %v4720 = vld [vmem:[%s4719] sm:$0xff]
        %v4721 = vld [vmem:[%s4719 + $0x8] sm:$0xff]
        %v4722 = vld [vmem:[%s4719 + $0x10] sm:$0xff]
        %v4723 = vld [vmem:[%s4719 + $0x18] sm:$0xff]
        %v4724 = vld [vmem:[%s4719 + $0x20] sm:$0xff]
        %v4725 = vld [vmem:[%s4719 + $0x28] sm:$0xff]
        %v4726 = vld [vmem:[%s4719 + $0x30] sm:$0xff]
        %v4727 = vld [vmem:[%s4719 + $0x38] sm:$0xff]
        %v4728 = vld [vmem:[%s4719 + $0x40] sm:$0xff]
        %v4729 = vld [vmem:[%s4719 + $0x48] sm:$0xff]
        %v4730 = vld [vmem:[%s4719 + $0x50] sm:$0xff]
        %v4731 = vld [vmem:[%s4719 + $0x58] sm:$0xff]
        %v4732 = vld [vmem:[%s4719 + $0x60] sm:$0xff]
        %v4733 = vld [vmem:[%s4719 + $0x68] sm:$0xff]
        %v4734 = vld [vmem:[%s4719 + $0x70] sm:$0xff]
        %v4735 = vld [vmem:[%s4719 + $0x78] sm:$0xff]
        %4736 = vmatpush.msra.mxu0 %v4735
        %4737 = vmatpush.msra.mxu0 %v4734
        %4738 = vmatpush.msra.mxu0 %v4733
        %4739 = vmatpush.msra.mxu0 %v4732
        %4740 = vmatpush.msra.mxu0 %v4731
        %4741 = vmatpush.msra.mxu0 %v4730
        %4742 = vmatpush.msra.mxu0 %v4729
        %4743 = vmatpush.msra.mxu0 %v4728
        %4744 = vmatpush.msra.mxu0 %v4727
        %4745 = vmatpush.msra.mxu0 %v4726
        %4746 = vmatpush.msra.mxu0 %v4725
        %4747 = vmatpush.msra.mxu0 %v4724
        %4748 = vmatpush.msra.mxu0 %v4723
        %4749 = vmatpush.msra.mxu0 %v4722
        %4750 = vmatpush.msra.mxu0 %v4721
        %4751 = vmatpush.msra.mxu0 %v4720
        %4752 = vmatmul.f32.gmra.mxu0 %v4718
        %v4753 = vpop.f32.mrf.mxu0
        %v4754 = vadd.f32 0.0, %v4753
        %4755 = vdwg.mxu0
        %4756 = vmatpush.msra.mxu0 %v4717
        %4757 = vmatpush.msra.mxu0 %v4716
        %4758 = vmatpush.msra.mxu0 %v4715
        %4759 = vmatpush.msra.mxu0 %v4714
        %4760 = vmatpush.msra.mxu0 %v4713
        %4761 = vmatpush.msra.mxu0 %v4712
        %4762 = vmatpush.msra.mxu0 %v4711
        %4763 = vmatpush.msra.mxu0 %v4710
        %4764 = vmatpush.msra.mxu0 %v4709
        %4765 = vmatpush.msra.mxu0 %v4708
        %4766 = vmatpush.msra.mxu0 %v4707
        %4767 = vmatpush.msra.mxu0 %v4706
        %4768 = vmatpush.msra.mxu0 %v4705
        %4769 = vmatpush.msra.mxu0 %v4704
        %4770 = vmatpush.msra.mxu0 %v4703
        %4771 = vmatpush.msra.mxu0 %v4702
        %4772 = vmatmul.f32.gmra.mxu0 %v4701
        %v4773 = vpop.f32.mrf.mxu0
        %v4774 = vadd.f32 %v4754, %v4773
        %4775 = vdwg.mxu0
        %v4776 = vld [vmem:[#allocation7 + $0x2] sm:$0x1]
        %s4777 = scalar_lea.vmem %s7, 256
        %v4778 = vld [vmem:[%s4777] sm:$0xff]
        %v4779 = vld [vmem:[%s4777 + $0x8] sm:$0xff]
        %v4780 = vld [vmem:[%s4777 + $0x10] sm:$0xff]
        %v4781 = vld [vmem:[%s4777 + $0x18] sm:$0xff]
        %v4782 = vld [vmem:[%s4777 + $0x20] sm:$0xff]
        %v4783 = vld [vmem:[%s4777 + $0x28] sm:$0xff]
        %v4784 = vld [vmem:[%s4777 + $0x30] sm:$0xff]
        %v4785 = vld [vmem:[%s4777 + $0x38] sm:$0xff]
        %v4786 = vld [vmem:[%s4777 + $0x40] sm:$0xff]
        %v4787 = vld [vmem:[%s4777 + $0x48] sm:$0xff]
        %v4788 = vld [vmem:[%s4777 + $0x50] sm:$0xff]
        %v4789 = vld [vmem:[%s4777 + $0x58] sm:$0xff]
        %v4790 = vld [vmem:[%s4777 + $0x60] sm:$0xff]
        %v4791 = vld [vmem:[%s4777 + $0x68] sm:$0xff]
        %v4792 = vld [vmem:[%s4777 + $0x70] sm:$0xff]
        %v4793 = vld [vmem:[%s4777 + $0x78] sm:$0xff]
        %4794 = vmatpush.msra.mxu0 %v4793
        %4795 = vmatpush.msra.mxu0 %v4792
        %4796 = vmatpush.msra.mxu0 %v4791
        %4797 = vmatpush.msra.mxu0 %v4790
        %4798 = vmatpush.msra.mxu0 %v4789
        %4799 = vmatpush.msra.mxu0 %v4788
        %4800 = vmatpush.msra.mxu0 %v4787
        %4801 = vmatpush.msra.mxu0 %v4786
        %4802 = vmatpush.msra.mxu0 %v4785
        %4803 = vmatpush.msra.mxu0 %v4784
        %4804 = vmatpush.msra.mxu0 %v4783
        %4805 = vmatpush.msra.mxu0 %v4782
        %4806 = vmatpush.msra.mxu0 %v4781
        %4807 = vmatpush.msra.mxu0 %v4780
        %4808 = vmatpush.msra.mxu0 %v4779
        %4809 = vmatpush.msra.mxu0 %v4778
        %4810 = vmatmul.f32.gmra.mxu0 %v4776
        %v4811 = vpop.f32.mrf.mxu0
        %v4812 = vadd.f32 0.0, %v4811
        %4813 = vdwg.mxu0
        %v4814 = vadd.f32 %v4774, %v4812
        %v4815 = vld [vmem:[#allocation7 + $0x3] sm:$0x1]
        %s4816 = scalar_lea.vmem %s7, 384
        %v4817 = vld [vmem:[%s4816] sm:$0xff]
        %v4818 = vld [vmem:[%s4816 + $0x8] sm:$0xff]
        %v4819 = vld [vmem:[%s4816 + $0x10] sm:$0xff]
        %v4820 = vld [vmem:[%s4816 + $0x18] sm:$0xff]
        %v4821 = vld [vmem:[%s4816 + $0x20] sm:$0xff]
        %v4822 = vld [vmem:[%s4816 + $0x28] sm:$0xff]
        %v4823 = vld [vmem:[%s4816 + $0x30] sm:$0xff]
        %v4824 = vld [vmem:[%s4816 + $0x38] sm:$0xff]
        %v4825 = vld [vmem:[%s4816 + $0x40] sm:$0xff]
        %v4826 = vld [vmem:[%s4816 + $0x48] sm:$0xff]
        %v4827 = vld [vmem:[%s4816 + $0x50] sm:$0xff]
        %v4828 = vld [vmem:[%s4816 + $0x58] sm:$0xff]
        %v4829 = vld [vmem:[%s4816 + $0x60] sm:$0xff]
        %v4830 = vld [vmem:[%s4816 + $0x68] sm:$0xff]
        %v4831 = vld [vmem:[%s4816 + $0x70] sm:$0xff]
        %v4832 = vld [vmem:[%s4816 + $0x78] sm:$0xff]
        %4833 = vmatpush.msra.mxu0 %v4832
        %4834 = vmatpush.msra.mxu0 %v4831
        %4835 = vmatpush.msra.mxu0 %v4830
        %4836 = vmatpush.msra.mxu0 %v4829
        %4837 = vmatpush.msra.mxu0 %v4828
        %4838 = vmatpush.msra.mxu0 %v4827
        %4839 = vmatpush.msra.mxu0 %v4826
        %4840 = vmatpush.msra.mxu0 %v4825
        %4841 = vmatpush.msra.mxu0 %v4824
        %4842 = vmatpush.msra.mxu0 %v4823
        %4843 = vmatpush.msra.mxu0 %v4822
        %4844 = vmatpush.msra.mxu0 %v4821
        %4845 = vmatpush.msra.mxu0 %v4820
        %4846 = vmatpush.msra.mxu0 %v4819
        %4847 = vmatpush.msra.mxu0 %v4818
        %4848 = vmatpush.msra.mxu0 %v4817
        %4849 = vmatmul.f32.gmra.mxu0 %v4815
        %v4850 = vpop.f32.mrf.mxu0
        %v4851 = vadd.f32 0.0, %v4850
        %4852 = vdwg.mxu0
        %v4853 = vadd.f32 %v4814, %v4851
        %v4854 = vld [vmem:[#allocation7 + $0x4] sm:$0x1]
        %s4855 = scalar_lea.vmem %s7, 512
        %v4856 = vld [vmem:[%s4855] sm:$0xff]
        %v4857 = vld [vmem:[%s4855 + $0x8] sm:$0xff]
        %v4858 = vld [vmem:[%s4855 + $0x10] sm:$0xff]
        %v4859 = vld [vmem:[%s4855 + $0x18] sm:$0xff]
        %v4860 = vld [vmem:[%s4855 + $0x20] sm:$0xff]
        %v4861 = vld [vmem:[%s4855 + $0x28] sm:$0xff]
        %v4862 = vld [vmem:[%s4855 + $0x30] sm:$0xff]
        %v4863 = vld [vmem:[%s4855 + $0x38] sm:$0xff]
        %v4864 = vld [vmem:[%s4855 + $0x40] sm:$0xff]
        %v4865 = vld [vmem:[%s4855 + $0x48] sm:$0xff]
        %v4866 = vld [vmem:[%s4855 + $0x50] sm:$0xff]
        %v4867 = vld [vmem:[%s4855 + $0x58] sm:$0xff]
        %v4868 = vld [vmem:[%s4855 + $0x60] sm:$0xff]
        %v4869 = vld [vmem:[%s4855 + $0x68] sm:$0xff]
        %v4870 = vld [vmem:[%s4855 + $0x70] sm:$0xff]
        %v4871 = vld [vmem:[%s4855 + $0x78] sm:$0xff]
        %4872 = vmatpush.msra.mxu0 %v4871
        %4873 = vmatpush.msra.mxu0 %v4870
        %4874 = vmatpush.msra.mxu0 %v4869
        %4875 = vmatpush.msra.mxu0 %v4868
        %4876 = vmatpush.msra.mxu0 %v4867
        %4877 = vmatpush.msra.mxu0 %v4866
        %4878 = vmatpush.msra.mxu0 %v4865
        %4879 = vmatpush.msra.mxu0 %v4864
        %4880 = vmatpush.msra.mxu0 %v4863
        %4881 = vmatpush.msra.mxu0 %v4862
        %4882 = vmatpush.msra.mxu0 %v4861
        %4883 = vmatpush.msra.mxu0 %v4860
        %4884 = vmatpush.msra.mxu0 %v4859
        %4885 = vmatpush.msra.mxu0 %v4858
        %4886 = vmatpush.msra.mxu0 %v4857
        %4887 = vmatpush.msra.mxu0 %v4856
        %4888 = vmatmul.f32.gmra.mxu0 %v4854
        %v4889 = vpop.f32.mrf.mxu0
        %v4890 = vadd.f32 0.0, %v4889
        %4891 = vdwg.mxu0
        %v4892 = vadd.f32 %v4853, %v4890
        %v4893 = vld [vmem:[#allocation7 + $0x5] sm:$0x1]
        %s4894 = scalar_lea.vmem %s7, 640
        %v4895 = vld [vmem:[%s4894] sm:$0xff]
        %v4896 = vld [vmem:[%s4894 + $0x8] sm:$0xff]
        %v4897 = vld [vmem:[%s4894 + $0x10] sm:$0xff]
        %v4898 = vld [vmem:[%s4894 + $0x18] sm:$0xff]
        %v4899 = vld [vmem:[%s4894 + $0x20] sm:$0xff]
        %v4900 = vld [vmem:[%s4894 + $0x28] sm:$0xff]
        %v4901 = vld [vmem:[%s4894 + $0x30] sm:$0xff]
        %v4902 = vld [vmem:[%s4894 + $0x38] sm:$0xff]
        %v4903 = vld [vmem:[%s4894 + $0x40] sm:$0xff]
        %v4904 = vld [vmem:[%s4894 + $0x48] sm:$0xff]
        %v4905 = vld [vmem:[%s4894 + $0x50] sm:$0xff]
        %v4906 = vld [vmem:[%s4894 + $0x58] sm:$0xff]
        %v4907 = vld [vmem:[%s4894 + $0x60] sm:$0xff]
        %v4908 = vld [vmem:[%s4894 + $0x68] sm:$0xff]
        %v4909 = vld [vmem:[%s4894 + $0x70] sm:$0xff]
        %v4910 = vld [vmem:[%s4894 + $0x78] sm:$0xff]
        %4911 = vmatpush.msra.mxu0 %v4910
        %4912 = vmatpush.msra.mxu0 %v4909
        %4913 = vmatpush.msra.mxu0 %v4908
        %4914 = vmatpush.msra.mxu0 %v4907
        %4915 = vmatpush.msra.mxu0 %v4906
        %4916 = vmatpush.msra.mxu0 %v4905
        %4917 = vmatpush.msra.mxu0 %v4904
        %4918 = vmatpush.msra.mxu0 %v4903
        %4919 = vmatpush.msra.mxu0 %v4902
        %4920 = vmatpush.msra.mxu0 %v4901
        %4921 = vmatpush.msra.mxu0 %v4900
        %4922 = vmatpush.msra.mxu0 %v4899
        %4923 = vmatpush.msra.mxu0 %v4898
        %4924 = vmatpush.msra.mxu0 %v4897
        %4925 = vmatpush.msra.mxu0 %v4896
        %4926 = vmatpush.msra.mxu0 %v4895
        %4927 = vmatmul.f32.gmra.mxu0 %v4893
        %v4928 = vpop.f32.mrf.mxu0
        %v4929 = vadd.f32 0.0, %v4928
        %4930 = vdwg.mxu0
        %v4931 = vadd.f32 %v4892, %v4929
        %v4932 = vld [vmem:[#allocation7 + $0x6] sm:$0x1]
        %s4933 = scalar_lea.vmem %s7, 768
        %v4934 = vld [vmem:[%s4933] sm:$0xff]
        %v4935 = vld [vmem:[%s4933 + $0x8] sm:$0xff]
        %v4936 = vld [vmem:[%s4933 + $0x10] sm:$0xff]
        %v4937 = vld [vmem:[%s4933 + $0x18] sm:$0xff]
        %v4938 = vld [vmem:[%s4933 + $0x20] sm:$0xff]
        %v4939 = vld [vmem:[%s4933 + $0x28] sm:$0xff]
        %v4940 = vld [vmem:[%s4933 + $0x30] sm:$0xff]
        %v4941 = vld [vmem:[%s4933 + $0x38] sm:$0xff]
        %v4942 = vld [vmem:[%s4933 + $0x40] sm:$0xff]
        %v4943 = vld [vmem:[%s4933 + $0x48] sm:$0xff]
        %v4944 = vld [vmem:[%s4933 + $0x50] sm:$0xff]
        %v4945 = vld [vmem:[%s4933 + $0x58] sm:$0xff]
        %v4946 = vld [vmem:[%s4933 + $0x60] sm:$0xff]
        %v4947 = vld [vmem:[%s4933 + $0x68] sm:$0xff]
        %v4948 = vld [vmem:[%s4933 + $0x70] sm:$0xff]
        %v4949 = vld [vmem:[%s4933 + $0x78] sm:$0xff]
        %4950 = vmatpush.msra.mxu0 %v4949
        %4951 = vmatpush.msra.mxu0 %v4948
        %4952 = vmatpush.msra.mxu0 %v4947
        %4953 = vmatpush.msra.mxu0 %v4946
        %4954 = vmatpush.msra.mxu0 %v4945
        %4955 = vmatpush.msra.mxu0 %v4944
        %4956 = vmatpush.msra.mxu0 %v4943
        %4957 = vmatpush.msra.mxu0 %v4942
        %4958 = vmatpush.msra.mxu0 %v4941
        %4959 = vmatpush.msra.mxu0 %v4940
        %4960 = vmatpush.msra.mxu0 %v4939
        %4961 = vmatpush.msra.mxu0 %v4938
        %4962 = vmatpush.msra.mxu0 %v4937
        %4963 = vmatpush.msra.mxu0 %v4936
        %4964 = vmatpush.msra.mxu0 %v4935
        %4965 = vmatpush.msra.mxu0 %v4934
        %4966 = vmatmul.f32.gmra.mxu0 %v4932
        %v4967 = vpop.f32.mrf.mxu0
        %v4968 = vadd.f32 0.0, %v4967
        %4969 = vdwg.mxu0
        %v4970 = vadd.f32 %v4931, %v4968
        %v4971 = vld [vmem:[#allocation7 + $0x7] sm:$0x1]
        %s4972 = scalar_lea.vmem %s7, 896
        %v4973 = vld [vmem:[%s4972] sm:$0xff]
        %v4974 = vld [vmem:[%s4972 + $0x8] sm:$0xff]
        %v4975 = vld [vmem:[%s4972 + $0x10] sm:$0xff]
        %v4976 = vld [vmem:[%s4972 + $0x18] sm:$0xff]
        %v4977 = vld [vmem:[%s4972 + $0x20] sm:$0xff]
        %v4978 = vld [vmem:[%s4972 + $0x28] sm:$0xff]
        %v4979 = vld [vmem:[%s4972 + $0x30] sm:$0xff]
        %v4980 = vld [vmem:[%s4972 + $0x38] sm:$0xff]
        %v4981 = vld [vmem:[%s4972 + $0x40] sm:$0xff]
        %v4982 = vld [vmem:[%s4972 + $0x48] sm:$0xff]
        %v4983 = vld [vmem:[%s4972 + $0x50] sm:$0xff]
        %v4984 = vld [vmem:[%s4972 + $0x58] sm:$0xff]
        %v4985 = vld [vmem:[%s4972 + $0x60] sm:$0xff]
        %v4986 = vld [vmem:[%s4972 + $0x68] sm:$0xff]
        %v4987 = vld [vmem:[%s4972 + $0x70] sm:$0xff]
        %v4988 = vld [vmem:[%s4972 + $0x78] sm:$0xff]
        %4989 = vmatpush.msra.mxu0 %v4988
        %4990 = vmatpush.msra.mxu0 %v4987
        %4991 = vmatpush.msra.mxu0 %v4986
        %4992 = vmatpush.msra.mxu0 %v4985
        %4993 = vmatpush.msra.mxu0 %v4984
        %4994 = vmatpush.msra.mxu0 %v4983
        %4995 = vmatpush.msra.mxu0 %v4982
        %4996 = vmatpush.msra.mxu0 %v4981
        %4997 = vmatpush.msra.mxu0 %v4980
        %4998 = vmatpush.msra.mxu0 %v4979
        %4999 = vmatpush.msra.mxu0 %v4978
        %5000 = vmatpush.msra.mxu0 %v4977
        %5001 = vmatpush.msra.mxu0 %v4976
        %5002 = vmatpush.msra.mxu0 %v4975
        %5003 = vmatpush.msra.mxu0 %v4974
        %5004 = vmatpush.msra.mxu0 %v4973
        %5005 = vmatmul.f32.gmra.mxu0 %v4971
        %v5006 = vpop.f32.mrf.mxu0
        %v5007 = vadd.f32 0.0, %v5006
        %5008 = vdwg.mxu0
        %v5009 = vadd.f32 %v4970, %v5007
        %v5010 = vld [vmem:[#allocation7 + $0x8] sm:$0x1]
        %s5011 = scalar_lea.vmem %s7, 1024
        %v5012 = vld [vmem:[%s5011] sm:$0xff]
        %v5013 = vld [vmem:[%s5011 + $0x8] sm:$0xff]
        %v5014 = vld [vmem:[%s5011 + $0x10] sm:$0xff]
        %v5015 = vld [vmem:[%s5011 + $0x18] sm:$0xff]
        %v5016 = vld [vmem:[%s5011 + $0x20] sm:$0xff]
        %v5017 = vld [vmem:[%s5011 + $0x28] sm:$0xff]
        %v5018 = vld [vmem:[%s5011 + $0x30] sm:$0xff]
        %v5019 = vld [vmem:[%s5011 + $0x38] sm:$0xff]
        %v5020 = vld [vmem:[%s5011 + $0x40] sm:$0xff]
        %v5021 = vld [vmem:[%s5011 + $0x48] sm:$0xff]
        %v5022 = vld [vmem:[%s5011 + $0x50] sm:$0xff]
        %v5023 = vld [vmem:[%s5011 + $0x58] sm:$0xff]
        %v5024 = vld [vmem:[%s5011 + $0x60] sm:$0xff]
        %v5025 = vld [vmem:[%s5011 + $0x68] sm:$0xff]
        %v5026 = vld [vmem:[%s5011 + $0x70] sm:$0xff]
        %v5027 = vld [vmem:[%s5011 + $0x78] sm:$0xff]
        %5028 = vmatpush.msra.mxu0 %v5027
        %5029 = vmatpush.msra.mxu0 %v5026
        %5030 = vmatpush.msra.mxu0 %v5025
        %5031 = vmatpush.msra.mxu0 %v5024
        %5032 = vmatpush.msra.mxu0 %v5023
        %5033 = vmatpush.msra.mxu0 %v5022
        %5034 = vmatpush.msra.mxu0 %v5021
        %5035 = vmatpush.msra.mxu0 %v5020
        %5036 = vmatpush.msra.mxu0 %v5019
        %5037 = vmatpush.msra.mxu0 %v5018
        %5038 = vmatpush.msra.mxu0 %v5017
        %5039 = vmatpush.msra.mxu0 %v5016
        %5040 = vmatpush.msra.mxu0 %v5015
        %5041 = vmatpush.msra.mxu0 %v5014
        %5042 = vmatpush.msra.mxu0 %v5013
        %5043 = vmatpush.msra.mxu0 %v5012
        %5044 = vmatmul.f32.gmra.mxu0 %v5010
        %v5045 = vpop.f32.mrf.mxu0
        %v5046 = vadd.f32 0.0, %v5045
        %5047 = vdwg.mxu0
        %v5048 = vadd.f32 %v5009, %v5046
        %v5049 = vld [vmem:[#allocation7 + $0x9] sm:$0x1]
        %s5050 = scalar_lea.vmem %s7, 1152
        %v5051 = vld [vmem:[%s5050] sm:$0xff]
        %v5052 = vld [vmem:[%s5050 + $0x8] sm:$0xff]
        %v5053 = vld [vmem:[%s5050 + $0x10] sm:$0xff]
        %v5054 = vld [vmem:[%s5050 + $0x18] sm:$0xff]
        %v5055 = vld [vmem:[%s5050 + $0x20] sm:$0xff]
        %v5056 = vld [vmem:[%s5050 + $0x28] sm:$0xff]
        %v5057 = vld [vmem:[%s5050 + $0x30] sm:$0xff]
        %v5058 = vld [vmem:[%s5050 + $0x38] sm:$0xff]
        %v5059 = vld [vmem:[%s5050 + $0x40] sm:$0xff]
        %v5060 = vld [vmem:[%s5050 + $0x48] sm:$0xff]
        %v5061 = vld [vmem:[%s5050 + $0x50] sm:$0xff]
        %v5062 = vld [vmem:[%s5050 + $0x58] sm:$0xff]
        %v5063 = vld [vmem:[%s5050 + $0x60] sm:$0xff]
        %v5064 = vld [vmem:[%s5050 + $0x68] sm:$0xff]
        %v5065 = vld [vmem:[%s5050 + $0x70] sm:$0xff]
        %v5066 = vld [vmem:[%s5050 + $0x78] sm:$0xff]
        %5067 = vmatpush.msra.mxu0 %v5066
        %5068 = vmatpush.msra.mxu0 %v5065
        %5069 = vmatpush.msra.mxu0 %v5064
        %5070 = vmatpush.msra.mxu0 %v5063
        %5071 = vmatpush.msra.mxu0 %v5062
        %5072 = vmatpush.msra.mxu0 %v5061
        %5073 = vmatpush.msra.mxu0 %v5060
        %5074 = vmatpush.msra.mxu0 %v5059
        %5075 = vmatpush.msra.mxu0 %v5058
        %5076 = vmatpush.msra.mxu0 %v5057
        %5077 = vmatpush.msra.mxu0 %v5056
        %5078 = vmatpush.msra.mxu0 %v5055
        %5079 = vmatpush.msra.mxu0 %v5054
        %5080 = vmatpush.msra.mxu0 %v5053
        %5081 = vmatpush.msra.mxu0 %v5052
        %5082 = vmatpush.msra.mxu0 %v5051
        %5083 = vmatmul.f32.gmra.mxu0 %v5049
        %v5084 = vpop.f32.mrf.mxu0
        %v5085 = vadd.f32 0.0, %v5084
        %5086 = vdwg.mxu0
        %v5087 = vadd.f32 %v5048, %v5085
        %v5088 = vld [vmem:[#allocation7 + $0xa] sm:$0x1]
        %s5089 = scalar_lea.vmem %s7, 1280
        %v5090 = vld [vmem:[%s5089] sm:$0xff]
        %v5091 = vld [vmem:[%s5089 + $0x8] sm:$0xff]
        %v5092 = vld [vmem:[%s5089 + $0x10] sm:$0xff]
        %v5093 = vld [vmem:[%s5089 + $0x18] sm:$0xff]
        %v5094 = vld [vmem:[%s5089 + $0x20] sm:$0xff]
        %v5095 = vld [vmem:[%s5089 + $0x28] sm:$0xff]
        %v5096 = vld [vmem:[%s5089 + $0x30] sm:$0xff]
        %v5097 = vld [vmem:[%s5089 + $0x38] sm:$0xff]
        %v5098 = vld [vmem:[%s5089 + $0x40] sm:$0xff]
        %v5099 = vld [vmem:[%s5089 + $0x48] sm:$0xff]
        %v5100 = vld [vmem:[%s5089 + $0x50] sm:$0xff]
        %v5101 = vld [vmem:[%s5089 + $0x58] sm:$0xff]
        %v5102 = vld [vmem:[%s5089 + $0x60] sm:$0xff]
        %v5103 = vld [vmem:[%s5089 + $0x68] sm:$0xff]
        %v5104 = vld [vmem:[%s5089 + $0x70] sm:$0xff]
        %v5105 = vld [vmem:[%s5089 + $0x78] sm:$0xff]
        %5106 = vmatpush.msra.mxu0 %v5105
        %5107 = vmatpush.msra.mxu0 %v5104
        %5108 = vmatpush.msra.mxu0 %v5103
        %5109 = vmatpush.msra.mxu0 %v5102
        %5110 = vmatpush.msra.mxu0 %v5101
        %5111 = vmatpush.msra.mxu0 %v5100
        %5112 = vmatpush.msra.mxu0 %v5099
        %5113 = vmatpush.msra.mxu0 %v5098
        %5114 = vmatpush.msra.mxu0 %v5097
        %5115 = vmatpush.msra.mxu0 %v5096
        %5116 = vmatpush.msra.mxu0 %v5095
        %5117 = vmatpush.msra.mxu0 %v5094
        %5118 = vmatpush.msra.mxu0 %v5093
        %5119 = vmatpush.msra.mxu0 %v5092
        %5120 = vmatpush.msra.mxu0 %v5091
        %5121 = vmatpush.msra.mxu0 %v5090
        %5122 = vmatmul.f32.gmra.mxu0 %v5088
        %v5123 = vpop.f32.mrf.mxu0
        %v5124 = vadd.f32 0.0, %v5123
        %5125 = vdwg.mxu0
        %v5126 = vadd.f32 %v5087, %v5124
        %v5127 = vld [vmem:[#allocation7 + $0xb] sm:$0x1]
        %s5128 = scalar_lea.vmem %s7, 1408
        %v5129 = vld [vmem:[%s5128] sm:$0xff]
        %v5130 = vld [vmem:[%s5128 + $0x8] sm:$0xff]
        %v5131 = vld [vmem:[%s5128 + $0x10] sm:$0xff]
        %v5132 = vld [vmem:[%s5128 + $0x18] sm:$0xff]
        %v5133 = vld [vmem:[%s5128 + $0x20] sm:$0xff]
        %v5134 = vld [vmem:[%s5128 + $0x28] sm:$0xff]
        %v5135 = vld [vmem:[%s5128 + $0x30] sm:$0xff]
        %v5136 = vld [vmem:[%s5128 + $0x38] sm:$0xff]
        %v5137 = vld [vmem:[%s5128 + $0x40] sm:$0xff]
        %v5138 = vld [vmem:[%s5128 + $0x48] sm:$0xff]
        %v5139 = vld [vmem:[%s5128 + $0x50] sm:$0xff]
        %v5140 = vld [vmem:[%s5128 + $0x58] sm:$0xff]
        %v5141 = vld [vmem:[%s5128 + $0x60] sm:$0xff]
        %v5142 = vld [vmem:[%s5128 + $0x68] sm:$0xff]
        %v5143 = vld [vmem:[%s5128 + $0x70] sm:$0xff]
        %v5144 = vld [vmem:[%s5128 + $0x78] sm:$0xff]
        %5145 = vmatpush.msra.mxu0 %v5144
        %5146 = vmatpush.msra.mxu0 %v5143
        %5147 = vmatpush.msra.mxu0 %v5142
        %5148 = vmatpush.msra.mxu0 %v5141
        %5149 = vmatpush.msra.mxu0 %v5140
        %5150 = vmatpush.msra.mxu0 %v5139
        %5151 = vmatpush.msra.mxu0 %v5138
        %5152 = vmatpush.msra.mxu0 %v5137
        %5153 = vmatpush.msra.mxu0 %v5136
        %5154 = vmatpush.msra.mxu0 %v5135
        %5155 = vmatpush.msra.mxu0 %v5134
        %5156 = vmatpush.msra.mxu0 %v5133
        %5157 = vmatpush.msra.mxu0 %v5132
        %5158 = vmatpush.msra.mxu0 %v5131
        %5159 = vmatpush.msra.mxu0 %v5130
        %5160 = vmatpush.msra.mxu0 %v5129
        %5161 = vmatmul.f32.gmra.mxu0 %v5127
        %v5162 = vpop.f32.mrf.mxu0
        %v5163 = vadd.f32 0.0, %v5162
        %5164 = vdwg.mxu0
        %v5165 = vadd.f32 %v5126, %v5163
        %v5166 = vld [vmem:[#allocation7 + $0xc] sm:$0x1]
        %s5167 = scalar_lea.vmem %s7, 1536
        %v5168 = vld [vmem:[%s5167] sm:$0xff]
        %v5169 = vld [vmem:[%s5167 + $0x8] sm:$0xff]
        %v5170 = vld [vmem:[%s5167 + $0x10] sm:$0xff]
        %v5171 = vld [vmem:[%s5167 + $0x18] sm:$0xff]
        %v5172 = vld [vmem:[%s5167 + $0x20] sm:$0xff]
        %v5173 = vld [vmem:[%s5167 + $0x28] sm:$0xff]
        %v5174 = vld [vmem:[%s5167 + $0x30] sm:$0xff]
        %v5175 = vld [vmem:[%s5167 + $0x38] sm:$0xff]
        %v5176 = vld [vmem:[%s5167 + $0x40] sm:$0xff]
        %v5177 = vld [vmem:[%s5167 + $0x48] sm:$0xff]
        %v5178 = vld [vmem:[%s5167 + $0x50] sm:$0xff]
        %v5179 = vld [vmem:[%s5167 + $0x58] sm:$0xff]
        %v5180 = vld [vmem:[%s5167 + $0x60] sm:$0xff]
        %v5181 = vld [vmem:[%s5167 + $0x68] sm:$0xff]
        %v5182 = vld [vmem:[%s5167 + $0x70] sm:$0xff]
        %v5183 = vld [vmem:[%s5167 + $0x78] sm:$0xff]
        %5184 = vmatpush.msra.mxu0 %v5183
        %5185 = vmatpush.msra.mxu0 %v5182
        %5186 = vmatpush.msra.mxu0 %v5181
        %5187 = vmatpush.msra.mxu0 %v5180
        %5188 = vmatpush.msra.mxu0 %v5179
        %5189 = vmatpush.msra.mxu0 %v5178
        %5190 = vmatpush.msra.mxu0 %v5177
        %5191 = vmatpush.msra.mxu0 %v5176
        %5192 = vmatpush.msra.mxu0 %v5175
        %5193 = vmatpush.msra.mxu0 %v5174
        %5194 = vmatpush.msra.mxu0 %v5173
        %5195 = vmatpush.msra.mxu0 %v5172
        %5196 = vmatpush.msra.mxu0 %v5171
        %5197 = vmatpush.msra.mxu0 %v5170
        %5198 = vmatpush.msra.mxu0 %v5169
        %5199 = vmatpush.msra.mxu0 %v5168
        %5200 = vmatmul.f32.gmra.mxu0 %v5166
        %v5201 = vpop.f32.mrf.mxu0
        %v5202 = vadd.f32 0.0, %v5201
        %5203 = vdwg.mxu0
        %v5204 = vadd.f32 %v5165, %v5202
        %v5205 = vld [vmem:[#allocation7 + $0xd] sm:$0x1]
        %s5206 = scalar_lea.vmem %s7, 1664
        %v5207 = vld [vmem:[%s5206] sm:$0xff]
        %v5208 = vld [vmem:[%s5206 + $0x8] sm:$0xff]
        %v5209 = vld [vmem:[%s5206 + $0x10] sm:$0xff]
        %v5210 = vld [vmem:[%s5206 + $0x18] sm:$0xff]
        %v5211 = vld [vmem:[%s5206 + $0x20] sm:$0xff]
        %v5212 = vld [vmem:[%s5206 + $0x28] sm:$0xff]
        %v5213 = vld [vmem:[%s5206 + $0x30] sm:$0xff]
        %v5214 = vld [vmem:[%s5206 + $0x38] sm:$0xff]
        %v5215 = vld [vmem:[%s5206 + $0x40] sm:$0xff]
        %v5216 = vld [vmem:[%s5206 + $0x48] sm:$0xff]
        %v5217 = vld [vmem:[%s5206 + $0x50] sm:$0xff]
        %v5218 = vld [vmem:[%s5206 + $0x58] sm:$0xff]
        %v5219 = vld [vmem:[%s5206 + $0x60] sm:$0xff]
        %v5220 = vld [vmem:[%s5206 + $0x68] sm:$0xff]
        %v5221 = vld [vmem:[%s5206 + $0x70] sm:$0xff]
        %v5222 = vld [vmem:[%s5206 + $0x78] sm:$0xff]
        %5223 = vmatpush.msra.mxu0 %v5222
        %5224 = vmatpush.msra.mxu0 %v5221
        %5225 = vmatpush.msra.mxu0 %v5220
        %5226 = vmatpush.msra.mxu0 %v5219
        %5227 = vmatpush.msra.mxu0 %v5218
        %5228 = vmatpush.msra.mxu0 %v5217
        %5229 = vmatpush.msra.mxu0 %v5216
        %5230 = vmatpush.msra.mxu0 %v5215
        %5231 = vmatpush.msra.mxu0 %v5214
        %5232 = vmatpush.msra.mxu0 %v5213
        %5233 = vmatpush.msra.mxu0 %v5212
        %5234 = vmatpush.msra.mxu0 %v5211
        %5235 = vmatpush.msra.mxu0 %v5210
        %5236 = vmatpush.msra.mxu0 %v5209
        %5237 = vmatpush.msra.mxu0 %v5208
        %5238 = vmatpush.msra.mxu0 %v5207
        %5239 = vmatmul.f32.gmra.mxu0 %v5205
        %v5240 = vpop.f32.mrf.mxu0
        %v5241 = vadd.f32 0.0, %v5240
        %5242 = vdwg.mxu0
        %v5243 = vadd.f32 %v5204, %v5241
        %v5244 = vld [vmem:[#allocation7 + $0xe] sm:$0x1]
        %s5245 = scalar_lea.vmem %s7, 1792
        %v5246 = vld [vmem:[%s5245] sm:$0xff]
        %v5247 = vld [vmem:[%s5245 + $0x8] sm:$0xff]
        %v5248 = vld [vmem:[%s5245 + $0x10] sm:$0xff]
        %v5249 = vld [vmem:[%s5245 + $0x18] sm:$0xff]
        %v5250 = vld [vmem:[%s5245 + $0x20] sm:$0xff]
        %v5251 = vld [vmem:[%s5245 + $0x28] sm:$0xff]
        %v5252 = vld [vmem:[%s5245 + $0x30] sm:$0xff]
        %v5253 = vld [vmem:[%s5245 + $0x38] sm:$0xff]
        %v5254 = vld [vmem:[%s5245 + $0x40] sm:$0xff]
        %v5255 = vld [vmem:[%s5245 + $0x48] sm:$0xff]
        %v5256 = vld [vmem:[%s5245 + $0x50] sm:$0xff]
        %v5257 = vld [vmem:[%s5245 + $0x58] sm:$0xff]
        %v5258 = vld [vmem:[%s5245 + $0x60] sm:$0xff]
        %v5259 = vld [vmem:[%s5245 + $0x68] sm:$0xff]
        %v5260 = vld [vmem:[%s5245 + $0x70] sm:$0xff]
        %v5261 = vld [vmem:[%s5245 + $0x78] sm:$0xff]
        %5262 = vmatpush.msra.mxu0 %v5261
        %5263 = vmatpush.msra.mxu0 %v5260
        %5264 = vmatpush.msra.mxu0 %v5259
        %5265 = vmatpush.msra.mxu0 %v5258
        %5266 = vmatpush.msra.mxu0 %v5257
        %5267 = vmatpush.msra.mxu0 %v5256
        %5268 = vmatpush.msra.mxu0 %v5255
        %5269 = vmatpush.msra.mxu0 %v5254
        %5270 = vmatpush.msra.mxu0 %v5253
        %5271 = vmatpush.msra.mxu0 %v5252
        %5272 = vmatpush.msra.mxu0 %v5251
        %5273 = vmatpush.msra.mxu0 %v5250
        %5274 = vmatpush.msra.mxu0 %v5249
        %5275 = vmatpush.msra.mxu0 %v5248
        %5276 = vmatpush.msra.mxu0 %v5247
        %5277 = vmatpush.msra.mxu0 %v5246
        %5278 = vmatmul.f32.gmra.mxu0 %v5244
        %v5279 = vpop.f32.mrf.mxu0
        %v5280 = vadd.f32 0.0, %v5279
        %5281 = vdwg.mxu0
        %v5282 = vadd.f32 %v5243, %v5280
        %v5283 = vld [vmem:[#allocation7 + $0xf] sm:$0x1]
        %s5284 = scalar_lea.vmem %s7, 1920
        %v5285 = vld [vmem:[%s5284] sm:$0xff]
        %v5286 = vld [vmem:[%s5284 + $0x8] sm:$0xff]
        %v5287 = vld [vmem:[%s5284 + $0x10] sm:$0xff]
        %v5288 = vld [vmem:[%s5284 + $0x18] sm:$0xff]
        %v5289 = vld [vmem:[%s5284 + $0x20] sm:$0xff]
        %v5290 = vld [vmem:[%s5284 + $0x28] sm:$0xff]
        %v5291 = vld [vmem:[%s5284 + $0x30] sm:$0xff]
        %v5292 = vld [vmem:[%s5284 + $0x38] sm:$0xff]
        %v5293 = vld [vmem:[%s5284 + $0x40] sm:$0xff]
        %v5294 = vld [vmem:[%s5284 + $0x48] sm:$0xff]
        %v5295 = vld [vmem:[%s5284 + $0x50] sm:$0xff]
        %v5296 = vld [vmem:[%s5284 + $0x58] sm:$0xff]
        %v5297 = vld [vmem:[%s5284 + $0x60] sm:$0xff]
        %v5298 = vld [vmem:[%s5284 + $0x68] sm:$0xff]
        %v5299 = vld [vmem:[%s5284 + $0x70] sm:$0xff]
        %v5300 = vld [vmem:[%s5284 + $0x78] sm:$0xff]
        %5301 = vmatpush.msra.mxu0 %v5300
        %5302 = vmatpush.msra.mxu0 %v5299
        %5303 = vmatpush.msra.mxu0 %v5298
        %5304 = vmatpush.msra.mxu0 %v5297
        %5305 = vmatpush.msra.mxu0 %v5296
        %5306 = vmatpush.msra.mxu0 %v5295
        %5307 = vmatpush.msra.mxu0 %v5294
        %5308 = vmatpush.msra.mxu0 %v5293
        %5309 = vmatpush.msra.mxu0 %v5292
        %5310 = vmatpush.msra.mxu0 %v5291
        %5311 = vmatpush.msra.mxu0 %v5290
        %5312 = vmatpush.msra.mxu0 %v5289
        %5313 = vmatpush.msra.mxu0 %v5288
        %5314 = vmatpush.msra.mxu0 %v5287
        %5315 = vmatpush.msra.mxu0 %v5286
        %5316 = vmatpush.msra.mxu0 %v5285
        %5317 = vmatmul.f32.gmra.mxu0 %v5283
        %v5318 = vpop.f32.mrf.mxu0
        %v5319 = vadd.f32 0.0, %v5318
        %5320 = vdwg.mxu0
        %v5321 = vadd.f32 %v5282, %v5319
        %v5322 = vld [vmem:[#allocation7 + $0x10] sm:$0x1]
        %s5323 = scalar_lea.vmem %s7, 2048
        %v5324 = vld [vmem:[%s5323] sm:$0xff]
        %v5325 = vld [vmem:[%s5323 + $0x8] sm:$0xff]
        %v5326 = vld [vmem:[%s5323 + $0x10] sm:$0xff]
        %v5327 = vld [vmem:[%s5323 + $0x18] sm:$0xff]
        %v5328 = vld [vmem:[%s5323 + $0x20] sm:$0xff]
        %v5329 = vld [vmem:[%s5323 + $0x28] sm:$0xff]
        %v5330 = vld [vmem:[%s5323 + $0x30] sm:$0xff]
        %v5331 = vld [vmem:[%s5323 + $0x38] sm:$0xff]
        %v5332 = vld [vmem:[%s5323 + $0x40] sm:$0xff]
        %v5333 = vld [vmem:[%s5323 + $0x48] sm:$0xff]
        %v5334 = vld [vmem:[%s5323 + $0x50] sm:$0xff]
        %v5335 = vld [vmem:[%s5323 + $0x58] sm:$0xff]
        %v5336 = vld [vmem:[%s5323 + $0x60] sm:$0xff]
        %v5337 = vld [vmem:[%s5323 + $0x68] sm:$0xff]
        %v5338 = vld [vmem:[%s5323 + $0x70] sm:$0xff]
        %v5339 = vld [vmem:[%s5323 + $0x78] sm:$0xff]
        %5340 = vmatpush.msra.mxu0 %v5339
        %5341 = vmatpush.msra.mxu0 %v5338
        %5342 = vmatpush.msra.mxu0 %v5337
        %5343 = vmatpush.msra.mxu0 %v5336
        %5344 = vmatpush.msra.mxu0 %v5335
        %5345 = vmatpush.msra.mxu0 %v5334
        %5346 = vmatpush.msra.mxu0 %v5333
        %5347 = vmatpush.msra.mxu0 %v5332
        %5348 = vmatpush.msra.mxu0 %v5331
        %5349 = vmatpush.msra.mxu0 %v5330
        %5350 = vmatpush.msra.mxu0 %v5329
        %5351 = vmatpush.msra.mxu0 %v5328
        %5352 = vmatpush.msra.mxu0 %v5327
        %5353 = vmatpush.msra.mxu0 %v5326
        %5354 = vmatpush.msra.mxu0 %v5325
        %5355 = vmatpush.msra.mxu0 %v5324
        %5356 = vmatmul.f32.gmra.mxu0 %v5322
        %v5357 = vpop.f32.mrf.mxu0
        %v5358 = vadd.f32 0.0, %v5357
        %5359 = vdwg.mxu0
        %v5360 = vadd.f32 %v5321, %v5358
        %v5361 = vld [vmem:[#allocation7 + $0x11] sm:$0x1]
        %s5362 = scalar_lea.vmem %s7, 2176
        %v5363 = vld [vmem:[%s5362] sm:$0xff]
        %v5364 = vld [vmem:[%s5362 + $0x8] sm:$0xff]
        %v5365 = vld [vmem:[%s5362 + $0x10] sm:$0xff]
        %v5366 = vld [vmem:[%s5362 + $0x18] sm:$0xff]
        %v5367 = vld [vmem:[%s5362 + $0x20] sm:$0xff]
        %v5368 = vld [vmem:[%s5362 + $0x28] sm:$0xff]
        %v5369 = vld [vmem:[%s5362 + $0x30] sm:$0xff]
        %v5370 = vld [vmem:[%s5362 + $0x38] sm:$0xff]
        %v5371 = vld [vmem:[%s5362 + $0x40] sm:$0xff]
        %v5372 = vld [vmem:[%s5362 + $0x48] sm:$0xff]
        %v5373 = vld [vmem:[%s5362 + $0x50] sm:$0xff]
        %v5374 = vld [vmem:[%s5362 + $0x58] sm:$0xff]
        %v5375 = vld [vmem:[%s5362 + $0x60] sm:$0xff]
        %v5376 = vld [vmem:[%s5362 + $0x68] sm:$0xff]
        %v5377 = vld [vmem:[%s5362 + $0x70] sm:$0xff]
        %v5378 = vld [vmem:[%s5362 + $0x78] sm:$0xff]
        %5379 = vmatpush.msra.mxu0 %v5378
        %5380 = vmatpush.msra.mxu0 %v5377
        %5381 = vmatpush.msra.mxu0 %v5376
        %5382 = vmatpush.msra.mxu0 %v5375
        %5383 = vmatpush.msra.mxu0 %v5374
        %5384 = vmatpush.msra.mxu0 %v5373
        %5385 = vmatpush.msra.mxu0 %v5372
        %5386 = vmatpush.msra.mxu0 %v5371
        %5387 = vmatpush.msra.mxu0 %v5370
        %5388 = vmatpush.msra.mxu0 %v5369
        %5389 = vmatpush.msra.mxu0 %v5368
        %5390 = vmatpush.msra.mxu0 %v5367
        %5391 = vmatpush.msra.mxu0 %v5366
        %5392 = vmatpush.msra.mxu0 %v5365
        %5393 = vmatpush.msra.mxu0 %v5364
        %5394 = vmatpush.msra.mxu0 %v5363
        %5395 = vmatmul.f32.gmra.mxu0 %v5361
        %v5396 = vpop.f32.mrf.mxu0
        %v5397 = vadd.f32 0.0, %v5396
        %5398 = vdwg.mxu0
        %v5399 = vadd.f32 %v5360, %v5397
        %v5400 = vld [vmem:[#allocation7 + $0x12] sm:$0x1]
        %s5401 = scalar_lea.vmem %s7, 2304
        %v5402 = vld [vmem:[%s5401] sm:$0xff]
        %v5403 = vld [vmem:[%s5401 + $0x8] sm:$0xff]
        %v5404 = vld [vmem:[%s5401 + $0x10] sm:$0xff]
        %v5405 = vld [vmem:[%s5401 + $0x18] sm:$0xff]
        %v5406 = vld [vmem:[%s5401 + $0x20] sm:$0xff]
        %v5407 = vld [vmem:[%s5401 + $0x28] sm:$0xff]
        %v5408 = vld [vmem:[%s5401 + $0x30] sm:$0xff]
        %v5409 = vld [vmem:[%s5401 + $0x38] sm:$0xff]
        %v5410 = vld [vmem:[%s5401 + $0x40] sm:$0xff]
        %v5411 = vld [vmem:[%s5401 + $0x48] sm:$0xff]
        %v5412 = vld [vmem:[%s5401 + $0x50] sm:$0xff]
        %v5413 = vld [vmem:[%s5401 + $0x58] sm:$0xff]
        %v5414 = vld [vmem:[%s5401 + $0x60] sm:$0xff]
        %v5415 = vld [vmem:[%s5401 + $0x68] sm:$0xff]
        %v5416 = vld [vmem:[%s5401 + $0x70] sm:$0xff]
        %v5417 = vld [vmem:[%s5401 + $0x78] sm:$0xff]
        %5418 = vmatpush.msra.mxu0 %v5417
        %5419 = vmatpush.msra.mxu0 %v5416
        %5420 = vmatpush.msra.mxu0 %v5415
        %5421 = vmatpush.msra.mxu0 %v5414
        %5422 = vmatpush.msra.mxu0 %v5413
        %5423 = vmatpush.msra.mxu0 %v5412
        %5424 = vmatpush.msra.mxu0 %v5411
        %5425 = vmatpush.msra.mxu0 %v5410
        %5426 = vmatpush.msra.mxu0 %v5409
        %5427 = vmatpush.msra.mxu0 %v5408
        %5428 = vmatpush.msra.mxu0 %v5407
        %5429 = vmatpush.msra.mxu0 %v5406
        %5430 = vmatpush.msra.mxu0 %v5405
        %5431 = vmatpush.msra.mxu0 %v5404
        %5432 = vmatpush.msra.mxu0 %v5403
        %5433 = vmatpush.msra.mxu0 %v5402
        %5434 = vmatmul.f32.gmra.mxu0 %v5400
        %v5435 = vpop.f32.mrf.mxu0
        %v5436 = vadd.f32 0.0, %v5435
        %5437 = vdwg.mxu0
        %v5438 = vadd.f32 %v5399, %v5436
        %v5439 = vld [vmem:[#allocation7 + $0x13] sm:$0x1]
        %s5440 = scalar_lea.vmem %s7, 2432
        %v5441 = vld [vmem:[%s5440] sm:$0xff]
        %v5442 = vld [vmem:[%s5440 + $0x8] sm:$0xff]
        %v5443 = vld [vmem:[%s5440 + $0x10] sm:$0xff]
        %v5444 = vld [vmem:[%s5440 + $0x18] sm:$0xff]
        %v5445 = vld [vmem:[%s5440 + $0x20] sm:$0xff]
        %v5446 = vld [vmem:[%s5440 + $0x28] sm:$0xff]
        %v5447 = vld [vmem:[%s5440 + $0x30] sm:$0xff]
        %v5448 = vld [vmem:[%s5440 + $0x38] sm:$0xff]
        %v5449 = vld [vmem:[%s5440 + $0x40] sm:$0xff]
        %v5450 = vld [vmem:[%s5440 + $0x48] sm:$0xff]
        %v5451 = vld [vmem:[%s5440 + $0x50] sm:$0xff]
        %v5452 = vld [vmem:[%s5440 + $0x58] sm:$0xff]
        %v5453 = vld [vmem:[%s5440 + $0x60] sm:$0xff]
        %v5454 = vld [vmem:[%s5440 + $0x68] sm:$0xff]
        %v5455 = vld [vmem:[%s5440 + $0x70] sm:$0xff]
        %v5456 = vld [vmem:[%s5440 + $0x78] sm:$0xff]
        %5457 = vmatpush.msra.mxu0 %v5456
        %5458 = vmatpush.msra.mxu0 %v5455
        %5459 = vmatpush.msra.mxu0 %v5454
        %5460 = vmatpush.msra.mxu0 %v5453
        %5461 = vmatpush.msra.mxu0 %v5452
        %5462 = vmatpush.msra.mxu0 %v5451
        %5463 = vmatpush.msra.mxu0 %v5450
        %5464 = vmatpush.msra.mxu0 %v5449
        %5465 = vmatpush.msra.mxu0 %v5448
        %5466 = vmatpush.msra.mxu0 %v5447
        %5467 = vmatpush.msra.mxu0 %v5446
        %5468 = vmatpush.msra.mxu0 %v5445
        %5469 = vmatpush.msra.mxu0 %v5444
        %5470 = vmatpush.msra.mxu0 %v5443
        %5471 = vmatpush.msra.mxu0 %v5442
        %5472 = vmatpush.msra.mxu0 %v5441
        %5473 = vmatmul.f32.gmra.mxu0 %v5439
        %v5474 = vpop.f32.mrf.mxu0
        %v5475 = vadd.f32 0.0, %v5474
        %5476 = vdwg.mxu0
        %v5477 = vadd.f32 %v5438, %v5475
        %v5478 = vld [vmem:[#allocation7 + $0x14] sm:$0x1]
        %s5479 = scalar_lea.vmem %s7, 2560
        %v5480 = vld [vmem:[%s5479] sm:$0xff]
        %v5481 = vld [vmem:[%s5479 + $0x8] sm:$0xff]
        %v5482 = vld [vmem:[%s5479 + $0x10] sm:$0xff]
        %v5483 = vld [vmem:[%s5479 + $0x18] sm:$0xff]
        %v5484 = vld [vmem:[%s5479 + $0x20] sm:$0xff]
        %v5485 = vld [vmem:[%s5479 + $0x28] sm:$0xff]
        %v5486 = vld [vmem:[%s5479 + $0x30] sm:$0xff]
        %v5487 = vld [vmem:[%s5479 + $0x38] sm:$0xff]
        %v5488 = vld [vmem:[%s5479 + $0x40] sm:$0xff]
        %v5489 = vld [vmem:[%s5479 + $0x48] sm:$0xff]
        %v5490 = vld [vmem:[%s5479 + $0x50] sm:$0xff]
        %v5491 = vld [vmem:[%s5479 + $0x58] sm:$0xff]
        %v5492 = vld [vmem:[%s5479 + $0x60] sm:$0xff]
        %v5493 = vld [vmem:[%s5479 + $0x68] sm:$0xff]
        %v5494 = vld [vmem:[%s5479 + $0x70] sm:$0xff]
        %v5495 = vld [vmem:[%s5479 + $0x78] sm:$0xff]
        %5496 = vmatpush.msra.mxu0 %v5495
        %5497 = vmatpush.msra.mxu0 %v5494
        %5498 = vmatpush.msra.mxu0 %v5493
        %5499 = vmatpush.msra.mxu0 %v5492
        %5500 = vmatpush.msra.mxu0 %v5491
        %5501 = vmatpush.msra.mxu0 %v5490
        %5502 = vmatpush.msra.mxu0 %v5489
        %5503 = vmatpush.msra.mxu0 %v5488
        %5504 = vmatpush.msra.mxu0 %v5487
        %5505 = vmatpush.msra.mxu0 %v5486
        %5506 = vmatpush.msra.mxu0 %v5485
        %5507 = vmatpush.msra.mxu0 %v5484
        %5508 = vmatpush.msra.mxu0 %v5483
        %5509 = vmatpush.msra.mxu0 %v5482
        %5510 = vmatpush.msra.mxu0 %v5481
        %5511 = vmatpush.msra.mxu0 %v5480
        %5512 = vmatmul.f32.gmra.mxu0 %v5478
        %v5513 = vpop.f32.mrf.mxu0
        %v5514 = vadd.f32 0.0, %v5513
        %5515 = vdwg.mxu0
        %v5516 = vadd.f32 %v5477, %v5514
        %v5517 = vld [vmem:[#allocation7 + $0x15] sm:$0x1]
        %s5518 = scalar_lea.vmem %s7, 2688
        %v5519 = vld [vmem:[%s5518] sm:$0xff]
        %v5520 = vld [vmem:[%s5518 + $0x8] sm:$0xff]
        %v5521 = vld [vmem:[%s5518 + $0x10] sm:$0xff]
        %v5522 = vld [vmem:[%s5518 + $0x18] sm:$0xff]
        %v5523 = vld [vmem:[%s5518 + $0x20] sm:$0xff]
        %v5524 = vld [vmem:[%s5518 + $0x28] sm:$0xff]
        %v5525 = vld [vmem:[%s5518 + $0x30] sm:$0xff]
        %v5526 = vld [vmem:[%s5518 + $0x38] sm:$0xff]
        %v5527 = vld [vmem:[%s5518 + $0x40] sm:$0xff]
        %v5528 = vld [vmem:[%s5518 + $0x48] sm:$0xff]
        %v5529 = vld [vmem:[%s5518 + $0x50] sm:$0xff]
        %v5530 = vld [vmem:[%s5518 + $0x58] sm:$0xff]
        %v5531 = vld [vmem:[%s5518 + $0x60] sm:$0xff]
        %v5532 = vld [vmem:[%s5518 + $0x68] sm:$0xff]
        %v5533 = vld [vmem:[%s5518 + $0x70] sm:$0xff]
        %v5534 = vld [vmem:[%s5518 + $0x78] sm:$0xff]
        %5535 = vmatpush.msra.mxu0 %v5534
        %5536 = vmatpush.msra.mxu0 %v5533
        %5537 = vmatpush.msra.mxu0 %v5532
        %5538 = vmatpush.msra.mxu0 %v5531
        %5539 = vmatpush.msra.mxu0 %v5530
        %5540 = vmatpush.msra.mxu0 %v5529
        %5541 = vmatpush.msra.mxu0 %v5528
        %5542 = vmatpush.msra.mxu0 %v5527
        %5543 = vmatpush.msra.mxu0 %v5526
        %5544 = vmatpush.msra.mxu0 %v5525
        %5545 = vmatpush.msra.mxu0 %v5524
        %5546 = vmatpush.msra.mxu0 %v5523
        %5547 = vmatpush.msra.mxu0 %v5522
        %5548 = vmatpush.msra.mxu0 %v5521
        %5549 = vmatpush.msra.mxu0 %v5520
        %5550 = vmatpush.msra.mxu0 %v5519
        %5551 = vmatmul.f32.gmra.mxu0 %v5517
        %v5552 = vpop.f32.mrf.mxu0
        %v5553 = vadd.f32 0.0, %v5552
        %5554 = vdwg.mxu0
        %v5555 = vadd.f32 %v5516, %v5553
        %v5556 = vld [vmem:[#allocation7 + $0x16] sm:$0x1]
        %s5557 = scalar_lea.vmem %s7, 2816
        %v5558 = vld [vmem:[%s5557] sm:$0xff]
        %v5559 = vld [vmem:[%s5557 + $0x8] sm:$0xff]
        %v5560 = vld [vmem:[%s5557 + $0x10] sm:$0xff]
        %v5561 = vld [vmem:[%s5557 + $0x18] sm:$0xff]
        %v5562 = vld [vmem:[%s5557 + $0x20] sm:$0xff]
        %v5563 = vld [vmem:[%s5557 + $0x28] sm:$0xff]
        %v5564 = vld [vmem:[%s5557 + $0x30] sm:$0xff]
        %v5565 = vld [vmem:[%s5557 + $0x38] sm:$0xff]
        %v5566 = vld [vmem:[%s5557 + $0x40] sm:$0xff]
        %v5567 = vld [vmem:[%s5557 + $0x48] sm:$0xff]
        %v5568 = vld [vmem:[%s5557 + $0x50] sm:$0xff]
        %v5569 = vld [vmem:[%s5557 + $0x58] sm:$0xff]
        %v5570 = vld [vmem:[%s5557 + $0x60] sm:$0xff]
        %v5571 = vld [vmem:[%s5557 + $0x68] sm:$0xff]
        %v5572 = vld [vmem:[%s5557 + $0x70] sm:$0xff]
        %v5573 = vld [vmem:[%s5557 + $0x78] sm:$0xff]
        %5574 = vmatpush.msra.mxu0 %v5573
        %5575 = vmatpush.msra.mxu0 %v5572
        %5576 = vmatpush.msra.mxu0 %v5571
        %5577 = vmatpush.msra.mxu0 %v5570
        %5578 = vmatpush.msra.mxu0 %v5569
        %5579 = vmatpush.msra.mxu0 %v5568
        %5580 = vmatpush.msra.mxu0 %v5567
        %5581 = vmatpush.msra.mxu0 %v5566
        %5582 = vmatpush.msra.mxu0 %v5565
        %5583 = vmatpush.msra.mxu0 %v5564
        %5584 = vmatpush.msra.mxu0 %v5563
        %5585 = vmatpush.msra.mxu0 %v5562
        %5586 = vmatpush.msra.mxu0 %v5561
        %5587 = vmatpush.msra.mxu0 %v5560
        %5588 = vmatpush.msra.mxu0 %v5559
        %5589 = vmatpush.msra.mxu0 %v5558
        %5590 = vmatmul.f32.gmra.mxu0 %v5556
        %v5591 = vpop.f32.mrf.mxu0
        %v5592 = vadd.f32 0.0, %v5591
        %5593 = vdwg.mxu0
        %v5594 = vadd.f32 %v5555, %v5592
        %v5595 = vld [vmem:[#allocation7 + $0x17] sm:$0x1]
        %s5596 = scalar_lea.vmem %s7, 2944
        %v5597 = vld [vmem:[%s5596] sm:$0xff]
        %v5598 = vld [vmem:[%s5596 + $0x8] sm:$0xff]
        %v5599 = vld [vmem:[%s5596 + $0x10] sm:$0xff]
        %v5600 = vld [vmem:[%s5596 + $0x18] sm:$0xff]
        %v5601 = vld [vmem:[%s5596 + $0x20] sm:$0xff]
        %v5602 = vld [vmem:[%s5596 + $0x28] sm:$0xff]
        %v5603 = vld [vmem:[%s5596 + $0x30] sm:$0xff]
        %v5604 = vld [vmem:[%s5596 + $0x38] sm:$0xff]
        %v5605 = vld [vmem:[%s5596 + $0x40] sm:$0xff]
        %v5606 = vld [vmem:[%s5596 + $0x48] sm:$0xff]
        %v5607 = vld [vmem:[%s5596 + $0x50] sm:$0xff]
        %v5608 = vld [vmem:[%s5596 + $0x58] sm:$0xff]
        %v5609 = vld [vmem:[%s5596 + $0x60] sm:$0xff]
        %v5610 = vld [vmem:[%s5596 + $0x68] sm:$0xff]
        %v5611 = vld [vmem:[%s5596 + $0x70] sm:$0xff]
        %v5612 = vld [vmem:[%s5596 + $0x78] sm:$0xff]
        %5613 = vmatpush.msra.mxu0 %v5612
        %5614 = vmatpush.msra.mxu0 %v5611
        %5615 = vmatpush.msra.mxu0 %v5610
        %5616 = vmatpush.msra.mxu0 %v5609
        %5617 = vmatpush.msra.mxu0 %v5608
        %5618 = vmatpush.msra.mxu0 %v5607
        %5619 = vmatpush.msra.mxu0 %v5606
        %5620 = vmatpush.msra.mxu0 %v5605
        %5621 = vmatpush.msra.mxu0 %v5604
        %5622 = vmatpush.msra.mxu0 %v5603
        %5623 = vmatpush.msra.mxu0 %v5602
        %5624 = vmatpush.msra.mxu0 %v5601
        %5625 = vmatpush.msra.mxu0 %v5600
        %5626 = vmatpush.msra.mxu0 %v5599
        %5627 = vmatpush.msra.mxu0 %v5598
        %5628 = vmatpush.msra.mxu0 %v5597
        %5629 = vmatmul.f32.gmra.mxu0 %v5595
        %v5630 = vpop.f32.mrf.mxu0
        %v5631 = vadd.f32 0.0, %v5630
        %5632 = vdwg.mxu0
        %v5633 = vadd.f32 %v5594, %v5631
        %v5634 = vld [vmem:[#allocation7 + $0x18] sm:$0x1]
        %s5635 = scalar_lea.vmem %s7, 3072
        %v5636 = vld [vmem:[%s5635] sm:$0xff]
        %v5637 = vld [vmem:[%s5635 + $0x8] sm:$0xff]
        %v5638 = vld [vmem:[%s5635 + $0x10] sm:$0xff]
        %v5639 = vld [vmem:[%s5635 + $0x18] sm:$0xff]
        %v5640 = vld [vmem:[%s5635 + $0x20] sm:$0xff]
        %v5641 = vld [vmem:[%s5635 + $0x28] sm:$0xff]
        %v5642 = vld [vmem:[%s5635 + $0x30] sm:$0xff]
        %v5643 = vld [vmem:[%s5635 + $0x38] sm:$0xff]
        %v5644 = vld [vmem:[%s5635 + $0x40] sm:$0xff]
        %v5645 = vld [vmem:[%s5635 + $0x48] sm:$0xff]
        %v5646 = vld [vmem:[%s5635 + $0x50] sm:$0xff]
        %v5647 = vld [vmem:[%s5635 + $0x58] sm:$0xff]
        %v5648 = vld [vmem:[%s5635 + $0x60] sm:$0xff]
        %v5649 = vld [vmem:[%s5635 + $0x68] sm:$0xff]
        %v5650 = vld [vmem:[%s5635 + $0x70] sm:$0xff]
        %v5651 = vld [vmem:[%s5635 + $0x78] sm:$0xff]
        %5652 = vmatpush.msra.mxu0 %v5651
        %5653 = vmatpush.msra.mxu0 %v5650
        %5654 = vmatpush.msra.mxu0 %v5649
        %5655 = vmatpush.msra.mxu0 %v5648
        %5656 = vmatpush.msra.mxu0 %v5647
        %5657 = vmatpush.msra.mxu0 %v5646
        %5658 = vmatpush.msra.mxu0 %v5645
        %5659 = vmatpush.msra.mxu0 %v5644
        %5660 = vmatpush.msra.mxu0 %v5643
        %5661 = vmatpush.msra.mxu0 %v5642
        %5662 = vmatpush.msra.mxu0 %v5641
        %5663 = vmatpush.msra.mxu0 %v5640
        %5664 = vmatpush.msra.mxu0 %v5639
        %5665 = vmatpush.msra.mxu0 %v5638
        %5666 = vmatpush.msra.mxu0 %v5637
        %5667 = vmatpush.msra.mxu0 %v5636
        %5668 = vmatmul.f32.gmra.mxu0 %v5634
        %v5669 = vpop.f32.mrf.mxu0
        %v5670 = vadd.f32 0.0, %v5669
        %5671 = vdwg.mxu0
        %v5672 = vadd.f32 %v5633, %v5670
        %v5673 = vld [vmem:[#allocation7 + $0x19] sm:$0x1]
        %s5674 = scalar_lea.vmem %s7, 3200
        %v5675 = vld [vmem:[%s5674] sm:$0xff]
        %v5676 = vld [vmem:[%s5674 + $0x8] sm:$0xff]
        %v5677 = vld [vmem:[%s5674 + $0x10] sm:$0xff]
        %v5678 = vld [vmem:[%s5674 + $0x18] sm:$0xff]
        %v5679 = vld [vmem:[%s5674 + $0x20] sm:$0xff]
        %v5680 = vld [vmem:[%s5674 + $0x28] sm:$0xff]
        %v5681 = vld [vmem:[%s5674 + $0x30] sm:$0xff]
        %v5682 = vld [vmem:[%s5674 + $0x38] sm:$0xff]
        %v5683 = vld [vmem:[%s5674 + $0x40] sm:$0xff]
        %v5684 = vld [vmem:[%s5674 + $0x48] sm:$0xff]
        %v5685 = vld [vmem:[%s5674 + $0x50] sm:$0xff]
        %v5686 = vld [vmem:[%s5674 + $0x58] sm:$0xff]
        %v5687 = vld [vmem:[%s5674 + $0x60] sm:$0xff]
        %v5688 = vld [vmem:[%s5674 + $0x68] sm:$0xff]
        %v5689 = vld [vmem:[%s5674 + $0x70] sm:$0xff]
        %v5690 = vld [vmem:[%s5674 + $0x78] sm:$0xff]
        %5691 = vmatpush.msra.mxu0 %v5690
        %5692 = vmatpush.msra.mxu0 %v5689
        %5693 = vmatpush.msra.mxu0 %v5688
        %5694 = vmatpush.msra.mxu0 %v5687
        %5695 = vmatpush.msra.mxu0 %v5686
        %5696 = vmatpush.msra.mxu0 %v5685
        %5697 = vmatpush.msra.mxu0 %v5684
        %5698 = vmatpush.msra.mxu0 %v5683
        %5699 = vmatpush.msra.mxu0 %v5682
        %5700 = vmatpush.msra.mxu0 %v5681
        %5701 = vmatpush.msra.mxu0 %v5680
        %5702 = vmatpush.msra.mxu0 %v5679
        %5703 = vmatpush.msra.mxu0 %v5678
        %5704 = vmatpush.msra.mxu0 %v5677
        %5705 = vmatpush.msra.mxu0 %v5676
        %5706 = vmatpush.msra.mxu0 %v5675
        %5707 = vmatmul.f32.gmra.mxu0 %v5673
        %v5708 = vpop.f32.mrf.mxu0
        %v5709 = vadd.f32 0.0, %v5708
        %5710 = vdwg.mxu0
        %v5711 = vadd.f32 %v5672, %v5709
        %v5712 = vld [vmem:[#allocation7 + $0x1a] sm:$0x1]
        %s5713 = scalar_lea.vmem %s7, 3328
        %v5714 = vld [vmem:[%s5713] sm:$0xff]
        %v5715 = vld [vmem:[%s5713 + $0x8] sm:$0xff]
        %v5716 = vld [vmem:[%s5713 + $0x10] sm:$0xff]
        %v5717 = vld [vmem:[%s5713 + $0x18] sm:$0xff]
        %v5718 = vld [vmem:[%s5713 + $0x20] sm:$0xff]
        %v5719 = vld [vmem:[%s5713 + $0x28] sm:$0xff]
        %v5720 = vld [vmem:[%s5713 + $0x30] sm:$0xff]
        %v5721 = vld [vmem:[%s5713 + $0x38] sm:$0xff]
        %v5722 = vld [vmem:[%s5713 + $0x40] sm:$0xff]
        %v5723 = vld [vmem:[%s5713 + $0x48] sm:$0xff]
        %v5724 = vld [vmem:[%s5713 + $0x50] sm:$0xff]
        %v5725 = vld [vmem:[%s5713 + $0x58] sm:$0xff]
        %v5726 = vld [vmem:[%s5713 + $0x60] sm:$0xff]
        %v5727 = vld [vmem:[%s5713 + $0x68] sm:$0xff]
        %v5728 = vld [vmem:[%s5713 + $0x70] sm:$0xff]
        %v5729 = vld [vmem:[%s5713 + $0x78] sm:$0xff]
        %5730 = vmatpush.msra.mxu0 %v5729
        %5731 = vmatpush.msra.mxu0 %v5728
        %5732 = vmatpush.msra.mxu0 %v5727
        %5733 = vmatpush.msra.mxu0 %v5726
        %5734 = vmatpush.msra.mxu0 %v5725
        %5735 = vmatpush.msra.mxu0 %v5724
        %5736 = vmatpush.msra.mxu0 %v5723
        %5737 = vmatpush.msra.mxu0 %v5722
        %5738 = vmatpush.msra.mxu0 %v5721
        %5739 = vmatpush.msra.mxu0 %v5720
        %5740 = vmatpush.msra.mxu0 %v5719
        %5741 = vmatpush.msra.mxu0 %v5718
        %5742 = vmatpush.msra.mxu0 %v5717
        %5743 = vmatpush.msra.mxu0 %v5716
        %5744 = vmatpush.msra.mxu0 %v5715
        %5745 = vmatpush.msra.mxu0 %v5714
        %5746 = vmatmul.f32.gmra.mxu0 %v5712
        %v5747 = vpop.f32.mrf.mxu0
        %v5748 = vadd.f32 0.0, %v5747
        %5749 = vdwg.mxu0
        %v5750 = vadd.f32 %v5711, %v5748
        %v5751 = vld [vmem:[#allocation7 + $0x1b] sm:$0x1]
        %s5752 = scalar_lea.vmem %s7, 3456
        %v5753 = vld [vmem:[%s5752] sm:$0xff]
        %v5754 = vld [vmem:[%s5752 + $0x8] sm:$0xff]
        %v5755 = vld [vmem:[%s5752 + $0x10] sm:$0xff]
        %v5756 = vld [vmem:[%s5752 + $0x18] sm:$0xff]
        %v5757 = vld [vmem:[%s5752 + $0x20] sm:$0xff]
        %v5758 = vld [vmem:[%s5752 + $0x28] sm:$0xff]
        %v5759 = vld [vmem:[%s5752 + $0x30] sm:$0xff]
        %v5760 = vld [vmem:[%s5752 + $0x38] sm:$0xff]
        %v5761 = vld [vmem:[%s5752 + $0x40] sm:$0xff]
        %v5762 = vld [vmem:[%s5752 + $0x48] sm:$0xff]
        %v5763 = vld [vmem:[%s5752 + $0x50] sm:$0xff]
        %v5764 = vld [vmem:[%s5752 + $0x58] sm:$0xff]
        %v5765 = vld [vmem:[%s5752 + $0x60] sm:$0xff]
        %v5766 = vld [vmem:[%s5752 + $0x68] sm:$0xff]
        %v5767 = vld [vmem:[%s5752 + $0x70] sm:$0xff]
        %v5768 = vld [vmem:[%s5752 + $0x78] sm:$0xff]
        %5769 = vmatpush.msra.mxu0 %v5768
        %5770 = vmatpush.msra.mxu0 %v5767
        %5771 = vmatpush.msra.mxu0 %v5766
        %5772 = vmatpush.msra.mxu0 %v5765
        %5773 = vmatpush.msra.mxu0 %v5764
        %5774 = vmatpush.msra.mxu0 %v5763
        %5775 = vmatpush.msra.mxu0 %v5762
        %5776 = vmatpush.msra.mxu0 %v5761
        %5777 = vmatpush.msra.mxu0 %v5760
        %5778 = vmatpush.msra.mxu0 %v5759
        %5779 = vmatpush.msra.mxu0 %v5758
        %5780 = vmatpush.msra.mxu0 %v5757
        %5781 = vmatpush.msra.mxu0 %v5756
        %5782 = vmatpush.msra.mxu0 %v5755
        %5783 = vmatpush.msra.mxu0 %v5754
        %5784 = vmatpush.msra.mxu0 %v5753
        %5785 = vmatmul.f32.gmra.mxu0 %v5751
        %v5786 = vpop.f32.mrf.mxu0
        %v5787 = vadd.f32 0.0, %v5786
        %5788 = vdwg.mxu0
        %v5789 = vadd.f32 %v5750, %v5787
        %v5790 = vld [vmem:[#allocation7 + $0x1c] sm:$0x1]
        %s5791 = scalar_lea.vmem %s7, 3584
        %v5792 = vld [vmem:[%s5791] sm:$0xff]
        %v5793 = vld [vmem:[%s5791 + $0x8] sm:$0xff]
        %v5794 = vld [vmem:[%s5791 + $0x10] sm:$0xff]
        %v5795 = vld [vmem:[%s5791 + $0x18] sm:$0xff]
        %v5796 = vld [vmem:[%s5791 + $0x20] sm:$0xff]
        %v5797 = vld [vmem:[%s5791 + $0x28] sm:$0xff]
        %v5798 = vld [vmem:[%s5791 + $0x30] sm:$0xff]
        %v5799 = vld [vmem:[%s5791 + $0x38] sm:$0xff]
        %v5800 = vld [vmem:[%s5791 + $0x40] sm:$0xff]
        %v5801 = vld [vmem:[%s5791 + $0x48] sm:$0xff]
        %v5802 = vld [vmem:[%s5791 + $0x50] sm:$0xff]
        %v5803 = vld [vmem:[%s5791 + $0x58] sm:$0xff]
        %v5804 = vld [vmem:[%s5791 + $0x60] sm:$0xff]
        %v5805 = vld [vmem:[%s5791 + $0x68] sm:$0xff]
        %v5806 = vld [vmem:[%s5791 + $0x70] sm:$0xff]
        %v5807 = vld [vmem:[%s5791 + $0x78] sm:$0xff]
        %5808 = vmatpush.msra.mxu0 %v5807
        %5809 = vmatpush.msra.mxu0 %v5806
        %5810 = vmatpush.msra.mxu0 %v5805
        %5811 = vmatpush.msra.mxu0 %v5804
        %5812 = vmatpush.msra.mxu0 %v5803
        %5813 = vmatpush.msra.mxu0 %v5802
        %5814 = vmatpush.msra.mxu0 %v5801
        %5815 = vmatpush.msra.mxu0 %v5800
        %5816 = vmatpush.msra.mxu0 %v5799
        %5817 = vmatpush.msra.mxu0 %v5798
        %5818 = vmatpush.msra.mxu0 %v5797
        %5819 = vmatpush.msra.mxu0 %v5796
        %5820 = vmatpush.msra.mxu0 %v5795
        %5821 = vmatpush.msra.mxu0 %v5794
        %5822 = vmatpush.msra.mxu0 %v5793
        %5823 = vmatpush.msra.mxu0 %v5792
        %5824 = vmatmul.f32.gmra.mxu0 %v5790
        %v5825 = vpop.f32.mrf.mxu0
        %v5826 = vadd.f32 0.0, %v5825
        %5827 = vdwg.mxu0
        %v5828 = vadd.f32 %v5789, %v5826
        %v5829 = vld [vmem:[#allocation7 + $0x1d] sm:$0x1]
        %s5830 = scalar_lea.vmem %s7, 3712
        %v5831 = vld [vmem:[%s5830] sm:$0xff]
        %v5832 = vld [vmem:[%s5830 + $0x8] sm:$0xff]
        %v5833 = vld [vmem:[%s5830 + $0x10] sm:$0xff]
        %v5834 = vld [vmem:[%s5830 + $0x18] sm:$0xff]
        %v5835 = vld [vmem:[%s5830 + $0x20] sm:$0xff]
        %v5836 = vld [vmem:[%s5830 + $0x28] sm:$0xff]
        %v5837 = vld [vmem:[%s5830 + $0x30] sm:$0xff]
        %v5838 = vld [vmem:[%s5830 + $0x38] sm:$0xff]
        %v5839 = vld [vmem:[%s5830 + $0x40] sm:$0xff]
        %v5840 = vld [vmem:[%s5830 + $0x48] sm:$0xff]
        %v5841 = vld [vmem:[%s5830 + $0x50] sm:$0xff]
        %v5842 = vld [vmem:[%s5830 + $0x58] sm:$0xff]
        %v5843 = vld [vmem:[%s5830 + $0x60] sm:$0xff]
        %v5844 = vld [vmem:[%s5830 + $0x68] sm:$0xff]
        %v5845 = vld [vmem:[%s5830 + $0x70] sm:$0xff]
        %v5846 = vld [vmem:[%s5830 + $0x78] sm:$0xff]
        %5847 = vmatpush.msra.mxu0 %v5846
        %5848 = vmatpush.msra.mxu0 %v5845
        %5849 = vmatpush.msra.mxu0 %v5844
        %5850 = vmatpush.msra.mxu0 %v5843
        %5851 = vmatpush.msra.mxu0 %v5842
        %5852 = vmatpush.msra.mxu0 %v5841
        %5853 = vmatpush.msra.mxu0 %v5840
        %5854 = vmatpush.msra.mxu0 %v5839
        %5855 = vmatpush.msra.mxu0 %v5838
        %5856 = vmatpush.msra.mxu0 %v5837
        %5857 = vmatpush.msra.mxu0 %v5836
        %5858 = vmatpush.msra.mxu0 %v5835
        %5859 = vmatpush.msra.mxu0 %v5834
        %5860 = vmatpush.msra.mxu0 %v5833
        %5861 = vmatpush.msra.mxu0 %v5832
        %5862 = vmatpush.msra.mxu0 %v5831
        %5863 = vmatmul.f32.gmra.mxu0 %v5829
        %v5864 = vpop.f32.mrf.mxu0
        %v5865 = vadd.f32 0.0, %v5864
        %5866 = vdwg.mxu0
        %v5867 = vadd.f32 %v5828, %v5865
        %v5868 = vld [vmem:[#allocation7 + $0x1e] sm:$0x1]
        %s5869 = scalar_lea.vmem %s7, 3840
        %v5870 = vld [vmem:[%s5869] sm:$0xff]
        %v5871 = vld [vmem:[%s5869 + $0x8] sm:$0xff]
        %v5872 = vld [vmem:[%s5869 + $0x10] sm:$0xff]
        %v5873 = vld [vmem:[%s5869 + $0x18] sm:$0xff]
        %v5874 = vld [vmem:[%s5869 + $0x20] sm:$0xff]
        %v5875 = vld [vmem:[%s5869 + $0x28] sm:$0xff]
        %v5876 = vld [vmem:[%s5869 + $0x30] sm:$0xff]
        %v5877 = vld [vmem:[%s5869 + $0x38] sm:$0xff]
        %v5878 = vld [vmem:[%s5869 + $0x40] sm:$0xff]
        %v5879 = vld [vmem:[%s5869 + $0x48] sm:$0xff]
        %v5880 = vld [vmem:[%s5869 + $0x50] sm:$0xff]
        %v5881 = vld [vmem:[%s5869 + $0x58] sm:$0xff]
        %v5882 = vld [vmem:[%s5869 + $0x60] sm:$0xff]
        %v5883 = vld [vmem:[%s5869 + $0x68] sm:$0xff]
        %v5884 = vld [vmem:[%s5869 + $0x70] sm:$0xff]
        %v5885 = vld [vmem:[%s5869 + $0x78] sm:$0xff]
        %5886 = vmatpush.msra.mxu0 %v5885
        %5887 = vmatpush.msra.mxu0 %v5884
        %5888 = vmatpush.msra.mxu0 %v5883
        %5889 = vmatpush.msra.mxu0 %v5882
        %5890 = vmatpush.msra.mxu0 %v5881
        %5891 = vmatpush.msra.mxu0 %v5880
        %5892 = vmatpush.msra.mxu0 %v5879
        %5893 = vmatpush.msra.mxu0 %v5878
        %5894 = vmatpush.msra.mxu0 %v5877
        %5895 = vmatpush.msra.mxu0 %v5876
        %5896 = vmatpush.msra.mxu0 %v5875
        %5897 = vmatpush.msra.mxu0 %v5874
        %5898 = vmatpush.msra.mxu0 %v5873
        %5899 = vmatpush.msra.mxu0 %v5872
        %5900 = vmatpush.msra.mxu0 %v5871
        %5901 = vmatpush.msra.mxu0 %v5870
        %5902 = vmatmul.f32.gmra.mxu0 %v5868
        %v5903 = vpop.f32.mrf.mxu0
        %v5904 = vadd.f32 0.0, %v5903
        %5905 = vdwg.mxu0
        %v5906 = vadd.f32 %v5867, %v5904
        %v5907 = vld [vmem:[#allocation7 + $0x1f] sm:$0x1]
        %s5908 = scalar_lea.vmem %s7, 3968
        %v5909 = vld [vmem:[%s5908] sm:$0xff]
        %v5910 = vld [vmem:[%s5908 + $0x8] sm:$0xff]
        %v5911 = vld [vmem:[%s5908 + $0x10] sm:$0xff]
        %v5912 = vld [vmem:[%s5908 + $0x18] sm:$0xff]
        %v5913 = vld [vmem:[%s5908 + $0x20] sm:$0xff]
        %v5914 = vld [vmem:[%s5908 + $0x28] sm:$0xff]
        %v5915 = vld [vmem:[%s5908 + $0x30] sm:$0xff]
        %v5916 = vld [vmem:[%s5908 + $0x38] sm:$0xff]
        %v5917 = vld [vmem:[%s5908 + $0x40] sm:$0xff]
        %v5918 = vld [vmem:[%s5908 + $0x48] sm:$0xff]
        %v5919 = vld [vmem:[%s5908 + $0x50] sm:$0xff]
        %v5920 = vld [vmem:[%s5908 + $0x58] sm:$0xff]
        %v5921 = vld [vmem:[%s5908 + $0x60] sm:$0xff]
        %v5922 = vld [vmem:[%s5908 + $0x68] sm:$0xff]
        %v5923 = vld [vmem:[%s5908 + $0x70] sm:$0xff]
        %v5924 = vld [vmem:[%s5908 + $0x78] sm:$0xff]
        %5925 = vmatpush.msra.mxu0 %v5924
        %5926 = vmatpush.msra.mxu0 %v5923
        %5927 = vmatpush.msra.mxu0 %v5922
        %5928 = vmatpush.msra.mxu0 %v5921
        %5929 = vmatpush.msra.mxu0 %v5920
        %5930 = vmatpush.msra.mxu0 %v5919
        %5931 = vmatpush.msra.mxu0 %v5918
        %5932 = vmatpush.msra.mxu0 %v5917
        %5933 = vmatpush.msra.mxu0 %v5916
        %5934 = vmatpush.msra.mxu0 %v5915
        %5935 = vmatpush.msra.mxu0 %v5914
        %5936 = vmatpush.msra.mxu0 %v5913
        %5937 = vmatpush.msra.mxu0 %v5912
        %5938 = vmatpush.msra.mxu0 %v5911
        %5939 = vmatpush.msra.mxu0 %v5910
        %5940 = vmatpush.msra.mxu0 %v5909
        %5941 = vmatmul.f32.gmra.mxu0 %v5907
        %v5942 = vpop.f32.mrf.mxu0
        %v5943 = vadd.f32 0.0, %v5942
        %5944 = vdwg.mxu0
        %v5945 = vadd.f32 %v5906, %v5943
        %v5946 = vld [vmem:[#allocation7 + $0x20] sm:$0x1]
        %s5947 = scalar_lea.vmem %s7, 4096
        %v5948 = vld [vmem:[%s5947] sm:$0xff]
        %v5949 = vld [vmem:[%s5947 + $0x8] sm:$0xff]
        %v5950 = vld [vmem:[%s5947 + $0x10] sm:$0xff]
        %v5951 = vld [vmem:[%s5947 + $0x18] sm:$0xff]
        %v5952 = vld [vmem:[%s5947 + $0x20] sm:$0xff]
        %v5953 = vld [vmem:[%s5947 + $0x28] sm:$0xff]
        %v5954 = vld [vmem:[%s5947 + $0x30] sm:$0xff]
        %v5955 = vld [vmem:[%s5947 + $0x38] sm:$0xff]
        %v5956 = vld [vmem:[%s5947 + $0x40] sm:$0xff]
        %v5957 = vld [vmem:[%s5947 + $0x48] sm:$0xff]
        %v5958 = vld [vmem:[%s5947 + $0x50] sm:$0xff]
        %v5959 = vld [vmem:[%s5947 + $0x58] sm:$0xff]
        %v5960 = vld [vmem:[%s5947 + $0x60] sm:$0xff]
        %v5961 = vld [vmem:[%s5947 + $0x68] sm:$0xff]
        %v5962 = vld [vmem:[%s5947 + $0x70] sm:$0xff]
        %v5963 = vld [vmem:[%s5947 + $0x78] sm:$0xff]
        %5964 = vmatpush.msra.mxu0 %v5963
        %5965 = vmatpush.msra.mxu0 %v5962
        %5966 = vmatpush.msra.mxu0 %v5961
        %5967 = vmatpush.msra.mxu0 %v5960
        %5968 = vmatpush.msra.mxu0 %v5959
        %5969 = vmatpush.msra.mxu0 %v5958
        %5970 = vmatpush.msra.mxu0 %v5957
        %5971 = vmatpush.msra.mxu0 %v5956
        %5972 = vmatpush.msra.mxu0 %v5955
        %5973 = vmatpush.msra.mxu0 %v5954
        %5974 = vmatpush.msra.mxu0 %v5953
        %5975 = vmatpush.msra.mxu0 %v5952
        %5976 = vmatpush.msra.mxu0 %v5951
        %5977 = vmatpush.msra.mxu0 %v5950
        %5978 = vmatpush.msra.mxu0 %v5949
        %5979 = vmatpush.msra.mxu0 %v5948
        %5980 = vmatmul.f32.gmra.mxu0 %v5946
        %v5981 = vpop.f32.mrf.mxu0
        %v5982 = vadd.f32 0.0, %v5981
        %5983 = vdwg.mxu0
        %v5984 = vadd.f32 %v5945, %v5982
        %v5985 = vld [vmem:[#allocation7 + $0x21] sm:$0x1]
        %s5986 = scalar_lea.vmem %s7, 4224
        %v5987 = vld [vmem:[%s5986] sm:$0xff]
        %v5988 = vld [vmem:[%s5986 + $0x8] sm:$0xff]
        %v5989 = vld [vmem:[%s5986 + $0x10] sm:$0xff]
        %v5990 = vld [vmem:[%s5986 + $0x18] sm:$0xff]
        %v5991 = vld [vmem:[%s5986 + $0x20] sm:$0xff]
        %v5992 = vld [vmem:[%s5986 + $0x28] sm:$0xff]
        %v5993 = vld [vmem:[%s5986 + $0x30] sm:$0xff]
        %v5994 = vld [vmem:[%s5986 + $0x38] sm:$0xff]
        %v5995 = vld [vmem:[%s5986 + $0x40] sm:$0xff]
        %v5996 = vld [vmem:[%s5986 + $0x48] sm:$0xff]
        %v5997 = vld [vmem:[%s5986 + $0x50] sm:$0xff]
        %v5998 = vld [vmem:[%s5986 + $0x58] sm:$0xff]
        %v5999 = vld [vmem:[%s5986 + $0x60] sm:$0xff]
        %v6000 = vld [vmem:[%s5986 + $0x68] sm:$0xff]
        %v6001 = vld [vmem:[%s5986 + $0x70] sm:$0xff]
        %v6002 = vld [vmem:[%s5986 + $0x78] sm:$0xff]
        %6003 = vmatpush.msra.mxu0 %v6002
        %6004 = vmatpush.msra.mxu0 %v6001
        %6005 = vmatpush.msra.mxu0 %v6000
        %6006 = vmatpush.msra.mxu0 %v5999
        %6007 = vmatpush.msra.mxu0 %v5998
        %6008 = vmatpush.msra.mxu0 %v5997
        %6009 = vmatpush.msra.mxu0 %v5996
        %6010 = vmatpush.msra.mxu0 %v5995
        %6011 = vmatpush.msra.mxu0 %v5994
        %6012 = vmatpush.msra.mxu0 %v5993
        %6013 = vmatpush.msra.mxu0 %v5992
        %6014 = vmatpush.msra.mxu0 %v5991
        %6015 = vmatpush.msra.mxu0 %v5990
        %6016 = vmatpush.msra.mxu0 %v5989
        %6017 = vmatpush.msra.mxu0 %v5988
        %6018 = vmatpush.msra.mxu0 %v5987
        %6019 = vmatmul.f32.gmra.mxu0 %v5985
        %v6020 = vpop.f32.mrf.mxu0
        %v6021 = vadd.f32 0.0, %v6020
        %6022 = vdwg.mxu0
        %v6023 = vadd.f32 %v5984, %v6021
        %v6024 = vld [vmem:[#allocation7 + $0x22] sm:$0x1]
        %s6025 = scalar_lea.vmem %s7, 4352
        %v6026 = vld [vmem:[%s6025] sm:$0xff]
        %v6027 = vld [vmem:[%s6025 + $0x8] sm:$0xff]
        %v6028 = vld [vmem:[%s6025 + $0x10] sm:$0xff]
        %v6029 = vld [vmem:[%s6025 + $0x18] sm:$0xff]
        %v6030 = vld [vmem:[%s6025 + $0x20] sm:$0xff]
        %v6031 = vld [vmem:[%s6025 + $0x28] sm:$0xff]
        %v6032 = vld [vmem:[%s6025 + $0x30] sm:$0xff]
        %v6033 = vld [vmem:[%s6025 + $0x38] sm:$0xff]
        %v6034 = vld [vmem:[%s6025 + $0x40] sm:$0xff]
        %v6035 = vld [vmem:[%s6025 + $0x48] sm:$0xff]
        %v6036 = vld [vmem:[%s6025 + $0x50] sm:$0xff]
        %v6037 = vld [vmem:[%s6025 + $0x58] sm:$0xff]
        %v6038 = vld [vmem:[%s6025 + $0x60] sm:$0xff]
        %v6039 = vld [vmem:[%s6025 + $0x68] sm:$0xff]
        %v6040 = vld [vmem:[%s6025 + $0x70] sm:$0xff]
        %v6041 = vld [vmem:[%s6025 + $0x78] sm:$0xff]
        %6042 = vmatpush.msra.mxu0 %v6041
        %6043 = vmatpush.msra.mxu0 %v6040
        %6044 = vmatpush.msra.mxu0 %v6039
        %6045 = vmatpush.msra.mxu0 %v6038
        %6046 = vmatpush.msra.mxu0 %v6037
        %6047 = vmatpush.msra.mxu0 %v6036
        %6048 = vmatpush.msra.mxu0 %v6035
        %6049 = vmatpush.msra.mxu0 %v6034
        %6050 = vmatpush.msra.mxu0 %v6033
        %6051 = vmatpush.msra.mxu0 %v6032
        %6052 = vmatpush.msra.mxu0 %v6031
        %6053 = vmatpush.msra.mxu0 %v6030
        %6054 = vmatpush.msra.mxu0 %v6029
        %6055 = vmatpush.msra.mxu0 %v6028
        %6056 = vmatpush.msra.mxu0 %v6027
        %6057 = vmatpush.msra.mxu0 %v6026
        %6058 = vmatmul.f32.gmra.mxu0 %v6024
        %v6059 = vpop.f32.mrf.mxu0
        %v6060 = vadd.f32 0.0, %v6059
        %6061 = vdwg.mxu0
        %v6062 = vadd.f32 %v6023, %v6060
        %v6063 = vld [vmem:[#allocation7 + $0x23] sm:$0x1]
        %s6064 = scalar_lea.vmem %s7, 4480
        %v6065 = vld [vmem:[%s6064] sm:$0xff]
        %v6066 = vld [vmem:[%s6064 + $0x8] sm:$0xff]
        %v6067 = vld [vmem:[%s6064 + $0x10] sm:$0xff]
        %v6068 = vld [vmem:[%s6064 + $0x18] sm:$0xff]
        %v6069 = vld [vmem:[%s6064 + $0x20] sm:$0xff]
        %v6070 = vld [vmem:[%s6064 + $0x28] sm:$0xff]
        %v6071 = vld [vmem:[%s6064 + $0x30] sm:$0xff]
        %v6072 = vld [vmem:[%s6064 + $0x38] sm:$0xff]
        %v6073 = vld [vmem:[%s6064 + $0x40] sm:$0xff]
        %v6074 = vld [vmem:[%s6064 + $0x48] sm:$0xff]
        %v6075 = vld [vmem:[%s6064 + $0x50] sm:$0xff]
        %v6076 = vld [vmem:[%s6064 + $0x58] sm:$0xff]
        %v6077 = vld [vmem:[%s6064 + $0x60] sm:$0xff]
        %v6078 = vld [vmem:[%s6064 + $0x68] sm:$0xff]
        %v6079 = vld [vmem:[%s6064 + $0x70] sm:$0xff]
        %v6080 = vld [vmem:[%s6064 + $0x78] sm:$0xff]
        %6081 = vmatpush.msra.mxu0 %v6080
        %6082 = vmatpush.msra.mxu0 %v6079
        %6083 = vmatpush.msra.mxu0 %v6078
        %6084 = vmatpush.msra.mxu0 %v6077
        %6085 = vmatpush.msra.mxu0 %v6076
        %6086 = vmatpush.msra.mxu0 %v6075
        %6087 = vmatpush.msra.mxu0 %v6074
        %6088 = vmatpush.msra.mxu0 %v6073
        %6089 = vmatpush.msra.mxu0 %v6072
        %6090 = vmatpush.msra.mxu0 %v6071
        %6091 = vmatpush.msra.mxu0 %v6070
        %6092 = vmatpush.msra.mxu0 %v6069
        %6093 = vmatpush.msra.mxu0 %v6068
        %6094 = vmatpush.msra.mxu0 %v6067
        %6095 = vmatpush.msra.mxu0 %v6066
        %6096 = vmatpush.msra.mxu0 %v6065
        %6097 = vmatmul.f32.gmra.mxu0 %v6063
        %v6098 = vpop.f32.mrf.mxu0
        %v6099 = vadd.f32 0.0, %v6098
        %6100 = vdwg.mxu0
        %v6101 = vadd.f32 %v6062, %v6099
        %v6102 = vld [vmem:[#allocation7 + $0x24] sm:$0x1]
        %s6103 = scalar_lea.vmem %s7, 4608
        %v6104 = vld [vmem:[%s6103] sm:$0xff]
        %v6105 = vld [vmem:[%s6103 + $0x8] sm:$0xff]
        %v6106 = vld [vmem:[%s6103 + $0x10] sm:$0xff]
        %v6107 = vld [vmem:[%s6103 + $0x18] sm:$0xff]
        %v6108 = vld [vmem:[%s6103 + $0x20] sm:$0xff]
        %v6109 = vld [vmem:[%s6103 + $0x28] sm:$0xff]
        %v6110 = vld [vmem:[%s6103 + $0x30] sm:$0xff]
        %v6111 = vld [vmem:[%s6103 + $0x38] sm:$0xff]
        %v6112 = vld [vmem:[%s6103 + $0x40] sm:$0xff]
        %v6113 = vld [vmem:[%s6103 + $0x48] sm:$0xff]
        %v6114 = vld [vmem:[%s6103 + $0x50] sm:$0xff]
        %v6115 = vld [vmem:[%s6103 + $0x58] sm:$0xff]
        %v6116 = vld [vmem:[%s6103 + $0x60] sm:$0xff]
        %v6117 = vld [vmem:[%s6103 + $0x68] sm:$0xff]
        %v6118 = vld [vmem:[%s6103 + $0x70] sm:$0xff]
        %v6119 = vld [vmem:[%s6103 + $0x78] sm:$0xff]
        %6120 = vmatpush.msra.mxu0 %v6119
        %6121 = vmatpush.msra.mxu0 %v6118
        %6122 = vmatpush.msra.mxu0 %v6117
        %6123 = vmatpush.msra.mxu0 %v6116
        %6124 = vmatpush.msra.mxu0 %v6115
        %6125 = vmatpush.msra.mxu0 %v6114
        %6126 = vmatpush.msra.mxu0 %v6113
        %6127 = vmatpush.msra.mxu0 %v6112
        %6128 = vmatpush.msra.mxu0 %v6111
        %6129 = vmatpush.msra.mxu0 %v6110
        %6130 = vmatpush.msra.mxu0 %v6109
        %6131 = vmatpush.msra.mxu0 %v6108
        %6132 = vmatpush.msra.mxu0 %v6107
        %6133 = vmatpush.msra.mxu0 %v6106
        %6134 = vmatpush.msra.mxu0 %v6105
        %6135 = vmatpush.msra.mxu0 %v6104
        %6136 = vmatmul.f32.gmra.mxu0 %v6102
        %v6137 = vpop.f32.mrf.mxu0
        %v6138 = vadd.f32 0.0, %v6137
        %6139 = vdwg.mxu0
        %v6140 = vadd.f32 %v6101, %v6138
        %v6141 = vld [vmem:[#allocation7 + $0x25] sm:$0x1]
        %s6142 = scalar_lea.vmem %s7, 4736
        %v6143 = vld [vmem:[%s6142] sm:$0xff]
        %v6144 = vld [vmem:[%s6142 + $0x8] sm:$0xff]
        %v6145 = vld [vmem:[%s6142 + $0x10] sm:$0xff]
        %v6146 = vld [vmem:[%s6142 + $0x18] sm:$0xff]
        %v6147 = vld [vmem:[%s6142 + $0x20] sm:$0xff]
        %v6148 = vld [vmem:[%s6142 + $0x28] sm:$0xff]
        %v6149 = vld [vmem:[%s6142 + $0x30] sm:$0xff]
        %v6150 = vld [vmem:[%s6142 + $0x38] sm:$0xff]
        %v6151 = vld [vmem:[%s6142 + $0x40] sm:$0xff]
        %v6152 = vld [vmem:[%s6142 + $0x48] sm:$0xff]
        %v6153 = vld [vmem:[%s6142 + $0x50] sm:$0xff]
        %v6154 = vld [vmem:[%s6142 + $0x58] sm:$0xff]
        %v6155 = vld [vmem:[%s6142 + $0x60] sm:$0xff]
        %v6156 = vld [vmem:[%s6142 + $0x68] sm:$0xff]
        %v6157 = vld [vmem:[%s6142 + $0x70] sm:$0xff]
        %v6158 = vld [vmem:[%s6142 + $0x78] sm:$0xff]
        %6159 = vmatpush.msra.mxu0 %v6158
        %6160 = vmatpush.msra.mxu0 %v6157
        %6161 = vmatpush.msra.mxu0 %v6156
        %6162 = vmatpush.msra.mxu0 %v6155
        %6163 = vmatpush.msra.mxu0 %v6154
        %6164 = vmatpush.msra.mxu0 %v6153
        %6165 = vmatpush.msra.mxu0 %v6152
        %6166 = vmatpush.msra.mxu0 %v6151
        %6167 = vmatpush.msra.mxu0 %v6150
        %6168 = vmatpush.msra.mxu0 %v6149
        %6169 = vmatpush.msra.mxu0 %v6148
        %6170 = vmatpush.msra.mxu0 %v6147
        %6171 = vmatpush.msra.mxu0 %v6146
        %6172 = vmatpush.msra.mxu0 %v6145
        %6173 = vmatpush.msra.mxu0 %v6144
        %6174 = vmatpush.msra.mxu0 %v6143
        %6175 = vmatmul.f32.gmra.mxu0 %v6141
        %v6176 = vpop.f32.mrf.mxu0
        %v6177 = vadd.f32 0.0, %v6176
        %6178 = vdwg.mxu0
        %v6179 = vadd.f32 %v6140, %v6177
        %v6180 = vld [vmem:[#allocation7 + $0x26] sm:$0x1]
        %s6181 = scalar_lea.vmem %s7, 4864
        %v6182 = vld [vmem:[%s6181] sm:$0xff]
        %v6183 = vld [vmem:[%s6181 + $0x8] sm:$0xff]
        %v6184 = vld [vmem:[%s6181 + $0x10] sm:$0xff]
        %v6185 = vld [vmem:[%s6181 + $0x18] sm:$0xff]
        %v6186 = vld [vmem:[%s6181 + $0x20] sm:$0xff]
        %v6187 = vld [vmem:[%s6181 + $0x28] sm:$0xff]
        %v6188 = vld [vmem:[%s6181 + $0x30] sm:$0xff]
        %v6189 = vld [vmem:[%s6181 + $0x38] sm:$0xff]
        %v6190 = vld [vmem:[%s6181 + $0x40] sm:$0xff]
        %v6191 = vld [vmem:[%s6181 + $0x48] sm:$0xff]
        %v6192 = vld [vmem:[%s6181 + $0x50] sm:$0xff]
        %v6193 = vld [vmem:[%s6181 + $0x58] sm:$0xff]
        %v6194 = vld [vmem:[%s6181 + $0x60] sm:$0xff]
        %v6195 = vld [vmem:[%s6181 + $0x68] sm:$0xff]
        %v6196 = vld [vmem:[%s6181 + $0x70] sm:$0xff]
        %v6197 = vld [vmem:[%s6181 + $0x78] sm:$0xff]
        %6198 = vmatpush.msra.mxu0 %v6197
        %6199 = vmatpush.msra.mxu0 %v6196
        %6200 = vmatpush.msra.mxu0 %v6195
        %6201 = vmatpush.msra.mxu0 %v6194
        %6202 = vmatpush.msra.mxu0 %v6193
        %6203 = vmatpush.msra.mxu0 %v6192
        %6204 = vmatpush.msra.mxu0 %v6191
        %6205 = vmatpush.msra.mxu0 %v6190
        %6206 = vmatpush.msra.mxu0 %v6189
        %6207 = vmatpush.msra.mxu0 %v6188
        %6208 = vmatpush.msra.mxu0 %v6187
        %6209 = vmatpush.msra.mxu0 %v6186
        %6210 = vmatpush.msra.mxu0 %v6185
        %6211 = vmatpush.msra.mxu0 %v6184
        %6212 = vmatpush.msra.mxu0 %v6183
        %6213 = vmatpush.msra.mxu0 %v6182
        %6214 = vmatmul.f32.gmra.mxu0 %v6180
        %v6215 = vpop.f32.mrf.mxu0
        %v6216 = vadd.f32 0.0, %v6215
        %6217 = vdwg.mxu0
        %v6218 = vadd.f32 %v6179, %v6216
        %v6219 = vld [vmem:[#allocation7 + $0x27] sm:$0x1]
        %s6220 = scalar_lea.vmem %s7, 4992
        %v6221 = vld [vmem:[%s6220] sm:$0xff]
        %v6222 = vld [vmem:[%s6220 + $0x8] sm:$0xff]
        %v6223 = vld [vmem:[%s6220 + $0x10] sm:$0xff]
        %v6224 = vld [vmem:[%s6220 + $0x18] sm:$0xff]
        %v6225 = vld [vmem:[%s6220 + $0x20] sm:$0xff]
        %v6226 = vld [vmem:[%s6220 + $0x28] sm:$0xff]
        %v6227 = vld [vmem:[%s6220 + $0x30] sm:$0xff]
        %v6228 = vld [vmem:[%s6220 + $0x38] sm:$0xff]
        %v6229 = vld [vmem:[%s6220 + $0x40] sm:$0xff]
        %v6230 = vld [vmem:[%s6220 + $0x48] sm:$0xff]
        %v6231 = vld [vmem:[%s6220 + $0x50] sm:$0xff]
        %v6232 = vld [vmem:[%s6220 + $0x58] sm:$0xff]
        %v6233 = vld [vmem:[%s6220 + $0x60] sm:$0xff]
        %v6234 = vld [vmem:[%s6220 + $0x68] sm:$0xff]
        %v6235 = vld [vmem:[%s6220 + $0x70] sm:$0xff]
        %v6236 = vld [vmem:[%s6220 + $0x78] sm:$0xff]
        %6237 = vmatpush.msra.mxu0 %v6236
        %6238 = vmatpush.msra.mxu0 %v6235
        %6239 = vmatpush.msra.mxu0 %v6234
        %6240 = vmatpush.msra.mxu0 %v6233
        %6241 = vmatpush.msra.mxu0 %v6232
        %6242 = vmatpush.msra.mxu0 %v6231
        %6243 = vmatpush.msra.mxu0 %v6230
        %6244 = vmatpush.msra.mxu0 %v6229
        %6245 = vmatpush.msra.mxu0 %v6228
        %6246 = vmatpush.msra.mxu0 %v6227
        %6247 = vmatpush.msra.mxu0 %v6226
        %6248 = vmatpush.msra.mxu0 %v6225
        %6249 = vmatpush.msra.mxu0 %v6224
        %6250 = vmatpush.msra.mxu0 %v6223
        %6251 = vmatpush.msra.mxu0 %v6222
        %6252 = vmatpush.msra.mxu0 %v6221
        %6253 = vmatmul.f32.gmra.mxu0 %v6219
        %v6254 = vpop.f32.mrf.mxu0
        %v6255 = vadd.f32 0.0, %v6254
        %6256 = vdwg.mxu0
        %v6257 = vadd.f32 %v6218, %v6255
        %v6258 = vld [vmem:[%s8] sm:$0x1]
        %v6259 = vadd.f32 %v6257, %v6258
        %v6260 = vmax.f32 %v6259, 0.0
        %v6261 = vld [vmem:[%s9] sm:$0xff]
        %v6262 = vld [vmem:[%s9 + $0x8] sm:$0xff]
        %v6263 = vld [vmem:[%s9 + $0x10] sm:$0xff]
        %v6264 = vld [vmem:[%s9 + $0x18] sm:$0xff]
        %v6265 = vld [vmem:[%s9 + $0x20] sm:$0xff]
        %v6266 = vld [vmem:[%s9 + $0x28] sm:$0xff]
        %v6267 = vld [vmem:[%s9 + $0x30] sm:$0xff]
        %v6268 = vld [vmem:[%s9 + $0x38] sm:$0xff]
        %v6269 = vld [vmem:[%s9 + $0x40] sm:$0xff]
        %v6270 = vld [vmem:[%s9 + $0x48] sm:$0xff]
        %v6271 = vld [vmem:[%s9 + $0x50] sm:$0xff]
        %v6272 = vld [vmem:[%s9 + $0x58] sm:$0xff]
        %v6273 = vld [vmem:[%s9 + $0x60] sm:$0xff]
        %v6274 = vld [vmem:[%s9 + $0x68] sm:$0xff]
        %v6275 = vld [vmem:[%s9 + $0x70] sm:$0xff]
        %v6276 = vld [vmem:[%s9 + $0x78] sm:$0xff]
        %v6277 = vld [vmem:[%s10] sm:$0x1]
        %6278 = vmatpush.msra.mxu0 %v6276
        %6279 = vmatpush.msra.mxu0 %v6275
        %6280 = vmatpush.msra.mxu0 %v6274
        %6281 = vmatpush.msra.mxu0 %v6273
        %6282 = vmatpush.msra.mxu0 %v6272
        %6283 = vmatpush.msra.mxu0 %v6271
        %6284 = vmatpush.msra.mxu0 %v6270
        %6285 = vmatpush.msra.mxu0 %v6269
        %6286 = vmatpush.msra.mxu0 %v6268
        %6287 = vmatpush.msra.mxu0 %v6267
        %6288 = vmatpush.msra.mxu0 %v6266
        %6289 = vmatpush.msra.mxu0 %v6265
        %6290 = vmatpush.msra.mxu0 %v6264
        %6291 = vmatpush.msra.mxu0 %v6263
        %6292 = vmatpush.msra.mxu0 %v6262
        %6293 = vmatpush.msra.mxu0 %v6261
        %6294 = vmatmul.f32.gmra.mxu0 %v6260
        %v6295 = vpop.f32.mrf.mxu0
        %v6296 = vadd.f32 %v6277, %v6295
        %6297 = vdwg.mxu0
        %vm6298 = vcmask 1040384
        %v6299 = vsel %vm6298, %v6296, -inf
        %6300 = vmax.xlane.f32.xlu0 %v6299
        %v6301 = vpop.xlane.xlu0 %6300
        %v6302 = vsub.f32 %v6296, %v6301
        %v6303 = vmul.f32 %v6302, 1.442695
        %v6304 = vpow.pop %v6303
        %v6305 = vsel %vm6298, %v6304, 0.0
        %6306 = vadd.xlane.f32.xlu0 %v6305
        %v6307 = vpop.xlane.xlu0 %6306
        %v6308 = vrcp.pop %v6307
        %v6309 = vmul.f32 %v6307, %v6308
        %v6310 = vsub.f32 1.0, %v6309
        %v6311 = vmul.f32 %v6308, %v6310
        %v6312 = vadd.f32 %v6308, %v6311
        %vm6313 = vweird.f32 %v6307
        %vm6314 = vweird.f32 %v6308
        %vm6315 = vmor %vm6313, %vm6314
        %v6316 = vsel %vm6315, %v6308, %v6312
        %v6317 = vand.u32 2147483647, %v6307
        %vm6318 = vcmp.eq.f32.partialorder %v6317, 8.507059e+37
        %v6319 = vand.u32 %v6307, 2147483648
        %v6320 = vor.u32 1.1754944e-38, %v6319
        %v6321 = vsel %vm6318, %v6320, %v6316
        %v6322 = vmul.f32 %v6304, %v6321
        %6323 = vst [vmem:[%s378] sm:$0x1] %v6322
        %s6324 = sand.u32 %s269, 1
        %s6325 = scalar_lea.sflag [#allocation9], %s6324
        %s6326 = sand.u32 %s269, 1
        %s6327 = scalar_lea.vmem [#allocation8], %s6326
        // Predicated region
        $region65: #{net_forward_pallas.1} parent=63 // pred_check
          %p6328 = pneg %p279
        $region66: #{net_forward_pallas.1} parent=63 // pred_check_branch
          %6330 = sbr.rel (%p6328) target = $region68
        $region67: #{net_forward_pallas.1} parent=63 // pred_region
          %6332 = vsyncadd %s6325, 0
          %s6333 = scalar_lea.hbm %s11, %s25
          %s6335 = sshll.u32 %s6327, 4
          %s6336 = int_to_ptr.vmem [resolvable:$true] %s6335
          %s6337 = sshll.u32 %s6333, 4
          %s6338 = int_to_ptr.hbm [resolvable:$true] %s6337
          %6340 = dma.vmem_to_hbm [thread:$0]  %s6336, 16, %s6338, %s6325
        $region68: #{net_forward_pallas.1} parent=63 // pred_fallthru
          _
      $region64: #{net_forward_pallas.1} parent=5 // pred_fallthru
        _
      %p6341 = scmp.le.s32.totalorder 2, %s20
      // Predicated region
      $region69: #{net_forward_pallas.1} parent=5 // pred_check
        %p6342 = pneg %p6341
      $region70: #{net_forward_pallas.1} parent=5 // pred_check_branch
        %6344 = sbr.rel (%p6342) target = $region72
      $region71: #{net_forward_pallas.1} parent=5 // pred_region
        %s6345 = ssub.s32 %s20, 2
        // Predicated region
        $region73: #{net_forward_pallas.1} parent=71 // pred_check
          %p6346 = pneg %p285
        $region74: #{net_forward_pallas.1} parent=71 // pred_check_branch
          %6348 = sbr.rel (%p6346) target = $region76
        $region75: #{net_forward_pallas.1} parent=71 // pred_region
          %s6349 = sand.u32 %s270, 1
          %s6350 = scalar_lea.sflag [#allocation9], %s6349
          %s6351 = sand.u32 %s270, 1
          %s6352 = scalar_lea.vmem [#allocation8], %s6351
          %6354 = dma.done %s6350, 16
        $region76: #{net_forward_pallas.1} parent=71 // pred_fallthru
          _
      $region72: #{net_forward_pallas.1} parent=5 // pred_fallthru
        _
    $region6: #{net_forward_pallas.1} parent=1 // loop_footer
      %s24 = sadd.s32 1, %s20
    $region7: #{net_forward_pallas.1} parent=1 // loop_footer_branch
      %19 = sbr.rel target = $region3
    $region8: #{net_forward_pallas.1} parent=1 // loop_exit
      _
    %6355 = vsyncpa [#allocation9], 1
    %s6356 = scalar_lea.sflag [#allocation9], 1
    %6357 = vsyncpa %s6356, 1

</llo_original>
